<compile_context>
chip_gen: v5e
topology: v5e:2x2
jax: 0.10.0
libtpu: 0.0.40
codegen_flags: <defaults>
</compile_context>

<pallas_src>
import jax
import jax.numpy as jnp
import numpy as np
from jax.experimental import pallas as pl
from jax.experimental.pallas import tpu as pltpu

HIDDEN = 100          # true hidden width from `layers`
HPAD = 128            # lane-padded hidden width
IN_DIM = 2            # (x, t)
OUT_DIM = 2           # (u, v)
OUT_PAD = 8           # sublane-padded output width (rows of the transposed output)
NUM_BLOCKS = 11       # len(layers) - 3 = 14 - 3

LB = np.array([-5.0, 0.0], dtype=np.float32)
UB = np.array([5.0, np.pi / 2.0], dtype=np.float32)

# Affine form of 2*(x - lb)/(ub - lb) - 1  ==  x*scale + shift (same constants
# used in the kernel and the reference so comparisons are like-for-like).
X_SCALE = float(np.float32(2.0) / (UB[0] - LB[0]))
X_SHIFT = float(np.float32(-2.0) * LB[0] / (UB[0] - LB[0]) - np.float32(1.0))
T_SCALE = float(np.float32(2.0) / (UB[1] - LB[1]))
T_SHIFT = float(np.float32(-2.0) * LB[1] / (UB[1] - LB[1]) - np.float32(1.0))


# ----------------------------------------------------------------------------- kernel
def resnet_pinn_kernel(x_ref, t_ref, w0_ref, b0_ref, w1_ref, b1_ref,
                       w2_ref, b2_ref, woutT_ref, boutT_ref, out_ref):
    mm_dtype = w1_ref.dtype  # matmul operand dtype (bf16 fast path or f32), f32 accumulation

    # In-kernel normalization to [-1, 1] (VPU work, hidden under MXU/EUP slack).
    xn = x_ref[...] * X_SCALE + X_SHIFT          # (TM, 1) f32
    tn = t_ref[...] * T_SCALE + T_SHIFT          # (TM, 1) f32

    # Layer 0: Linear(2, 100) as two broadcast-FMAs (W0 has only 2 live rows;
    # a 128x128 MXU matmul here would be ~98% wasted MACs).
    h = jnp.tanh(xn * w0_ref[0:1, :] + tn * w0_ref[1:2, :] + b0_ref[...])  # (TM, 128) f32

    # 11 residual blocks, statically unrolled so the LLO scheduler overlaps
    # MXU matmuls, EUP tanh and VPU adds.  All weights stay resident in VMEM.
    for k in range(NUM_BLOCKS):
        # Inner activation z lives in mm_dtype only (bf16 on the fast path):
        # it feeds nothing but the second matmul, so this halves its store/load
        # traffic and (v6e/v7x) uses the bf16 EUP tanh path.
        z = jnp.tanh(
            (jnp.dot(h.astype(mm_dtype), w1_ref[k],
                     preferred_element_type=jnp.float32) + b1_ref[k]
             ).astype(mm_dtype))                                         # (TM,128) mm_dtype
        z2 = jnp.dot(z, w2_ref[k], preferred_element_type=jnp.float32) + b2_ref[k]
        h = jnp.tanh(z2 + h)                                             # residual stream stays f32

    # Output projection, transposed: uv^T = Wout^T @ h^T  -> (8, TM) lane-dense
    # block (rows 0..1 carry u, v).  Avoids writing a (N,128) padded slab.
    hT = h.astype(mm_dtype).T                                            # (128, TM)
    out_ref[...] = (jnp.dot(woutT_ref[...], hT,
                            preferred_element_type=jnp.float32)
                    + boutT_ref[...])                                    # (8, TM) f32


# ----------------------------------------------------------------------------- tiling helpers
def _round_up(n, m):
    return ((n + m - 1) // m) * m


def _pick_tm(n):
    """Largest row tile up to 512.

    Big tiles amortize the ~0.35us/step grid overhead on single-TensorCore
    v5e/v6e; 512 still leaves a multi-step grid at N>=1024 so a core-sharded
    axis can feed both v7x TensorCores.  N is padded up to a multiple of the
    returned tile by the wrapper (no grid-of-1 full-array fallback)."""
    for tm in (512, 256, 128, 64, 32, 16, 8):
        if n >= tm:
            return tm
    return 8


# ----------------------------------------------------------------------------- params
def _linear_init(key, fan_in, fan_out):
    """PyTorch nn.Linear default init: U(-1/sqrt(fan_in), 1/sqrt(fan_in))."""
    kw, kb = jax.random.split(key)
    bound = 1.0 / float(np.sqrt(fan_in))
    w = jax.random.uniform(kw, (fan_in, fan_out), jnp.float32, minval=-bound, maxval=bound)
    b = jax.random.uniform(kb, (fan_out,), jnp.float32, minval=-bound, maxval=bound)
    return np.asarray(w), np.asarray(b)


def init_params(key):
    """Deterministic synthetic parameters (shapes & init match the PyTorch module).
    Weights stored as (in, out) = W_torch.T."""
    keys = jax.random.split(key, 2 + 2 * NUM_BLOCKS)
    w0, b0 = _linear_init(keys[0], IN_DIM, HIDDEN)
    w1s, b1s, w2s, b2s = [], [], [], []
    for i in range(NUM_BLOCKS):
        w1, b1 = _linear_init(keys[1 + 2 * i], HIDDEN, HIDDEN)
        w2, b2 = _linear_init(keys[2 + 2 * i], HIDDEN, HIDDEN)
        w1s.append(w1); b1s.append(b1); w2s.append(w2); b2s.append(b2)
    wout, bout = _linear_init(keys[-1], HIDDEN, OUT_DIM)
    return dict(w0=w0, b0=b0,
                w1=np.stack(w1s), b1=np.stack(b1s),
                w2=np.stack(w2s), b2=np.stack(b2s),
                wout=wout, bout=bout)


def _pad2(w, rows, cols):
    out = np.zeros((rows, cols), dtype=np.float32)
    out[: w.shape[0], : w.shape[1]] = w
    return out


def pad_params(p, mm_dtype=jnp.bfloat16):
    """Zero-pad parameters to lane/sublane-aligned shapes.

    Matmul weights (W1/W2/Wout^T) are stored in `mm_dtype` (bf16 production
    default -> bf16-native MXU on v5e/v6e/v7x, half the weight DMA); W0 and all
    biases stay f32 (used on the VPU in f32).  Zero padding keeps padded lanes
    exactly 0 through tanh and the residual adds."""
    w0_p = _pad2(p["w0"], IN_DIM, HPAD)                               # (2, 128)
    b0_p = _pad2(p["b0"][None, :], 1, HPAD)                           # (1, 128)
    w1_p = np.stack([_pad2(w, HPAD, HPAD) for w in p["w1"]])          # (11,128,128)
    b1_p = np.stack([_pad2(b[None, :], 1, HPAD) for b in p["b1"]])    # (11,1,128)
    w2_p = np.stack([_pad2(w, HPAD, HPAD) for w in p["w2"]])
    b2_p = np.stack([_pad2(b[None, :], 1, HPAD) for b in p["b2"]])
    woutT_p = _pad2(p["wout"].T, OUT_PAD, HPAD)                       # (8, 128)
    boutT_p = _pad2(p["bout"][:, None], OUT_PAD, 1)                   # (8, 1)
    return (
        jnp.asarray(w0_p, jnp.float32),
        jnp.asarray(b0_p, jnp.float32),
        jnp.asarray(w1_p, mm_dtype),
        jnp.asarray(b1_p, jnp.float32),
        jnp.asarray(w2_p, mm_dtype),
        jnp.asarray(b2_p, jnp.float32),
        jnp.asarray(woutT_p, mm_dtype),
        jnp.asarray(boutT_p, jnp.float32),
    )


# ----------------------------------------------------------------------------- wrapper
@jax.jit
def resnet_pinn_forward(x, t, w0, b0, w1, b1, w2, b2, woutT, boutT):
    """Pallas-backed equivalent of ResNetPINN.forward(x, t) -> (u, v)."""
    n = x.shape[0]
    tm = _pick_tm(n)
    n_pad = _round_up(n, tm)
    if n_pad != n:
        # Pad the row axis with zeros (tanh of finite values -> finite, padded
        # rows are simply cropped below).  No grid-of-1 / un-tiled fallback.
        x = jnp.pad(x, ((0, n_pad - n), (0, 0)))
        t = jnp.pad(t, ((0, n_pad - n), (0, 0)))

    row = lambda i: (i, 0)
    col = lambda i: (0, i)
    full2 = lambda i: (0, 0)
    full3 = lambda i: (0, 0, 0)

    param_bytes = sum(int(a.size) * a.dtype.itemsize
                      for a in (w0, b0, w1, b1, w2, b2, woutT, boutT))
    cost = pl.CostEstimate(
        flops=2 * n_pad * HPAD * (2 * NUM_BLOCKS * HPAD + IN_DIM + OUT_PAD),
        transcendentals=(2 * NUM_BLOCKS + 1) * n_pad * HPAD,
        bytes_accessed=param_bytes + n_pad * IN_DIM * 4 + OUT_PAD * n_pad * 4,
    )

    uvT = pl.pallas_call(
        resnet_pinn_kernel,
        out_shape=jax.ShapeDtypeStruct((OUT_PAD, n_pad), jnp.float32),
        grid_spec=pltpu.PrefetchScalarGridSpec(
            num_scalar_prefetch=0,
            grid=(n_pad // tm,),
            in_specs=[
                pl.BlockSpec((tm, 1), row),                      # x tile (N,1)
                pl.BlockSpec((tm, 1), row),                      # t tile (N,1)
                pl.BlockSpec((IN_DIM, HPAD), full2),             # W0 (2,128)
                pl.BlockSpec((1, HPAD), full2),                  # b0
                pl.BlockSpec((NUM_BLOCKS, HPAD, HPAD), full3),   # W1 stack
                pl.BlockSpec((NUM_BLOCKS, 1, HPAD), full3),      # b1 stack
                pl.BlockSpec((NUM_BLOCKS, HPAD, HPAD), full3),   # W2 stack
                pl.BlockSpec((NUM_BLOCKS, 1, HPAD), full3),      # b2 stack
                pl.BlockSpec((OUT_PAD, HPAD), full2),            # Wout^T (8,128)
                pl.BlockSpec((OUT_PAD, 1), full2),               # bout^T (8,1)
            ],
            out_specs=pl.BlockSpec((OUT_PAD, tm), col),          # lane-dense (8, TM) blocks
        ),
        compiler_params=pltpu.CompilerParams(
            # On v7x (2 TensorCores) switch to (pltpu.CORE_PARALLEL,) to shard
            # the row grid across both cores; kept portable here for v5e/v6e.
            dimension_semantics=("parallel",),
        ),
        cost_estimate=cost,
    )(x, t, w0, b0, w1, b1, w2, b2, woutT, boutT)

    u = uvT[0, :n][:, None]
    v = uvT[1, :n][:, None]
    return u, v


# ----------------------------------------------------------------------------- reference
def reference_forward(x, t, p):
    """Pure-JAX unpadded f32 reference of the PyTorch forward (exact module semantics)."""
    hp = jax.lax.Precision.HIGHEST
    xn = x * X_SCALE + X_SHIFT
    tn = t * T_SCALE + T_SHIFT
    X = jnp.concatenate([xn, tn], axis=1)
    h = jnp.tanh(jnp.dot(X, jnp.asarray(p["w0"]), precision=hp) + jnp.asarray(p["b0"]))
    for k in range(NUM_BLOCKS):
        z = jnp.tanh(jnp.dot(h, jnp.asarray(p["w1"][k]), precision=hp) + jnp.asarray(p["b1"][k]))
        z = jnp.dot(z, jnp.asarray(p["w2"][k]), precision=hp) + jnp.asarray(p["b2"][k])
        h = jnp.tanh(z + h)
    uv = jnp.dot(h, jnp.asarray(p["wout"]), precision=hp) + jnp.asarray(p["bout"])
    return uv[:, 0:1], uv[:, 1:2]


# ----------------------------------------------------------------------------- main
if __name__ == "__main__":
    key = jax.random.PRNGKey(0)
    k_param, k_x, k_t = jax.random.split(key, 3)

    params = init_params(k_param)

    # Collocation points.  N deliberately NOT a multiple of the row tile to
    # exercise the pad-to-tile / crop path (N=1000 -> padded to 1024, TM=512).
    N = 1000
    x = jax.random.uniform(k_x, (N, 1), jnp.float32,
                           minval=float(LB[0]), maxval=float(UB[0]))
    t = jax.random.uniform(k_t, (N, 1), jnp.float32,
                           minval=float(LB[1]), maxval=float(UB[1]))

    u_ref, v_ref = reference_forward(x, t, params)
    u_ref = np.asarray(u_ref)
    v_ref = np.asarray(v_ref)

    # --- f32-weights path: exact module semantics (validation path) ---
    padded_f32 = pad_params(params, jnp.float32)
    u32, v32 = resnet_pinn_forward(x, t, *padded_f32)
    u32, v32 = jax.block_until_ready((u32, v32))
    np.testing.assert_allclose(np.asarray(u32), u_ref, rtol=1e-2, atol=1e-2)
    np.testing.assert_allclose(np.asarray(v32), v_ref, rtol=1e-2, atol=1e-2)

    # --- production path: bf16 MXU operands / bf16 inner activation, f32 accumulation.
    # bf16 rounding accumulated through 23 matmuls + 23 tanh in a residual chain
    # means this cannot (and should not) be asserted at f32 tolerances; the f32
    # path above is the semantics check.  For the real PINN loss (u_x, u_xx, ...)
    # confirm downstream derivative tolerance before adopting bf16 weights.
    padded_bf16 = pad_params(params)  # bf16 default
    u16, v16 = resnet_pinn_forward(x, t, *padded_bf16)
    u16, v16 = jax.block_until_ready((u16, v16))
    np.testing.assert_allclose(np.asarray(u16), u_ref, rtol=5e-2, atol=1e-1)
    np.testing.assert_allclose(np.asarray(v16), v_ref, rtol=5e-2, atol=1e-1)

    # TODO(synk): net_f_uv / compute_loss / train require autograd (u_x, u_t, u_xx, ...)
    # and an Adam loop; only the forward pass is implemented as a Pallas kernel here.
    print("KERNEL_OK")
</pallas_src>

<mosaic_0001>
module attributes {stable_mosaic.version = 11 : i64} {
  func.func @resnet_pinn_kernel(%arg0: i32, %arg1: memref<512x1xf32, #tpu.memory_space<vmem>>, %arg2: memref<512x1xf32, #tpu.memory_space<vmem>>, %arg3: memref<2x128xf32, #tpu.memory_space<vmem>>, %arg4: memref<1x128xf32, #tpu.memory_space<vmem>>, %arg5: memref<11x128x128xf32, #tpu.memory_space<vmem>>, %arg6: memref<11x1x128xf32, #tpu.memory_space<vmem>>, %arg7: memref<11x128x128xf32, #tpu.memory_space<vmem>>, %arg8: memref<11x1x128xf32, #tpu.memory_space<vmem>>, %arg9: memref<8x128xf32, #tpu.memory_space<vmem>>, %arg10: memref<8x1xf32, #tpu.memory_space<vmem>>, %arg11: memref<8x512xf32, #tpu.memory_space<vmem>>) attributes {dimension_semantics = [#tpu.dimension_semantics<parallel>], iteration_bounds = array<i64: 2>, scalar_prefetch = 0 : i64, scratch_operands = 0 : i64, tpu.core_type = #tpu.core_type<tc>, window_params = [{transform_indices = @transform_0, window_bounds = array<i64: 512, 1>}, {transform_indices = @transform_1, window_bounds = array<i64: 512, 1>}, {pipeline_mode = #tpu.pipeline_mode<synchronous>, transform_indices = @transform_2, window_bounds = array<i64: 2, 128>}, {pipeline_mode = #tpu.pipeline_mode<synchronous>, transform_indices = @transform_3, window_bounds = array<i64: 1, 128>}, {pipeline_mode = #tpu.pipeline_mode<synchronous>, transform_indices = @transform_4, window_bounds = array<i64: 11, 128, 128>}, {pipeline_mode = #tpu.pipeline_mode<synchronous>, transform_indices = @transform_5, window_bounds = array<i64: 11, 1, 128>}, {pipeline_mode = #tpu.pipeline_mode<synchronous>, transform_indices = @transform_6, window_bounds = array<i64: 11, 128, 128>}, {pipeline_mode = #tpu.pipeline_mode<synchronous>, transform_indices = @transform_7, window_bounds = array<i64: 11, 1, 128>}, {pipeline_mode = #tpu.pipeline_mode<synchronous>, transform_indices = @transform_8, window_bounds = array<i64: 8, 128>}, {pipeline_mode = #tpu.pipeline_mode<synchronous>, transform_indices = @transform_9, window_bounds = array<i64: 8, 1>}, {transform_indices = @transform_10, window_bounds = array<i64: 8, 512>}]} {
    %c0 = arith.constant 0 : index
    %c0_0 = arith.constant 0 : index
    %0 = vector.load %arg1[%c0, %c0_0] : memref<512x1xf32, #tpu.memory_space<vmem>>, vector<512x1xf32>
    %cst = arith.constant 2.000000e-01 : f32
    %1 = vector.broadcast %cst : f32 to vector<512x1xf32>
    %2 = arith.mulf %0, %1 : vector<512x1xf32>
    %cst_1 = arith.constant 0.000000e+00 : f32
    %3 = vector.broadcast %cst_1 : f32 to vector<512x1xf32>
    %4 = arith.addf %2, %3 : vector<512x1xf32>
    %c0_2 = arith.constant 0 : index
    %c0_3 = arith.constant 0 : index
    %5 = vector.load %arg2[%c0_2, %c0_3] : memref<512x1xf32, #tpu.memory_space<vmem>>, vector<512x1xf32>
    %cst_4 = arith.constant 1.27323949 : f32
    %6 = vector.broadcast %cst_4 : f32 to vector<512x1xf32>
    %7 = arith.mulf %5, %6 : vector<512x1xf32>
    %cst_5 = arith.constant -1.000000e+00 : f32
    %8 = vector.broadcast %cst_5 : f32 to vector<512x1xf32>
    %9 = arith.addf %7, %8 : vector<512x1xf32>
    %c0_6 = arith.constant 0 : index
    %c0_7 = arith.constant 0 : index
    %10 = vector.load %arg3[%c0_6, %c0_7] : memref<2x128xf32, #tpu.memory_space<vmem>>, vector<1x128xf32>
    %11 = vector.broadcast %4 : vector<512x1xf32> to vector<512x128xf32>
    %12 = vector.broadcast %10 : vector<1x128xf32> to vector<512x128xf32>
    %13 = arith.mulf %11, %12 : vector<512x128xf32>
    %c1 = arith.constant 1 : index
    %c0_8 = arith.constant 0 : index
    %14 = vector.load %arg3[%c1, %c0_8] : memref<2x128xf32, #tpu.memory_space<vmem>>, vector<1x128xf32>
    %15 = vector.broadcast %9 : vector<512x1xf32> to vector<512x128xf32>
    %16 = vector.broadcast %14 : vector<1x128xf32> to vector<512x128xf32>
    %17 = arith.mulf %15, %16 : vector<512x128xf32>
    %18 = arith.addf %13, %17 : vector<512x128xf32>
    %c0_9 = arith.constant 0 : index
    %c0_10 = arith.constant 0 : index
    %19 = vector.load %arg4[%c0_9, %c0_10] : memref<1x128xf32, #tpu.memory_space<vmem>>, vector<1x128xf32>
    %20 = vector.broadcast %19 : vector<1x128xf32> to vector<512x128xf32>
    %21 = arith.addf %18, %20 : vector<512x128xf32>
    %22 = math.tanh %21 : vector<512x128xf32>
    %c0_11 = arith.constant 0 : index
    %c0_12 = arith.constant 0 : index
    %c0_13 = arith.constant 0 : index
    %23 = vector.load %arg5[%c0_11, %c0_12, %c0_13] : memref<11x128x128xf32, #tpu.memory_space<vmem>>, vector<1x128x128xf32>
    %24 = vector.shape_cast %23 : vector<1x128x128xf32> to vector<128x128xf32>
    %cst_14 = arith.constant dense<0.000000e+00> : vector<512x128xf32>
    %25 = tpu.matmul %22, %24, %cst_14 {dimension_numbers = #tpu.dot_dimension_numbers<[1], [0], [0], [1], [0, 0, 1, 1], [], []>} : vector<512x128xf32>, vector<128x128xf32>, vector<512x128xf32> -> vector<512x128xf32>
    %c0_15 = arith.constant 0 : index
    %c0_16 = arith.constant 0 : index
    %c0_17 = arith.constant 0 : index
    %26 = vector.load %arg6[%c0_15, %c0_16, %c0_17] : memref<11x1x128xf32, #tpu.memory_space<vmem>>, vector<1x1x128xf32>
    %27 = vector.shape_cast %26 : vector<1x1x128xf32> to vector<1x128xf32>
    %28 = vector.broadcast %27 : vector<1x128xf32> to vector<512x128xf32>
    %29 = arith.addf %25, %28 : vector<512x128xf32>
    %30 = math.tanh %29 : vector<512x128xf32>
    %c0_18 = arith.constant 0 : index
    %c0_19 = arith.constant 0 : index
    %c0_20 = arith.constant 0 : index
    %31 = vector.load %arg7[%c0_18, %c0_19, %c0_20] : memref<11x128x128xf32, #tpu.memory_space<vmem>>, vector<1x128x128xf32>
    %32 = vector.shape_cast %31 : vector<1x128x128xf32> to vector<128x128xf32>
    %cst_21 = arith.constant dense<0.000000e+00> : vector<512x128xf32>
    %33 = tpu.matmul %30, %32, %cst_21 {dimension_numbers = #tpu.dot_dimension_numbers<[1], [0], [0], [1], [0, 0, 1, 1], [], []>} : vector<512x128xf32>, vector<128x128xf32>, vector<512x128xf32> -> vector<512x128xf32>
    %c0_22 = arith.constant 0 : index
    %c0_23 = arith.constant 0 : index
    %c0_24 = arith.constant 0 : index
    %34 = vector.load %arg8[%c0_22, %c0_23, %c0_24] : memref<11x1x128xf32, #tpu.memory_space<vmem>>, vector<1x1x128xf32>
    %35 = vector.shape_cast %34 : vector<1x1x128xf32> to vector<1x128xf32>
    %36 = vector.broadcast %35 : vector<1x128xf32> to vector<512x128xf32>
    %37 = arith.addf %33, %36 : vector<512x128xf32>
    %38 = arith.addf %37, %22 : vector<512x128xf32>
    %39 = math.tanh %38 : vector<512x128xf32>
    %c1_25 = arith.constant 1 : index
    %c0_26 = arith.constant 0 : index
    %c0_27 = arith.constant 0 : index
    %40 = vector.load %arg5[%c1_25, %c0_26, %c0_27] : memref<11x128x128xf32, #tpu.memory_space<vmem>>, vector<1x128x128xf32>
    %41 = vector.shape_cast %40 : vector<1x128x128xf32> to vector<128x128xf32>
    %cst_28 = arith.constant dense<0.000000e+00> : vector<512x128xf32>
    %42 = tpu.matmul %39, %41, %cst_28 {dimension_numbers = #tpu.dot_dimension_numbers<[1], [0], [0], [1], [0, 0, 1, 1], [], []>} : vector<512x128xf32>, vector<128x128xf32>, vector<512x128xf32> -> vector<512x128xf32>
    %c1_29 = arith.constant 1 : index
    %c0_30 = arith.constant 0 : index
    %c0_31 = arith.constant 0 : index
    %43 = vector.load %arg6[%c1_29, %c0_30, %c0_31] : memref<11x1x128xf32, #tpu.memory_space<vmem>>, vector<1x1x128xf32>
    %44 = vector.shape_cast %43 : vector<1x1x128xf32> to vector<1x128xf32>
    %45 = vector.broadcast %44 : vector<1x128xf32> to vector<512x128xf32>
    %46 = arith.addf %42, %45 : vector<512x128xf32>
    %47 = math.tanh %46 : vector<512x128xf32>
    %c1_32 = arith.constant 1 : index
    %c0_33 = arith.constant 0 : index
    %c0_34 = arith.constant 0 : index
    %48 = vector.load %arg7[%c1_32, %c0_33, %c0_34] : memref<11x128x128xf32, #tpu.memory_space<vmem>>, vector<1x128x128xf32>
    %49 = vector.shape_cast %48 : vector<1x128x128xf32> to vector<128x128xf32>
    %cst_35 = arith.constant dense<0.000000e+00> : vector<512x128xf32>
    %50 = tpu.matmul %47, %49, %cst_35 {dimension_numbers = #tpu.dot_dimension_numbers<[1], [0], [0], [1], [0, 0, 1, 1], [], []>} : vector<512x128xf32>, vector<128x128xf32>, vector<512x128xf32> -> vector<512x128xf32>
    %c1_36 = arith.constant 1 : index
    %c0_37 = arith.constant 0 : index
    %c0_38 = arith.constant 0 : index
    %51 = vector.load %arg8[%c1_36, %c0_37, %c0_38] : memref<11x1x128xf32, #tpu.memory_space<vmem>>, vector<1x1x128xf32>
    %52 = vector.shape_cast %51 : vector<1x1x128xf32> to vector<1x128xf32>
    %53 = vector.broadcast %52 : vector<1x128xf32> to vector<512x128xf32>
    %54 = arith.addf %50, %53 : vector<512x128xf32>
    %55 = arith.addf %54, %39 : vector<512x128xf32>
    %56 = math.tanh %55 : vector<512x128xf32>
    %c2 = arith.constant 2 : index
    %c0_39 = arith.constant 0 : index
    %c0_40 = arith.constant 0 : index
    %57 = vector.load %arg5[%c2, %c0_39, %c0_40] : memref<11x128x128xf32, #tpu.memory_space<vmem>>, vector<1x128x128xf32>
    %58 = vector.shape_cast %57 : vector<1x128x128xf32> to vector<128x128xf32>
    %cst_41 = arith.constant dense<0.000000e+00> : vector<512x128xf32>
    %59 = tpu.matmul %56, %58, %cst_41 {dimension_numbers = #tpu.dot_dimension_numbers<[1], [0], [0], [1], [0, 0, 1, 1], [], []>} : vector<512x128xf32>, vector<128x128xf32>, vector<512x128xf32> -> vector<512x128xf32>
    %c2_42 = arith.constant 2 : index
    %c0_43 = arith.constant 0 : index
    %c0_44 = arith.constant 0 : index
    %60 = vector.load %arg6[%c2_42, %c0_43, %c0_44] : memref<11x1x128xf32, #tpu.memory_space<vmem>>, vector<1x1x128xf32>
    %61 = vector.shape_cast %60 : vector<1x1x128xf32> to vector<1x128xf32>
    %62 = vector.broadcast %61 : vector<1x128xf32> to vector<512x128xf32>
    %63 = arith.addf %59, %62 : vector<512x128xf32>
    %64 = math.tanh %63 : vector<512x128xf32>
    %c2_45 = arith.constant 2 : index
    %c0_46 = arith.constant 0 : index
    %c0_47 = arith.constant 0 : index
    %65 = vector.load %arg7[%c2_45, %c0_46, %c0_47] : memref<11x128x128xf32, #tpu.memory_space<vmem>>, vector<1x128x128xf32>
    %66 = vector.shape_cast %65 : vector<1x128x128xf32> to vector<128x128xf32>
    %cst_48 = arith.constant dense<0.000000e+00> : vector<512x128xf32>
    %67 = tpu.matmul %64, %66, %cst_48 {dimension_numbers = #tpu.dot_dimension_numbers<[1], [0], [0], [1], [0, 0, 1, 1], [], []>} : vector<512x128xf32>, vector<128x128xf32>, vector<512x128xf32> -> vector<512x128xf32>
    %c2_49 = arith.constant 2 : index
    %c0_50 = arith.constant 0 : index
    %c0_51 = arith.constant 0 : index
    %68 = vector.load %arg8[%c2_49, %c0_50, %c0_51] : memref<11x1x128xf32, #tpu.memory_space<vmem>>, vector<1x1x128xf32>
    %69 = vector.shape_cast %68 : vector<1x1x128xf32> to vector<1x128xf32>
    %70 = vector.broadcast %69 : vector<1x128xf32> to vector<512x128xf32>
    %71 = arith.addf %67, %70 : vector<512x128xf32>
    %72 = arith.addf %71, %56 : vector<512x128xf32>
    %73 = math.tanh %72 : vector<512x128xf32>
    %c3 = arith.constant 3 : index
    %c0_52 = arith.constant 0 : index
    %c0_53 = arith.constant 0 : index
    %74 = vector.load %arg5[%c3, %c0_52, %c0_53] : memref<11x128x128xf32, #tpu.memory_space<vmem>>, vector<1x128x128xf32>
    %75 = vector.shape_cast %74 : vector<1x128x128xf32> to vector<128x128xf32>
    %cst_54 = arith.constant dense<0.000000e+00> : vector<512x128xf32>
    %76 = tpu.matmul %73, %75, %cst_54 {dimension_numbers = #tpu.dot_dimension_numbers<[1], [0], [0], [1], [0, 0, 1, 1], [], []>} : vector<512x128xf32>, vector<128x128xf32>, vector<512x128xf32> -> vector<512x128xf32>
    %c3_55 = arith.constant 3 : index
    %c0_56 = arith.constant 0 : index
    %c0_57 = arith.constant 0 : index
    %77 = vector.load %arg6[%c3_55, %c0_56, %c0_57] : memref<11x1x128xf32, #tpu.memory_space<vmem>>, vector<1x1x128xf32>
    %78 = vector.shape_cast %77 : vector<1x1x128xf32> to vector<1x128xf32>
    %79 = vector.broadcast %78 : vector<1x128xf32> to vector<512x128xf32>
    %80 = arith.addf %76, %79 : vector<512x128xf32>
    %81 = math.tanh %80 : vector<512x128xf32>
    %c3_58 = arith.constant 3 : index
    %c0_59 = arith.constant 0 : index
    %c0_60 = arith.constant 0 : index
    %82 = vector.load %arg7[%c3_58, %c0_59, %c0_60] : memref<11x128x128xf32, #tpu.memory_space<vmem>>, vector<1x128x128xf32>
    %83 = vector.shape_cast %82 : vector<1x128x128xf32> to vector<128x128xf32>
    %cst_61 = arith.constant dense<0.000000e+00> : vector<512x128xf32>
    %84 = tpu.matmul %81, %83, %cst_61 {dimension_numbers = #tpu.dot_dimension_numbers<[1], [0], [0], [1], [0, 0, 1, 1], [], []>} : vector<512x128xf32>, vector<128x128xf32>, vector<512x128xf32> -> vector<512x128xf32>
    %c3_62 = arith.constant 3 : index
    %c0_63 = arith.constant 0 : index
    %c0_64 = arith.constant 0 : index
    %85 = vector.load %arg8[%c3_62, %c0_63, %c0_64] : memref<11x1x128xf32, #tpu.memory_space<vmem>>, vector<1x1x128xf32>
    %86 = vector.shape_cast %85 : vector<1x1x128xf32> to vector<1x128xf32>
    %87 = vector.broadcast %86 : vector<1x128xf32> to vector<512x128xf32>
    %88 = arith.addf %84, %87 : vector<512x128xf32>
    %89 = arith.addf %88, %73 : vector<512x128xf32>
    %90 = math.tanh %89 : vector<512x128xf32>
    %c4 = arith.constant 4 : index
    %c0_65 = arith.constant 0 : index
    %c0_66 = arith.constant 0 : index
    %91 = vector.load %arg5[%c4, %c0_65, %c0_66] : memref<11x128x128xf32, #tpu.memory_space<vmem>>, vector<1x128x128xf32>
    %92 = vector.shape_cast %91 : vector<1x128x128xf32> to vector<128x128xf32>
    %cst_67 = arith.constant dense<0.000000e+00> : vector<512x128xf32>
    %93 = tpu.matmul %90, %92, %cst_67 {dimension_numbers = #tpu.dot_dimension_numbers<[1], [0], [0], [1], [0, 0, 1, 1], [], []>} : vector<512x128xf32>, vector<128x128xf32>, vector<512x128xf32> -> vector<512x128xf32>
    %c4_68 = arith.constant 4 : index
    %c0_69 = arith.constant 0 : index
    %c0_70 = arith.constant 0 : index
    %94 = vector.load %arg6[%c4_68, %c0_69, %c0_70] : memref<11x1x128xf32, #tpu.memory_space<vmem>>, vector<1x1x128xf32>
    %95 = vector.shape_cast %94 : vector<1x1x128xf32> to vector<1x128xf32>
    %96 = vector.broadcast %95 : vector<1x128xf32> to vector<512x128xf32>
    %97 = arith.addf %93, %96 : vector<512x128xf32>
    %98 = math.tanh %97 : vector<512x128xf32>
    %c4_71 = arith.constant 4 : index
    %c0_72 = arith.constant 0 : index
    %c0_73 = arith.constant 0 : index
    %99 = vector.load %arg7[%c4_71, %c0_72, %c0_73] : memref<11x128x128xf32, #tpu.memory_space<vmem>>, vector<1x128x128xf32>
    %100 = vector.shape_cast %99 : vector<1x128x128xf32> to vector<128x128xf32>
    %cst_74 = arith.constant dense<0.000000e+00> : vector<512x128xf32>
    %101 = tpu.matmul %98, %100, %cst_74 {dimension_numbers = #tpu.dot_dimension_numbers<[1], [0], [0], [1], [0, 0, 1, 1], [], []>} : vector<512x128xf32>, vector<128x128xf32>, vector<512x128xf32> -> vector<512x128xf32>
    %c4_75 = arith.constant 4 : index
    %c0_76 = arith.constant 0 : index
    %c0_77 = arith.constant 0 : index
    %102 = vector.load %arg8[%c4_75, %c0_76, %c0_77] : memref<11x1x128xf32, #tpu.memory_space<vmem>>, vector<1x1x128xf32>
    %103 = vector.shape_cast %102 : vector<1x1x128xf32> to vector<1x128xf32>
    %104 = vector.broadcast %103 : vector<1x128xf32> to vector<512x128xf32>
    %105 = arith.addf %101, %104 : vector<512x128xf32>
    %106 = arith.addf %105, %90 : vector<512x128xf32>
    %107 = math.tanh %106 : vector<512x128xf32>
    %c5 = arith.constant 5 : index
    %c0_78 = arith.constant 0 : index
    %c0_79 = arith.constant 0 : index
    %108 = vector.load %arg5[%c5, %c0_78, %c0_79] : memref<11x128x128xf32, #tpu.memory_space<vmem>>, vector<1x128x128xf32>
    %109 = vector.shape_cast %108 : vector<1x128x128xf32> to vector<128x128xf32>
    %cst_80 = arith.constant dense<0.000000e+00> : vector<512x128xf32>
    %110 = tpu.matmul %107, %109, %cst_80 {dimension_numbers = #tpu.dot_dimension_numbers<[1], [0], [0], [1], [0, 0, 1, 1], [], []>} : vector<512x128xf32>, vector<128x128xf32>, vector<512x128xf32> -> vector<512x128xf32>
    %c5_81 = arith.constant 5 : index
    %c0_82 = arith.constant 0 : index
    %c0_83 = arith.constant 0 : index
    %111 = vector.load %arg6[%c5_81, %c0_82, %c0_83] : memref<11x1x128xf32, #tpu.memory_space<vmem>>, vector<1x1x128xf32>
    %112 = vector.shape_cast %111 : vector<1x1x128xf32> to vector<1x128xf32>
    %113 = vector.broadcast %112 : vector<1x128xf32> to vector<512x128xf32>
    %114 = arith.addf %110, %113 : vector<512x128xf32>
    %115 = math.tanh %114 : vector<512x128xf32>
    %c5_84 = arith.constant 5 : index
    %c0_85 = arith.constant 0 : index
    %c0_86 = arith.constant 0 : index
    %116 = vector.load %arg7[%c5_84, %c0_85, %c0_86] : memref<11x128x128xf32, #tpu.memory_space<vmem>>, vector<1x128x128xf32>
    %117 = vector.shape_cast %116 : vector<1x128x128xf32> to vector<128x128xf32>
    %cst_87 = arith.constant dense<0.000000e+00> : vector<512x128xf32>
    %118 = tpu.matmul %115, %117, %cst_87 {dimension_numbers = #tpu.dot_dimension_numbers<[1], [0], [0], [1], [0, 0, 1, 1], [], []>} : vector<512x128xf32>, vector<128x128xf32>, vector<512x128xf32> -> vector<512x128xf32>
    %c5_88 = arith.constant 5 : index
    %c0_89 = arith.constant 0 : index
    %c0_90 = arith.constant 0 : index
    %119 = vector.load %arg8[%c5_88, %c0_89, %c0_90] : memref<11x1x128xf32, #tpu.memory_space<vmem>>, vector<1x1x128xf32>
    %120 = vector.shape_cast %119 : vector<1x1x128xf32> to vector<1x128xf32>
    %121 = vector.broadcast %120 : vector<1x128xf32> to vector<512x128xf32>
    %122 = arith.addf %118, %121 : vector<512x128xf32>
    %123 = arith.addf %122, %107 : vector<512x128xf32>
    %124 = math.tanh %123 : vector<512x128xf32>
    %c6 = arith.constant 6 : index
    %c0_91 = arith.constant 0 : index
    %c0_92 = arith.constant 0 : index
    %125 = vector.load %arg5[%c6, %c0_91, %c0_92] : memref<11x128x128xf32, #tpu.memory_space<vmem>>, vector<1x128x128xf32>
    %126 = vector.shape_cast %125 : vector<1x128x128xf32> to vector<128x128xf32>
    %cst_93 = arith.constant dense<0.000000e+00> : vector<512x128xf32>
    %127 = tpu.matmul %124, %126, %cst_93 {dimension_numbers = #tpu.dot_dimension_numbers<[1], [0], [0], [1], [0, 0, 1, 1], [], []>} : vector<512x128xf32>, vector<128x128xf32>, vector<512x128xf32> -> vector<512x128xf32>
    %c6_94 = arith.constant 6 : index
    %c0_95 = arith.constant 0 : index
    %c0_96 = arith.constant 0 : index
    %128 = vector.load %arg6[%c6_94, %c0_95, %c0_96] : memref<11x1x128xf32, #tpu.memory_space<vmem>>, vector<1x1x128xf32>
    %129 = vector.shape_cast %128 : vector<1x1x128xf32> to vector<1x128xf32>
    %130 = vector.broadcast %129 : vector<1x128xf32> to vector<512x128xf32>
    %131 = arith.addf %127, %130 : vector<512x128xf32>
    %132 = math.tanh %131 : vector<512x128xf32>
    %c6_97 = arith.constant 6 : index
    %c0_98 = arith.constant 0 : index
    %c0_99 = arith.constant 0 : index
    %133 = vector.load %arg7[%c6_97, %c0_98, %c0_99] : memref<11x128x128xf32, #tpu.memory_space<vmem>>, vector<1x128x128xf32>
    %134 = vector.shape_cast %133 : vector<1x128x128xf32> to vector<128x128xf32>
    %cst_100 = arith.constant dense<0.000000e+00> : vector<512x128xf32>
    %135 = tpu.matmul %132, %134, %cst_100 {dimension_numbers = #tpu.dot_dimension_numbers<[1], [0], [0], [1], [0, 0, 1, 1], [], []>} : vector<512x128xf32>, vector<128x128xf32>, vector<512x128xf32> -> vector<512x128xf32>
    %c6_101 = arith.constant 6 : index
    %c0_102 = arith.constant 0 : index
    %c0_103 = arith.constant 0 : index
    %136 = vector.load %arg8[%c6_101, %c0_102, %c0_103] : memref<11x1x128xf32, #tpu.memory_space<vmem>>, vector<1x1x128xf32>
    %137 = vector.shape_cast %136 : vector<1x1x128xf32> to vector<1x128xf32>
    %138 = vector.broadcast %137 : vector<1x128xf32> to vector<512x128xf32>
    %139 = arith.addf %135, %138 : vector<512x128xf32>
    %140 = arith.addf %139, %124 : vector<512x128xf32>
    %141 = math.tanh %140 : vector<512x128xf32>
    %c7 = arith.constant 7 : index
    %c0_104 = arith.constant 0 : index
    %c0_105 = arith.constant 0 : index
    %142 = vector.load %arg5[%c7, %c0_104, %c0_105] : memref<11x128x128xf32, #tpu.memory_space<vmem>>, vector<1x128x128xf32>
    %143 = vector.shape_cast %142 : vector<1x128x128xf32> to vector<128x128xf32>
    %cst_106 = arith.constant dense<0.000000e+00> : vector<512x128xf32>
    %144 = tpu.matmul %141, %143, %cst_106 {dimension_numbers = #tpu.dot_dimension_numbers<[1], [0], [0], [1], [0, 0, 1, 1], [], []>} : vector<512x128xf32>, vector<128x128xf32>, vector<512x128xf32> -> vector<512x128xf32>
    %c7_107 = arith.constant 7 : index
    %c0_108 = arith.constant 0 : index
    %c0_109 = arith.constant 0 : index
    %145 = vector.load %arg6[%c7_107, %c0_108, %c0_109] : memref<11x1x128xf32, #tpu.memory_space<vmem>>, vector<1x1x128xf32>
    %146 = vector.shape_cast %145 : vector<1x1x128xf32> to vector<1x128xf32>
    %147 = vector.broadcast %146 : vector<1x128xf32> to vector<512x128xf32>
    %148 = arith.addf %144, %147 : vector<512x128xf32>
    %149 = math.tanh %148 : vector<512x128xf32>
    %c7_110 = arith.constant 7 : index
    %c0_111 = arith.constant 0 : index
    %c0_112 = arith.constant 0 : index
    %150 = vector.load %arg7[%c7_110, %c0_111, %c0_112] : memref<11x128x128xf32, #tpu.memory_space<vmem>>, vector<1x128x128xf32>
    %151 = vector.shape_cast %150 : vector<1x128x128xf32> to vector<128x128xf32>
    %cst_113 = arith.constant dense<0.000000e+00> : vector<512x128xf32>
    %152 = tpu.matmul %149, %151, %cst_113 {dimension_numbers = #tpu.dot_dimension_numbers<[1], [0], [0], [1], [0, 0, 1, 1], [], []>} : vector<512x128xf32>, vector<128x128xf32>, vector<512x128xf32> -> vector<512x128xf32>
    %c7_114 = arith.constant 7 : index
    %c0_115 = arith.constant 0 : index
    %c0_116 = arith.constant 0 : index
    %153 = vector.load %arg8[%c7_114, %c0_115, %c0_116] : memref<11x1x128xf32, #tpu.memory_space<vmem>>, vector<1x1x128xf32>
    %154 = vector.shape_cast %153 : vector<1x1x128xf32> to vector<1x128xf32>
    %155 = vector.broadcast %154 : vector<1x128xf32> to vector<512x128xf32>
    %156 = arith.addf %152, %155 : vector<512x128xf32>
    %157 = arith.addf %156, %141 : vector<512x128xf32>
    %158 = math.tanh %157 : vector<512x128xf32>
    %c8 = arith.constant 8 : index
    %c0_117 = arith.constant 0 : index
    %c0_118 = arith.constant 0 : index
    %159 = vector.load %arg5[%c8, %c0_117, %c0_118] : memref<11x128x128xf32, #tpu.memory_space<vmem>>, vector<1x128x128xf32>
    %160 = vector.shape_cast %159 : vector<1x128x128xf32> to vector<128x128xf32>
    %cst_119 = arith.constant dense<0.000000e+00> : vector<512x128xf32>
    %161 = tpu.matmul %158, %160, %cst_119 {dimension_numbers = #tpu.dot_dimension_numbers<[1], [0], [0], [1], [0, 0, 1, 1], [], []>} : vector<512x128xf32>, vector<128x128xf32>, vector<512x128xf32> -> vector<512x128xf32>
    %c8_120 = arith.constant 8 : index
    %c0_121 = arith.constant 0 : index
    %c0_122 = arith.constant 0 : index
    %162 = vector.load %arg6[%c8_120, %c0_121, %c0_122] : memref<11x1x128xf32, #tpu.memory_space<vmem>>, vector<1x1x128xf32>
    %163 = vector.shape_cast %162 : vector<1x1x128xf32> to vector<1x128xf32>
    %164 = vector.broadcast %163 : vector<1x128xf32> to vector<512x128xf32>
    %165 = arith.addf %161, %164 : vector<512x128xf32>
    %166 = math.tanh %165 : vector<512x128xf32>
    %c8_123 = arith.constant 8 : index
    %c0_124 = arith.constant 0 : index
    %c0_125 = arith.constant 0 : index
    %167 = vector.load %arg7[%c8_123, %c0_124, %c0_125] : memref<11x128x128xf32, #tpu.memory_space<vmem>>, vector<1x128x128xf32>
    %168 = vector.shape_cast %167 : vector<1x128x128xf32> to vector<128x128xf32>
    %cst_126 = arith.constant dense<0.000000e+00> : vector<512x128xf32>
    %169 = tpu.matmul %166, %168, %cst_126 {dimension_numbers = #tpu.dot_dimension_numbers<[1], [0], [0], [1], [0, 0, 1, 1], [], []>} : vector<512x128xf32>, vector<128x128xf32>, vector<512x128xf32> -> vector<512x128xf32>
    %c8_127 = arith.constant 8 : index
    %c0_128 = arith.constant 0 : index
    %c0_129 = arith.constant 0 : index
    %170 = vector.load %arg8[%c8_127, %c0_128, %c0_129] : memref<11x1x128xf32, #tpu.memory_space<vmem>>, vector<1x1x128xf32>
    %171 = vector.shape_cast %170 : vector<1x1x128xf32> to vector<1x128xf32>
    %172 = vector.broadcast %171 : vector<1x128xf32> to vector<512x128xf32>
    %173 = arith.addf %169, %172 : vector<512x128xf32>
    %174 = arith.addf %173, %158 : vector<512x128xf32>
    %175 = math.tanh %174 : vector<512x128xf32>
    %c9 = arith.constant 9 : index
    %c0_130 = arith.constant 0 : index
    %c0_131 = arith.constant 0 : index
    %176 = vector.load %arg5[%c9, %c0_130, %c0_131] : memref<11x128x128xf32, #tpu.memory_space<vmem>>, vector<1x128x128xf32>
    %177 = vector.shape_cast %176 : vector<1x128x128xf32> to vector<128x128xf32>
    %cst_132 = arith.constant dense<0.000000e+00> : vector<512x128xf32>
    %178 = tpu.matmul %175, %177, %cst_132 {dimension_numbers = #tpu.dot_dimension_numbers<[1], [0], [0], [1], [0, 0, 1, 1], [], []>} : vector<512x128xf32>, vector<128x128xf32>, vector<512x128xf32> -> vector<512x128xf32>
    %c9_133 = arith.constant 9 : index
    %c0_134 = arith.constant 0 : index
    %c0_135 = arith.constant 0 : index
    %179 = vector.load %arg6[%c9_133, %c0_134, %c0_135] : memref<11x1x128xf32, #tpu.memory_space<vmem>>, vector<1x1x128xf32>
    %180 = vector.shape_cast %179 : vector<1x1x128xf32> to vector<1x128xf32>
    %181 = vector.broadcast %180 : vector<1x128xf32> to vector<512x128xf32>
    %182 = arith.addf %178, %181 : vector<512x128xf32>
    %183 = math.tanh %182 : vector<512x128xf32>
    %c9_136 = arith.constant 9 : index
    %c0_137 = arith.constant 0 : index
    %c0_138 = arith.constant 0 : index
    %184 = vector.load %arg7[%c9_136, %c0_137, %c0_138] : memref<11x128x128xf32, #tpu.memory_space<vmem>>, vector<1x128x128xf32>
    %185 = vector.shape_cast %184 : vector<1x128x128xf32> to vector<128x128xf32>
    %cst_139 = arith.constant dense<0.000000e+00> : vector<512x128xf32>
    %186 = tpu.matmul %183, %185, %cst_139 {dimension_numbers = #tpu.dot_dimension_numbers<[1], [0], [0], [1], [0, 0, 1, 1], [], []>} : vector<512x128xf32>, vector<128x128xf32>, vector<512x128xf32> -> vector<512x128xf32>
    %c9_140 = arith.constant 9 : index
    %c0_141 = arith.constant 0 : index
    %c0_142 = arith.constant 0 : index
    %187 = vector.load %arg8[%c9_140, %c0_141, %c0_142] : memref<11x1x128xf32, #tpu.memory_space<vmem>>, vector<1x1x128xf32>
    %188 = vector.shape_cast %187 : vector<1x1x128xf32> to vector<1x128xf32>
    %189 = vector.broadcast %188 : vector<1x128xf32> to vector<512x128xf32>
    %190 = arith.addf %186, %189 : vector<512x128xf32>
    %191 = arith.addf %190, %175 : vector<512x128xf32>
    %192 = math.tanh %191 : vector<512x128xf32>
    %c10 = arith.constant 10 : index
    %c0_143 = arith.constant 0 : index
    %c0_144 = arith.constant 0 : index
    %193 = vector.load %arg5[%c10, %c0_143, %c0_144] : memref<11x128x128xf32, #tpu.memory_space<vmem>>, vector<1x128x128xf32>
    %194 = vector.shape_cast %193 : vector<1x128x128xf32> to vector<128x128xf32>
    %cst_145 = arith.constant dense<0.000000e+00> : vector<512x128xf32>
    %195 = tpu.matmul %192, %194, %cst_145 {dimension_numbers = #tpu.dot_dimension_numbers<[1], [0], [0], [1], [0, 0, 1, 1], [], []>} : vector<512x128xf32>, vector<128x128xf32>, vector<512x128xf32> -> vector<512x128xf32>
    %c10_146 = arith.constant 10 : index
    %c0_147 = arith.constant 0 : index
    %c0_148 = arith.constant 0 : index
    %196 = vector.load %arg6[%c10_146, %c0_147, %c0_148] : memref<11x1x128xf32, #tpu.memory_space<vmem>>, vector<1x1x128xf32>
    %197 = vector.shape_cast %196 : vector<1x1x128xf32> to vector<1x128xf32>
    %198 = vector.broadcast %197 : vector<1x128xf32> to vector<512x128xf32>
    %199 = arith.addf %195, %198 : vector<512x128xf32>
    %200 = math.tanh %199 : vector<512x128xf32>
    %c10_149 = arith.constant 10 : index
    %c0_150 = arith.constant 0 : index
    %c0_151 = arith.constant 0 : index
    %201 = vector.load %arg7[%c10_149, %c0_150, %c0_151] : memref<11x128x128xf32, #tpu.memory_space<vmem>>, vector<1x128x128xf32>
    %202 = vector.shape_cast %201 : vector<1x128x128xf32> to vector<128x128xf32>
    %cst_152 = arith.constant dense<0.000000e+00> : vector<512x128xf32>
    %203 = tpu.matmul %200, %202, %cst_152 {dimension_numbers = #tpu.dot_dimension_numbers<[1], [0], [0], [1], [0, 0, 1, 1], [], []>} : vector<512x128xf32>, vector<128x128xf32>, vector<512x128xf32> -> vector<512x128xf32>
    %c10_153 = arith.constant 10 : index
    %c0_154 = arith.constant 0 : index
    %c0_155 = arith.constant 0 : index
    %204 = vector.load %arg8[%c10_153, %c0_154, %c0_155] : memref<11x1x128xf32, #tpu.memory_space<vmem>>, vector<1x1x128xf32>
    %205 = vector.shape_cast %204 : vector<1x1x128xf32> to vector<1x128xf32>
    %206 = vector.broadcast %205 : vector<1x128xf32> to vector<512x128xf32>
    %207 = arith.addf %203, %206 : vector<512x128xf32>
    %208 = arith.addf %207, %192 : vector<512x128xf32>
    %209 = math.tanh %208 : vector<512x128xf32>
    %210 = tpu.transpose %209, [1, 0] : vector<512x128xf32> -> vector<128x512xf32>
    %c0_156 = arith.constant 0 : index
    %c0_157 = arith.constant 0 : index
    %211 = vector.load %arg9[%c0_156, %c0_157] : memref<8x128xf32, #tpu.memory_space<vmem>>, vector<8x128xf32>
    %cst_158 = arith.constant dense<0.000000e+00> : vector<8x512xf32>
    %212 = tpu.matmul %211, %210, %cst_158 {dimension_numbers = #tpu.dot_dimension_numbers<[1], [0], [0], [1], [0, 0, 1, 1], [], []>} : vector<8x128xf32>, vector<128x512xf32>, vector<8x512xf32> -> vector<8x512xf32>
    %c0_159 = arith.constant 0 : index
    %c0_160 = arith.constant 0 : index
    %213 = vector.load %arg10[%c0_159, %c0_160] : memref<8x1xf32, #tpu.memory_space<vmem>>, vector<8x1xf32>
    %214 = vector.broadcast %213 : vector<8x1xf32> to vector<8x512xf32>
    %215 = arith.addf %212, %214 : vector<8x512xf32>
    %c0_161 = arith.constant 0 : index
    %c0_162 = arith.constant 0 : index
    %216 = vector.load %arg11[%c0_161, %c0_162] : memref<8x512xf32, #tpu.memory_space<vmem>>, vector<8x512xf32>
    tpu.vector_store %arg11[%c0_161, %c0_162], %215 {strides = array<i32>} : memref<8x512xf32, #tpu.memory_space<vmem>>, vector<8x512xf32>,
    return
  }
  func.func @transform_0(%arg0: i32) -> (i32, i32) {
    %c0_i32 = arith.constant 0 : i32
    %c0_i32_0 = arith.constant 0 : i32
    return %arg0, %c0_i32 : i32, i32
  }
  func.func @transform_1(%arg0: i32) -> (i32, i32) {
    %c0_i32 = arith.constant 0 : i32
    %c0_i32_0 = arith.constant 0 : i32
    return %arg0, %c0_i32 : i32, i32
  }
  func.func @transform_2(%arg0: i32) -> (i32, i32) {
    %c0_i32 = arith.constant 0 : i32
    %c0_i32_0 = arith.constant 0 : i32
    %c0_i32_1 = arith.constant 0 : i32
    return %c0_i32, %c0_i32_0 : i32, i32
  }
  func.func @transform_3(%arg0: i32) -> (i32, i32) {
    %c0_i32 = arith.constant 0 : i32
    %c0_i32_0 = arith.constant 0 : i32
    %c0_i32_1 = arith.constant 0 : i32
    return %c0_i32, %c0_i32_0 : i32, i32
  }
  func.func @transform_4(%arg0: i32) -> (i32, i32, i32) {
    %c0_i32 = arith.constant 0 : i32
    %c0_i32_0 = arith.constant 0 : i32
    %c0_i32_1 = arith.constant 0 : i32
    %c0_i32_2 = arith.constant 0 : i32
    return %c0_i32, %c0_i32_0, %c0_i32_1 : i32, i32, i32
  }
  func.func @transform_5(%arg0: i32) -> (i32, i32, i32) {
    %c0_i32 = arith.constant 0 : i32
    %c0_i32_0 = arith.constant 0 : i32
    %c0_i32_1 = arith.constant 0 : i32
    %c0_i32_2 = arith.constant 0 : i32
    return %c0_i32, %c0_i32_0, %c0_i32_1 : i32, i32, i32
  }
  func.func @transform_6(%arg0: i32) -> (i32, i32, i32) {
    %c0_i32 = arith.constant 0 : i32
    %c0_i32_0 = arith.constant 0 : i32
    %c0_i32_1 = arith.constant 0 : i32
    %c0_i32_2 = arith.constant 0 : i32
    return %c0_i32, %c0_i32_0, %c0_i32_1 : i32, i32, i32
  }
  func.func @transform_7(%arg0: i32) -> (i32, i32, i32) {
    %c0_i32 = arith.constant 0 : i32
    %c0_i32_0 = arith.constant 0 : i32
    %c0_i32_1 = arith.constant 0 : i32
    %c0_i32_2 = arith.constant 0 : i32
    return %c0_i32, %c0_i32_0, %c0_i32_1 : i32, i32, i32
  }
  func.func @transform_8(%arg0: i32) -> (i32, i32) {
    %c0_i32 = arith.constant 0 : i32
    %c0_i32_0 = arith.constant 0 : i32
    %c0_i32_1 = arith.constant 0 : i32
    return %c0_i32, %c0_i32_0 : i32, i32
  }
  func.func @transform_9(%arg0: i32) -> (i32, i32) {
    %c0_i32 = arith.constant 0 : i32
    %c0_i32_0 = arith.constant 0 : i32
    %c0_i32_1 = arith.constant 0 : i32
    return %c0_i32, %c0_i32_0 : i32, i32
  }
  func.func @transform_10(%arg0: i32) -> (i32, i32) {
    %c0_i32 = arith.constant 0 : i32
    %c0_i32_0 = arith.constant 0 : i32
    return %c0_i32, %arg0 : i32, i32
  }
}

</mosaic_0001>

<llo_original>
// kernel: resnet_pinn_forward.1
$region0: #{resnet_pinn_forward.1}
  #allocation0 [shape = 'u32[]', space=smem, size = 0x4, offset = 0x4, fixed_abs, tag = 'smem constant byte address 0x4 - core index']
  #allocation1 [shape = 'u32[72,128]{1,0:T(1,128)}', space=vmem, size = 0x9000, scoped, tag = 'internal scratch']
  %s0 = inlined_call_operand.vmem [shape: f32[1024,1], index: 0, kind: input, shape index: {}]
  %s1 = inlined_call_operand.vmem [shape: f32[1024,1], index: 1, kind: input, shape index: {}]
  %s2 = inlined_call_operand.vmem [shape: f32[2,128], index: 2, kind: input, shape index: {}]
  %s3 = inlined_call_operand.vmem [shape: f32[1,128], index: 3, kind: input, shape index: {}]
  %s4 = inlined_call_operand.vmem [shape: f32[11,128,128], index: 4, kind: input, shape index: {}]
  %s5 = inlined_call_operand.vmem [shape: f32[11,1,128], index: 5, kind: input, shape index: {}]
  %s6 = inlined_call_operand.vmem [shape: f32[11,128,128], index: 6, kind: input, shape index: {}]
  %s7 = inlined_call_operand.vmem [shape: f32[11,1,128], index: 7, kind: input, shape index: {}]
  %s8 = inlined_call_operand.vmem [shape: f32[8,128], index: 8, kind: input, shape index: {}]
  %s9 = inlined_call_operand.vmem [shape: f32[8,1], index: 9, kind: input, shape index: {}]
  %s10 = inlined_call_operand.vmem [shape: f32[8,1024], index: 10, kind: output, shape index: {}]
  %s11 = sld [smem:[#allocation0]]
  $region73: #{resnet_pinn_forward.1} parent=0
    _
  %s13 = ssub.s32 1, %s11
  %s14 = scalar_select 0, %s13, %s11
  loop: start=0, step=1, limit=4
  $region2: #{resnet_pinn_forward.1} parent=0 // loop_pre_header
    _
  $region3: #{resnet_pinn_forward.1} parent=0 // loop_header
    %s16 = sphi 0, %s20
    %p17 = scmp.ge.s32.totalorder %s16, 4
    %s26 = sphi 0, %s28
    %s29 = sphi 0, %s26
    %s30 = sphi 0, %s29
    %s46 = sphi 0, %s30
    %s52 = sphi 0, %s54
    %s55 = sphi 0, %s52
    %s56 = sphi 0, %s55
    %s72 = sphi 0, %s56
    %s76 = sphi 0, %s76
    %s78 = sphi 0, %s76
    %s79 = sphi 0, %s78
    %s93 = sphi 0, %s79
    %s97 = sphi 0, %s97
    %s99 = sphi 0, %s97
    %s100 = sphi 0, %s99
    %s114 = sphi 0, %s100
    %s118 = sphi 0, %s118
    %s120 = sphi 0, %s118
    %s121 = sphi 0, %s120
    %s135 = sphi 0, %s121
    %s139 = sphi 0, %s139
    %s141 = sphi 0, %s139
    %s142 = sphi 0, %s141
    %s156 = sphi 0, %s142
    %s160 = sphi 0, %s160
    %s162 = sphi 0, %s160
    %s163 = sphi 0, %s162
    %s177 = sphi 0, %s163
    %s181 = sphi 0, %s181
    %s183 = sphi 0, %s181
    %s184 = sphi 0, %s183
    %s198 = sphi 0, %s184
    %s202 = sphi 0, %s202
    %s204 = sphi 0, %s202
    %s205 = sphi 0, %s204
    %s219 = sphi 0, %s205
    %s223 = sphi 0, %s223
    %s225 = sphi 0, %s223
    %s226 = sphi 0, %s225
    %s240 = sphi 0, %s226
    %s246 = sphi 0, %s248
    %s249 = sphi 0, %s246
    %s250 = sphi 0, %s249
    %s266 = sphi 0, %s250
  $region4: #{resnet_pinn_forward.1} parent=0 // loop_header_branch
    %19 = sbr.rel (%p17) target = $region8
  $region5: #{resnet_pinn_forward.1} parent=0 // loop_body
    %s21 = ssub.s32 %s16, 1
    %s22 = ssub.s32 %s16, 2
    %s23 = sadd.s32 %s16, 1
    %s24 = ssub.s32 %s16, %s23
    %p25 = scmp.eq.s32.totalorder %s24, 0
    %s27 = sadd.s32 %s26, 1
    %s28 = scalar_select %p25, %s26, %s27
    %p31 = pneg %p25
    %p32 = scmp.eq.s32.totalorder %s16, 1
    %p33 = por %p31, %p32
    %p34 = scmp.ne.s32.totalorder %s26, %s29
    %p35 = scmp.eq.s32.totalorder %s16, 0
    %p36 = por %p34, %p35
    %p37 = scmp.ne.s32.totalorder %s26, %s29
    %p38 = scmp.eq.s32.totalorder %s21, 1
    %p39 = por %p37, %p38
    %p40 = scmp.ne.s32.totalorder %s29, %s30
    %p41 = scmp.eq.s32.totalorder %s21, 0
    %p42 = por %p40, %p41
    %p43 = scmp.ne.s32.totalorder %s29, %s30
    %p44 = scmp.eq.s32.totalorder %s22, 1
    %p45 = por %p43, %p44
    %p47 = scmp.ne.s32.totalorder %s30, %s46
    %p48 = scmp.eq.s32.totalorder %s22, 0
    %p49 = por %p47, %p48
    %s50 = ssub.s32 %s16, %s23
    %p51 = scmp.eq.s32.totalorder %s50, 0
    %s53 = sadd.s32 %s52, 1
    %s54 = scalar_select %p51, %s52, %s53
    %p57 = pneg %p51
    %p58 = scmp.eq.s32.totalorder %s16, 1
    %p59 = por %p57, %p58
    %p60 = scmp.ne.s32.totalorder %s52, %s55
    %p61 = scmp.eq.s32.totalorder %s16, 0
    %p62 = por %p60, %p61
    %p63 = scmp.ne.s32.totalorder %s52, %s55
    %p64 = scmp.eq.s32.totalorder %s21, 1
    %p65 = por %p63, %p64
    %p66 = scmp.ne.s32.totalorder %s55, %s56
    %p67 = scmp.eq.s32.totalorder %s21, 0
    %p68 = por %p66, %p67
    %p69 = scmp.ne.s32.totalorder %s55, %s56
    %p70 = scmp.eq.s32.totalorder %s22, 1
    %p71 = por %p69, %p70
    %p73 = scmp.ne.s32.totalorder %s56, %s72
    %p74 = scmp.eq.s32.totalorder %s22, 0
    %p75 = por %p73, %p74
    %s77 = sadd.s32 %s76, 1
    %p80 = scmp.eq.s32.totalorder %s16, 1
    %p81 = scmp.ne.s32.totalorder %s76, %s78
    %p82 = scmp.eq.s32.totalorder %s16, 0
    %p83 = por %p81, %p82
    %p84 = scmp.ne.s32.totalorder %s76, %s78
    %p85 = scmp.eq.s32.totalorder %s21, 1
    %p86 = por %p84, %p85
    %p87 = scmp.ne.s32.totalorder %s78, %s79
    %p88 = scmp.eq.s32.totalorder %s21, 0
    %p89 = por %p87, %p88
    %p90 = scmp.ne.s32.totalorder %s78, %s79
    %p91 = scmp.eq.s32.totalorder %s22, 1
    %p92 = por %p90, %p91
    %p94 = scmp.ne.s32.totalorder %s79, %s93
    %p95 = scmp.eq.s32.totalorder %s22, 0
    %p96 = por %p94, %p95
    %s98 = sadd.s32 %s97, 1
    %p101 = scmp.eq.s32.totalorder %s16, 1
    %p102 = scmp.ne.s32.totalorder %s97, %s99
    %p103 = scmp.eq.s32.totalorder %s16, 0
    %p104 = por %p102, %p103
    %p105 = scmp.ne.s32.totalorder %s97, %s99
    %p106 = scmp.eq.s32.totalorder %s21, 1
    %p107 = por %p105, %p106
    %p108 = scmp.ne.s32.totalorder %s99, %s100
    %p109 = scmp.eq.s32.totalorder %s21, 0
    %p110 = por %p108, %p109
    %p111 = scmp.ne.s32.totalorder %s99, %s100
    %p112 = scmp.eq.s32.totalorder %s22, 1
    %p113 = por %p111, %p112
    %p115 = scmp.ne.s32.totalorder %s100, %s114
    %p116 = scmp.eq.s32.totalorder %s22, 0
    %p117 = por %p115, %p116
    %s119 = sadd.s32 %s118, 1
    %p122 = scmp.eq.s32.totalorder %s16, 1
    %p123 = scmp.ne.s32.totalorder %s118, %s120
    %p124 = scmp.eq.s32.totalorder %s16, 0
    %p125 = por %p123, %p124
    %p126 = scmp.ne.s32.totalorder %s118, %s120
    %p127 = scmp.eq.s32.totalorder %s21, 1
    %p128 = por %p126, %p127
    %p129 = scmp.ne.s32.totalorder %s120, %s121
    %p130 = scmp.eq.s32.totalorder %s21, 0
    %p131 = por %p129, %p130
    %p132 = scmp.ne.s32.totalorder %s120, %s121
    %p133 = scmp.eq.s32.totalorder %s22, 1
    %p134 = por %p132, %p133
    %p136 = scmp.ne.s32.totalorder %s121, %s135
    %p137 = scmp.eq.s32.totalorder %s22, 0
    %p138 = por %p136, %p137
    %s140 = sadd.s32 %s139, 1
    %p143 = scmp.eq.s32.totalorder %s16, 1
    %p144 = scmp.ne.s32.totalorder %s139, %s141
    %p145 = scmp.eq.s32.totalorder %s16, 0
    %p146 = por %p144, %p145
    %p147 = scmp.ne.s32.totalorder %s139, %s141
    %p148 = scmp.eq.s32.totalorder %s21, 1
    %p149 = por %p147, %p148
    %p150 = scmp.ne.s32.totalorder %s141, %s142
    %p151 = scmp.eq.s32.totalorder %s21, 0
    %p152 = por %p150, %p151
    %p153 = scmp.ne.s32.totalorder %s141, %s142
    %p154 = scmp.eq.s32.totalorder %s22, 1
    %p155 = por %p153, %p154
    %p157 = scmp.ne.s32.totalorder %s142, %s156
    %p158 = scmp.eq.s32.totalorder %s22, 0
    %p159 = por %p157, %p158
    %s161 = sadd.s32 %s160, 1
    %p164 = scmp.eq.s32.totalorder %s16, 1
    %p165 = scmp.ne.s32.totalorder %s160, %s162
    %p166 = scmp.eq.s32.totalorder %s16, 0
    %p167 = por %p165, %p166
    %p168 = scmp.ne.s32.totalorder %s160, %s162
    %p169 = scmp.eq.s32.totalorder %s21, 1
    %p170 = por %p168, %p169
    %p171 = scmp.ne.s32.totalorder %s162, %s163
    %p172 = scmp.eq.s32.totalorder %s21, 0
    %p173 = por %p171, %p172
    %p174 = scmp.ne.s32.totalorder %s162, %s163
    %p175 = scmp.eq.s32.totalorder %s22, 1
    %p176 = por %p174, %p175
    %p178 = scmp.ne.s32.totalorder %s163, %s177
    %p179 = scmp.eq.s32.totalorder %s22, 0
    %p180 = por %p178, %p179
    %s182 = sadd.s32 %s181, 1
    %p185 = scmp.eq.s32.totalorder %s16, 1
    %p186 = scmp.ne.s32.totalorder %s181, %s183
    %p187 = scmp.eq.s32.totalorder %s16, 0
    %p188 = por %p186, %p187
    %p189 = scmp.ne.s32.totalorder %s181, %s183
    %p190 = scmp.eq.s32.totalorder %s21, 1
    %p191 = por %p189, %p190
    %p192 = scmp.ne.s32.totalorder %s183, %s184
    %p193 = scmp.eq.s32.totalorder %s21, 0
    %p194 = por %p192, %p193
    %p195 = scmp.ne.s32.totalorder %s183, %s184
    %p196 = scmp.eq.s32.totalorder %s22, 1
    %p197 = por %p195, %p196
    %p199 = scmp.ne.s32.totalorder %s184, %s198
    %p200 = scmp.eq.s32.totalorder %s22, 0
    %p201 = por %p199, %p200
    %s203 = sadd.s32 %s202, 1
    %p206 = scmp.eq.s32.totalorder %s16, 1
    %p207 = scmp.ne.s32.totalorder %s202, %s204
    %p208 = scmp.eq.s32.totalorder %s16, 0
    %p209 = por %p207, %p208
    %p210 = scmp.ne.s32.totalorder %s202, %s204
    %p211 = scmp.eq.s32.totalorder %s21, 1
    %p212 = por %p210, %p211
    %p213 = scmp.ne.s32.totalorder %s204, %s205
    %p214 = scmp.eq.s32.totalorder %s21, 0
    %p215 = por %p213, %p214
    %p216 = scmp.ne.s32.totalorder %s204, %s205
    %p217 = scmp.eq.s32.totalorder %s22, 1
    %p218 = por %p216, %p217
    %p220 = scmp.ne.s32.totalorder %s205, %s219
    %p221 = scmp.eq.s32.totalorder %s22, 0
    %p222 = por %p220, %p221
    %s224 = sadd.s32 %s223, 1
    %p227 = scmp.eq.s32.totalorder %s16, 1
    %p228 = scmp.ne.s32.totalorder %s223, %s225
    %p229 = scmp.eq.s32.totalorder %s16, 0
    %p230 = por %p228, %p229
    %p231 = scmp.ne.s32.totalorder %s223, %s225
    %p232 = scmp.eq.s32.totalorder %s21, 1
    %p233 = por %p231, %p232
    %p234 = scmp.ne.s32.totalorder %s225, %s226
    %p235 = scmp.eq.s32.totalorder %s21, 0
    %p236 = por %p234, %p235
    %p237 = scmp.ne.s32.totalorder %s225, %s226
    %p238 = scmp.eq.s32.totalorder %s22, 1
    %p239 = por %p237, %p238
    %p241 = scmp.ne.s32.totalorder %s226, %s240
    %p242 = scmp.eq.s32.totalorder %s22, 0
    %p243 = por %p241, %p242
    %s244 = ssub.s32 %s16, %s23
    %p245 = scmp.eq.s32.totalorder %s244, 0
    %s247 = sadd.s32 %s246, 1
    %s248 = scalar_select %p245, %s246, %s247
    %p251 = pneg %p245
    %p252 = scmp.eq.s32.totalorder %s16, 1
    %p253 = por %p251, %p252
    %p254 = scmp.ne.s32.totalorder %s246, %s249
    %p255 = scmp.eq.s32.totalorder %s16, 0
    %p256 = por %p254, %p255
    %p257 = scmp.ne.s32.totalorder %s246, %s249
    %p258 = scmp.eq.s32.totalorder %s21, 1
    %p259 = por %p257, %p258
    %p260 = scmp.ne.s32.totalorder %s249, %s250
    %p261 = scmp.eq.s32.totalorder %s21, 0
    %p262 = por %p260, %p261
    %p263 = scmp.ne.s32.totalorder %s249, %s250
    %p264 = scmp.eq.s32.totalorder %s22, 1
    %p265 = por %p263, %p264
    %p267 = scmp.ne.s32.totalorder %s250, %s266
    %p268 = scmp.eq.s32.totalorder %s22, 0
    %p269 = por %p267, %p268
    %p270 = scmp.le.s32.totalorder 1, %s16
    %p271 = scmp.lt.s32.totalorder %s16, 3
    %p272 = pnand %p270, %p271
    %p273 = pneg %p272
    // Predicated region
    $region9: #{resnet_pinn_forward.1} parent=5 // pred_check
      _
    $region10: #{resnet_pinn_forward.1} parent=5 // pred_check_branch
      %275 = sbr.rel (%p272) target = $region12
    $region11: #{resnet_pinn_forward.1} parent=5 // pred_region
      %s276 = ssub.s32 %s16, 1
      // Predicated region
      $region13: #{resnet_pinn_forward.1} parent=11 // pred_check
        %p277 = pneg %p89
      $region14: #{resnet_pinn_forward.1} parent=11 // pred_check_branch
        %279 = sbr.rel (%p277) target = $region16
      $region15: #{resnet_pinn_forward.1} parent=11 // pred_region
        _
      $region16: #{resnet_pinn_forward.1} parent=11 // pred_fallthru
        _
      // Predicated region
      $region17: #{resnet_pinn_forward.1} parent=11 // pred_check
        %p280 = pneg %p110
      $region18: #{resnet_pinn_forward.1} parent=11 // pred_check_branch
        %282 = sbr.rel (%p280) target = $region20
      $region19: #{resnet_pinn_forward.1} parent=11 // pred_region
        _
      $region20: #{resnet_pinn_forward.1} parent=11 // pred_fallthru
        _
      // Predicated region
      $region21: #{resnet_pinn_forward.1} parent=11 // pred_check
        %p283 = pneg %p131
      $region22: #{resnet_pinn_forward.1} parent=11 // pred_check_branch
        %285 = sbr.rel (%p283) target = $region24
      $region23: #{resnet_pinn_forward.1} parent=11 // pred_region
        _
      $region24: #{resnet_pinn_forward.1} parent=11 // pred_fallthru
        _
      // Predicated region
      $region25: #{resnet_pinn_forward.1} parent=11 // pred_check
        %p286 = pneg %p152
      $region26: #{resnet_pinn_forward.1} parent=11 // pred_check_branch
        %288 = sbr.rel (%p286) target = $region28
      $region27: #{resnet_pinn_forward.1} parent=11 // pred_region
        _
      $region28: #{resnet_pinn_forward.1} parent=11 // pred_fallthru
        _
      // Predicated region
      $region29: #{resnet_pinn_forward.1} parent=11 // pred_check
        %p289 = pneg %p173
      $region30: #{resnet_pinn_forward.1} parent=11 // pred_check_branch
        %291 = sbr.rel (%p289) target = $region32
      $region31: #{resnet_pinn_forward.1} parent=11 // pred_region
        _
      $region32: #{resnet_pinn_forward.1} parent=11 // pred_fallthru
        _
      // Predicated region
      $region33: #{resnet_pinn_forward.1} parent=11 // pred_check
        %p292 = pneg %p194
      $region34: #{resnet_pinn_forward.1} parent=11 // pred_check_branch
        %294 = sbr.rel (%p292) target = $region36
      $region35: #{resnet_pinn_forward.1} parent=11 // pred_region
        _
      $region36: #{resnet_pinn_forward.1} parent=11 // pred_fallthru
        _
      // Predicated region
      $region37: #{resnet_pinn_forward.1} parent=11 // pred_check
        %p295 = pneg %p215
      $region38: #{resnet_pinn_forward.1} parent=11 // pred_check_branch
        %297 = sbr.rel (%p295) target = $region40
      $region39: #{resnet_pinn_forward.1} parent=11 // pred_region
        _
      $region40: #{resnet_pinn_forward.1} parent=11 // pred_fallthru
        _
      // Predicated region
      $region41: #{resnet_pinn_forward.1} parent=11 // pred_check
        %p298 = pneg %p236
      $region42: #{resnet_pinn_forward.1} parent=11 // pred_check_branch
        %300 = sbr.rel (%p298) target = $region44
      $region43: #{resnet_pinn_forward.1} parent=11 // pred_region
        _
      $region44: #{resnet_pinn_forward.1} parent=11 // pred_fallthru
        _
    $region12: #{resnet_pinn_forward.1} parent=5 // pred_fallthru
      _
    %p301 = scmp.lt.s32.totalorder %s16, 2
    // Predicated region
    $region45: #{resnet_pinn_forward.1} parent=5 // pred_check
      %p302 = pneg %p301
    $region46: #{resnet_pinn_forward.1} parent=5 // pred_check_branch
      %304 = sbr.rel (%p302) target = $region48
    $region47: #{resnet_pinn_forward.1} parent=5 // pred_region
      // Predicated region
      $region49: #{resnet_pinn_forward.1} parent=47 // pred_check
        %p305 = pneg %p36
      $region50: #{resnet_pinn_forward.1} parent=47 // pred_check_branch
        %307 = sbr.rel (%p305) target = $region52
      $region51: #{resnet_pinn_forward.1} parent=47 // pred_region
        %s308 = smul.u32 64, %s16
        %p309 = scmp.lt.s32.totalorder %s308, 127
        %s310 = scalar_select %p309, %s308, 127
        %s311 = smul.addr %s310, 8
        %s312 = scalar_lea.vmem %s0, %s311
        %s313 = smul.u32 64, %s16
      $region52: #{resnet_pinn_forward.1} parent=47 // pred_fallthru
        _
      // Predicated region
      $region53: #{resnet_pinn_forward.1} parent=47 // pred_check
        %p314 = pneg %p62
      $region54: #{resnet_pinn_forward.1} parent=47 // pred_check_branch
        %316 = sbr.rel (%p314) target = $region56
      $region55: #{resnet_pinn_forward.1} parent=47 // pred_region
        %s317 = smul.u32 64, %s16
        %p318 = scmp.lt.s32.totalorder %s317, 127
        %s319 = scalar_select %p318, %s317, 127
        %s320 = smul.addr %s319, 8
        %s321 = scalar_lea.vmem %s1, %s320
        %s322 = smul.u32 64, %s16
      $region56: #{resnet_pinn_forward.1} parent=47 // pred_fallthru
        _
    $region48: #{resnet_pinn_forward.1} parent=5 // pred_fallthru
      _
    %p323 = scmp.le.s32.totalorder 1, %s16
    %p324 = scmp.lt.s32.totalorder %s16, 3
    %p325 = pnand %p323, %p324
    %p326 = pneg %p325
    // Predicated region
    $region57: #{resnet_pinn_forward.1} parent=5 // pred_check
      _
    $region58: #{resnet_pinn_forward.1} parent=5 // pred_check_branch
      %328 = sbr.rel (%p325) target = $region60
    $region59: #{resnet_pinn_forward.1} parent=5 // pred_region
      %s329 = ssub.s32 %s16, 1
      %s330 = smul.u32 64, %s21
      %p331 = scmp.lt.s32.totalorder %s330, 127
      %s332 = scalar_select %p331, %s330, 127
      %s333 = smul.addr %s332, 8
      %s334 = scalar_lea.vmem %s0, %s333
      %p335 = pneg %p42
      %p336 = pneg %p39
      %s337 = smul.u32 64, %s21
      %p338 = scmp.lt.s32.totalorder %s337, 127
      %s339 = scalar_select %p338, %s337, 127
      %s340 = smul.addr %s339, 8
      %s341 = scalar_lea.vmem %s1, %s340
      %p342 = pneg %p68
      %p343 = pneg %p65
      %p344 = pneg %p89
      %p345 = pneg %p86
      %p346 = pneg %p110
      %p347 = pneg %p107
      %p348 = pneg %p131
      %p349 = pneg %p128
      %p350 = pneg %p152
      %p351 = pneg %p149
      %p352 = pneg %p173
      %p353 = pneg %p170
      %p354 = pneg %p194
      %p355 = pneg %p191
      %p356 = pneg %p215
      %p357 = pneg %p212
      %p358 = pneg %p236
      %p359 = pneg %p233
      %p360 = pneg %p262
      %p361 = pneg %p259
      %s362 = smul.u32 4, %s21
      %p363 = scmp.lt.s32.totalorder %s362, 7
      %s364 = scalar_select %p363, %s362, 7
      %s365 = smul.addr %s364, 8
      %s366 = scalar_lea.vmem %s10, %s365
      %s367 = smul.u32 64, %s21
      %p368 = scmp.lt.s32.totalorder %s367, 127
      %s369 = scalar_select %p368, %s367, 127
      %s370 = smul.addr %s369, 8
      %s371 = scalar_lea.vmem %s0, %s370
      %s372 = smul.u32 64, %s21
      %s373 = smul.u32 64, %s21
      %p374 = scmp.lt.s32.totalorder %s373, 127
      %s375 = scalar_select %p374, %s373, 127
      %s376 = smul.addr %s375, 8
      %s377 = scalar_lea.vmem %s1, %s376
      %s378 = smul.u32 64, %s21
      %s379 = smul.u32 4, %s21
      %p380 = scmp.lt.s32.totalorder %s379, 7
      %s381 = scalar_select %p380, %s379, 7
      %s382 = smul.addr %s381, 8
      %s383 = scalar_lea.vmem %s10, %s382
      %s384 = smul.u32 4, %s21
      %v385 = vld [vmem:[%s371] sm:$0xff]
      %v386 = vld [vmem:[%s371 + $0x8] sm:$0xff]
      %v387 = vld [vmem:[%s371 + $0x10] sm:$0xff]
      %v388 = vld [vmem:[%s371 + $0x18] sm:$0xff]
      %v389 = vld [vmem:[%s371 + $0x20] sm:$0xff]
      %v390 = vld [vmem:[%s371 + $0x28] sm:$0xff]
      %v391 = vld [vmem:[%s371 + $0x30] sm:$0xff]
      %v392 = vld [vmem:[%s371 + $0x38] sm:$0xff]
      %v393 = vld [vmem:[%s371 + $0x40] sm:$0xff]
      %v394 = vld [vmem:[%s371 + $0x48] sm:$0xff]
      %v395 = vld [vmem:[%s371 + $0x50] sm:$0xff]
      %v396 = vld [vmem:[%s371 + $0x58] sm:$0xff]
      %v397 = vld [vmem:[%s371 + $0x60] sm:$0xff]
      %v398 = vld [vmem:[%s371 + $0x68] sm:$0xff]
      %v399 = vld [vmem:[%s371 + $0x70] sm:$0xff]
      %v400 = vld [vmem:[%s371 + $0x78] sm:$0xff]
      %v401 = vld [vmem:[%s371 + $0x80] sm:$0xff]
      %v402 = vld [vmem:[%s371 + $0x88] sm:$0xff]
      %v403 = vld [vmem:[%s371 + $0x90] sm:$0xff]
      %v404 = vld [vmem:[%s371 + $0x98] sm:$0xff]
      %v405 = vld [vmem:[%s371 + $0xa0] sm:$0xff]
      %v406 = vld [vmem:[%s371 + $0xa8] sm:$0xff]
      %v407 = vld [vmem:[%s371 + $0xb0] sm:$0xff]
      %v408 = vld [vmem:[%s371 + $0xb8] sm:$0xff]
      %v409 = vld [vmem:[%s371 + $0xc0] sm:$0xff]
      %v410 = vld [vmem:[%s371 + $0xc8] sm:$0xff]
      %v411 = vld [vmem:[%s371 + $0xd0] sm:$0xff]
      %v412 = vld [vmem:[%s371 + $0xd8] sm:$0xff]
      %v413 = vld [vmem:[%s371 + $0xe0] sm:$0xff]
      %v414 = vld [vmem:[%s371 + $0xe8] sm:$0xff]
      %v415 = vld [vmem:[%s371 + $0xf0] sm:$0xff]
      %v416 = vld [vmem:[%s371 + $0xf8] sm:$0xff]
      %v417 = vld [vmem:[%s371 + $0x100] sm:$0xff]
      %v418 = vld [vmem:[%s371 + $0x108] sm:$0xff]
      %v419 = vld [vmem:[%s371 + $0x110] sm:$0xff]
      %v420 = vld [vmem:[%s371 + $0x118] sm:$0xff]
      %v421 = vld [vmem:[%s371 + $0x120] sm:$0xff]
      %v422 = vld [vmem:[%s371 + $0x128] sm:$0xff]
      %v423 = vld [vmem:[%s371 + $0x130] sm:$0xff]
      %v424 = vld [vmem:[%s371 + $0x138] sm:$0xff]
      %v425 = vld [vmem:[%s371 + $0x140] sm:$0xff]
      %v426 = vld [vmem:[%s371 + $0x148] sm:$0xff]
      %v427 = vld [vmem:[%s371 + $0x150] sm:$0xff]
      %v428 = vld [vmem:[%s371 + $0x158] sm:$0xff]
      %v429 = vld [vmem:[%s371 + $0x160] sm:$0xff]
      %v430 = vld [vmem:[%s371 + $0x168] sm:$0xff]
      %v431 = vld [vmem:[%s371 + $0x170] sm:$0xff]
      %v432 = vld [vmem:[%s371 + $0x178] sm:$0xff]
      %v433 = vld [vmem:[%s371 + $0x180] sm:$0xff]
      %v434 = vld [vmem:[%s371 + $0x188] sm:$0xff]
      %v435 = vld [vmem:[%s371 + $0x190] sm:$0xff]
      %v436 = vld [vmem:[%s371 + $0x198] sm:$0xff]
      %v437 = vld [vmem:[%s371 + $0x1a0] sm:$0xff]
      %v438 = vld [vmem:[%s371 + $0x1a8] sm:$0xff]
      %v439 = vld [vmem:[%s371 + $0x1b0] sm:$0xff]
      %v440 = vld [vmem:[%s371 + $0x1b8] sm:$0xff]
      %v441 = vld [vmem:[%s371 + $0x1c0] sm:$0xff]
      %v442 = vld [vmem:[%s371 + $0x1c8] sm:$0xff]
      %v443 = vld [vmem:[%s371 + $0x1d0] sm:$0xff]
      %v444 = vld [vmem:[%s371 + $0x1d8] sm:$0xff]
      %v445 = vld [vmem:[%s371 + $0x1e0] sm:$0xff]
      %v446 = vld [vmem:[%s371 + $0x1e8] sm:$0xff]
      %v447 = vld [vmem:[%s371 + $0x1f0] sm:$0xff]
      %v448 = vld [vmem:[%s371 + $0x1f8] sm:$0xff]
      %v449 = vmul.f32 %v385, 0.2
      %v450 = vmul.f32 %v386, 0.2
      %v451 = vmul.f32 %v387, 0.2
      %v452 = vmul.f32 %v388, 0.2
      %v453 = vmul.f32 %v389, 0.2
      %v454 = vmul.f32 %v390, 0.2
      %v455 = vmul.f32 %v391, 0.2
      %v456 = vmul.f32 %v392, 0.2
      %v457 = vmul.f32 %v393, 0.2
      %v458 = vmul.f32 %v394, 0.2
      %v459 = vmul.f32 %v395, 0.2
      %v460 = vmul.f32 %v396, 0.2
      %v461 = vmul.f32 %v397, 0.2
      %v462 = vmul.f32 %v398, 0.2
      %v463 = vmul.f32 %v399, 0.2
      %v464 = vmul.f32 %v400, 0.2
      %v465 = vmul.f32 %v401, 0.2
      %v466 = vmul.f32 %v402, 0.2
      %v467 = vmul.f32 %v403, 0.2
      %v468 = vmul.f32 %v404, 0.2
      %v469 = vmul.f32 %v405, 0.2
      %v470 = vmul.f32 %v406, 0.2
      %v471 = vmul.f32 %v407, 0.2
      %v472 = vmul.f32 %v408, 0.2
      %v473 = vmul.f32 %v409, 0.2
      %v474 = vmul.f32 %v410, 0.2
      %v475 = vmul.f32 %v411, 0.2
      %v476 = vmul.f32 %v412, 0.2
      %v477 = vmul.f32 %v413, 0.2
      %v478 = vmul.f32 %v414, 0.2
      %v479 = vmul.f32 %v415, 0.2
      %v480 = vmul.f32 %v416, 0.2
      %v481 = vmul.f32 %v417, 0.2
      %v482 = vmul.f32 %v418, 0.2
      %v483 = vmul.f32 %v419, 0.2
      %v484 = vmul.f32 %v420, 0.2
      %v485 = vmul.f32 %v421, 0.2
      %v486 = vmul.f32 %v422, 0.2
      %v487 = vmul.f32 %v423, 0.2
      %v488 = vmul.f32 %v424, 0.2
      %v489 = vmul.f32 %v425, 0.2
      %v490 = vmul.f32 %v426, 0.2
      %v491 = vmul.f32 %v427, 0.2
      %v492 = vmul.f32 %v428, 0.2
      %v493 = vmul.f32 %v429, 0.2
      %v494 = vmul.f32 %v430, 0.2
      %v495 = vmul.f32 %v431, 0.2
      %v496 = vmul.f32 %v432, 0.2
      %v497 = vmul.f32 %v433, 0.2
      %v498 = vmul.f32 %v434, 0.2
      %v499 = vmul.f32 %v435, 0.2
      %v500 = vmul.f32 %v436, 0.2
      %v501 = vmul.f32 %v437, 0.2
      %v502 = vmul.f32 %v438, 0.2
      %v503 = vmul.f32 %v439, 0.2
      %v504 = vmul.f32 %v440, 0.2
      %v505 = vmul.f32 %v441, 0.2
      %v506 = vmul.f32 %v442, 0.2
      %v507 = vmul.f32 %v443, 0.2
      %v508 = vmul.f32 %v444, 0.2
      %v509 = vmul.f32 %v445, 0.2
      %v510 = vmul.f32 %v446, 0.2
      %v511 = vmul.f32 %v447, 0.2
      %v512 = vmul.f32 %v448, 0.2
      %v513 = vadd.f32 %v449, 0.0
      %v514 = vadd.f32 %v450, 0.0
      %v515 = vadd.f32 %v451, 0.0
      %v516 = vadd.f32 %v452, 0.0
      %v517 = vadd.f32 %v453, 0.0
      %v518 = vadd.f32 %v454, 0.0
      %v519 = vadd.f32 %v455, 0.0
      %v520 = vadd.f32 %v456, 0.0
      %v521 = vadd.f32 %v457, 0.0
      %v522 = vadd.f32 %v458, 0.0
      %v523 = vadd.f32 %v459, 0.0
      %v524 = vadd.f32 %v460, 0.0
      %v525 = vadd.f32 %v461, 0.0
      %v526 = vadd.f32 %v462, 0.0
      %v527 = vadd.f32 %v463, 0.0
      %v528 = vadd.f32 %v464, 0.0
      %v529 = vadd.f32 %v465, 0.0
      %v530 = vadd.f32 %v466, 0.0
      %v531 = vadd.f32 %v467, 0.0
      %v532 = vadd.f32 %v468, 0.0
      %v533 = vadd.f32 %v469, 0.0
      %v534 = vadd.f32 %v470, 0.0
      %v535 = vadd.f32 %v471, 0.0
      %v536 = vadd.f32 %v472, 0.0
      %v537 = vadd.f32 %v473, 0.0
      %v538 = vadd.f32 %v474, 0.0
      %v539 = vadd.f32 %v475, 0.0
      %v540 = vadd.f32 %v476, 0.0
      %v541 = vadd.f32 %v477, 0.0
      %v542 = vadd.f32 %v478, 0.0
      %v543 = vadd.f32 %v479, 0.0
      %v544 = vadd.f32 %v480, 0.0
      %v545 = vadd.f32 %v481, 0.0
      %v546 = vadd.f32 %v482, 0.0
      %v547 = vadd.f32 %v483, 0.0
      %v548 = vadd.f32 %v484, 0.0
      %v549 = vadd.f32 %v485, 0.0
      %v550 = vadd.f32 %v486, 0.0
      %v551 = vadd.f32 %v487, 0.0
      %v552 = vadd.f32 %v488, 0.0
      %v553 = vadd.f32 %v489, 0.0
      %v554 = vadd.f32 %v490, 0.0
      %v555 = vadd.f32 %v491, 0.0
      %v556 = vadd.f32 %v492, 0.0
      %v557 = vadd.f32 %v493, 0.0
      %v558 = vadd.f32 %v494, 0.0
      %v559 = vadd.f32 %v495, 0.0
      %v560 = vadd.f32 %v496, 0.0
      %v561 = vadd.f32 %v497, 0.0
      %v562 = vadd.f32 %v498, 0.0
      %v563 = vadd.f32 %v499, 0.0
      %v564 = vadd.f32 %v500, 0.0
      %v565 = vadd.f32 %v501, 0.0
      %v566 = vadd.f32 %v502, 0.0
      %v567 = vadd.f32 %v503, 0.0
      %v568 = vadd.f32 %v504, 0.0
      %v569 = vadd.f32 %v505, 0.0
      %v570 = vadd.f32 %v506, 0.0
      %v571 = vadd.f32 %v507, 0.0
      %v572 = vadd.f32 %v508, 0.0
      %v573 = vadd.f32 %v509, 0.0
      %v574 = vadd.f32 %v510, 0.0
      %v575 = vadd.f32 %v511, 0.0
      %v576 = vadd.f32 %v512, 0.0
      %v577 = vld [vmem:[%s377] sm:$0xff]
      %v578 = vld [vmem:[%s377 + $0x8] sm:$0xff]
      %v579 = vld [vmem:[%s377 + $0x10] sm:$0xff]
      %v580 = vld [vmem:[%s377 + $0x18] sm:$0xff]
      %v581 = vld [vmem:[%s377 + $0x20] sm:$0xff]
      %v582 = vld [vmem:[%s377 + $0x28] sm:$0xff]
      %v583 = vld [vmem:[%s377 + $0x30] sm:$0xff]
      %v584 = vld [vmem:[%s377 + $0x38] sm:$0xff]
      %v585 = vld [vmem:[%s377 + $0x40] sm:$0xff]
      %v586 = vld [vmem:[%s377 + $0x48] sm:$0xff]
      %v587 = vld [vmem:[%s377 + $0x50] sm:$0xff]
      %v588 = vld [vmem:[%s377 + $0x58] sm:$0xff]
      %v589 = vld [vmem:[%s377 + $0x60] sm:$0xff]
      %v590 = vld [vmem:[%s377 + $0x68] sm:$0xff]
      %v591 = vld [vmem:[%s377 + $0x70] sm:$0xff]
      %v592 = vld [vmem:[%s377 + $0x78] sm:$0xff]
      %v593 = vld [vmem:[%s377 + $0x80] sm:$0xff]
      %v594 = vld [vmem:[%s377 + $0x88] sm:$0xff]
      %v595 = vld [vmem:[%s377 + $0x90] sm:$0xff]
      %v596 = vld [vmem:[%s377 + $0x98] sm:$0xff]
      %v597 = vld [vmem:[%s377 + $0xa0] sm:$0xff]
      %v598 = vld [vmem:[%s377 + $0xa8] sm:$0xff]
      %v599 = vld [vmem:[%s377 + $0xb0] sm:$0xff]
      %v600 = vld [vmem:[%s377 + $0xb8] sm:$0xff]
      %v601 = vld [vmem:[%s377 + $0xc0] sm:$0xff]
      %v602 = vld [vmem:[%s377 + $0xc8] sm:$0xff]
      %v603 = vld [vmem:[%s377 + $0xd0] sm:$0xff]
      %v604 = vld [vmem:[%s377 + $0xd8] sm:$0xff]
      %v605 = vld [vmem:[%s377 + $0xe0] sm:$0xff]
      %v606 = vld [vmem:[%s377 + $0xe8] sm:$0xff]
      %v607 = vld [vmem:[%s377 + $0xf0] sm:$0xff]
      %v608 = vld [vmem:[%s377 + $0xf8] sm:$0xff]
      %v609 = vld [vmem:[%s377 + $0x100] sm:$0xff]
      %v610 = vld [vmem:[%s377 + $0x108] sm:$0xff]
      %v611 = vld [vmem:[%s377 + $0x110] sm:$0xff]
      %v612 = vld [vmem:[%s377 + $0x118] sm:$0xff]
      %v613 = vld [vmem:[%s377 + $0x120] sm:$0xff]
      %v614 = vld [vmem:[%s377 + $0x128] sm:$0xff]
      %v615 = vld [vmem:[%s377 + $0x130] sm:$0xff]
      %v616 = vld [vmem:[%s377 + $0x138] sm:$0xff]
      %v617 = vld [vmem:[%s377 + $0x140] sm:$0xff]
      %v618 = vld [vmem:[%s377 + $0x148] sm:$0xff]
      %v619 = vld [vmem:[%s377 + $0x150] sm:$0xff]
      %v620 = vld [vmem:[%s377 + $0x158] sm:$0xff]
      %v621 = vld [vmem:[%s377 + $0x160] sm:$0xff]
      %v622 = vld [vmem:[%s377 + $0x168] sm:$0xff]
      %v623 = vld [vmem:[%s377 + $0x170] sm:$0xff]
      %v624 = vld [vmem:[%s377 + $0x178] sm:$0xff]
      %v625 = vld [vmem:[%s377 + $0x180] sm:$0xff]
      %v626 = vld [vmem:[%s377 + $0x188] sm:$0xff]
      %v627 = vld [vmem:[%s377 + $0x190] sm:$0xff]
      %v628 = vld [vmem:[%s377 + $0x198] sm:$0xff]
      %v629 = vld [vmem:[%s377 + $0x1a0] sm:$0xff]
      %v630 = vld [vmem:[%s377 + $0x1a8] sm:$0xff]
      %v631 = vld [vmem:[%s377 + $0x1b0] sm:$0xff]
      %v632 = vld [vmem:[%s377 + $0x1b8] sm:$0xff]
      %v633 = vld [vmem:[%s377 + $0x1c0] sm:$0xff]
      %v634 = vld [vmem:[%s377 + $0x1c8] sm:$0xff]
      %v635 = vld [vmem:[%s377 + $0x1d0] sm:$0xff]
      %v636 = vld [vmem:[%s377 + $0x1d8] sm:$0xff]
      %v637 = vld [vmem:[%s377 + $0x1e0] sm:$0xff]
      %v638 = vld [vmem:[%s377 + $0x1e8] sm:$0xff]
      %v639 = vld [vmem:[%s377 + $0x1f0] sm:$0xff]
      %v640 = vld [vmem:[%s377 + $0x1f8] sm:$0xff]
      %v641 = vmul.f32 %v577, 1.2732395
      %v642 = vmul.f32 %v578, 1.2732395
      %v643 = vmul.f32 %v579, 1.2732395
      %v644 = vmul.f32 %v580, 1.2732395
      %v645 = vmul.f32 %v581, 1.2732395
      %v646 = vmul.f32 %v582, 1.2732395
      %v647 = vmul.f32 %v583, 1.2732395
      %v648 = vmul.f32 %v584, 1.2732395
      %v649 = vmul.f32 %v585, 1.2732395
      %v650 = vmul.f32 %v586, 1.2732395
      %v651 = vmul.f32 %v587, 1.2732395
      %v652 = vmul.f32 %v588, 1.2732395
      %v653 = vmul.f32 %v589, 1.2732395
      %v654 = vmul.f32 %v590, 1.2732395
      %v655 = vmul.f32 %v591, 1.2732395
      %v656 = vmul.f32 %v592, 1.2732395
      %v657 = vmul.f32 %v593, 1.2732395
      %v658 = vmul.f32 %v594, 1.2732395
      %v659 = vmul.f32 %v595, 1.2732395
      %v660 = vmul.f32 %v596, 1.2732395
      %v661 = vmul.f32 %v597, 1.2732395
      %v662 = vmul.f32 %v598, 1.2732395
      %v663 = vmul.f32 %v599, 1.2732395
      %v664 = vmul.f32 %v600, 1.2732395
      %v665 = vmul.f32 %v601, 1.2732395
      %v666 = vmul.f32 %v602, 1.2732395
      %v667 = vmul.f32 %v603, 1.2732395
      %v668 = vmul.f32 %v604, 1.2732395
      %v669 = vmul.f32 %v605, 1.2732395
      %v670 = vmul.f32 %v606, 1.2732395
      %v671 = vmul.f32 %v607, 1.2732395
      %v672 = vmul.f32 %v608, 1.2732395
      %v673 = vmul.f32 %v609, 1.2732395
      %v674 = vmul.f32 %v610, 1.2732395
      %v675 = vmul.f32 %v611, 1.2732395
      %v676 = vmul.f32 %v612, 1.2732395
      %v677 = vmul.f32 %v613, 1.2732395
      %v678 = vmul.f32 %v614, 1.2732395
      %v679 = vmul.f32 %v615, 1.2732395
      %v680 = vmul.f32 %v616, 1.2732395
      %v681 = vmul.f32 %v617, 1.2732395
      %v682 = vmul.f32 %v618, 1.2732395
      %v683 = vmul.f32 %v619, 1.2732395
      %v684 = vmul.f32 %v620, 1.2732395
      %v685 = vmul.f32 %v621, 1.2732395
      %v686 = vmul.f32 %v622, 1.2732395
      %v687 = vmul.f32 %v623, 1.2732395
      %v688 = vmul.f32 %v624, 1.2732395
      %v689 = vmul.f32 %v625, 1.2732395
      %v690 = vmul.f32 %v626, 1.2732395
      %v691 = vmul.f32 %v627, 1.2732395
      %v692 = vmul.f32 %v628, 1.2732395
      %v693 = vmul.f32 %v629, 1.2732395
      %v694 = vmul.f32 %v630, 1.2732395
      %v695 = vmul.f32 %v631, 1.2732395
      %v696 = vmul.f32 %v632, 1.2732395
      %v697 = vmul.f32 %v633, 1.2732395
      %v698 = vmul.f32 %v634, 1.2732395
      %v699 = vmul.f32 %v635, 1.2732395
      %v700 = vmul.f32 %v636, 1.2732395
      %v701 = vmul.f32 %v637, 1.2732395
      %v702 = vmul.f32 %v638, 1.2732395
      %v703 = vmul.f32 %v639, 1.2732395
      %v704 = vmul.f32 %v640, 1.2732395
      %v705 = vadd.f32 %v641, -1.0
      %v706 = vadd.f32 %v642, -1.0
      %v707 = vadd.f32 %v643, -1.0
      %v708 = vadd.f32 %v644, -1.0
      %v709 = vadd.f32 %v645, -1.0
      %v710 = vadd.f32 %v646, -1.0
      %v711 = vadd.f32 %v647, -1.0
      %v712 = vadd.f32 %v648, -1.0
      %v713 = vadd.f32 %v649, -1.0
      %v714 = vadd.f32 %v650, -1.0
      %v715 = vadd.f32 %v651, -1.0
      %v716 = vadd.f32 %v652, -1.0
      %v717 = vadd.f32 %v653, -1.0
      %v718 = vadd.f32 %v654, -1.0
      %v719 = vadd.f32 %v655, -1.0
      %v720 = vadd.f32 %v656, -1.0
      %v721 = vadd.f32 %v657, -1.0
      %v722 = vadd.f32 %v658, -1.0
      %v723 = vadd.f32 %v659, -1.0
      %v724 = vadd.f32 %v660, -1.0
      %v725 = vadd.f32 %v661, -1.0
      %v726 = vadd.f32 %v662, -1.0
      %v727 = vadd.f32 %v663, -1.0
      %v728 = vadd.f32 %v664, -1.0
      %v729 = vadd.f32 %v665, -1.0
      %v730 = vadd.f32 %v666, -1.0
      %v731 = vadd.f32 %v667, -1.0
      %v732 = vadd.f32 %v668, -1.0
      %v733 = vadd.f32 %v669, -1.0
      %v734 = vadd.f32 %v670, -1.0
      %v735 = vadd.f32 %v671, -1.0
      %v736 = vadd.f32 %v672, -1.0
      %v737 = vadd.f32 %v673, -1.0
      %v738 = vadd.f32 %v674, -1.0
      %v739 = vadd.f32 %v675, -1.0
      %v740 = vadd.f32 %v676, -1.0
      %v741 = vadd.f32 %v677, -1.0
      %v742 = vadd.f32 %v678, -1.0
      %v743 = vadd.f32 %v679, -1.0
      %v744 = vadd.f32 %v680, -1.0
      %v745 = vadd.f32 %v681, -1.0
      %v746 = vadd.f32 %v682, -1.0
      %v747 = vadd.f32 %v683, -1.0
      %v748 = vadd.f32 %v684, -1.0
      %v749 = vadd.f32 %v685, -1.0
      %v750 = vadd.f32 %v686, -1.0
      %v751 = vadd.f32 %v687, -1.0
      %v752 = vadd.f32 %v688, -1.0
      %v753 = vadd.f32 %v689, -1.0
      %v754 = vadd.f32 %v690, -1.0
      %v755 = vadd.f32 %v691, -1.0
      %v756 = vadd.f32 %v692, -1.0
      %v757 = vadd.f32 %v693, -1.0
      %v758 = vadd.f32 %v694, -1.0
      %v759 = vadd.f32 %v695, -1.0
      %v760 = vadd.f32 %v696, -1.0
      %v761 = vadd.f32 %v697, -1.0
      %v762 = vadd.f32 %v698, -1.0
      %v763 = vadd.f32 %v699, -1.0
      %v764 = vadd.f32 %v700, -1.0
      %v765 = vadd.f32 %v701, -1.0
      %v766 = vadd.f32 %v702, -1.0
      %v767 = vadd.f32 %v703, -1.0
      %v768 = vadd.f32 %v704, -1.0
      %v769 = vld [vmem:[%s2] sm:$0x1]
      %771 = vset.pattern.permute.xlu0 0
      %772 = vperm.xlu0 %771, %v513
      %v773 = vpop.permute.xlu0 %772
      %776 = vset.pattern.permute.xlu0 0
      %777 = vperm.xlu0 %776, %v514
      %v778 = vpop.permute.xlu0 %777
      %781 = vset.pattern.permute.xlu0 0
      %782 = vperm.xlu0 %781, %v515
      %v783 = vpop.permute.xlu0 %782
      %786 = vset.pattern.permute.xlu0 0
      %787 = vperm.xlu0 %786, %v516
      %v788 = vpop.permute.xlu0 %787
      %791 = vset.pattern.permute.xlu0 0
      %792 = vperm.xlu0 %791, %v517
      %v793 = vpop.permute.xlu0 %792
      %796 = vset.pattern.permute.xlu0 0
      %797 = vperm.xlu0 %796, %v518
      %v798 = vpop.permute.xlu0 %797
      %801 = vset.pattern.permute.xlu0 0
      %802 = vperm.xlu0 %801, %v519
      %v803 = vpop.permute.xlu0 %802
      %806 = vset.pattern.permute.xlu0 0
      %807 = vperm.xlu0 %806, %v520
      %v808 = vpop.permute.xlu0 %807
      %811 = vset.pattern.permute.xlu0 0
      %812 = vperm.xlu0 %811, %v521
      %v813 = vpop.permute.xlu0 %812
      %816 = vset.pattern.permute.xlu0 0
      %817 = vperm.xlu0 %816, %v522
      %v818 = vpop.permute.xlu0 %817
      %821 = vset.pattern.permute.xlu0 0
      %822 = vperm.xlu0 %821, %v523
      %v823 = vpop.permute.xlu0 %822
      %826 = vset.pattern.permute.xlu0 0
      %827 = vperm.xlu0 %826, %v524
      %v828 = vpop.permute.xlu0 %827
      %831 = vset.pattern.permute.xlu0 0
      %832 = vperm.xlu0 %831, %v525
      %v833 = vpop.permute.xlu0 %832
      %836 = vset.pattern.permute.xlu0 0
      %837 = vperm.xlu0 %836, %v526
      %v838 = vpop.permute.xlu0 %837
      %841 = vset.pattern.permute.xlu0 0
      %842 = vperm.xlu0 %841, %v527
      %v843 = vpop.permute.xlu0 %842
      %846 = vset.pattern.permute.xlu0 0
      %847 = vperm.xlu0 %846, %v528
      %v848 = vpop.permute.xlu0 %847
      %851 = vset.pattern.permute.xlu0 0
      %852 = vperm.xlu0 %851, %v529
      %v853 = vpop.permute.xlu0 %852
      %856 = vset.pattern.permute.xlu0 0
      %857 = vperm.xlu0 %856, %v530
      %v858 = vpop.permute.xlu0 %857
      %861 = vset.pattern.permute.xlu0 0
      %862 = vperm.xlu0 %861, %v531
      %v863 = vpop.permute.xlu0 %862
      %866 = vset.pattern.permute.xlu0 0
      %867 = vperm.xlu0 %866, %v532
      %v868 = vpop.permute.xlu0 %867
      %871 = vset.pattern.permute.xlu0 0
      %872 = vperm.xlu0 %871, %v533
      %v873 = vpop.permute.xlu0 %872
      %876 = vset.pattern.permute.xlu0 0
      %877 = vperm.xlu0 %876, %v534
      %v878 = vpop.permute.xlu0 %877
      %881 = vset.pattern.permute.xlu0 0
      %882 = vperm.xlu0 %881, %v535
      %v883 = vpop.permute.xlu0 %882
      %886 = vset.pattern.permute.xlu0 0
      %887 = vperm.xlu0 %886, %v536
      %v888 = vpop.permute.xlu0 %887
      %891 = vset.pattern.permute.xlu0 0
      %892 = vperm.xlu0 %891, %v537
      %v893 = vpop.permute.xlu0 %892
      %896 = vset.pattern.permute.xlu0 0
      %897 = vperm.xlu0 %896, %v538
      %v898 = vpop.permute.xlu0 %897
      %901 = vset.pattern.permute.xlu0 0
      %902 = vperm.xlu0 %901, %v539
      %v903 = vpop.permute.xlu0 %902
      %906 = vset.pattern.permute.xlu0 0
      %907 = vperm.xlu0 %906, %v540
      %v908 = vpop.permute.xlu0 %907
      %911 = vset.pattern.permute.xlu0 0
      %912 = vperm.xlu0 %911, %v541
      %v913 = vpop.permute.xlu0 %912
      %916 = vset.pattern.permute.xlu0 0
      %917 = vperm.xlu0 %916, %v542
      %v918 = vpop.permute.xlu0 %917
      %921 = vset.pattern.permute.xlu0 0
      %922 = vperm.xlu0 %921, %v543
      %v923 = vpop.permute.xlu0 %922
      %926 = vset.pattern.permute.xlu0 0
      %927 = vperm.xlu0 %926, %v544
      %v928 = vpop.permute.xlu0 %927
      %931 = vset.pattern.permute.xlu0 0
      %932 = vperm.xlu0 %931, %v545
      %v933 = vpop.permute.xlu0 %932
      %936 = vset.pattern.permute.xlu0 0
      %937 = vperm.xlu0 %936, %v546
      %v938 = vpop.permute.xlu0 %937
      %941 = vset.pattern.permute.xlu0 0
      %942 = vperm.xlu0 %941, %v547
      %v943 = vpop.permute.xlu0 %942
      %946 = vset.pattern.permute.xlu0 0
      %947 = vperm.xlu0 %946, %v548
      %v948 = vpop.permute.xlu0 %947
      %951 = vset.pattern.permute.xlu0 0
      %952 = vperm.xlu0 %951, %v549
      %v953 = vpop.permute.xlu0 %952
      %956 = vset.pattern.permute.xlu0 0
      %957 = vperm.xlu0 %956, %v550
      %v958 = vpop.permute.xlu0 %957
      %961 = vset.pattern.permute.xlu0 0
      %962 = vperm.xlu0 %961, %v551
      %v963 = vpop.permute.xlu0 %962
      %966 = vset.pattern.permute.xlu0 0
      %967 = vperm.xlu0 %966, %v552
      %v968 = vpop.permute.xlu0 %967
      %971 = vset.pattern.permute.xlu0 0
      %972 = vperm.xlu0 %971, %v553
      %v973 = vpop.permute.xlu0 %972
      %976 = vset.pattern.permute.xlu0 0
      %977 = vperm.xlu0 %976, %v554
      %v978 = vpop.permute.xlu0 %977
      %981 = vset.pattern.permute.xlu0 0
      %982 = vperm.xlu0 %981, %v555
      %v983 = vpop.permute.xlu0 %982
      %986 = vset.pattern.permute.xlu0 0
      %987 = vperm.xlu0 %986, %v556
      %v988 = vpop.permute.xlu0 %987
      %991 = vset.pattern.permute.xlu0 0
      %992 = vperm.xlu0 %991, %v557
      %v993 = vpop.permute.xlu0 %992
      %996 = vset.pattern.permute.xlu0 0
      %997 = vperm.xlu0 %996, %v558
      %v998 = vpop.permute.xlu0 %997
      %1001 = vset.pattern.permute.xlu0 0
      %1002 = vperm.xlu0 %1001, %v559
      %v1003 = vpop.permute.xlu0 %1002
      %1006 = vset.pattern.permute.xlu0 0
      %1007 = vperm.xlu0 %1006, %v560
      %v1008 = vpop.permute.xlu0 %1007
      %1011 = vset.pattern.permute.xlu0 0
      %1012 = vperm.xlu0 %1011, %v561
      %v1013 = vpop.permute.xlu0 %1012
      %1016 = vset.pattern.permute.xlu0 0
      %1017 = vperm.xlu0 %1016, %v562
      %v1018 = vpop.permute.xlu0 %1017
      %1021 = vset.pattern.permute.xlu0 0
      %1022 = vperm.xlu0 %1021, %v563
      %v1023 = vpop.permute.xlu0 %1022
      %1026 = vset.pattern.permute.xlu0 0
      %1027 = vperm.xlu0 %1026, %v564
      %v1028 = vpop.permute.xlu0 %1027
      %1031 = vset.pattern.permute.xlu0 0
      %1032 = vperm.xlu0 %1031, %v565
      %v1033 = vpop.permute.xlu0 %1032
      %1036 = vset.pattern.permute.xlu0 0
      %1037 = vperm.xlu0 %1036, %v566
      %v1038 = vpop.permute.xlu0 %1037
      %1041 = vset.pattern.permute.xlu0 0
      %1042 = vperm.xlu0 %1041, %v567
      %v1043 = vpop.permute.xlu0 %1042
      %1046 = vset.pattern.permute.xlu0 0
      %1047 = vperm.xlu0 %1046, %v568
      %v1048 = vpop.permute.xlu0 %1047
      %1051 = vset.pattern.permute.xlu0 0
      %1052 = vperm.xlu0 %1051, %v569
      %v1053 = vpop.permute.xlu0 %1052
      %1056 = vset.pattern.permute.xlu0 0
      %1057 = vperm.xlu0 %1056, %v570
      %v1058 = vpop.permute.xlu0 %1057
      %1061 = vset.pattern.permute.xlu0 0
      %1062 = vperm.xlu0 %1061, %v571
      %v1063 = vpop.permute.xlu0 %1062
      %1066 = vset.pattern.permute.xlu0 0
      %1067 = vperm.xlu0 %1066, %v572
      %v1068 = vpop.permute.xlu0 %1067
      %1071 = vset.pattern.permute.xlu0 0
      %1072 = vperm.xlu0 %1071, %v573
      %v1073 = vpop.permute.xlu0 %1072
      %1076 = vset.pattern.permute.xlu0 0
      %1077 = vperm.xlu0 %1076, %v574
      %v1078 = vpop.permute.xlu0 %1077
      %1081 = vset.pattern.permute.xlu0 0
      %1082 = vperm.xlu0 %1081, %v575
      %v1083 = vpop.permute.xlu0 %1082
      %1086 = vset.pattern.permute.xlu0 0
      %1087 = vperm.xlu0 %1086, %v576
      %v1088 = vpop.permute.xlu0 %1087
      %v1090 = vperm.slane %v769, 0
      %v1091 = vmul.f32 %v773, %v1090
      %v1092 = vmul.f32 %v778, %v1090
      %v1093 = vmul.f32 %v783, %v1090
      %v1094 = vmul.f32 %v788, %v1090
      %v1095 = vmul.f32 %v793, %v1090
      %v1096 = vmul.f32 %v798, %v1090
      %v1097 = vmul.f32 %v803, %v1090
      %v1098 = vmul.f32 %v808, %v1090
      %v1099 = vmul.f32 %v813, %v1090
      %v1100 = vmul.f32 %v818, %v1090
      %v1101 = vmul.f32 %v823, %v1090
      %v1102 = vmul.f32 %v828, %v1090
      %v1103 = vmul.f32 %v833, %v1090
      %v1104 = vmul.f32 %v838, %v1090
      %v1105 = vmul.f32 %v843, %v1090
      %v1106 = vmul.f32 %v848, %v1090
      %v1107 = vmul.f32 %v853, %v1090
      %v1108 = vmul.f32 %v858, %v1090
      %v1109 = vmul.f32 %v863, %v1090
      %v1110 = vmul.f32 %v868, %v1090
      %v1111 = vmul.f32 %v873, %v1090
      %v1112 = vmul.f32 %v878, %v1090
      %v1113 = vmul.f32 %v883, %v1090
      %v1114 = vmul.f32 %v888, %v1090
      %v1115 = vmul.f32 %v893, %v1090
      %v1116 = vmul.f32 %v898, %v1090
      %v1117 = vmul.f32 %v903, %v1090
      %v1118 = vmul.f32 %v908, %v1090
      %v1119 = vmul.f32 %v913, %v1090
      %v1120 = vmul.f32 %v918, %v1090
      %v1121 = vmul.f32 %v923, %v1090
      %v1122 = vmul.f32 %v928, %v1090
      %v1123 = vmul.f32 %v933, %v1090
      %v1124 = vmul.f32 %v938, %v1090
      %v1125 = vmul.f32 %v943, %v1090
      %v1126 = vmul.f32 %v948, %v1090
      %v1127 = vmul.f32 %v953, %v1090
      %v1128 = vmul.f32 %v958, %v1090
      %v1129 = vmul.f32 %v963, %v1090
      %v1130 = vmul.f32 %v968, %v1090
      %v1131 = vmul.f32 %v973, %v1090
      %v1132 = vmul.f32 %v978, %v1090
      %v1133 = vmul.f32 %v983, %v1090
      %v1134 = vmul.f32 %v988, %v1090
      %v1135 = vmul.f32 %v993, %v1090
      %v1136 = vmul.f32 %v998, %v1090
      %v1137 = vmul.f32 %v1003, %v1090
      %v1138 = vmul.f32 %v1008, %v1090
      %v1139 = vmul.f32 %v1013, %v1090
      %v1140 = vmul.f32 %v1018, %v1090
      %v1141 = vmul.f32 %v1023, %v1090
      %v1142 = vmul.f32 %v1028, %v1090
      %v1143 = vmul.f32 %v1033, %v1090
      %v1144 = vmul.f32 %v1038, %v1090
      %v1145 = vmul.f32 %v1043, %v1090
      %v1146 = vmul.f32 %v1048, %v1090
      %v1147 = vmul.f32 %v1053, %v1090
      %v1148 = vmul.f32 %v1058, %v1090
      %v1149 = vmul.f32 %v1063, %v1090
      %v1150 = vmul.f32 %v1068, %v1090
      %v1151 = vmul.f32 %v1073, %v1090
      %v1152 = vmul.f32 %v1078, %v1090
      %v1153 = vmul.f32 %v1083, %v1090
      %v1154 = vmul.f32 %v1088, %v1090
      %v1155 = vld [vmem:[%s2 + $0x1] sm:$0x1]
      %1157 = vset.pattern.permute.xlu0 0
      %1158 = vperm.xlu0 %1157, %v705
      %v1159 = vpop.permute.xlu0 %1158
      %1162 = vset.pattern.permute.xlu0 0
      %1163 = vperm.xlu0 %1162, %v706
      %v1164 = vpop.permute.xlu0 %1163
      %1167 = vset.pattern.permute.xlu0 0
      %1168 = vperm.xlu0 %1167, %v707
      %v1169 = vpop.permute.xlu0 %1168
      %1172 = vset.pattern.permute.xlu0 0
      %1173 = vperm.xlu0 %1172, %v708
      %v1174 = vpop.permute.xlu0 %1173
      %1177 = vset.pattern.permute.xlu0 0
      %1178 = vperm.xlu0 %1177, %v709
      %v1179 = vpop.permute.xlu0 %1178
      %1182 = vset.pattern.permute.xlu0 0
      %1183 = vperm.xlu0 %1182, %v710
      %v1184 = vpop.permute.xlu0 %1183
      %1187 = vset.pattern.permute.xlu0 0
      %1188 = vperm.xlu0 %1187, %v711
      %v1189 = vpop.permute.xlu0 %1188
      %1192 = vset.pattern.permute.xlu0 0
      %1193 = vperm.xlu0 %1192, %v712
      %v1194 = vpop.permute.xlu0 %1193
      %1197 = vset.pattern.permute.xlu0 0
      %1198 = vperm.xlu0 %1197, %v713
      %v1199 = vpop.permute.xlu0 %1198
      %1202 = vset.pattern.permute.xlu0 0
      %1203 = vperm.xlu0 %1202, %v714
      %v1204 = vpop.permute.xlu0 %1203
      %1207 = vset.pattern.permute.xlu0 0
      %1208 = vperm.xlu0 %1207, %v715
      %v1209 = vpop.permute.xlu0 %1208
      %1212 = vset.pattern.permute.xlu0 0
      %1213 = vperm.xlu0 %1212, %v716
      %v1214 = vpop.permute.xlu0 %1213
      %1217 = vset.pattern.permute.xlu0 0
      %1218 = vperm.xlu0 %1217, %v717
      %v1219 = vpop.permute.xlu0 %1218
      %1222 = vset.pattern.permute.xlu0 0
      %1223 = vperm.xlu0 %1222, %v718
      %v1224 = vpop.permute.xlu0 %1223
      %1227 = vset.pattern.permute.xlu0 0
      %1228 = vperm.xlu0 %1227, %v719
      %v1229 = vpop.permute.xlu0 %1228
      %1232 = vset.pattern.permute.xlu0 0
      %1233 = vperm.xlu0 %1232, %v720
      %v1234 = vpop.permute.xlu0 %1233
      %1237 = vset.pattern.permute.xlu0 0
      %1238 = vperm.xlu0 %1237, %v721
      %v1239 = vpop.permute.xlu0 %1238
      %1242 = vset.pattern.permute.xlu0 0
      %1243 = vperm.xlu0 %1242, %v722
      %v1244 = vpop.permute.xlu0 %1243
      %1247 = vset.pattern.permute.xlu0 0
      %1248 = vperm.xlu0 %1247, %v723
      %v1249 = vpop.permute.xlu0 %1248
      %1252 = vset.pattern.permute.xlu0 0
      %1253 = vperm.xlu0 %1252, %v724
      %v1254 = vpop.permute.xlu0 %1253
      %1257 = vset.pattern.permute.xlu0 0
      %1258 = vperm.xlu0 %1257, %v725
      %v1259 = vpop.permute.xlu0 %1258
      %1262 = vset.pattern.permute.xlu0 0
      %1263 = vperm.xlu0 %1262, %v726
      %v1264 = vpop.permute.xlu0 %1263
      %1267 = vset.pattern.permute.xlu0 0
      %1268 = vperm.xlu0 %1267, %v727
      %v1269 = vpop.permute.xlu0 %1268
      %1272 = vset.pattern.permute.xlu0 0
      %1273 = vperm.xlu0 %1272, %v728
      %v1274 = vpop.permute.xlu0 %1273
      %1277 = vset.pattern.permute.xlu0 0
      %1278 = vperm.xlu0 %1277, %v729
      %v1279 = vpop.permute.xlu0 %1278
      %1282 = vset.pattern.permute.xlu0 0
      %1283 = vperm.xlu0 %1282, %v730
      %v1284 = vpop.permute.xlu0 %1283
      %1287 = vset.pattern.permute.xlu0 0
      %1288 = vperm.xlu0 %1287, %v731
      %v1289 = vpop.permute.xlu0 %1288
      %1292 = vset.pattern.permute.xlu0 0
      %1293 = vperm.xlu0 %1292, %v732
      %v1294 = vpop.permute.xlu0 %1293
      %1297 = vset.pattern.permute.xlu0 0
      %1298 = vperm.xlu0 %1297, %v733
      %v1299 = vpop.permute.xlu0 %1298
      %1302 = vset.pattern.permute.xlu0 0
      %1303 = vperm.xlu0 %1302, %v734
      %v1304 = vpop.permute.xlu0 %1303
      %1307 = vset.pattern.permute.xlu0 0
      %1308 = vperm.xlu0 %1307, %v735
      %v1309 = vpop.permute.xlu0 %1308
      %1312 = vset.pattern.permute.xlu0 0
      %1313 = vperm.xlu0 %1312, %v736
      %v1314 = vpop.permute.xlu0 %1313
      %1317 = vset.pattern.permute.xlu0 0
      %1318 = vperm.xlu0 %1317, %v737
      %v1319 = vpop.permute.xlu0 %1318
      %1322 = vset.pattern.permute.xlu0 0
      %1323 = vperm.xlu0 %1322, %v738
      %v1324 = vpop.permute.xlu0 %1323
      %1327 = vset.pattern.permute.xlu0 0
      %1328 = vperm.xlu0 %1327, %v739
      %v1329 = vpop.permute.xlu0 %1328
      %1332 = vset.pattern.permute.xlu0 0
      %1333 = vperm.xlu0 %1332, %v740
      %v1334 = vpop.permute.xlu0 %1333
      %1337 = vset.pattern.permute.xlu0 0
      %1338 = vperm.xlu0 %1337, %v741
      %v1339 = vpop.permute.xlu0 %1338
      %1342 = vset.pattern.permute.xlu0 0
      %1343 = vperm.xlu0 %1342, %v742
      %v1344 = vpop.permute.xlu0 %1343
      %1347 = vset.pattern.permute.xlu0 0
      %1348 = vperm.xlu0 %1347, %v743
      %v1349 = vpop.permute.xlu0 %1348
      %1352 = vset.pattern.permute.xlu0 0
      %1353 = vperm.xlu0 %1352, %v744
      %v1354 = vpop.permute.xlu0 %1353
      %1357 = vset.pattern.permute.xlu0 0
      %1358 = vperm.xlu0 %1357, %v745
      %v1359 = vpop.permute.xlu0 %1358
      %1362 = vset.pattern.permute.xlu0 0
      %1363 = vperm.xlu0 %1362, %v746
      %v1364 = vpop.permute.xlu0 %1363
      %1367 = vset.pattern.permute.xlu0 0
      %1368 = vperm.xlu0 %1367, %v747
      %v1369 = vpop.permute.xlu0 %1368
      %1372 = vset.pattern.permute.xlu0 0
      %1373 = vperm.xlu0 %1372, %v748
      %v1374 = vpop.permute.xlu0 %1373
      %1377 = vset.pattern.permute.xlu0 0
      %1378 = vperm.xlu0 %1377, %v749
      %v1379 = vpop.permute.xlu0 %1378
      %1382 = vset.pattern.permute.xlu0 0
      %1383 = vperm.xlu0 %1382, %v750
      %v1384 = vpop.permute.xlu0 %1383
      %1387 = vset.pattern.permute.xlu0 0
      %1388 = vperm.xlu0 %1387, %v751
      %v1389 = vpop.permute.xlu0 %1388
      %1392 = vset.pattern.permute.xlu0 0
      %1393 = vperm.xlu0 %1392, %v752
      %v1394 = vpop.permute.xlu0 %1393
      %1397 = vset.pattern.permute.xlu0 0
      %1398 = vperm.xlu0 %1397, %v753
      %v1399 = vpop.permute.xlu0 %1398
      %1402 = vset.pattern.permute.xlu0 0
      %1403 = vperm.xlu0 %1402, %v754
      %v1404 = vpop.permute.xlu0 %1403
      %1407 = vset.pattern.permute.xlu0 0
      %1408 = vperm.xlu0 %1407, %v755
      %v1409 = vpop.permute.xlu0 %1408
      %1412 = vset.pattern.permute.xlu0 0
      %1413 = vperm.xlu0 %1412, %v756
      %v1414 = vpop.permute.xlu0 %1413
      %1417 = vset.pattern.permute.xlu0 0
      %1418 = vperm.xlu0 %1417, %v757
      %v1419 = vpop.permute.xlu0 %1418
      %1422 = vset.pattern.permute.xlu0 0
      %1423 = vperm.xlu0 %1422, %v758
      %v1424 = vpop.permute.xlu0 %1423
      %1427 = vset.pattern.permute.xlu0 0
      %1428 = vperm.xlu0 %1427, %v759
      %v1429 = vpop.permute.xlu0 %1428
      %1432 = vset.pattern.permute.xlu0 0
      %1433 = vperm.xlu0 %1432, %v760
      %v1434 = vpop.permute.xlu0 %1433
      %1437 = vset.pattern.permute.xlu0 0
      %1438 = vperm.xlu0 %1437, %v761
      %v1439 = vpop.permute.xlu0 %1438
      %1442 = vset.pattern.permute.xlu0 0
      %1443 = vperm.xlu0 %1442, %v762
      %v1444 = vpop.permute.xlu0 %1443
      %1447 = vset.pattern.permute.xlu0 0
      %1448 = vperm.xlu0 %1447, %v763
      %v1449 = vpop.permute.xlu0 %1448
      %1452 = vset.pattern.permute.xlu0 0
      %1453 = vperm.xlu0 %1452, %v764
      %v1454 = vpop.permute.xlu0 %1453
      %1457 = vset.pattern.permute.xlu0 0
      %1458 = vperm.xlu0 %1457, %v765
      %v1459 = vpop.permute.xlu0 %1458
      %1462 = vset.pattern.permute.xlu0 0
      %1463 = vperm.xlu0 %1462, %v766
      %v1464 = vpop.permute.xlu0 %1463
      %1467 = vset.pattern.permute.xlu0 0
      %1468 = vperm.xlu0 %1467, %v767
      %v1469 = vpop.permute.xlu0 %1468
      %1472 = vset.pattern.permute.xlu0 0
      %1473 = vperm.xlu0 %1472, %v768
      %v1474 = vpop.permute.xlu0 %1473
      %v1476 = vperm.slane %v1155, 0
      %v1477 = vmul.f32 %v1159, %v1476
      %v1478 = vmul.f32 %v1164, %v1476
      %v1479 = vmul.f32 %v1169, %v1476
      %v1480 = vmul.f32 %v1174, %v1476
      %v1481 = vmul.f32 %v1179, %v1476
      %v1482 = vmul.f32 %v1184, %v1476
      %v1483 = vmul.f32 %v1189, %v1476
      %v1484 = vmul.f32 %v1194, %v1476
      %v1485 = vmul.f32 %v1199, %v1476
      %v1486 = vmul.f32 %v1204, %v1476
      %v1487 = vmul.f32 %v1209, %v1476
      %v1488 = vmul.f32 %v1214, %v1476
      %v1489 = vmul.f32 %v1219, %v1476
      %v1490 = vmul.f32 %v1224, %v1476
      %v1491 = vmul.f32 %v1229, %v1476
      %v1492 = vmul.f32 %v1234, %v1476
      %v1493 = vmul.f32 %v1239, %v1476
      %v1494 = vmul.f32 %v1244, %v1476
      %v1495 = vmul.f32 %v1249, %v1476
      %v1496 = vmul.f32 %v1254, %v1476
      %v1497 = vmul.f32 %v1259, %v1476
      %v1498 = vmul.f32 %v1264, %v1476
      %v1499 = vmul.f32 %v1269, %v1476
      %v1500 = vmul.f32 %v1274, %v1476
      %v1501 = vmul.f32 %v1279, %v1476
      %v1502 = vmul.f32 %v1284, %v1476
      %v1503 = vmul.f32 %v1289, %v1476
      %v1504 = vmul.f32 %v1294, %v1476
      %v1505 = vmul.f32 %v1299, %v1476
      %v1506 = vmul.f32 %v1304, %v1476
      %v1507 = vmul.f32 %v1309, %v1476
      %v1508 = vmul.f32 %v1314, %v1476
      %v1509 = vmul.f32 %v1319, %v1476
      %v1510 = vmul.f32 %v1324, %v1476
      %v1511 = vmul.f32 %v1329, %v1476
      %v1512 = vmul.f32 %v1334, %v1476
      %v1513 = vmul.f32 %v1339, %v1476
      %v1514 = vmul.f32 %v1344, %v1476
      %v1515 = vmul.f32 %v1349, %v1476
      %v1516 = vmul.f32 %v1354, %v1476
      %v1517 = vmul.f32 %v1359, %v1476
      %v1518 = vmul.f32 %v1364, %v1476
      %v1519 = vmul.f32 %v1369, %v1476
      %v1520 = vmul.f32 %v1374, %v1476
      %v1521 = vmul.f32 %v1379, %v1476
      %v1522 = vmul.f32 %v1384, %v1476
      %v1523 = vmul.f32 %v1389, %v1476
      %v1524 = vmul.f32 %v1394, %v1476
      %v1525 = vmul.f32 %v1399, %v1476
      %v1526 = vmul.f32 %v1404, %v1476
      %v1527 = vmul.f32 %v1409, %v1476
      %v1528 = vmul.f32 %v1414, %v1476
      %v1529 = vmul.f32 %v1419, %v1476
      %v1530 = vmul.f32 %v1424, %v1476
      %v1531 = vmul.f32 %v1429, %v1476
      %v1532 = vmul.f32 %v1434, %v1476
      %v1533 = vmul.f32 %v1439, %v1476
      %v1534 = vmul.f32 %v1444, %v1476
      %v1535 = vmul.f32 %v1449, %v1476
      %v1536 = vmul.f32 %v1454, %v1476
      %v1537 = vmul.f32 %v1459, %v1476
      %v1538 = vmul.f32 %v1464, %v1476
      %v1539 = vmul.f32 %v1469, %v1476
      %v1540 = vmul.f32 %v1474, %v1476
      %v1541 = vadd.f32 %v1091, %v1477
      %v1542 = vadd.f32 %v1092, %v1478
      %v1543 = vadd.f32 %v1093, %v1479
      %v1544 = vadd.f32 %v1094, %v1480
      %v1545 = vadd.f32 %v1095, %v1481
      %v1546 = vadd.f32 %v1096, %v1482
      %v1547 = vadd.f32 %v1097, %v1483
      %v1548 = vadd.f32 %v1098, %v1484
      %v1549 = vadd.f32 %v1099, %v1485
      %v1550 = vadd.f32 %v1100, %v1486
      %v1551 = vadd.f32 %v1101, %v1487
      %v1552 = vadd.f32 %v1102, %v1488
      %v1553 = vadd.f32 %v1103, %v1489
      %v1554 = vadd.f32 %v1104, %v1490
      %v1555 = vadd.f32 %v1105, %v1491
      %v1556 = vadd.f32 %v1106, %v1492
      %v1557 = vadd.f32 %v1107, %v1493
      %v1558 = vadd.f32 %v1108, %v1494
      %v1559 = vadd.f32 %v1109, %v1495
      %v1560 = vadd.f32 %v1110, %v1496
      %v1561 = vadd.f32 %v1111, %v1497
      %v1562 = vadd.f32 %v1112, %v1498
      %v1563 = vadd.f32 %v1113, %v1499
      %v1564 = vadd.f32 %v1114, %v1500
      %v1565 = vadd.f32 %v1115, %v1501
      %v1566 = vadd.f32 %v1116, %v1502
      %v1567 = vadd.f32 %v1117, %v1503
      %v1568 = vadd.f32 %v1118, %v1504
      %v1569 = vadd.f32 %v1119, %v1505
      %v1570 = vadd.f32 %v1120, %v1506
      %v1571 = vadd.f32 %v1121, %v1507
      %v1572 = vadd.f32 %v1122, %v1508
      %v1573 = vadd.f32 %v1123, %v1509
      %v1574 = vadd.f32 %v1124, %v1510
      %v1575 = vadd.f32 %v1125, %v1511
      %v1576 = vadd.f32 %v1126, %v1512
      %v1577 = vadd.f32 %v1127, %v1513
      %v1578 = vadd.f32 %v1128, %v1514
      %v1579 = vadd.f32 %v1129, %v1515
      %v1580 = vadd.f32 %v1130, %v1516
      %v1581 = vadd.f32 %v1131, %v1517
      %v1582 = vadd.f32 %v1132, %v1518
      %v1583 = vadd.f32 %v1133, %v1519
      %v1584 = vadd.f32 %v1134, %v1520
      %v1585 = vadd.f32 %v1135, %v1521
      %v1586 = vadd.f32 %v1136, %v1522
      %v1587 = vadd.f32 %v1137, %v1523
      %v1588 = vadd.f32 %v1138, %v1524
      %v1589 = vadd.f32 %v1139, %v1525
      %v1590 = vadd.f32 %v1140, %v1526
      %v1591 = vadd.f32 %v1141, %v1527
      %v1592 = vadd.f32 %v1142, %v1528
      %v1593 = vadd.f32 %v1143, %v1529
      %v1594 = vadd.f32 %v1144, %v1530
      %v1595 = vadd.f32 %v1145, %v1531
      %v1596 = vadd.f32 %v1146, %v1532
      %v1597 = vadd.f32 %v1147, %v1533
      %v1598 = vadd.f32 %v1148, %v1534
      %v1599 = vadd.f32 %v1149, %v1535
      %v1600 = vadd.f32 %v1150, %v1536
      %v1601 = vadd.f32 %v1151, %v1537
      %v1602 = vadd.f32 %v1152, %v1538
      %v1603 = vadd.f32 %v1153, %v1539
      %v1604 = vadd.f32 %v1154, %v1540
      %v1605 = vld [vmem:[%s3] sm:$0x1]
      %v1607 = vperm.slane %v1605, 0
      %v1609 = vadd.f32 %v1541, %v1607
      %v1610 = vadd.f32 %v1542, %v1607
      %v1611 = vadd.f32 %v1543, %v1607
      %v1612 = vadd.f32 %v1544, %v1607
      %v1613 = vadd.f32 %v1545, %v1607
      %v1614 = vadd.f32 %v1546, %v1607
      %v1615 = vadd.f32 %v1547, %v1607
      %v1616 = vadd.f32 %v1548, %v1607
      %v1617 = vadd.f32 %v1549, %v1607
      %v1618 = vadd.f32 %v1550, %v1607
      %v1619 = vadd.f32 %v1551, %v1607
      %v1620 = vadd.f32 %v1552, %v1607
      %v1621 = vadd.f32 %v1553, %v1607
      %v1622 = vadd.f32 %v1554, %v1607
      %v1623 = vadd.f32 %v1555, %v1607
      %v1624 = vadd.f32 %v1556, %v1607
      %v1625 = vadd.f32 %v1557, %v1607
      %v1626 = vadd.f32 %v1558, %v1607
      %v1627 = vadd.f32 %v1559, %v1607
      %v1628 = vadd.f32 %v1560, %v1607
      %v1629 = vadd.f32 %v1561, %v1607
      %v1630 = vadd.f32 %v1562, %v1607
      %v1631 = vadd.f32 %v1563, %v1607
      %v1632 = vadd.f32 %v1564, %v1607
      %v1633 = vadd.f32 %v1565, %v1607
      %v1634 = vadd.f32 %v1566, %v1607
      %v1635 = vadd.f32 %v1567, %v1607
      %v1636 = vadd.f32 %v1568, %v1607
      %v1637 = vadd.f32 %v1569, %v1607
      %v1638 = vadd.f32 %v1570, %v1607
      %v1639 = vadd.f32 %v1571, %v1607
      %v1640 = vadd.f32 %v1572, %v1607
      %v1641 = vadd.f32 %v1573, %v1607
      %v1642 = vadd.f32 %v1574, %v1607
      %v1643 = vadd.f32 %v1575, %v1607
      %v1644 = vadd.f32 %v1576, %v1607
      %v1645 = vadd.f32 %v1577, %v1607
      %v1646 = vadd.f32 %v1578, %v1607
      %v1647 = vadd.f32 %v1579, %v1607
      %v1648 = vadd.f32 %v1580, %v1607
      %v1649 = vadd.f32 %v1581, %v1607
      %v1650 = vadd.f32 %v1582, %v1607
      %v1651 = vadd.f32 %v1583, %v1607
      %v1652 = vadd.f32 %v1584, %v1607
      %v1653 = vadd.f32 %v1585, %v1607
      %v1654 = vadd.f32 %v1586, %v1607
      %v1655 = vadd.f32 %v1587, %v1607
      %v1656 = vadd.f32 %v1588, %v1607
      %v1657 = vadd.f32 %v1589, %v1607
      %v1658 = vadd.f32 %v1590, %v1607
      %v1659 = vadd.f32 %v1591, %v1607
      %v1660 = vadd.f32 %v1592, %v1607
      %v1661 = vadd.f32 %v1593, %v1607
      %v1662 = vadd.f32 %v1594, %v1607
      %v1663 = vadd.f32 %v1595, %v1607
      %v1664 = vadd.f32 %v1596, %v1607
      %v1665 = vadd.f32 %v1597, %v1607
      %v1666 = vadd.f32 %v1598, %v1607
      %v1667 = vadd.f32 %v1599, %v1607
      %v1668 = vadd.f32 %v1600, %v1607
      %v1669 = vadd.f32 %v1601, %v1607
      %v1670 = vadd.f32 %v1602, %v1607
      %v1671 = vadd.f32 %v1603, %v1607
      %v1672 = vadd.f32 %v1604, %v1607
      %v1673 = vtanh.pop %v1609
      %v1674 = vtanh.pop %v1610
      %v1675 = vtanh.pop %v1611
      %v1676 = vtanh.pop %v1612
      %v1677 = vtanh.pop %v1613
      %v1678 = vtanh.pop %v1614
      %v1679 = vtanh.pop %v1615
      %v1680 = vtanh.pop %v1616
      %v1681 = vtanh.pop %v1617
      %v1682 = vtanh.pop %v1618
      %v1683 = vtanh.pop %v1619
      %v1684 = vtanh.pop %v1620
      %v1685 = vtanh.pop %v1621
      %v1686 = vtanh.pop %v1622
      %v1687 = vtanh.pop %v1623
      %v1688 = vtanh.pop %v1624
      %v1689 = vtanh.pop %v1625
      %v1690 = vtanh.pop %v1626
      %v1691 = vtanh.pop %v1627
      %v1692 = vtanh.pop %v1628
      %v1693 = vtanh.pop %v1629
      %v1694 = vtanh.pop %v1630
      %v1695 = vtanh.pop %v1631
      %v1696 = vtanh.pop %v1632
      %v1697 = vtanh.pop %v1633
      %v1698 = vtanh.pop %v1634
      %v1699 = vtanh.pop %v1635
      %v1700 = vtanh.pop %v1636
      %v1701 = vtanh.pop %v1637
      %v1702 = vtanh.pop %v1638
      %v1703 = vtanh.pop %v1639
      %v1704 = vtanh.pop %v1640
      %v1705 = vtanh.pop %v1641
      %v1706 = vtanh.pop %v1642
      %v1707 = vtanh.pop %v1643
      %v1708 = vtanh.pop %v1644
      %v1709 = vtanh.pop %v1645
      %v1710 = vtanh.pop %v1646
      %v1711 = vtanh.pop %v1647
      %v1712 = vtanh.pop %v1648
      %v1713 = vtanh.pop %v1649
      %v1714 = vtanh.pop %v1650
      %v1715 = vtanh.pop %v1651
      %v1716 = vtanh.pop %v1652
      %v1717 = vtanh.pop %v1653
      %v1718 = vtanh.pop %v1654
      %v1719 = vtanh.pop %v1655
      %v1720 = vtanh.pop %v1656
      %v1721 = vtanh.pop %v1657
      %v1722 = vtanh.pop %v1658
      %v1723 = vtanh.pop %v1659
      %v1724 = vtanh.pop %v1660
      %v1725 = vtanh.pop %v1661
      %v1726 = vtanh.pop %v1662
      %v1727 = vtanh.pop %v1663
      %v1728 = vtanh.pop %v1664
      %v1729 = vtanh.pop %v1665
      %v1730 = vtanh.pop %v1666
      %v1731 = vtanh.pop %v1667
      %v1732 = vtanh.pop %v1668
      %v1733 = vtanh.pop %v1669
      %v1734 = vtanh.pop %v1670
      %v1735 = vtanh.pop %v1671
      %v1736 = vtanh.pop %v1672
      %v1737 = vld [vmem:[%s4] sm:$0xff]
      %v1738 = vld [vmem:[%s4 + $0x8] sm:$0xff]
      %v1739 = vld [vmem:[%s4 + $0x10] sm:$0xff]
      %v1740 = vld [vmem:[%s4 + $0x18] sm:$0xff]
      %v1741 = vld [vmem:[%s4 + $0x20] sm:$0xff]
      %v1742 = vld [vmem:[%s4 + $0x28] sm:$0xff]
      %v1743 = vld [vmem:[%s4 + $0x30] sm:$0xff]
      %v1744 = vld [vmem:[%s4 + $0x38] sm:$0xff]
      %v1745 = vld [vmem:[%s4 + $0x40] sm:$0xff]
      %v1746 = vld [vmem:[%s4 + $0x48] sm:$0xff]
      %v1747 = vld [vmem:[%s4 + $0x50] sm:$0xff]
      %v1748 = vld [vmem:[%s4 + $0x58] sm:$0xff]
      %v1749 = vld [vmem:[%s4 + $0x60] sm:$0xff]
      %v1750 = vld [vmem:[%s4 + $0x68] sm:$0xff]
      %v1751 = vld [vmem:[%s4 + $0x70] sm:$0xff]
      %v1752 = vld [vmem:[%s4 + $0x78] sm:$0xff]
      %v1753 = vld [vmem:[%s5] sm:$0x1]
      %v1755 = vperm.slane %v1753, 0
      %1757 = vmatpush.msra.mxu0 %v1752
      %1758 = vmatpush.msra.mxu0 %v1751
      %1759 = vmatpush.msra.mxu0 %v1750
      %1760 = vmatpush.msra.mxu0 %v1749
      %1761 = vmatpush.msra.mxu0 %v1748
      %1762 = vmatpush.msra.mxu0 %v1747
      %1763 = vmatpush.msra.mxu0 %v1746
      %1764 = vmatpush.msra.mxu0 %v1745
      %1765 = vmatpush.msra.mxu0 %v1744
      %1766 = vmatpush.msra.mxu0 %v1743
      %1767 = vmatpush.msra.mxu0 %v1742
      %1768 = vmatpush.msra.mxu0 %v1741
      %1769 = vmatpush.msra.mxu0 %v1740
      %1770 = vmatpush.msra.mxu0 %v1739
      %1771 = vmatpush.msra.mxu0 %v1738
      %1772 = vmatpush.msra.mxu0 %v1737
      %1773 = vmatmul.f32.gmra.mxu0 %v1673
      %v1774 = vpop.f32.mrf.mxu0
      %v1775 = vadd.f32 %v1755, %v1774
      %1776 = vmatmul.f32.gmra.mxu0 %v1674
      %v1777 = vpop.f32.mrf.mxu0
      %v1778 = vadd.f32 %v1755, %v1777
      %1779 = vmatmul.f32.gmra.mxu0 %v1675
      %v1780 = vpop.f32.mrf.mxu0
      %v1781 = vadd.f32 %v1755, %v1780
      %1782 = vmatmul.f32.gmra.mxu0 %v1676
      %v1783 = vpop.f32.mrf.mxu0
      %v1784 = vadd.f32 %v1755, %v1783
      %1785 = vmatmul.f32.gmra.mxu0 %v1677
      %v1786 = vpop.f32.mrf.mxu0
      %v1787 = vadd.f32 %v1755, %v1786
      %1788 = vmatmul.f32.gmra.mxu0 %v1678
      %v1789 = vpop.f32.mrf.mxu0
      %v1790 = vadd.f32 %v1755, %v1789
      %1791 = vmatmul.f32.gmra.mxu0 %v1679
      %v1792 = vpop.f32.mrf.mxu0
      %v1793 = vadd.f32 %v1755, %v1792
      %1794 = vmatmul.f32.gmra.mxu0 %v1680
      %v1795 = vpop.f32.mrf.mxu0
      %v1796 = vadd.f32 %v1755, %v1795
      %1797 = vmatmul.f32.gmra.mxu0 %v1681
      %v1798 = vpop.f32.mrf.mxu0
      %v1799 = vadd.f32 %v1755, %v1798
      %1800 = vmatmul.f32.gmra.mxu0 %v1682
      %v1801 = vpop.f32.mrf.mxu0
      %v1802 = vadd.f32 %v1755, %v1801
      %1803 = vmatmul.f32.gmra.mxu0 %v1683
      %v1804 = vpop.f32.mrf.mxu0
      %v1805 = vadd.f32 %v1755, %v1804
      %1806 = vmatmul.f32.gmra.mxu0 %v1684
      %v1807 = vpop.f32.mrf.mxu0
      %v1808 = vadd.f32 %v1755, %v1807
      %1809 = vmatmul.f32.gmra.mxu0 %v1685
      %v1810 = vpop.f32.mrf.mxu0
      %v1811 = vadd.f32 %v1755, %v1810
      %1812 = vmatmul.f32.gmra.mxu0 %v1686
      %v1813 = vpop.f32.mrf.mxu0
      %v1814 = vadd.f32 %v1755, %v1813
      %1815 = vmatmul.f32.gmra.mxu0 %v1687
      %v1816 = vpop.f32.mrf.mxu0
      %v1817 = vadd.f32 %v1755, %v1816
      %1818 = vmatmul.f32.gmra.mxu0 %v1688
      %v1819 = vpop.f32.mrf.mxu0
      %v1820 = vadd.f32 %v1755, %v1819
      %1821 = vmatmul.f32.gmra.mxu0 %v1689
      %v1822 = vpop.f32.mrf.mxu0
      %v1823 = vadd.f32 %v1755, %v1822
      %1824 = vmatmul.f32.gmra.mxu0 %v1690
      %v1825 = vpop.f32.mrf.mxu0
      %v1826 = vadd.f32 %v1755, %v1825
      %1827 = vmatmul.f32.gmra.mxu0 %v1691
      %v1828 = vpop.f32.mrf.mxu0
      %v1829 = vadd.f32 %v1755, %v1828
      %1830 = vmatmul.f32.gmra.mxu0 %v1692
      %v1831 = vpop.f32.mrf.mxu0
      %v1832 = vadd.f32 %v1755, %v1831
      %1833 = vmatmul.f32.gmra.mxu0 %v1693
      %v1834 = vpop.f32.mrf.mxu0
      %v1835 = vadd.f32 %v1755, %v1834
      %1836 = vmatmul.f32.gmra.mxu0 %v1694
      %v1837 = vpop.f32.mrf.mxu0
      %v1838 = vadd.f32 %v1755, %v1837
      %1839 = vmatmul.f32.gmra.mxu0 %v1695
      %v1840 = vpop.f32.mrf.mxu0
      %v1841 = vadd.f32 %v1755, %v1840
      %1842 = vmatmul.f32.gmra.mxu0 %v1696
      %v1843 = vpop.f32.mrf.mxu0
      %v1844 = vadd.f32 %v1755, %v1843
      %1845 = vmatmul.f32.gmra.mxu0 %v1697
      %v1846 = vpop.f32.mrf.mxu0
      %v1847 = vadd.f32 %v1755, %v1846
      %1848 = vmatmul.f32.gmra.mxu0 %v1698
      %v1849 = vpop.f32.mrf.mxu0
      %v1850 = vadd.f32 %v1755, %v1849
      %1851 = vmatmul.f32.gmra.mxu0 %v1699
      %v1852 = vpop.f32.mrf.mxu0
      %v1853 = vadd.f32 %v1755, %v1852
      %1854 = vmatmul.f32.gmra.mxu0 %v1700
      %v1855 = vpop.f32.mrf.mxu0
      %v1856 = vadd.f32 %v1755, %v1855
      %1857 = vmatmul.f32.gmra.mxu0 %v1701
      %v1858 = vpop.f32.mrf.mxu0
      %v1859 = vadd.f32 %v1755, %v1858
      %1860 = vmatmul.f32.gmra.mxu0 %v1702
      %v1861 = vpop.f32.mrf.mxu0
      %v1862 = vadd.f32 %v1755, %v1861
      %1863 = vmatmul.f32.gmra.mxu0 %v1703
      %v1864 = vpop.f32.mrf.mxu0
      %v1865 = vadd.f32 %v1755, %v1864
      %1866 = vmatmul.f32.gmra.mxu0 %v1704
      %v1867 = vpop.f32.mrf.mxu0
      %v1868 = vadd.f32 %v1755, %v1867
      %1869 = vmatmul.f32.gmra.mxu0 %v1705
      %v1870 = vpop.f32.mrf.mxu0
      %v1871 = vadd.f32 %v1755, %v1870
      %1872 = vmatmul.f32.gmra.mxu0 %v1706
      %v1873 = vpop.f32.mrf.mxu0
      %v1874 = vadd.f32 %v1755, %v1873
      %1875 = vmatmul.f32.gmra.mxu0 %v1707
      %v1876 = vpop.f32.mrf.mxu0
      %v1877 = vadd.f32 %v1755, %v1876
      %1878 = vmatmul.f32.gmra.mxu0 %v1708
      %v1879 = vpop.f32.mrf.mxu0
      %v1880 = vadd.f32 %v1755, %v1879
      %1881 = vmatmul.f32.gmra.mxu0 %v1709
      %v1882 = vpop.f32.mrf.mxu0
      %v1883 = vadd.f32 %v1755, %v1882
      %1884 = vmatmul.f32.gmra.mxu0 %v1710
      %v1885 = vpop.f32.mrf.mxu0
      %v1886 = vadd.f32 %v1755, %v1885
      %1887 = vmatmul.f32.gmra.mxu0 %v1711
      %v1888 = vpop.f32.mrf.mxu0
      %v1889 = vadd.f32 %v1755, %v1888
      %1890 = vmatmul.f32.gmra.mxu0 %v1712
      %v1891 = vpop.f32.mrf.mxu0
      %v1892 = vadd.f32 %v1755, %v1891
      %1893 = vmatmul.f32.gmra.mxu0 %v1713
      %v1894 = vpop.f32.mrf.mxu0
      %v1895 = vadd.f32 %v1755, %v1894
      %1896 = vmatmul.f32.gmra.mxu0 %v1714
      %v1897 = vpop.f32.mrf.mxu0
      %v1898 = vadd.f32 %v1755, %v1897
      %1899 = vmatmul.f32.gmra.mxu0 %v1715
      %v1900 = vpop.f32.mrf.mxu0
      %v1901 = vadd.f32 %v1755, %v1900
      %1902 = vmatmul.f32.gmra.mxu0 %v1716
      %v1903 = vpop.f32.mrf.mxu0
      %v1904 = vadd.f32 %v1755, %v1903
      %1905 = vmatmul.f32.gmra.mxu0 %v1717
      %v1906 = vpop.f32.mrf.mxu0
      %v1907 = vadd.f32 %v1755, %v1906
      %1908 = vmatmul.f32.gmra.mxu0 %v1718
      %v1909 = vpop.f32.mrf.mxu0
      %v1910 = vadd.f32 %v1755, %v1909
      %1911 = vmatmul.f32.gmra.mxu0 %v1719
      %v1912 = vpop.f32.mrf.mxu0
      %v1913 = vadd.f32 %v1755, %v1912
      %1914 = vmatmul.f32.gmra.mxu0 %v1720
      %v1915 = vpop.f32.mrf.mxu0
      %v1916 = vadd.f32 %v1755, %v1915
      %1917 = vmatmul.f32.gmra.mxu0 %v1721
      %v1918 = vpop.f32.mrf.mxu0
      %v1919 = vadd.f32 %v1755, %v1918
      %1920 = vmatmul.f32.gmra.mxu0 %v1722
      %v1921 = vpop.f32.mrf.mxu0
      %v1922 = vadd.f32 %v1755, %v1921
      %1923 = vmatmul.f32.gmra.mxu0 %v1723
      %v1924 = vpop.f32.mrf.mxu0
      %v1925 = vadd.f32 %v1755, %v1924
      %1926 = vmatmul.f32.gmra.mxu0 %v1724
      %v1927 = vpop.f32.mrf.mxu0
      %v1928 = vadd.f32 %v1755, %v1927
      %1929 = vmatmul.f32.gmra.mxu0 %v1725
      %v1930 = vpop.f32.mrf.mxu0
      %v1931 = vadd.f32 %v1755, %v1930
      %1932 = vmatmul.f32.gmra.mxu0 %v1726
      %v1933 = vpop.f32.mrf.mxu0
      %v1934 = vadd.f32 %v1755, %v1933
      %1935 = vmatmul.f32.gmra.mxu0 %v1727
      %v1936 = vpop.f32.mrf.mxu0
      %v1937 = vadd.f32 %v1755, %v1936
      %1938 = vmatmul.f32.gmra.mxu0 %v1728
      %v1939 = vpop.f32.mrf.mxu0
      %v1940 = vadd.f32 %v1755, %v1939
      %1941 = vmatmul.f32.gmra.mxu0 %v1729
      %v1942 = vpop.f32.mrf.mxu0
      %v1943 = vadd.f32 %v1755, %v1942
      %1944 = vmatmul.f32.gmra.mxu0 %v1730
      %v1945 = vpop.f32.mrf.mxu0
      %v1946 = vadd.f32 %v1755, %v1945
      %1947 = vmatmul.f32.gmra.mxu0 %v1731
      %v1948 = vpop.f32.mrf.mxu0
      %v1949 = vadd.f32 %v1755, %v1948
      %1950 = vmatmul.f32.gmra.mxu0 %v1732
      %v1951 = vpop.f32.mrf.mxu0
      %v1952 = vadd.f32 %v1755, %v1951
      %1953 = vmatmul.f32.gmra.mxu0 %v1733
      %v1954 = vpop.f32.mrf.mxu0
      %v1955 = vadd.f32 %v1755, %v1954
      %1956 = vmatmul.f32.gmra.mxu0 %v1734
      %v1957 = vpop.f32.mrf.mxu0
      %v1958 = vadd.f32 %v1755, %v1957
      %1959 = vmatmul.f32.gmra.mxu0 %v1735
      %v1960 = vpop.f32.mrf.mxu0
      %v1961 = vadd.f32 %v1755, %v1960
      %1962 = vmatmul.f32.gmra.mxu0 %v1736
      %v1963 = vpop.f32.mrf.mxu0
      %v1964 = vadd.f32 %v1755, %v1963
      %1965 = vdwg.mxu0
      %v1966 = vtanh.pop %v1775
      %v1967 = vtanh.pop %v1778
      %v1968 = vtanh.pop %v1781
      %v1969 = vtanh.pop %v1784
      %v1970 = vtanh.pop %v1787
      %v1971 = vtanh.pop %v1790
      %v1972 = vtanh.pop %v1793
      %v1973 = vtanh.pop %v1796
      %v1974 = vtanh.pop %v1799
      %v1975 = vtanh.pop %v1802
      %v1976 = vtanh.pop %v1805
      %v1977 = vtanh.pop %v1808
      %v1978 = vtanh.pop %v1811
      %v1979 = vtanh.pop %v1814
      %v1980 = vtanh.pop %v1817
      %v1981 = vtanh.pop %v1820
      %v1982 = vtanh.pop %v1823
      %v1983 = vtanh.pop %v1826
      %v1984 = vtanh.pop %v1829
      %v1985 = vtanh.pop %v1832
      %v1986 = vtanh.pop %v1835
      %v1987 = vtanh.pop %v1838
      %v1988 = vtanh.pop %v1841
      %v1989 = vtanh.pop %v1844
      %v1990 = vtanh.pop %v1847
      %v1991 = vtanh.pop %v1850
      %v1992 = vtanh.pop %v1853
      %v1993 = vtanh.pop %v1856
      %v1994 = vtanh.pop %v1859
      %v1995 = vtanh.pop %v1862
      %v1996 = vtanh.pop %v1865
      %v1997 = vtanh.pop %v1868
      %v1998 = vtanh.pop %v1871
      %v1999 = vtanh.pop %v1874
      %v2000 = vtanh.pop %v1877
      %v2001 = vtanh.pop %v1880
      %v2002 = vtanh.pop %v1883
      %v2003 = vtanh.pop %v1886
      %v2004 = vtanh.pop %v1889
      %v2005 = vtanh.pop %v1892
      %v2006 = vtanh.pop %v1895
      %v2007 = vtanh.pop %v1898
      %v2008 = vtanh.pop %v1901
      %v2009 = vtanh.pop %v1904
      %v2010 = vtanh.pop %v1907
      %v2011 = vtanh.pop %v1910
      %v2012 = vtanh.pop %v1913
      %v2013 = vtanh.pop %v1916
      %v2014 = vtanh.pop %v1919
      %v2015 = vtanh.pop %v1922
      %v2016 = vtanh.pop %v1925
      %v2017 = vtanh.pop %v1928
      %v2018 = vtanh.pop %v1931
      %v2019 = vtanh.pop %v1934
      %v2020 = vtanh.pop %v1937
      %v2021 = vtanh.pop %v1940
      %v2022 = vtanh.pop %v1943
      %v2023 = vtanh.pop %v1946
      %v2024 = vtanh.pop %v1949
      %v2025 = vtanh.pop %v1952
      %v2026 = vtanh.pop %v1955
      %v2027 = vtanh.pop %v1958
      %v2028 = vtanh.pop %v1961
      %v2029 = vtanh.pop %v1964
      %v2030 = vld [vmem:[%s6] sm:$0xff]
      %v2031 = vld [vmem:[%s6 + $0x8] sm:$0xff]
      %v2032 = vld [vmem:[%s6 + $0x10] sm:$0xff]
      %v2033 = vld [vmem:[%s6 + $0x18] sm:$0xff]
      %v2034 = vld [vmem:[%s6 + $0x20] sm:$0xff]
      %v2035 = vld [vmem:[%s6 + $0x28] sm:$0xff]
      %v2036 = vld [vmem:[%s6 + $0x30] sm:$0xff]
      %v2037 = vld [vmem:[%s6 + $0x38] sm:$0xff]
      %v2038 = vld [vmem:[%s6 + $0x40] sm:$0xff]
      %v2039 = vld [vmem:[%s6 + $0x48] sm:$0xff]
      %v2040 = vld [vmem:[%s6 + $0x50] sm:$0xff]
      %v2041 = vld [vmem:[%s6 + $0x58] sm:$0xff]
      %v2042 = vld [vmem:[%s6 + $0x60] sm:$0xff]
      %v2043 = vld [vmem:[%s6 + $0x68] sm:$0xff]
      %v2044 = vld [vmem:[%s6 + $0x70] sm:$0xff]
      %v2045 = vld [vmem:[%s6 + $0x78] sm:$0xff]
      %v2046 = vld [vmem:[%s7] sm:$0x1]
      %v2048 = vperm.slane %v2046, 0
      %2050 = vmatpush.msra.mxu0 %v2045
      %2051 = vmatpush.msra.mxu0 %v2044
      %2052 = vmatpush.msra.mxu0 %v2043
      %2053 = vmatpush.msra.mxu0 %v2042
      %2054 = vmatpush.msra.mxu0 %v2041
      %2055 = vmatpush.msra.mxu0 %v2040
      %2056 = vmatpush.msra.mxu0 %v2039
      %2057 = vmatpush.msra.mxu0 %v2038
      %2058 = vmatpush.msra.mxu0 %v2037
      %2059 = vmatpush.msra.mxu0 %v2036
      %2060 = vmatpush.msra.mxu0 %v2035
      %2061 = vmatpush.msra.mxu0 %v2034
      %2062 = vmatpush.msra.mxu0 %v2033
      %2063 = vmatpush.msra.mxu0 %v2032
      %2064 = vmatpush.msra.mxu0 %v2031
      %2065 = vmatpush.msra.mxu0 %v2030
      %2066 = vmatmul.f32.gmra.mxu0 %v1966
      %v2067 = vpop.f32.mrf.mxu0
      %v2068 = vadd.f32 %v2048, %v2067
      %2069 = vmatmul.f32.gmra.mxu0 %v1967
      %v2070 = vpop.f32.mrf.mxu0
      %v2071 = vadd.f32 %v2048, %v2070
      %2072 = vmatmul.f32.gmra.mxu0 %v1968
      %v2073 = vpop.f32.mrf.mxu0
      %v2074 = vadd.f32 %v2048, %v2073
      %2075 = vmatmul.f32.gmra.mxu0 %v1969
      %v2076 = vpop.f32.mrf.mxu0
      %v2077 = vadd.f32 %v2048, %v2076
      %2078 = vmatmul.f32.gmra.mxu0 %v1970
      %v2079 = vpop.f32.mrf.mxu0
      %v2080 = vadd.f32 %v2048, %v2079
      %2081 = vmatmul.f32.gmra.mxu0 %v1971
      %v2082 = vpop.f32.mrf.mxu0
      %v2083 = vadd.f32 %v2048, %v2082
      %2084 = vmatmul.f32.gmra.mxu0 %v1972
      %v2085 = vpop.f32.mrf.mxu0
      %v2086 = vadd.f32 %v2048, %v2085
      %2087 = vmatmul.f32.gmra.mxu0 %v1973
      %v2088 = vpop.f32.mrf.mxu0
      %v2089 = vadd.f32 %v2048, %v2088
      %2090 = vmatmul.f32.gmra.mxu0 %v1974
      %v2091 = vpop.f32.mrf.mxu0
      %v2092 = vadd.f32 %v2048, %v2091
      %2093 = vmatmul.f32.gmra.mxu0 %v1975
      %v2094 = vpop.f32.mrf.mxu0
      %v2095 = vadd.f32 %v2048, %v2094
      %2096 = vmatmul.f32.gmra.mxu0 %v1976
      %v2097 = vpop.f32.mrf.mxu0
      %v2098 = vadd.f32 %v2048, %v2097
      %2099 = vmatmul.f32.gmra.mxu0 %v1977
      %v2100 = vpop.f32.mrf.mxu0
      %v2101 = vadd.f32 %v2048, %v2100
      %2102 = vmatmul.f32.gmra.mxu0 %v1978
      %v2103 = vpop.f32.mrf.mxu0
      %v2104 = vadd.f32 %v2048, %v2103
      %2105 = vmatmul.f32.gmra.mxu0 %v1979
      %v2106 = vpop.f32.mrf.mxu0
      %v2107 = vadd.f32 %v2048, %v2106
      %2108 = vmatmul.f32.gmra.mxu0 %v1980
      %v2109 = vpop.f32.mrf.mxu0
      %v2110 = vadd.f32 %v2048, %v2109
      %2111 = vmatmul.f32.gmra.mxu0 %v1981
      %v2112 = vpop.f32.mrf.mxu0
      %v2113 = vadd.f32 %v2048, %v2112
      %2114 = vmatmul.f32.gmra.mxu0 %v1982
      %v2115 = vpop.f32.mrf.mxu0
      %v2116 = vadd.f32 %v2048, %v2115
      %2117 = vmatmul.f32.gmra.mxu0 %v1983
      %v2118 = vpop.f32.mrf.mxu0
      %v2119 = vadd.f32 %v2048, %v2118
      %2120 = vmatmul.f32.gmra.mxu0 %v1984
      %v2121 = vpop.f32.mrf.mxu0
      %v2122 = vadd.f32 %v2048, %v2121
      %2123 = vmatmul.f32.gmra.mxu0 %v1985
      %v2124 = vpop.f32.mrf.mxu0
      %v2125 = vadd.f32 %v2048, %v2124
      %2126 = vmatmul.f32.gmra.mxu0 %v1986
      %v2127 = vpop.f32.mrf.mxu0
      %v2128 = vadd.f32 %v2048, %v2127
      %2129 = vmatmul.f32.gmra.mxu0 %v1987
      %v2130 = vpop.f32.mrf.mxu0
      %v2131 = vadd.f32 %v2048, %v2130
      %2132 = vmatmul.f32.gmra.mxu0 %v1988
      %v2133 = vpop.f32.mrf.mxu0
      %v2134 = vadd.f32 %v2048, %v2133
      %2135 = vmatmul.f32.gmra.mxu0 %v1989
      %v2136 = vpop.f32.mrf.mxu0
      %v2137 = vadd.f32 %v2048, %v2136
      %2138 = vmatmul.f32.gmra.mxu0 %v1990
      %v2139 = vpop.f32.mrf.mxu0
      %v2140 = vadd.f32 %v2048, %v2139
      %2141 = vmatmul.f32.gmra.mxu0 %v1991
      %v2142 = vpop.f32.mrf.mxu0
      %v2143 = vadd.f32 %v2048, %v2142
      %2144 = vmatmul.f32.gmra.mxu0 %v1992
      %v2145 = vpop.f32.mrf.mxu0
      %v2146 = vadd.f32 %v2048, %v2145
      %2147 = vmatmul.f32.gmra.mxu0 %v1993
      %v2148 = vpop.f32.mrf.mxu0
      %v2149 = vadd.f32 %v2048, %v2148
      %2150 = vmatmul.f32.gmra.mxu0 %v1994
      %v2151 = vpop.f32.mrf.mxu0
      %v2152 = vadd.f32 %v2048, %v2151
      %2153 = vmatmul.f32.gmra.mxu0 %v1995
      %v2154 = vpop.f32.mrf.mxu0
      %v2155 = vadd.f32 %v2048, %v2154
      %2156 = vmatmul.f32.gmra.mxu0 %v1996
      %v2157 = vpop.f32.mrf.mxu0
      %v2158 = vadd.f32 %v2048, %v2157
      %2159 = vmatmul.f32.gmra.mxu0 %v1997
      %v2160 = vpop.f32.mrf.mxu0
      %v2161 = vadd.f32 %v2048, %v2160
      %2162 = vmatmul.f32.gmra.mxu0 %v1998
      %v2163 = vpop.f32.mrf.mxu0
      %v2164 = vadd.f32 %v2048, %v2163
      %2165 = vmatmul.f32.gmra.mxu0 %v1999
      %v2166 = vpop.f32.mrf.mxu0
      %v2167 = vadd.f32 %v2048, %v2166
      %2168 = vmatmul.f32.gmra.mxu0 %v2000
      %v2169 = vpop.f32.mrf.mxu0
      %v2170 = vadd.f32 %v2048, %v2169
      %2171 = vmatmul.f32.gmra.mxu0 %v2001
      %v2172 = vpop.f32.mrf.mxu0
      %v2173 = vadd.f32 %v2048, %v2172
      %2174 = vmatmul.f32.gmra.mxu0 %v2002
      %v2175 = vpop.f32.mrf.mxu0
      %v2176 = vadd.f32 %v2048, %v2175
      %2177 = vmatmul.f32.gmra.mxu0 %v2003
      %v2178 = vpop.f32.mrf.mxu0
      %v2179 = vadd.f32 %v2048, %v2178
      %2180 = vmatmul.f32.gmra.mxu0 %v2004
      %v2181 = vpop.f32.mrf.mxu0
      %v2182 = vadd.f32 %v2048, %v2181
      %2183 = vmatmul.f32.gmra.mxu0 %v2005
      %v2184 = vpop.f32.mrf.mxu0
      %v2185 = vadd.f32 %v2048, %v2184
      %2186 = vmatmul.f32.gmra.mxu0 %v2006
      %v2187 = vpop.f32.mrf.mxu0
      %v2188 = vadd.f32 %v2048, %v2187
      %2189 = vmatmul.f32.gmra.mxu0 %v2007
      %v2190 = vpop.f32.mrf.mxu0
      %v2191 = vadd.f32 %v2048, %v2190
      %2192 = vmatmul.f32.gmra.mxu0 %v2008
      %v2193 = vpop.f32.mrf.mxu0
      %v2194 = vadd.f32 %v2048, %v2193
      %2195 = vmatmul.f32.gmra.mxu0 %v2009
      %v2196 = vpop.f32.mrf.mxu0
      %v2197 = vadd.f32 %v2048, %v2196
      %2198 = vmatmul.f32.gmra.mxu0 %v2010
      %v2199 = vpop.f32.mrf.mxu0
      %v2200 = vadd.f32 %v2048, %v2199
      %2201 = vmatmul.f32.gmra.mxu0 %v2011
      %v2202 = vpop.f32.mrf.mxu0
      %v2203 = vadd.f32 %v2048, %v2202
      %2204 = vmatmul.f32.gmra.mxu0 %v2012
      %v2205 = vpop.f32.mrf.mxu0
      %v2206 = vadd.f32 %v2048, %v2205
      %2207 = vmatmul.f32.gmra.mxu0 %v2013
      %v2208 = vpop.f32.mrf.mxu0
      %v2209 = vadd.f32 %v2048, %v2208
      %2210 = vmatmul.f32.gmra.mxu0 %v2014
      %v2211 = vpop.f32.mrf.mxu0
      %v2212 = vadd.f32 %v2048, %v2211
      %2213 = vmatmul.f32.gmra.mxu0 %v2015
      %v2214 = vpop.f32.mrf.mxu0
      %v2215 = vadd.f32 %v2048, %v2214
      %2216 = vmatmul.f32.gmra.mxu0 %v2016
      %v2217 = vpop.f32.mrf.mxu0
      %v2218 = vadd.f32 %v2048, %v2217
      %2219 = vmatmul.f32.gmra.mxu0 %v2017
      %v2220 = vpop.f32.mrf.mxu0
      %v2221 = vadd.f32 %v2048, %v2220
      %2222 = vmatmul.f32.gmra.mxu0 %v2018
      %v2223 = vpop.f32.mrf.mxu0
      %v2224 = vadd.f32 %v2048, %v2223
      %2225 = vmatmul.f32.gmra.mxu0 %v2019
      %v2226 = vpop.f32.mrf.mxu0
      %v2227 = vadd.f32 %v2048, %v2226
      %2228 = vmatmul.f32.gmra.mxu0 %v2020
      %v2229 = vpop.f32.mrf.mxu0
      %v2230 = vadd.f32 %v2048, %v2229
      %2231 = vmatmul.f32.gmra.mxu0 %v2021
      %v2232 = vpop.f32.mrf.mxu0
      %v2233 = vadd.f32 %v2048, %v2232
      %2234 = vmatmul.f32.gmra.mxu0 %v2022
      %v2235 = vpop.f32.mrf.mxu0
      %v2236 = vadd.f32 %v2048, %v2235
      %2237 = vmatmul.f32.gmra.mxu0 %v2023
      %v2238 = vpop.f32.mrf.mxu0
      %v2239 = vadd.f32 %v2048, %v2238
      %2240 = vmatmul.f32.gmra.mxu0 %v2024
      %v2241 = vpop.f32.mrf.mxu0
      %v2242 = vadd.f32 %v2048, %v2241
      %2243 = vmatmul.f32.gmra.mxu0 %v2025
      %v2244 = vpop.f32.mrf.mxu0
      %v2245 = vadd.f32 %v2048, %v2244
      %2246 = vmatmul.f32.gmra.mxu0 %v2026
      %v2247 = vpop.f32.mrf.mxu0
      %v2248 = vadd.f32 %v2048, %v2247
      %2249 = vmatmul.f32.gmra.mxu0 %v2027
      %v2250 = vpop.f32.mrf.mxu0
      %v2251 = vadd.f32 %v2048, %v2250
      %2252 = vmatmul.f32.gmra.mxu0 %v2028
      %v2253 = vpop.f32.mrf.mxu0
      %v2254 = vadd.f32 %v2048, %v2253
      %2255 = vmatmul.f32.gmra.mxu0 %v2029
      %v2256 = vpop.f32.mrf.mxu0
      %v2257 = vadd.f32 %v2048, %v2256
      %2258 = vdwg.mxu0
      %v2259 = vadd.f32 %v2068, %v1673
      %v2260 = vadd.f32 %v2071, %v1674
      %v2261 = vadd.f32 %v2074, %v1675
      %v2262 = vadd.f32 %v2077, %v1676
      %v2263 = vadd.f32 %v2080, %v1677
      %v2264 = vadd.f32 %v2083, %v1678
      %v2265 = vadd.f32 %v2086, %v1679
      %v2266 = vadd.f32 %v2089, %v1680
      %v2267 = vadd.f32 %v2092, %v1681
      %v2268 = vadd.f32 %v2095, %v1682
      %v2269 = vadd.f32 %v2098, %v1683
      %v2270 = vadd.f32 %v2101, %v1684
      %v2271 = vadd.f32 %v2104, %v1685
      %v2272 = vadd.f32 %v2107, %v1686
      %v2273 = vadd.f32 %v2110, %v1687
      %v2274 = vadd.f32 %v2113, %v1688
      %v2275 = vadd.f32 %v2116, %v1689
      %v2276 = vadd.f32 %v2119, %v1690
      %v2277 = vadd.f32 %v2122, %v1691
      %v2278 = vadd.f32 %v2125, %v1692
      %v2279 = vadd.f32 %v2128, %v1693
      %v2280 = vadd.f32 %v2131, %v1694
      %v2281 = vadd.f32 %v2134, %v1695
      %v2282 = vadd.f32 %v2137, %v1696
      %v2283 = vadd.f32 %v2140, %v1697
      %v2284 = vadd.f32 %v2143, %v1698
      %v2285 = vadd.f32 %v2146, %v1699
      %v2286 = vadd.f32 %v2149, %v1700
      %v2287 = vadd.f32 %v2152, %v1701
      %v2288 = vadd.f32 %v2155, %v1702
      %v2289 = vadd.f32 %v2158, %v1703
      %v2290 = vadd.f32 %v2161, %v1704
      %v2291 = vadd.f32 %v2164, %v1705
      %v2292 = vadd.f32 %v2167, %v1706
      %v2293 = vadd.f32 %v2170, %v1707
      %v2294 = vadd.f32 %v2173, %v1708
      %v2295 = vadd.f32 %v2176, %v1709
      %v2296 = vadd.f32 %v2179, %v1710
      %v2297 = vadd.f32 %v2182, %v1711
      %v2298 = vadd.f32 %v2185, %v1712
      %v2299 = vadd.f32 %v2188, %v1713
      %v2300 = vadd.f32 %v2191, %v1714
      %v2301 = vadd.f32 %v2194, %v1715
      %v2302 = vadd.f32 %v2197, %v1716
      %v2303 = vadd.f32 %v2200, %v1717
      %v2304 = vadd.f32 %v2203, %v1718
      %v2305 = vadd.f32 %v2206, %v1719
      %v2306 = vadd.f32 %v2209, %v1720
      %v2307 = vadd.f32 %v2212, %v1721
      %v2308 = vadd.f32 %v2215, %v1722
      %v2309 = vadd.f32 %v2218, %v1723
      %v2310 = vadd.f32 %v2221, %v1724
      %v2311 = vadd.f32 %v2224, %v1725
      %v2312 = vadd.f32 %v2227, %v1726
      %v2313 = vadd.f32 %v2230, %v1727
      %v2314 = vadd.f32 %v2233, %v1728
      %v2315 = vadd.f32 %v2236, %v1729
      %v2316 = vadd.f32 %v2239, %v1730
      %v2317 = vadd.f32 %v2242, %v1731
      %v2318 = vadd.f32 %v2245, %v1732
      %v2319 = vadd.f32 %v2248, %v1733
      %v2320 = vadd.f32 %v2251, %v1734
      %v2321 = vadd.f32 %v2254, %v1735
      %v2322 = vadd.f32 %v2257, %v1736
      %v2323 = vtanh.pop %v2259
      %v2324 = vtanh.pop %v2260
      %v2325 = vtanh.pop %v2261
      %v2326 = vtanh.pop %v2262
      %v2327 = vtanh.pop %v2263
      %v2328 = vtanh.pop %v2264
      %v2329 = vtanh.pop %v2265
      %v2330 = vtanh.pop %v2266
      %v2331 = vtanh.pop %v2267
      %v2332 = vtanh.pop %v2268
      %v2333 = vtanh.pop %v2269
      %v2334 = vtanh.pop %v2270
      %v2335 = vtanh.pop %v2271
      %v2336 = vtanh.pop %v2272
      %v2337 = vtanh.pop %v2273
      %v2338 = vtanh.pop %v2274
      %v2339 = vtanh.pop %v2275
      %v2340 = vtanh.pop %v2276
      %v2341 = vtanh.pop %v2277
      %v2342 = vtanh.pop %v2278
      %v2343 = vtanh.pop %v2279
      %v2344 = vtanh.pop %v2280
      %v2345 = vtanh.pop %v2281
      %v2346 = vtanh.pop %v2282
      %v2347 = vtanh.pop %v2283
      %v2348 = vtanh.pop %v2284
      %v2349 = vtanh.pop %v2285
      %v2350 = vtanh.pop %v2286
      %v2351 = vtanh.pop %v2287
      %v2352 = vtanh.pop %v2288
      %v2353 = vtanh.pop %v2289
      %v2354 = vtanh.pop %v2290
      %v2355 = vtanh.pop %v2291
      %v2356 = vtanh.pop %v2292
      %v2357 = vtanh.pop %v2293
      %v2358 = vtanh.pop %v2294
      %v2359 = vtanh.pop %v2295
      %v2360 = vtanh.pop %v2296
      %v2361 = vtanh.pop %v2297
      %v2362 = vtanh.pop %v2298
      %v2363 = vtanh.pop %v2299
      %v2364 = vtanh.pop %v2300
      %v2365 = vtanh.pop %v2301
      %v2366 = vtanh.pop %v2302
      %v2367 = vtanh.pop %v2303
      %v2368 = vtanh.pop %v2304
      %v2369 = vtanh.pop %v2305
      %v2370 = vtanh.pop %v2306
      %v2371 = vtanh.pop %v2307
      %v2372 = vtanh.pop %v2308
      %v2373 = vtanh.pop %v2309
      %v2374 = vtanh.pop %v2310
      %v2375 = vtanh.pop %v2311
      %v2376 = vtanh.pop %v2312
      %v2377 = vtanh.pop %v2313
      %v2378 = vtanh.pop %v2314
      %v2379 = vtanh.pop %v2315
      %v2380 = vtanh.pop %v2316
      %v2381 = vtanh.pop %v2317
      %v2382 = vtanh.pop %v2318
      %v2383 = vtanh.pop %v2319
      %v2384 = vtanh.pop %v2320
      %v2385 = vtanh.pop %v2321
      %v2386 = vtanh.pop %v2322
      %s2387 = scalar_lea.vmem %s4, 128
      %v2388 = vld [vmem:[%s2387] sm:$0xff]
      %v2389 = vld [vmem:[%s2387 + $0x8] sm:$0xff]
      %v2390 = vld [vmem:[%s2387 + $0x10] sm:$0xff]
      %v2391 = vld [vmem:[%s2387 + $0x18] sm:$0xff]
      %v2392 = vld [vmem:[%s2387 + $0x20] sm:$0xff]
      %v2393 = vld [vmem:[%s2387 + $0x28] sm:$0xff]
      %v2394 = vld [vmem:[%s2387 + $0x30] sm:$0xff]
      %v2395 = vld [vmem:[%s2387 + $0x38] sm:$0xff]
      %v2396 = vld [vmem:[%s2387 + $0x40] sm:$0xff]
      %v2397 = vld [vmem:[%s2387 + $0x48] sm:$0xff]
      %v2398 = vld [vmem:[%s2387 + $0x50] sm:$0xff]
      %v2399 = vld [vmem:[%s2387 + $0x58] sm:$0xff]
      %v2400 = vld [vmem:[%s2387 + $0x60] sm:$0xff]
      %v2401 = vld [vmem:[%s2387 + $0x68] sm:$0xff]
      %v2402 = vld [vmem:[%s2387 + $0x70] sm:$0xff]
      %v2403 = vld [vmem:[%s2387 + $0x78] sm:$0xff]
      %s2404 = scalar_lea.vmem %s5, 1
      %v2405 = vld [vmem:[%s2404] sm:$0x1]
      %v2407 = vperm.slane %v2405, 0
      %2409 = vmatpush.msra.mxu0 %v2403
      %2410 = vmatpush.msra.mxu0 %v2402
      %2411 = vmatpush.msra.mxu0 %v2401
      %2412 = vmatpush.msra.mxu0 %v2400
      %2413 = vmatpush.msra.mxu0 %v2399
      %2414 = vmatpush.msra.mxu0 %v2398
      %2415 = vmatpush.msra.mxu0 %v2397
      %2416 = vmatpush.msra.mxu0 %v2396
      %2417 = vmatpush.msra.mxu0 %v2395
      %2418 = vmatpush.msra.mxu0 %v2394
      %2419 = vmatpush.msra.mxu0 %v2393
      %2420 = vmatpush.msra.mxu0 %v2392
      %2421 = vmatpush.msra.mxu0 %v2391
      %2422 = vmatpush.msra.mxu0 %v2390
      %2423 = vmatpush.msra.mxu0 %v2389
      %2424 = vmatpush.msra.mxu0 %v2388
      %2425 = vmatmul.f32.gmra.mxu0 %v2323
      %v2426 = vpop.f32.mrf.mxu0
      %v2427 = vadd.f32 %v2407, %v2426
      %2428 = vmatmul.f32.gmra.mxu0 %v2324
      %v2429 = vpop.f32.mrf.mxu0
      %v2430 = vadd.f32 %v2407, %v2429
      %2431 = vmatmul.f32.gmra.mxu0 %v2325
      %v2432 = vpop.f32.mrf.mxu0
      %v2433 = vadd.f32 %v2407, %v2432
      %2434 = vmatmul.f32.gmra.mxu0 %v2326
      %v2435 = vpop.f32.mrf.mxu0
      %v2436 = vadd.f32 %v2407, %v2435
      %2437 = vmatmul.f32.gmra.mxu0 %v2327
      %v2438 = vpop.f32.mrf.mxu0
      %v2439 = vadd.f32 %v2407, %v2438
      %2440 = vmatmul.f32.gmra.mxu0 %v2328
      %v2441 = vpop.f32.mrf.mxu0
      %v2442 = vadd.f32 %v2407, %v2441
      %2443 = vmatmul.f32.gmra.mxu0 %v2329
      %v2444 = vpop.f32.mrf.mxu0
      %v2445 = vadd.f32 %v2407, %v2444
      %2446 = vmatmul.f32.gmra.mxu0 %v2330
      %v2447 = vpop.f32.mrf.mxu0
      %v2448 = vadd.f32 %v2407, %v2447
      %2449 = vmatmul.f32.gmra.mxu0 %v2331
      %v2450 = vpop.f32.mrf.mxu0
      %v2451 = vadd.f32 %v2407, %v2450
      %2452 = vmatmul.f32.gmra.mxu0 %v2332
      %v2453 = vpop.f32.mrf.mxu0
      %v2454 = vadd.f32 %v2407, %v2453
      %2455 = vmatmul.f32.gmra.mxu0 %v2333
      %v2456 = vpop.f32.mrf.mxu0
      %v2457 = vadd.f32 %v2407, %v2456
      %2458 = vmatmul.f32.gmra.mxu0 %v2334
      %v2459 = vpop.f32.mrf.mxu0
      %v2460 = vadd.f32 %v2407, %v2459
      %2461 = vmatmul.f32.gmra.mxu0 %v2335
      %v2462 = vpop.f32.mrf.mxu0
      %v2463 = vadd.f32 %v2407, %v2462
      %2464 = vmatmul.f32.gmra.mxu0 %v2336
      %v2465 = vpop.f32.mrf.mxu0
      %v2466 = vadd.f32 %v2407, %v2465
      %2467 = vmatmul.f32.gmra.mxu0 %v2337
      %v2468 = vpop.f32.mrf.mxu0
      %v2469 = vadd.f32 %v2407, %v2468
      %2470 = vmatmul.f32.gmra.mxu0 %v2338
      %v2471 = vpop.f32.mrf.mxu0
      %v2472 = vadd.f32 %v2407, %v2471
      %2473 = vmatmul.f32.gmra.mxu0 %v2339
      %v2474 = vpop.f32.mrf.mxu0
      %v2475 = vadd.f32 %v2407, %v2474
      %2476 = vmatmul.f32.gmra.mxu0 %v2340
      %v2477 = vpop.f32.mrf.mxu0
      %v2478 = vadd.f32 %v2407, %v2477
      %2479 = vmatmul.f32.gmra.mxu0 %v2341
      %v2480 = vpop.f32.mrf.mxu0
      %v2481 = vadd.f32 %v2407, %v2480
      %2482 = vmatmul.f32.gmra.mxu0 %v2342
      %v2483 = vpop.f32.mrf.mxu0
      %v2484 = vadd.f32 %v2407, %v2483
      %2485 = vmatmul.f32.gmra.mxu0 %v2343
      %v2486 = vpop.f32.mrf.mxu0
      %v2487 = vadd.f32 %v2407, %v2486
      %2488 = vmatmul.f32.gmra.mxu0 %v2344
      %v2489 = vpop.f32.mrf.mxu0
      %v2490 = vadd.f32 %v2407, %v2489
      %2491 = vmatmul.f32.gmra.mxu0 %v2345
      %v2492 = vpop.f32.mrf.mxu0
      %v2493 = vadd.f32 %v2407, %v2492
      %2494 = vmatmul.f32.gmra.mxu0 %v2346
      %v2495 = vpop.f32.mrf.mxu0
      %v2496 = vadd.f32 %v2407, %v2495
      %2497 = vmatmul.f32.gmra.mxu0 %v2347
      %v2498 = vpop.f32.mrf.mxu0
      %v2499 = vadd.f32 %v2407, %v2498
      %2500 = vmatmul.f32.gmra.mxu0 %v2348
      %v2501 = vpop.f32.mrf.mxu0
      %v2502 = vadd.f32 %v2407, %v2501
      %2503 = vmatmul.f32.gmra.mxu0 %v2349
      %v2504 = vpop.f32.mrf.mxu0
      %v2505 = vadd.f32 %v2407, %v2504
      %2506 = vmatmul.f32.gmra.mxu0 %v2350
      %v2507 = vpop.f32.mrf.mxu0
      %v2508 = vadd.f32 %v2407, %v2507
      %2509 = vmatmul.f32.gmra.mxu0 %v2351
      %v2510 = vpop.f32.mrf.mxu0
      %v2511 = vadd.f32 %v2407, %v2510
      %2512 = vmatmul.f32.gmra.mxu0 %v2352
      %v2513 = vpop.f32.mrf.mxu0
      %v2514 = vadd.f32 %v2407, %v2513
      %2515 = vmatmul.f32.gmra.mxu0 %v2353
      %v2516 = vpop.f32.mrf.mxu0
      %v2517 = vadd.f32 %v2407, %v2516
      %2518 = vmatmul.f32.gmra.mxu0 %v2354
      %v2519 = vpop.f32.mrf.mxu0
      %v2520 = vadd.f32 %v2407, %v2519
      %2521 = vmatmul.f32.gmra.mxu0 %v2355
      %v2522 = vpop.f32.mrf.mxu0
      %v2523 = vadd.f32 %v2407, %v2522
      %2524 = vmatmul.f32.gmra.mxu0 %v2356
      %v2525 = vpop.f32.mrf.mxu0
      %v2526 = vadd.f32 %v2407, %v2525
      %2527 = vmatmul.f32.gmra.mxu0 %v2357
      %v2528 = vpop.f32.mrf.mxu0
      %v2529 = vadd.f32 %v2407, %v2528
      %2530 = vmatmul.f32.gmra.mxu0 %v2358
      %v2531 = vpop.f32.mrf.mxu0
      %v2532 = vadd.f32 %v2407, %v2531
      %2533 = vmatmul.f32.gmra.mxu0 %v2359
      %v2534 = vpop.f32.mrf.mxu0
      %v2535 = vadd.f32 %v2407, %v2534
      %2536 = vmatmul.f32.gmra.mxu0 %v2360
      %v2537 = vpop.f32.mrf.mxu0
      %v2538 = vadd.f32 %v2407, %v2537
      %2539 = vmatmul.f32.gmra.mxu0 %v2361
      %v2540 = vpop.f32.mrf.mxu0
      %v2541 = vadd.f32 %v2407, %v2540
      %2542 = vmatmul.f32.gmra.mxu0 %v2362
      %v2543 = vpop.f32.mrf.mxu0
      %v2544 = vadd.f32 %v2407, %v2543
      %2545 = vmatmul.f32.gmra.mxu0 %v2363
      %v2546 = vpop.f32.mrf.mxu0
      %v2547 = vadd.f32 %v2407, %v2546
      %2548 = vmatmul.f32.gmra.mxu0 %v2364
      %v2549 = vpop.f32.mrf.mxu0
      %v2550 = vadd.f32 %v2407, %v2549
      %2551 = vmatmul.f32.gmra.mxu0 %v2365
      %v2552 = vpop.f32.mrf.mxu0
      %v2553 = vadd.f32 %v2407, %v2552
      %2554 = vmatmul.f32.gmra.mxu0 %v2366
      %v2555 = vpop.f32.mrf.mxu0
      %v2556 = vadd.f32 %v2407, %v2555
      %2557 = vmatmul.f32.gmra.mxu0 %v2367
      %v2558 = vpop.f32.mrf.mxu0
      %v2559 = vadd.f32 %v2407, %v2558
      %2560 = vmatmul.f32.gmra.mxu0 %v2368
      %v2561 = vpop.f32.mrf.mxu0
      %v2562 = vadd.f32 %v2407, %v2561
      %2563 = vmatmul.f32.gmra.mxu0 %v2369
      %v2564 = vpop.f32.mrf.mxu0
      %v2565 = vadd.f32 %v2407, %v2564
      %2566 = vmatmul.f32.gmra.mxu0 %v2370
      %v2567 = vpop.f32.mrf.mxu0
      %v2568 = vadd.f32 %v2407, %v2567
      %2569 = vmatmul.f32.gmra.mxu0 %v2371
      %v2570 = vpop.f32.mrf.mxu0
      %v2571 = vadd.f32 %v2407, %v2570
      %2572 = vmatmul.f32.gmra.mxu0 %v2372
      %v2573 = vpop.f32.mrf.mxu0
      %v2574 = vadd.f32 %v2407, %v2573
      %2575 = vmatmul.f32.gmra.mxu0 %v2373
      %v2576 = vpop.f32.mrf.mxu0
      %v2577 = vadd.f32 %v2407, %v2576
      %2578 = vmatmul.f32.gmra.mxu0 %v2374
      %v2579 = vpop.f32.mrf.mxu0
      %v2580 = vadd.f32 %v2407, %v2579
      %2581 = vmatmul.f32.gmra.mxu0 %v2375
      %v2582 = vpop.f32.mrf.mxu0
      %v2583 = vadd.f32 %v2407, %v2582
      %2584 = vmatmul.f32.gmra.mxu0 %v2376
      %v2585 = vpop.f32.mrf.mxu0
      %v2586 = vadd.f32 %v2407, %v2585
      %2587 = vmatmul.f32.gmra.mxu0 %v2377
      %v2588 = vpop.f32.mrf.mxu0
      %v2589 = vadd.f32 %v2407, %v2588
      %2590 = vmatmul.f32.gmra.mxu0 %v2378
      %v2591 = vpop.f32.mrf.mxu0
      %v2592 = vadd.f32 %v2407, %v2591
      %2593 = vmatmul.f32.gmra.mxu0 %v2379
      %v2594 = vpop.f32.mrf.mxu0
      %v2595 = vadd.f32 %v2407, %v2594
      %2596 = vmatmul.f32.gmra.mxu0 %v2380
      %v2597 = vpop.f32.mrf.mxu0
      %v2598 = vadd.f32 %v2407, %v2597
      %2599 = vmatmul.f32.gmra.mxu0 %v2381
      %v2600 = vpop.f32.mrf.mxu0
      %v2601 = vadd.f32 %v2407, %v2600
      %2602 = vmatmul.f32.gmra.mxu0 %v2382
      %v2603 = vpop.f32.mrf.mxu0
      %v2604 = vadd.f32 %v2407, %v2603
      %2605 = vmatmul.f32.gmra.mxu0 %v2383
      %v2606 = vpop.f32.mrf.mxu0
      %v2607 = vadd.f32 %v2407, %v2606
      %2608 = vmatmul.f32.gmra.mxu0 %v2384
      %v2609 = vpop.f32.mrf.mxu0
      %v2610 = vadd.f32 %v2407, %v2609
      %2611 = vmatmul.f32.gmra.mxu0 %v2385
      %v2612 = vpop.f32.mrf.mxu0
      %v2613 = vadd.f32 %v2407, %v2612
      %2614 = vmatmul.f32.gmra.mxu0 %v2386
      %v2615 = vpop.f32.mrf.mxu0
      %v2616 = vadd.f32 %v2407, %v2615
      %2617 = vdwg.mxu0
      %v2618 = vtanh.pop %v2427
      %v2619 = vtanh.pop %v2430
      %v2620 = vtanh.pop %v2433
      %v2621 = vtanh.pop %v2436
      %v2622 = vtanh.pop %v2439
      %v2623 = vtanh.pop %v2442
      %v2624 = vtanh.pop %v2445
      %v2625 = vtanh.pop %v2448
      %v2626 = vtanh.pop %v2451
      %v2627 = vtanh.pop %v2454
      %v2628 = vtanh.pop %v2457
      %v2629 = vtanh.pop %v2460
      %v2630 = vtanh.pop %v2463
      %v2631 = vtanh.pop %v2466
      %v2632 = vtanh.pop %v2469
      %v2633 = vtanh.pop %v2472
      %v2634 = vtanh.pop %v2475
      %v2635 = vtanh.pop %v2478
      %v2636 = vtanh.pop %v2481
      %v2637 = vtanh.pop %v2484
      %v2638 = vtanh.pop %v2487
      %v2639 = vtanh.pop %v2490
      %v2640 = vtanh.pop %v2493
      %v2641 = vtanh.pop %v2496
      %v2642 = vtanh.pop %v2499
      %v2643 = vtanh.pop %v2502
      %v2644 = vtanh.pop %v2505
      %v2645 = vtanh.pop %v2508
      %v2646 = vtanh.pop %v2511
      %v2647 = vtanh.pop %v2514
      %v2648 = vtanh.pop %v2517
      %v2649 = vtanh.pop %v2520
      %v2650 = vtanh.pop %v2523
      %v2651 = vtanh.pop %v2526
      %v2652 = vtanh.pop %v2529
      %v2653 = vtanh.pop %v2532
      %v2654 = vtanh.pop %v2535
      %v2655 = vtanh.pop %v2538
      %v2656 = vtanh.pop %v2541
      %v2657 = vtanh.pop %v2544
      %v2658 = vtanh.pop %v2547
      %v2659 = vtanh.pop %v2550
      %v2660 = vtanh.pop %v2553
      %v2661 = vtanh.pop %v2556
      %v2662 = vtanh.pop %v2559
      %v2663 = vtanh.pop %v2562
      %v2664 = vtanh.pop %v2565
      %v2665 = vtanh.pop %v2568
      %v2666 = vtanh.pop %v2571
      %v2667 = vtanh.pop %v2574
      %v2668 = vtanh.pop %v2577
      %v2669 = vtanh.pop %v2580
      %v2670 = vtanh.pop %v2583
      %v2671 = vtanh.pop %v2586
      %v2672 = vtanh.pop %v2589
      %v2673 = vtanh.pop %v2592
      %v2674 = vtanh.pop %v2595
      %v2675 = vtanh.pop %v2598
      %v2676 = vtanh.pop %v2601
      %v2677 = vtanh.pop %v2604
      %v2678 = vtanh.pop %v2607
      %v2679 = vtanh.pop %v2610
      %v2680 = vtanh.pop %v2613
      %v2681 = vtanh.pop %v2616
      %s2682 = scalar_lea.vmem %s6, 128
      %v2683 = vld [vmem:[%s2682] sm:$0xff]
      %v2684 = vld [vmem:[%s2682 + $0x8] sm:$0xff]
      %v2685 = vld [vmem:[%s2682 + $0x10] sm:$0xff]
      %v2686 = vld [vmem:[%s2682 + $0x18] sm:$0xff]
      %v2687 = vld [vmem:[%s2682 + $0x20] sm:$0xff]
      %v2688 = vld [vmem:[%s2682 + $0x28] sm:$0xff]
      %v2689 = vld [vmem:[%s2682 + $0x30] sm:$0xff]
      %v2690 = vld [vmem:[%s2682 + $0x38] sm:$0xff]
      %v2691 = vld [vmem:[%s2682 + $0x40] sm:$0xff]
      %v2692 = vld [vmem:[%s2682 + $0x48] sm:$0xff]
      %v2693 = vld [vmem:[%s2682 + $0x50] sm:$0xff]
      %v2694 = vld [vmem:[%s2682 + $0x58] sm:$0xff]
      %v2695 = vld [vmem:[%s2682 + $0x60] sm:$0xff]
      %v2696 = vld [vmem:[%s2682 + $0x68] sm:$0xff]
      %v2697 = vld [vmem:[%s2682 + $0x70] sm:$0xff]
      %v2698 = vld [vmem:[%s2682 + $0x78] sm:$0xff]
      %s2699 = scalar_lea.vmem %s7, 1
      %v2700 = vld [vmem:[%s2699] sm:$0x1]
      %v2702 = vperm.slane %v2700, 0
      %2704 = vmatpush.msra.mxu0 %v2698
      %2705 = vmatpush.msra.mxu0 %v2697
      %2706 = vmatpush.msra.mxu0 %v2696
      %2707 = vmatpush.msra.mxu0 %v2695
      %2708 = vmatpush.msra.mxu0 %v2694
      %2709 = vmatpush.msra.mxu0 %v2693
      %2710 = vmatpush.msra.mxu0 %v2692
      %2711 = vmatpush.msra.mxu0 %v2691
      %2712 = vmatpush.msra.mxu0 %v2690
      %2713 = vmatpush.msra.mxu0 %v2689
      %2714 = vmatpush.msra.mxu0 %v2688
      %2715 = vmatpush.msra.mxu0 %v2687
      %2716 = vmatpush.msra.mxu0 %v2686
      %2717 = vmatpush.msra.mxu0 %v2685
      %2718 = vmatpush.msra.mxu0 %v2684
      %2719 = vmatpush.msra.mxu0 %v2683
      %2720 = vmatmul.f32.gmra.mxu0 %v2618
      %v2721 = vpop.f32.mrf.mxu0
      %v2722 = vadd.f32 %v2702, %v2721
      %2723 = vmatmul.f32.gmra.mxu0 %v2619
      %v2724 = vpop.f32.mrf.mxu0
      %v2725 = vadd.f32 %v2702, %v2724
      %2726 = vmatmul.f32.gmra.mxu0 %v2620
      %v2727 = vpop.f32.mrf.mxu0
      %v2728 = vadd.f32 %v2702, %v2727
      %2729 = vmatmul.f32.gmra.mxu0 %v2621
      %v2730 = vpop.f32.mrf.mxu0
      %v2731 = vadd.f32 %v2702, %v2730
      %2732 = vmatmul.f32.gmra.mxu0 %v2622
      %v2733 = vpop.f32.mrf.mxu0
      %v2734 = vadd.f32 %v2702, %v2733
      %2735 = vmatmul.f32.gmra.mxu0 %v2623
      %v2736 = vpop.f32.mrf.mxu0
      %v2737 = vadd.f32 %v2702, %v2736
      %2738 = vmatmul.f32.gmra.mxu0 %v2624
      %v2739 = vpop.f32.mrf.mxu0
      %v2740 = vadd.f32 %v2702, %v2739
      %2741 = vmatmul.f32.gmra.mxu0 %v2625
      %v2742 = vpop.f32.mrf.mxu0
      %v2743 = vadd.f32 %v2702, %v2742
      %2744 = vmatmul.f32.gmra.mxu0 %v2626
      %v2745 = vpop.f32.mrf.mxu0
      %v2746 = vadd.f32 %v2702, %v2745
      %2747 = vmatmul.f32.gmra.mxu0 %v2627
      %v2748 = vpop.f32.mrf.mxu0
      %v2749 = vadd.f32 %v2702, %v2748
      %2750 = vmatmul.f32.gmra.mxu0 %v2628
      %v2751 = vpop.f32.mrf.mxu0
      %v2752 = vadd.f32 %v2702, %v2751
      %2753 = vmatmul.f32.gmra.mxu0 %v2629
      %v2754 = vpop.f32.mrf.mxu0
      %v2755 = vadd.f32 %v2702, %v2754
      %2756 = vmatmul.f32.gmra.mxu0 %v2630
      %v2757 = vpop.f32.mrf.mxu0
      %v2758 = vadd.f32 %v2702, %v2757
      %2759 = vmatmul.f32.gmra.mxu0 %v2631
      %v2760 = vpop.f32.mrf.mxu0
      %v2761 = vadd.f32 %v2702, %v2760
      %2762 = vmatmul.f32.gmra.mxu0 %v2632
      %v2763 = vpop.f32.mrf.mxu0
      %v2764 = vadd.f32 %v2702, %v2763
      %2765 = vmatmul.f32.gmra.mxu0 %v2633
      %v2766 = vpop.f32.mrf.mxu0
      %v2767 = vadd.f32 %v2702, %v2766
      %2768 = vmatmul.f32.gmra.mxu0 %v2634
      %v2769 = vpop.f32.mrf.mxu0
      %v2770 = vadd.f32 %v2702, %v2769
      %2771 = vmatmul.f32.gmra.mxu0 %v2635
      %v2772 = vpop.f32.mrf.mxu0
      %v2773 = vadd.f32 %v2702, %v2772
      %2774 = vmatmul.f32.gmra.mxu0 %v2636
      %v2775 = vpop.f32.mrf.mxu0
      %v2776 = vadd.f32 %v2702, %v2775
      %2777 = vmatmul.f32.gmra.mxu0 %v2637
      %v2778 = vpop.f32.mrf.mxu0
      %v2779 = vadd.f32 %v2702, %v2778
      %2780 = vmatmul.f32.gmra.mxu0 %v2638
      %v2781 = vpop.f32.mrf.mxu0
      %v2782 = vadd.f32 %v2702, %v2781
      %2783 = vmatmul.f32.gmra.mxu0 %v2639
      %v2784 = vpop.f32.mrf.mxu0
      %v2785 = vadd.f32 %v2702, %v2784
      %2786 = vmatmul.f32.gmra.mxu0 %v2640
      %v2787 = vpop.f32.mrf.mxu0
      %v2788 = vadd.f32 %v2702, %v2787
      %2789 = vmatmul.f32.gmra.mxu0 %v2641
      %v2790 = vpop.f32.mrf.mxu0
      %v2791 = vadd.f32 %v2702, %v2790
      %2792 = vmatmul.f32.gmra.mxu0 %v2642
      %v2793 = vpop.f32.mrf.mxu0
      %v2794 = vadd.f32 %v2702, %v2793
      %2795 = vmatmul.f32.gmra.mxu0 %v2643
      %v2796 = vpop.f32.mrf.mxu0
      %v2797 = vadd.f32 %v2702, %v2796
      %2798 = vmatmul.f32.gmra.mxu0 %v2644
      %v2799 = vpop.f32.mrf.mxu0
      %v2800 = vadd.f32 %v2702, %v2799
      %2801 = vmatmul.f32.gmra.mxu0 %v2645
      %v2802 = vpop.f32.mrf.mxu0
      %v2803 = vadd.f32 %v2702, %v2802
      %2804 = vmatmul.f32.gmra.mxu0 %v2646
      %v2805 = vpop.f32.mrf.mxu0
      %v2806 = vadd.f32 %v2702, %v2805
      %2807 = vmatmul.f32.gmra.mxu0 %v2647
      %v2808 = vpop.f32.mrf.mxu0
      %v2809 = vadd.f32 %v2702, %v2808
      %2810 = vmatmul.f32.gmra.mxu0 %v2648
      %v2811 = vpop.f32.mrf.mxu0
      %v2812 = vadd.f32 %v2702, %v2811
      %2813 = vmatmul.f32.gmra.mxu0 %v2649
      %v2814 = vpop.f32.mrf.mxu0
      %v2815 = vadd.f32 %v2702, %v2814
      %2816 = vmatmul.f32.gmra.mxu0 %v2650
      %v2817 = vpop.f32.mrf.mxu0
      %v2818 = vadd.f32 %v2702, %v2817
      %2819 = vmatmul.f32.gmra.mxu0 %v2651
      %v2820 = vpop.f32.mrf.mxu0
      %v2821 = vadd.f32 %v2702, %v2820
      %2822 = vmatmul.f32.gmra.mxu0 %v2652
      %v2823 = vpop.f32.mrf.mxu0
      %v2824 = vadd.f32 %v2702, %v2823
      %2825 = vmatmul.f32.gmra.mxu0 %v2653
      %v2826 = vpop.f32.mrf.mxu0
      %v2827 = vadd.f32 %v2702, %v2826
      %2828 = vmatmul.f32.gmra.mxu0 %v2654
      %v2829 = vpop.f32.mrf.mxu0
      %v2830 = vadd.f32 %v2702, %v2829
      %2831 = vmatmul.f32.gmra.mxu0 %v2655
      %v2832 = vpop.f32.mrf.mxu0
      %v2833 = vadd.f32 %v2702, %v2832
      %2834 = vmatmul.f32.gmra.mxu0 %v2656
      %v2835 = vpop.f32.mrf.mxu0
      %v2836 = vadd.f32 %v2702, %v2835
      %2837 = vmatmul.f32.gmra.mxu0 %v2657
      %v2838 = vpop.f32.mrf.mxu0
      %v2839 = vadd.f32 %v2702, %v2838
      %2840 = vmatmul.f32.gmra.mxu0 %v2658
      %v2841 = vpop.f32.mrf.mxu0
      %v2842 = vadd.f32 %v2702, %v2841
      %2843 = vmatmul.f32.gmra.mxu0 %v2659
      %v2844 = vpop.f32.mrf.mxu0
      %v2845 = vadd.f32 %v2702, %v2844
      %2846 = vmatmul.f32.gmra.mxu0 %v2660
      %v2847 = vpop.f32.mrf.mxu0
      %v2848 = vadd.f32 %v2702, %v2847
      %2849 = vmatmul.f32.gmra.mxu0 %v2661
      %v2850 = vpop.f32.mrf.mxu0
      %v2851 = vadd.f32 %v2702, %v2850
      %2852 = vmatmul.f32.gmra.mxu0 %v2662
      %v2853 = vpop.f32.mrf.mxu0
      %v2854 = vadd.f32 %v2702, %v2853
      %2855 = vmatmul.f32.gmra.mxu0 %v2663
      %v2856 = vpop.f32.mrf.mxu0
      %v2857 = vadd.f32 %v2702, %v2856
      %2858 = vmatmul.f32.gmra.mxu0 %v2664
      %v2859 = vpop.f32.mrf.mxu0
      %v2860 = vadd.f32 %v2702, %v2859
      %2861 = vmatmul.f32.gmra.mxu0 %v2665
      %v2862 = vpop.f32.mrf.mxu0
      %v2863 = vadd.f32 %v2702, %v2862
      %2864 = vmatmul.f32.gmra.mxu0 %v2666
      %v2865 = vpop.f32.mrf.mxu0
      %v2866 = vadd.f32 %v2702, %v2865
      %2867 = vmatmul.f32.gmra.mxu0 %v2667
      %v2868 = vpop.f32.mrf.mxu0
      %v2869 = vadd.f32 %v2702, %v2868
      %2870 = vmatmul.f32.gmra.mxu0 %v2668
      %v2871 = vpop.f32.mrf.mxu0
      %v2872 = vadd.f32 %v2702, %v2871
      %2873 = vmatmul.f32.gmra.mxu0 %v2669
      %v2874 = vpop.f32.mrf.mxu0
      %v2875 = vadd.f32 %v2702, %v2874
      %2876 = vmatmul.f32.gmra.mxu0 %v2670
      %v2877 = vpop.f32.mrf.mxu0
      %v2878 = vadd.f32 %v2702, %v2877
      %2879 = vmatmul.f32.gmra.mxu0 %v2671
      %v2880 = vpop.f32.mrf.mxu0
      %v2881 = vadd.f32 %v2702, %v2880
      %2882 = vmatmul.f32.gmra.mxu0 %v2672
      %v2883 = vpop.f32.mrf.mxu0
      %v2884 = vadd.f32 %v2702, %v2883
      %2885 = vmatmul.f32.gmra.mxu0 %v2673
      %v2886 = vpop.f32.mrf.mxu0
      %v2887 = vadd.f32 %v2702, %v2886
      %2888 = vmatmul.f32.gmra.mxu0 %v2674
      %v2889 = vpop.f32.mrf.mxu0
      %v2890 = vadd.f32 %v2702, %v2889
      %2891 = vmatmul.f32.gmra.mxu0 %v2675
      %v2892 = vpop.f32.mrf.mxu0
      %v2893 = vadd.f32 %v2702, %v2892
      %2894 = vmatmul.f32.gmra.mxu0 %v2676
      %v2895 = vpop.f32.mrf.mxu0
      %v2896 = vadd.f32 %v2702, %v2895
      %2897 = vmatmul.f32.gmra.mxu0 %v2677
      %v2898 = vpop.f32.mrf.mxu0
      %v2899 = vadd.f32 %v2702, %v2898
      %2900 = vmatmul.f32.gmra.mxu0 %v2678
      %v2901 = vpop.f32.mrf.mxu0
      %v2902 = vadd.f32 %v2702, %v2901
      %2903 = vmatmul.f32.gmra.mxu0 %v2679
      %v2904 = vpop.f32.mrf.mxu0
      %v2905 = vadd.f32 %v2702, %v2904
      %2906 = vmatmul.f32.gmra.mxu0 %v2680
      %v2907 = vpop.f32.mrf.mxu0
      %v2908 = vadd.f32 %v2702, %v2907
      %2909 = vmatmul.f32.gmra.mxu0 %v2681
      %v2910 = vpop.f32.mrf.mxu0
      %v2911 = vadd.f32 %v2702, %v2910
      %2912 = vdwg.mxu0
      %v2913 = vadd.f32 %v2722, %v2323
      %v2914 = vadd.f32 %v2725, %v2324
      %v2915 = vadd.f32 %v2728, %v2325
      %v2916 = vadd.f32 %v2731, %v2326
      %v2917 = vadd.f32 %v2734, %v2327
      %v2918 = vadd.f32 %v2737, %v2328
      %v2919 = vadd.f32 %v2740, %v2329
      %v2920 = vadd.f32 %v2743, %v2330
      %v2921 = vadd.f32 %v2746, %v2331
      %v2922 = vadd.f32 %v2749, %v2332
      %v2923 = vadd.f32 %v2752, %v2333
      %v2924 = vadd.f32 %v2755, %v2334
      %v2925 = vadd.f32 %v2758, %v2335
      %v2926 = vadd.f32 %v2761, %v2336
      %v2927 = vadd.f32 %v2764, %v2337
      %v2928 = vadd.f32 %v2767, %v2338
      %v2929 = vadd.f32 %v2770, %v2339
      %v2930 = vadd.f32 %v2773, %v2340
      %v2931 = vadd.f32 %v2776, %v2341
      %v2932 = vadd.f32 %v2779, %v2342
      %v2933 = vadd.f32 %v2782, %v2343
      %v2934 = vadd.f32 %v2785, %v2344
      %v2935 = vadd.f32 %v2788, %v2345
      %v2936 = vadd.f32 %v2791, %v2346
      %v2937 = vadd.f32 %v2794, %v2347
      %v2938 = vadd.f32 %v2797, %v2348
      %v2939 = vadd.f32 %v2800, %v2349
      %v2940 = vadd.f32 %v2803, %v2350
      %v2941 = vadd.f32 %v2806, %v2351
      %v2942 = vadd.f32 %v2809, %v2352
      %v2943 = vadd.f32 %v2812, %v2353
      %v2944 = vadd.f32 %v2815, %v2354
      %v2945 = vadd.f32 %v2818, %v2355
      %v2946 = vadd.f32 %v2821, %v2356
      %v2947 = vadd.f32 %v2824, %v2357
      %v2948 = vadd.f32 %v2827, %v2358
      %v2949 = vadd.f32 %v2830, %v2359
      %v2950 = vadd.f32 %v2833, %v2360
      %v2951 = vadd.f32 %v2836, %v2361
      %v2952 = vadd.f32 %v2839, %v2362
      %v2953 = vadd.f32 %v2842, %v2363
      %v2954 = vadd.f32 %v2845, %v2364
      %v2955 = vadd.f32 %v2848, %v2365
      %v2956 = vadd.f32 %v2851, %v2366
      %v2957 = vadd.f32 %v2854, %v2367
      %v2958 = vadd.f32 %v2857, %v2368
      %v2959 = vadd.f32 %v2860, %v2369
      %v2960 = vadd.f32 %v2863, %v2370
      %v2961 = vadd.f32 %v2866, %v2371
      %v2962 = vadd.f32 %v2869, %v2372
      %v2963 = vadd.f32 %v2872, %v2373
      %v2964 = vadd.f32 %v2875, %v2374
      %v2965 = vadd.f32 %v2878, %v2375
      %v2966 = vadd.f32 %v2881, %v2376
      %v2967 = vadd.f32 %v2884, %v2377
      %v2968 = vadd.f32 %v2887, %v2378
      %v2969 = vadd.f32 %v2890, %v2379
      %v2970 = vadd.f32 %v2893, %v2380
      %v2971 = vadd.f32 %v2896, %v2381
      %v2972 = vadd.f32 %v2899, %v2382
      %v2973 = vadd.f32 %v2902, %v2383
      %v2974 = vadd.f32 %v2905, %v2384
      %v2975 = vadd.f32 %v2908, %v2385
      %v2976 = vadd.f32 %v2911, %v2386
      %v2977 = vtanh.pop %v2913
      %v2978 = vtanh.pop %v2914
      %v2979 = vtanh.pop %v2915
      %v2980 = vtanh.pop %v2916
      %v2981 = vtanh.pop %v2917
      %v2982 = vtanh.pop %v2918
      %v2983 = vtanh.pop %v2919
      %v2984 = vtanh.pop %v2920
      %v2985 = vtanh.pop %v2921
      %v2986 = vtanh.pop %v2922
      %v2987 = vtanh.pop %v2923
      %v2988 = vtanh.pop %v2924
      %v2989 = vtanh.pop %v2925
      %v2990 = vtanh.pop %v2926
      %v2991 = vtanh.pop %v2927
      %v2992 = vtanh.pop %v2928
      %v2993 = vtanh.pop %v2929
      %v2994 = vtanh.pop %v2930
      %v2995 = vtanh.pop %v2931
      %v2996 = vtanh.pop %v2932
      %v2997 = vtanh.pop %v2933
      %v2998 = vtanh.pop %v2934
      %v2999 = vtanh.pop %v2935
      %v3000 = vtanh.pop %v2936
      %v3001 = vtanh.pop %v2937
      %v3002 = vtanh.pop %v2938
      %v3003 = vtanh.pop %v2939
      %v3004 = vtanh.pop %v2940
      %v3005 = vtanh.pop %v2941
      %v3006 = vtanh.pop %v2942
      %v3007 = vtanh.pop %v2943
      %v3008 = vtanh.pop %v2944
      %v3009 = vtanh.pop %v2945
      %v3010 = vtanh.pop %v2946
      %v3011 = vtanh.pop %v2947
      %v3012 = vtanh.pop %v2948
      %v3013 = vtanh.pop %v2949
      %v3014 = vtanh.pop %v2950
      %v3015 = vtanh.pop %v2951
      %v3016 = vtanh.pop %v2952
      %v3017 = vtanh.pop %v2953
      %v3018 = vtanh.pop %v2954
      %v3019 = vtanh.pop %v2955
      %v3020 = vtanh.pop %v2956
      %v3021 = vtanh.pop %v2957
      %v3022 = vtanh.pop %v2958
      %v3023 = vtanh.pop %v2959
      %v3024 = vtanh.pop %v2960
      %v3025 = vtanh.pop %v2961
      %v3026 = vtanh.pop %v2962
      %v3027 = vtanh.pop %v2963
      %v3028 = vtanh.pop %v2964
      %v3029 = vtanh.pop %v2965
      %v3030 = vtanh.pop %v2966
      %v3031 = vtanh.pop %v2967
      %v3032 = vtanh.pop %v2968
      %v3033 = vtanh.pop %v2969
      %v3034 = vtanh.pop %v2970
      %v3035 = vtanh.pop %v2971
      %v3036 = vtanh.pop %v2972
      %v3037 = vtanh.pop %v2973
      %v3038 = vtanh.pop %v2974
      %v3039 = vtanh.pop %v2975
      %v3040 = vtanh.pop %v2976
      %s3041 = scalar_lea.vmem %s4, 256
      %v3042 = vld [vmem:[%s3041] sm:$0xff]
      %v3043 = vld [vmem:[%s3041 + $0x8] sm:$0xff]
      %v3044 = vld [vmem:[%s3041 + $0x10] sm:$0xff]
      %v3045 = vld [vmem:[%s3041 + $0x18] sm:$0xff]
      %v3046 = vld [vmem:[%s3041 + $0x20] sm:$0xff]
      %v3047 = vld [vmem:[%s3041 + $0x28] sm:$0xff]
      %v3048 = vld [vmem:[%s3041 + $0x30] sm:$0xff]
      %v3049 = vld [vmem:[%s3041 + $0x38] sm:$0xff]
      %v3050 = vld [vmem:[%s3041 + $0x40] sm:$0xff]
      %v3051 = vld [vmem:[%s3041 + $0x48] sm:$0xff]
      %v3052 = vld [vmem:[%s3041 + $0x50] sm:$0xff]
      %v3053 = vld [vmem:[%s3041 + $0x58] sm:$0xff]
      %v3054 = vld [vmem:[%s3041 + $0x60] sm:$0xff]
      %v3055 = vld [vmem:[%s3041 + $0x68] sm:$0xff]
      %v3056 = vld [vmem:[%s3041 + $0x70] sm:$0xff]
      %v3057 = vld [vmem:[%s3041 + $0x78] sm:$0xff]
      %s3058 = scalar_lea.vmem %s5, 2
      %v3059 = vld [vmem:[%s3058] sm:$0x1]
      %v3061 = vperm.slane %v3059, 0
      %3063 = vmatpush.msra.mxu0 %v3057
      %3064 = vmatpush.msra.mxu0 %v3056
      %3065 = vmatpush.msra.mxu0 %v3055
      %3066 = vmatpush.msra.mxu0 %v3054
      %3067 = vmatpush.msra.mxu0 %v3053
      %3068 = vmatpush.msra.mxu0 %v3052
      %3069 = vmatpush.msra.mxu0 %v3051
      %3070 = vmatpush.msra.mxu0 %v3050
      %3071 = vmatpush.msra.mxu0 %v3049
      %3072 = vmatpush.msra.mxu0 %v3048
      %3073 = vmatpush.msra.mxu0 %v3047
      %3074 = vmatpush.msra.mxu0 %v3046
      %3075 = vmatpush.msra.mxu0 %v3045
      %3076 = vmatpush.msra.mxu0 %v3044
      %3077 = vmatpush.msra.mxu0 %v3043
      %3078 = vmatpush.msra.mxu0 %v3042
      %3079 = vmatmul.f32.gmra.mxu0 %v2977
      %v3080 = vpop.f32.mrf.mxu0
      %v3081 = vadd.f32 %v3061, %v3080
      %3082 = vmatmul.f32.gmra.mxu0 %v2978
      %v3083 = vpop.f32.mrf.mxu0
      %v3084 = vadd.f32 %v3061, %v3083
      %3085 = vmatmul.f32.gmra.mxu0 %v2979
      %v3086 = vpop.f32.mrf.mxu0
      %v3087 = vadd.f32 %v3061, %v3086
      %3088 = vmatmul.f32.gmra.mxu0 %v2980
      %v3089 = vpop.f32.mrf.mxu0
      %v3090 = vadd.f32 %v3061, %v3089
      %3091 = vmatmul.f32.gmra.mxu0 %v2981
      %v3092 = vpop.f32.mrf.mxu0
      %v3093 = vadd.f32 %v3061, %v3092
      %3094 = vmatmul.f32.gmra.mxu0 %v2982
      %v3095 = vpop.f32.mrf.mxu0
      %v3096 = vadd.f32 %v3061, %v3095
      %3097 = vmatmul.f32.gmra.mxu0 %v2983
      %v3098 = vpop.f32.mrf.mxu0
      %v3099 = vadd.f32 %v3061, %v3098
      %3100 = vmatmul.f32.gmra.mxu0 %v2984
      %v3101 = vpop.f32.mrf.mxu0
      %v3102 = vadd.f32 %v3061, %v3101
      %3103 = vmatmul.f32.gmra.mxu0 %v2985
      %v3104 = vpop.f32.mrf.mxu0
      %v3105 = vadd.f32 %v3061, %v3104
      %3106 = vmatmul.f32.gmra.mxu0 %v2986
      %v3107 = vpop.f32.mrf.mxu0
      %v3108 = vadd.f32 %v3061, %v3107
      %3109 = vmatmul.f32.gmra.mxu0 %v2987
      %v3110 = vpop.f32.mrf.mxu0
      %v3111 = vadd.f32 %v3061, %v3110
      %3112 = vmatmul.f32.gmra.mxu0 %v2988
      %v3113 = vpop.f32.mrf.mxu0
      %v3114 = vadd.f32 %v3061, %v3113
      %3115 = vmatmul.f32.gmra.mxu0 %v2989
      %v3116 = vpop.f32.mrf.mxu0
      %v3117 = vadd.f32 %v3061, %v3116
      %3118 = vmatmul.f32.gmra.mxu0 %v2990
      %v3119 = vpop.f32.mrf.mxu0
      %v3120 = vadd.f32 %v3061, %v3119
      %3121 = vmatmul.f32.gmra.mxu0 %v2991
      %v3122 = vpop.f32.mrf.mxu0
      %v3123 = vadd.f32 %v3061, %v3122
      %3124 = vmatmul.f32.gmra.mxu0 %v2992
      %v3125 = vpop.f32.mrf.mxu0
      %v3126 = vadd.f32 %v3061, %v3125
      %3127 = vmatmul.f32.gmra.mxu0 %v2993
      %v3128 = vpop.f32.mrf.mxu0
      %v3129 = vadd.f32 %v3061, %v3128
      %3130 = vmatmul.f32.gmra.mxu0 %v2994
      %v3131 = vpop.f32.mrf.mxu0
      %v3132 = vadd.f32 %v3061, %v3131
      %3133 = vmatmul.f32.gmra.mxu0 %v2995
      %v3134 = vpop.f32.mrf.mxu0
      %v3135 = vadd.f32 %v3061, %v3134
      %3136 = vmatmul.f32.gmra.mxu0 %v2996
      %v3137 = vpop.f32.mrf.mxu0
      %v3138 = vadd.f32 %v3061, %v3137
      %3139 = vmatmul.f32.gmra.mxu0 %v2997
      %v3140 = vpop.f32.mrf.mxu0
      %v3141 = vadd.f32 %v3061, %v3140
      %3142 = vmatmul.f32.gmra.mxu0 %v2998
      %v3143 = vpop.f32.mrf.mxu0
      %v3144 = vadd.f32 %v3061, %v3143
      %3145 = vmatmul.f32.gmra.mxu0 %v2999
      %v3146 = vpop.f32.mrf.mxu0
      %v3147 = vadd.f32 %v3061, %v3146
      %3148 = vmatmul.f32.gmra.mxu0 %v3000
      %v3149 = vpop.f32.mrf.mxu0
      %v3150 = vadd.f32 %v3061, %v3149
      %3151 = vmatmul.f32.gmra.mxu0 %v3001
      %v3152 = vpop.f32.mrf.mxu0
      %v3153 = vadd.f32 %v3061, %v3152
      %3154 = vmatmul.f32.gmra.mxu0 %v3002
      %v3155 = vpop.f32.mrf.mxu0
      %v3156 = vadd.f32 %v3061, %v3155
      %3157 = vmatmul.f32.gmra.mxu0 %v3003
      %v3158 = vpop.f32.mrf.mxu0
      %v3159 = vadd.f32 %v3061, %v3158
      %3160 = vmatmul.f32.gmra.mxu0 %v3004
      %v3161 = vpop.f32.mrf.mxu0
      %v3162 = vadd.f32 %v3061, %v3161
      %3163 = vmatmul.f32.gmra.mxu0 %v3005
      %v3164 = vpop.f32.mrf.mxu0
      %v3165 = vadd.f32 %v3061, %v3164
      %3166 = vmatmul.f32.gmra.mxu0 %v3006
      %v3167 = vpop.f32.mrf.mxu0
      %v3168 = vadd.f32 %v3061, %v3167
      %3169 = vmatmul.f32.gmra.mxu0 %v3007
      %v3170 = vpop.f32.mrf.mxu0
      %v3171 = vadd.f32 %v3061, %v3170
      %3172 = vmatmul.f32.gmra.mxu0 %v3008
      %v3173 = vpop.f32.mrf.mxu0
      %v3174 = vadd.f32 %v3061, %v3173
      %3175 = vmatmul.f32.gmra.mxu0 %v3009
      %v3176 = vpop.f32.mrf.mxu0
      %v3177 = vadd.f32 %v3061, %v3176
      %3178 = vmatmul.f32.gmra.mxu0 %v3010
      %v3179 = vpop.f32.mrf.mxu0
      %v3180 = vadd.f32 %v3061, %v3179
      %3181 = vmatmul.f32.gmra.mxu0 %v3011
      %v3182 = vpop.f32.mrf.mxu0
      %v3183 = vadd.f32 %v3061, %v3182
      %3184 = vmatmul.f32.gmra.mxu0 %v3012
      %v3185 = vpop.f32.mrf.mxu0
      %v3186 = vadd.f32 %v3061, %v3185
      %3187 = vmatmul.f32.gmra.mxu0 %v3013
      %v3188 = vpop.f32.mrf.mxu0
      %v3189 = vadd.f32 %v3061, %v3188
      %3190 = vmatmul.f32.gmra.mxu0 %v3014
      %v3191 = vpop.f32.mrf.mxu0
      %v3192 = vadd.f32 %v3061, %v3191
      %3193 = vmatmul.f32.gmra.mxu0 %v3015
      %v3194 = vpop.f32.mrf.mxu0
      %v3195 = vadd.f32 %v3061, %v3194
      %3196 = vmatmul.f32.gmra.mxu0 %v3016
      %v3197 = vpop.f32.mrf.mxu0
      %v3198 = vadd.f32 %v3061, %v3197
      %3199 = vmatmul.f32.gmra.mxu0 %v3017
      %v3200 = vpop.f32.mrf.mxu0
      %v3201 = vadd.f32 %v3061, %v3200
      %3202 = vmatmul.f32.gmra.mxu0 %v3018
      %v3203 = vpop.f32.mrf.mxu0
      %v3204 = vadd.f32 %v3061, %v3203
      %3205 = vmatmul.f32.gmra.mxu0 %v3019
      %v3206 = vpop.f32.mrf.mxu0
      %v3207 = vadd.f32 %v3061, %v3206
      %3208 = vmatmul.f32.gmra.mxu0 %v3020
      %v3209 = vpop.f32.mrf.mxu0
      %v3210 = vadd.f32 %v3061, %v3209
      %3211 = vmatmul.f32.gmra.mxu0 %v3021
      %v3212 = vpop.f32.mrf.mxu0
      %v3213 = vadd.f32 %v3061, %v3212
      %3214 = vmatmul.f32.gmra.mxu0 %v3022
      %v3215 = vpop.f32.mrf.mxu0
      %v3216 = vadd.f32 %v3061, %v3215
      %3217 = vmatmul.f32.gmra.mxu0 %v3023
      %v3218 = vpop.f32.mrf.mxu0
      %v3219 = vadd.f32 %v3061, %v3218
      %3220 = vmatmul.f32.gmra.mxu0 %v3024
      %v3221 = vpop.f32.mrf.mxu0
      %v3222 = vadd.f32 %v3061, %v3221
      %3223 = vmatmul.f32.gmra.mxu0 %v3025
      %v3224 = vpop.f32.mrf.mxu0
      %v3225 = vadd.f32 %v3061, %v3224
      %3226 = vmatmul.f32.gmra.mxu0 %v3026
      %v3227 = vpop.f32.mrf.mxu0
      %v3228 = vadd.f32 %v3061, %v3227
      %3229 = vmatmul.f32.gmra.mxu0 %v3027
      %v3230 = vpop.f32.mrf.mxu0
      %v3231 = vadd.f32 %v3061, %v3230
      %3232 = vmatmul.f32.gmra.mxu0 %v3028
      %v3233 = vpop.f32.mrf.mxu0
      %v3234 = vadd.f32 %v3061, %v3233
      %3235 = vmatmul.f32.gmra.mxu0 %v3029
      %v3236 = vpop.f32.mrf.mxu0
      %v3237 = vadd.f32 %v3061, %v3236
      %3238 = vmatmul.f32.gmra.mxu0 %v3030
      %v3239 = vpop.f32.mrf.mxu0
      %v3240 = vadd.f32 %v3061, %v3239
      %3241 = vmatmul.f32.gmra.mxu0 %v3031
      %v3242 = vpop.f32.mrf.mxu0
      %v3243 = vadd.f32 %v3061, %v3242
      %3244 = vmatmul.f32.gmra.mxu0 %v3032
      %v3245 = vpop.f32.mrf.mxu0
      %v3246 = vadd.f32 %v3061, %v3245
      %3247 = vmatmul.f32.gmra.mxu0 %v3033
      %v3248 = vpop.f32.mrf.mxu0
      %v3249 = vadd.f32 %v3061, %v3248
      %3250 = vmatmul.f32.gmra.mxu0 %v3034
      %v3251 = vpop.f32.mrf.mxu0
      %v3252 = vadd.f32 %v3061, %v3251
      %3253 = vmatmul.f32.gmra.mxu0 %v3035
      %v3254 = vpop.f32.mrf.mxu0
      %v3255 = vadd.f32 %v3061, %v3254
      %3256 = vmatmul.f32.gmra.mxu0 %v3036
      %v3257 = vpop.f32.mrf.mxu0
      %v3258 = vadd.f32 %v3061, %v3257
      %3259 = vmatmul.f32.gmra.mxu0 %v3037
      %v3260 = vpop.f32.mrf.mxu0
      %v3261 = vadd.f32 %v3061, %v3260
      %3262 = vmatmul.f32.gmra.mxu0 %v3038
      %v3263 = vpop.f32.mrf.mxu0
      %v3264 = vadd.f32 %v3061, %v3263
      %3265 = vmatmul.f32.gmra.mxu0 %v3039
      %v3266 = vpop.f32.mrf.mxu0
      %v3267 = vadd.f32 %v3061, %v3266
      %3268 = vmatmul.f32.gmra.mxu0 %v3040
      %v3269 = vpop.f32.mrf.mxu0
      %v3270 = vadd.f32 %v3061, %v3269
      %3271 = vdwg.mxu0
      %v3272 = vtanh.pop %v3081
      %v3273 = vtanh.pop %v3084
      %v3274 = vtanh.pop %v3087
      %v3275 = vtanh.pop %v3090
      %v3276 = vtanh.pop %v3093
      %v3277 = vtanh.pop %v3096
      %v3278 = vtanh.pop %v3099
      %v3279 = vtanh.pop %v3102
      %v3280 = vtanh.pop %v3105
      %v3281 = vtanh.pop %v3108
      %v3282 = vtanh.pop %v3111
      %v3283 = vtanh.pop %v3114
      %v3284 = vtanh.pop %v3117
      %v3285 = vtanh.pop %v3120
      %v3286 = vtanh.pop %v3123
      %v3287 = vtanh.pop %v3126
      %v3288 = vtanh.pop %v3129
      %v3289 = vtanh.pop %v3132
      %v3290 = vtanh.pop %v3135
      %v3291 = vtanh.pop %v3138
      %v3292 = vtanh.pop %v3141
      %v3293 = vtanh.pop %v3144
      %v3294 = vtanh.pop %v3147
      %v3295 = vtanh.pop %v3150
      %v3296 = vtanh.pop %v3153
      %v3297 = vtanh.pop %v3156
      %v3298 = vtanh.pop %v3159
      %v3299 = vtanh.pop %v3162
      %v3300 = vtanh.pop %v3165
      %v3301 = vtanh.pop %v3168
      %v3302 = vtanh.pop %v3171
      %v3303 = vtanh.pop %v3174
      %v3304 = vtanh.pop %v3177
      %v3305 = vtanh.pop %v3180
      %v3306 = vtanh.pop %v3183
      %v3307 = vtanh.pop %v3186
      %v3308 = vtanh.pop %v3189
      %v3309 = vtanh.pop %v3192
      %v3310 = vtanh.pop %v3195
      %v3311 = vtanh.pop %v3198
      %v3312 = vtanh.pop %v3201
      %v3313 = vtanh.pop %v3204
      %v3314 = vtanh.pop %v3207
      %v3315 = vtanh.pop %v3210
      %v3316 = vtanh.pop %v3213
      %v3317 = vtanh.pop %v3216
      %v3318 = vtanh.pop %v3219
      %v3319 = vtanh.pop %v3222
      %v3320 = vtanh.pop %v3225
      %v3321 = vtanh.pop %v3228
      %v3322 = vtanh.pop %v3231
      %v3323 = vtanh.pop %v3234
      %v3324 = vtanh.pop %v3237
      %v3325 = vtanh.pop %v3240
      %v3326 = vtanh.pop %v3243
      %v3327 = vtanh.pop %v3246
      %v3328 = vtanh.pop %v3249
      %v3329 = vtanh.pop %v3252
      %v3330 = vtanh.pop %v3255
      %v3331 = vtanh.pop %v3258
      %v3332 = vtanh.pop %v3261
      %v3333 = vtanh.pop %v3264
      %v3334 = vtanh.pop %v3267
      %v3335 = vtanh.pop %v3270
      %s3336 = scalar_lea.vmem %s6, 256
      %v3337 = vld [vmem:[%s3336] sm:$0xff]
      %v3338 = vld [vmem:[%s3336 + $0x8] sm:$0xff]
      %v3339 = vld [vmem:[%s3336 + $0x10] sm:$0xff]
      %v3340 = vld [vmem:[%s3336 + $0x18] sm:$0xff]
      %v3341 = vld [vmem:[%s3336 + $0x20] sm:$0xff]
      %v3342 = vld [vmem:[%s3336 + $0x28] sm:$0xff]
      %v3343 = vld [vmem:[%s3336 + $0x30] sm:$0xff]
      %v3344 = vld [vmem:[%s3336 + $0x38] sm:$0xff]
      %v3345 = vld [vmem:[%s3336 + $0x40] sm:$0xff]
      %v3346 = vld [vmem:[%s3336 + $0x48] sm:$0xff]
      %v3347 = vld [vmem:[%s3336 + $0x50] sm:$0xff]
      %v3348 = vld [vmem:[%s3336 + $0x58] sm:$0xff]
      %v3349 = vld [vmem:[%s3336 + $0x60] sm:$0xff]
      %v3350 = vld [vmem:[%s3336 + $0x68] sm:$0xff]
      %v3351 = vld [vmem:[%s3336 + $0x70] sm:$0xff]
      %v3352 = vld [vmem:[%s3336 + $0x78] sm:$0xff]
      %s3353 = scalar_lea.vmem %s7, 2
      %v3354 = vld [vmem:[%s3353] sm:$0x1]
      %v3356 = vperm.slane %v3354, 0
      %3358 = vmatpush.msra.mxu0 %v3352
      %3359 = vmatpush.msra.mxu0 %v3351
      %3360 = vmatpush.msra.mxu0 %v3350
      %3361 = vmatpush.msra.mxu0 %v3349
      %3362 = vmatpush.msra.mxu0 %v3348
      %3363 = vmatpush.msra.mxu0 %v3347
      %3364 = vmatpush.msra.mxu0 %v3346
      %3365 = vmatpush.msra.mxu0 %v3345
      %3366 = vmatpush.msra.mxu0 %v3344
      %3367 = vmatpush.msra.mxu0 %v3343
      %3368 = vmatpush.msra.mxu0 %v3342
      %3369 = vmatpush.msra.mxu0 %v3341
      %3370 = vmatpush.msra.mxu0 %v3340
      %3371 = vmatpush.msra.mxu0 %v3339
      %3372 = vmatpush.msra.mxu0 %v3338
      %3373 = vmatpush.msra.mxu0 %v3337
      %3374 = vmatmul.f32.gmra.mxu0 %v3272
      %v3375 = vpop.f32.mrf.mxu0
      %v3376 = vadd.f32 %v3356, %v3375
      %3377 = vmatmul.f32.gmra.mxu0 %v3273
      %v3378 = vpop.f32.mrf.mxu0
      %v3379 = vadd.f32 %v3356, %v3378
      %3380 = vmatmul.f32.gmra.mxu0 %v3274
      %v3381 = vpop.f32.mrf.mxu0
      %v3382 = vadd.f32 %v3356, %v3381
      %3383 = vmatmul.f32.gmra.mxu0 %v3275
      %v3384 = vpop.f32.mrf.mxu0
      %v3385 = vadd.f32 %v3356, %v3384
      %3386 = vmatmul.f32.gmra.mxu0 %v3276
      %v3387 = vpop.f32.mrf.mxu0
      %v3388 = vadd.f32 %v3356, %v3387
      %3389 = vmatmul.f32.gmra.mxu0 %v3277
      %v3390 = vpop.f32.mrf.mxu0
      %v3391 = vadd.f32 %v3356, %v3390
      %3392 = vmatmul.f32.gmra.mxu0 %v3278
      %v3393 = vpop.f32.mrf.mxu0
      %v3394 = vadd.f32 %v3356, %v3393
      %3395 = vmatmul.f32.gmra.mxu0 %v3279
      %v3396 = vpop.f32.mrf.mxu0
      %v3397 = vadd.f32 %v3356, %v3396
      %3398 = vmatmul.f32.gmra.mxu0 %v3280
      %v3399 = vpop.f32.mrf.mxu0
      %v3400 = vadd.f32 %v3356, %v3399
      %3401 = vmatmul.f32.gmra.mxu0 %v3281
      %v3402 = vpop.f32.mrf.mxu0
      %v3403 = vadd.f32 %v3356, %v3402
      %3404 = vmatmul.f32.gmra.mxu0 %v3282
      %v3405 = vpop.f32.mrf.mxu0
      %v3406 = vadd.f32 %v3356, %v3405
      %3407 = vmatmul.f32.gmra.mxu0 %v3283
      %v3408 = vpop.f32.mrf.mxu0
      %v3409 = vadd.f32 %v3356, %v3408
      %3410 = vmatmul.f32.gmra.mxu0 %v3284
      %v3411 = vpop.f32.mrf.mxu0
      %v3412 = vadd.f32 %v3356, %v3411
      %3413 = vmatmul.f32.gmra.mxu0 %v3285
      %v3414 = vpop.f32.mrf.mxu0
      %v3415 = vadd.f32 %v3356, %v3414
      %3416 = vmatmul.f32.gmra.mxu0 %v3286
      %v3417 = vpop.f32.mrf.mxu0
      %v3418 = vadd.f32 %v3356, %v3417
      %3419 = vmatmul.f32.gmra.mxu0 %v3287
      %v3420 = vpop.f32.mrf.mxu0
      %v3421 = vadd.f32 %v3356, %v3420
      %3422 = vmatmul.f32.gmra.mxu0 %v3288
      %v3423 = vpop.f32.mrf.mxu0
      %v3424 = vadd.f32 %v3356, %v3423
      %3425 = vmatmul.f32.gmra.mxu0 %v3289
      %v3426 = vpop.f32.mrf.mxu0
      %v3427 = vadd.f32 %v3356, %v3426
      %3428 = vmatmul.f32.gmra.mxu0 %v3290
      %v3429 = vpop.f32.mrf.mxu0
      %v3430 = vadd.f32 %v3356, %v3429
      %3431 = vmatmul.f32.gmra.mxu0 %v3291
      %v3432 = vpop.f32.mrf.mxu0
      %v3433 = vadd.f32 %v3356, %v3432
      %3434 = vmatmul.f32.gmra.mxu0 %v3292
      %v3435 = vpop.f32.mrf.mxu0
      %v3436 = vadd.f32 %v3356, %v3435
      %3437 = vmatmul.f32.gmra.mxu0 %v3293
      %v3438 = vpop.f32.mrf.mxu0
      %v3439 = vadd.f32 %v3356, %v3438
      %3440 = vmatmul.f32.gmra.mxu0 %v3294
      %v3441 = vpop.f32.mrf.mxu0
      %v3442 = vadd.f32 %v3356, %v3441
      %3443 = vmatmul.f32.gmra.mxu0 %v3295
      %v3444 = vpop.f32.mrf.mxu0
      %v3445 = vadd.f32 %v3356, %v3444
      %3446 = vmatmul.f32.gmra.mxu0 %v3296
      %v3447 = vpop.f32.mrf.mxu0
      %v3448 = vadd.f32 %v3356, %v3447
      %3449 = vmatmul.f32.gmra.mxu0 %v3297
      %v3450 = vpop.f32.mrf.mxu0
      %v3451 = vadd.f32 %v3356, %v3450
      %3452 = vmatmul.f32.gmra.mxu0 %v3298
      %v3453 = vpop.f32.mrf.mxu0
      %v3454 = vadd.f32 %v3356, %v3453
      %3455 = vmatmul.f32.gmra.mxu0 %v3299
      %v3456 = vpop.f32.mrf.mxu0
      %v3457 = vadd.f32 %v3356, %v3456
      %3458 = vmatmul.f32.gmra.mxu0 %v3300
      %v3459 = vpop.f32.mrf.mxu0
      %v3460 = vadd.f32 %v3356, %v3459
      %3461 = vmatmul.f32.gmra.mxu0 %v3301
      %v3462 = vpop.f32.mrf.mxu0
      %v3463 = vadd.f32 %v3356, %v3462
      %3464 = vmatmul.f32.gmra.mxu0 %v3302
      %v3465 = vpop.f32.mrf.mxu0
      %v3466 = vadd.f32 %v3356, %v3465
      %3467 = vmatmul.f32.gmra.mxu0 %v3303
      %v3468 = vpop.f32.mrf.mxu0
      %v3469 = vadd.f32 %v3356, %v3468
      %3470 = vmatmul.f32.gmra.mxu0 %v3304
      %v3471 = vpop.f32.mrf.mxu0
      %v3472 = vadd.f32 %v3356, %v3471
      %3473 = vmatmul.f32.gmra.mxu0 %v3305
      %v3474 = vpop.f32.mrf.mxu0
      %v3475 = vadd.f32 %v3356, %v3474
      %3476 = vmatmul.f32.gmra.mxu0 %v3306
      %v3477 = vpop.f32.mrf.mxu0
      %v3478 = vadd.f32 %v3356, %v3477
      %3479 = vmatmul.f32.gmra.mxu0 %v3307
      %v3480 = vpop.f32.mrf.mxu0
      %v3481 = vadd.f32 %v3356, %v3480
      %3482 = vmatmul.f32.gmra.mxu0 %v3308
      %v3483 = vpop.f32.mrf.mxu0
      %v3484 = vadd.f32 %v3356, %v3483
      %3485 = vmatmul.f32.gmra.mxu0 %v3309
      %v3486 = vpop.f32.mrf.mxu0
      %v3487 = vadd.f32 %v3356, %v3486
      %3488 = vmatmul.f32.gmra.mxu0 %v3310
      %v3489 = vpop.f32.mrf.mxu0
      %v3490 = vadd.f32 %v3356, %v3489
      %3491 = vmatmul.f32.gmra.mxu0 %v3311
      %v3492 = vpop.f32.mrf.mxu0
      %v3493 = vadd.f32 %v3356, %v3492
      %3494 = vmatmul.f32.gmra.mxu0 %v3312
      %v3495 = vpop.f32.mrf.mxu0
      %v3496 = vadd.f32 %v3356, %v3495
      %3497 = vmatmul.f32.gmra.mxu0 %v3313
      %v3498 = vpop.f32.mrf.mxu0
      %v3499 = vadd.f32 %v3356, %v3498
      %3500 = vmatmul.f32.gmra.mxu0 %v3314
      %v3501 = vpop.f32.mrf.mxu0
      %v3502 = vadd.f32 %v3356, %v3501
      %3503 = vmatmul.f32.gmra.mxu0 %v3315
      %v3504 = vpop.f32.mrf.mxu0
      %v3505 = vadd.f32 %v3356, %v3504
      %3506 = vmatmul.f32.gmra.mxu0 %v3316
      %v3507 = vpop.f32.mrf.mxu0
      %v3508 = vadd.f32 %v3356, %v3507
      %3509 = vmatmul.f32.gmra.mxu0 %v3317
      %v3510 = vpop.f32.mrf.mxu0
      %v3511 = vadd.f32 %v3356, %v3510
      %3512 = vmatmul.f32.gmra.mxu0 %v3318
      %v3513 = vpop.f32.mrf.mxu0
      %v3514 = vadd.f32 %v3356, %v3513
      %3515 = vmatmul.f32.gmra.mxu0 %v3319
      %v3516 = vpop.f32.mrf.mxu0
      %v3517 = vadd.f32 %v3356, %v3516
      %3518 = vmatmul.f32.gmra.mxu0 %v3320
      %v3519 = vpop.f32.mrf.mxu0
      %v3520 = vadd.f32 %v3356, %v3519
      %3521 = vmatmul.f32.gmra.mxu0 %v3321
      %v3522 = vpop.f32.mrf.mxu0
      %v3523 = vadd.f32 %v3356, %v3522
      %3524 = vmatmul.f32.gmra.mxu0 %v3322
      %v3525 = vpop.f32.mrf.mxu0
      %v3526 = vadd.f32 %v3356, %v3525
      %3527 = vmatmul.f32.gmra.mxu0 %v3323
      %v3528 = vpop.f32.mrf.mxu0
      %v3529 = vadd.f32 %v3356, %v3528
      %3530 = vmatmul.f32.gmra.mxu0 %v3324
      %v3531 = vpop.f32.mrf.mxu0
      %v3532 = vadd.f32 %v3356, %v3531
      %3533 = vmatmul.f32.gmra.mxu0 %v3325
      %v3534 = vpop.f32.mrf.mxu0
      %v3535 = vadd.f32 %v3356, %v3534
      %3536 = vmatmul.f32.gmra.mxu0 %v3326
      %v3537 = vpop.f32.mrf.mxu0
      %v3538 = vadd.f32 %v3356, %v3537
      %3539 = vmatmul.f32.gmra.mxu0 %v3327
      %v3540 = vpop.f32.mrf.mxu0
      %v3541 = vadd.f32 %v3356, %v3540
      %3542 = vmatmul.f32.gmra.mxu0 %v3328
      %v3543 = vpop.f32.mrf.mxu0
      %v3544 = vadd.f32 %v3356, %v3543
      %3545 = vmatmul.f32.gmra.mxu0 %v3329
      %v3546 = vpop.f32.mrf.mxu0
      %v3547 = vadd.f32 %v3356, %v3546
      %3548 = vmatmul.f32.gmra.mxu0 %v3330
      %v3549 = vpop.f32.mrf.mxu0
      %v3550 = vadd.f32 %v3356, %v3549
      %3551 = vmatmul.f32.gmra.mxu0 %v3331
      %v3552 = vpop.f32.mrf.mxu0
      %v3553 = vadd.f32 %v3356, %v3552
      %3554 = vmatmul.f32.gmra.mxu0 %v3332
      %v3555 = vpop.f32.mrf.mxu0
      %v3556 = vadd.f32 %v3356, %v3555
      %3557 = vmatmul.f32.gmra.mxu0 %v3333
      %v3558 = vpop.f32.mrf.mxu0
      %v3559 = vadd.f32 %v3356, %v3558
      %3560 = vmatmul.f32.gmra.mxu0 %v3334
      %v3561 = vpop.f32.mrf.mxu0
      %v3562 = vadd.f32 %v3356, %v3561
      %3563 = vmatmul.f32.gmra.mxu0 %v3335
      %v3564 = vpop.f32.mrf.mxu0
      %v3565 = vadd.f32 %v3356, %v3564
      %3566 = vdwg.mxu0
      %v3567 = vadd.f32 %v3376, %v2977
      %v3568 = vadd.f32 %v3379, %v2978
      %v3569 = vadd.f32 %v3382, %v2979
      %v3570 = vadd.f32 %v3385, %v2980
      %v3571 = vadd.f32 %v3388, %v2981
      %v3572 = vadd.f32 %v3391, %v2982
      %v3573 = vadd.f32 %v3394, %v2983
      %v3574 = vadd.f32 %v3397, %v2984
      %v3575 = vadd.f32 %v3400, %v2985
      %v3576 = vadd.f32 %v3403, %v2986
      %v3577 = vadd.f32 %v3406, %v2987
      %v3578 = vadd.f32 %v3409, %v2988
      %v3579 = vadd.f32 %v3412, %v2989
      %v3580 = vadd.f32 %v3415, %v2990
      %v3581 = vadd.f32 %v3418, %v2991
      %v3582 = vadd.f32 %v3421, %v2992
      %v3583 = vadd.f32 %v3424, %v2993
      %v3584 = vadd.f32 %v3427, %v2994
      %v3585 = vadd.f32 %v3430, %v2995
      %v3586 = vadd.f32 %v3433, %v2996
      %v3587 = vadd.f32 %v3436, %v2997
      %v3588 = vadd.f32 %v3439, %v2998
      %v3589 = vadd.f32 %v3442, %v2999
      %v3590 = vadd.f32 %v3445, %v3000
      %v3591 = vadd.f32 %v3448, %v3001
      %v3592 = vadd.f32 %v3451, %v3002
      %v3593 = vadd.f32 %v3454, %v3003
      %v3594 = vadd.f32 %v3457, %v3004
      %v3595 = vadd.f32 %v3460, %v3005
      %v3596 = vadd.f32 %v3463, %v3006
      %v3597 = vadd.f32 %v3466, %v3007
      %v3598 = vadd.f32 %v3469, %v3008
      %v3599 = vadd.f32 %v3472, %v3009
      %v3600 = vadd.f32 %v3475, %v3010
      %v3601 = vadd.f32 %v3478, %v3011
      %v3602 = vadd.f32 %v3481, %v3012
      %v3603 = vadd.f32 %v3484, %v3013
      %v3604 = vadd.f32 %v3487, %v3014
      %v3605 = vadd.f32 %v3490, %v3015
      %v3606 = vadd.f32 %v3493, %v3016
      %v3607 = vadd.f32 %v3496, %v3017
      %v3608 = vadd.f32 %v3499, %v3018
      %v3609 = vadd.f32 %v3502, %v3019
      %v3610 = vadd.f32 %v3505, %v3020
      %v3611 = vadd.f32 %v3508, %v3021
      %v3612 = vadd.f32 %v3511, %v3022
      %v3613 = vadd.f32 %v3514, %v3023
      %v3614 = vadd.f32 %v3517, %v3024
      %v3615 = vadd.f32 %v3520, %v3025
      %v3616 = vadd.f32 %v3523, %v3026
      %v3617 = vadd.f32 %v3526, %v3027
      %v3618 = vadd.f32 %v3529, %v3028
      %v3619 = vadd.f32 %v3532, %v3029
      %v3620 = vadd.f32 %v3535, %v3030
      %v3621 = vadd.f32 %v3538, %v3031
      %v3622 = vadd.f32 %v3541, %v3032
      %v3623 = vadd.f32 %v3544, %v3033
      %v3624 = vadd.f32 %v3547, %v3034
      %v3625 = vadd.f32 %v3550, %v3035
      %v3626 = vadd.f32 %v3553, %v3036
      %v3627 = vadd.f32 %v3556, %v3037
      %v3628 = vadd.f32 %v3559, %v3038
      %v3629 = vadd.f32 %v3562, %v3039
      %v3630 = vadd.f32 %v3565, %v3040
      %v3631 = vtanh.pop %v3567
      %v3632 = vtanh.pop %v3568
      %v3633 = vtanh.pop %v3569
      %v3634 = vtanh.pop %v3570
      %v3635 = vtanh.pop %v3571
      %v3636 = vtanh.pop %v3572
      %v3637 = vtanh.pop %v3573
      %v3638 = vtanh.pop %v3574
      %v3639 = vtanh.pop %v3575
      %v3640 = vtanh.pop %v3576
      %v3641 = vtanh.pop %v3577
      %v3642 = vtanh.pop %v3578
      %v3643 = vtanh.pop %v3579
      %v3644 = vtanh.pop %v3580
      %v3645 = vtanh.pop %v3581
      %v3646 = vtanh.pop %v3582
      %v3647 = vtanh.pop %v3583
      %v3648 = vtanh.pop %v3584
      %v3649 = vtanh.pop %v3585
      %v3650 = vtanh.pop %v3586
      %v3651 = vtanh.pop %v3587
      %v3652 = vtanh.pop %v3588
      %v3653 = vtanh.pop %v3589
      %v3654 = vtanh.pop %v3590
      %v3655 = vtanh.pop %v3591
      %v3656 = vtanh.pop %v3592
      %v3657 = vtanh.pop %v3593
      %v3658 = vtanh.pop %v3594
      %v3659 = vtanh.pop %v3595
      %v3660 = vtanh.pop %v3596
      %v3661 = vtanh.pop %v3597
      %v3662 = vtanh.pop %v3598
      %v3663 = vtanh.pop %v3599
      %v3664 = vtanh.pop %v3600
      %v3665 = vtanh.pop %v3601
      %v3666 = vtanh.pop %v3602
      %v3667 = vtanh.pop %v3603
      %v3668 = vtanh.pop %v3604
      %v3669 = vtanh.pop %v3605
      %v3670 = vtanh.pop %v3606
      %v3671 = vtanh.pop %v3607
      %v3672 = vtanh.pop %v3608
      %v3673 = vtanh.pop %v3609
      %v3674 = vtanh.pop %v3610
      %v3675 = vtanh.pop %v3611
      %v3676 = vtanh.pop %v3612
      %v3677 = vtanh.pop %v3613
      %v3678 = vtanh.pop %v3614
      %v3679 = vtanh.pop %v3615
      %v3680 = vtanh.pop %v3616
      %v3681 = vtanh.pop %v3617
      %v3682 = vtanh.pop %v3618
      %v3683 = vtanh.pop %v3619
      %v3684 = vtanh.pop %v3620
      %v3685 = vtanh.pop %v3621
      %v3686 = vtanh.pop %v3622
      %v3687 = vtanh.pop %v3623
      %v3688 = vtanh.pop %v3624
      %v3689 = vtanh.pop %v3625
      %v3690 = vtanh.pop %v3626
      %v3691 = vtanh.pop %v3627
      %v3692 = vtanh.pop %v3628
      %v3693 = vtanh.pop %v3629
      %v3694 = vtanh.pop %v3630
      %s3695 = scalar_lea.vmem %s4, 384
      %v3696 = vld [vmem:[%s3695] sm:$0xff]
      %v3697 = vld [vmem:[%s3695 + $0x8] sm:$0xff]
      %v3698 = vld [vmem:[%s3695 + $0x10] sm:$0xff]
      %v3699 = vld [vmem:[%s3695 + $0x18] sm:$0xff]
      %v3700 = vld [vmem:[%s3695 + $0x20] sm:$0xff]
      %v3701 = vld [vmem:[%s3695 + $0x28] sm:$0xff]
      %v3702 = vld [vmem:[%s3695 + $0x30] sm:$0xff]
      %v3703 = vld [vmem:[%s3695 + $0x38] sm:$0xff]
      %v3704 = vld [vmem:[%s3695 + $0x40] sm:$0xff]
      %v3705 = vld [vmem:[%s3695 + $0x48] sm:$0xff]
      %v3706 = vld [vmem:[%s3695 + $0x50] sm:$0xff]
      %v3707 = vld [vmem:[%s3695 + $0x58] sm:$0xff]
      %v3708 = vld [vmem:[%s3695 + $0x60] sm:$0xff]
      %v3709 = vld [vmem:[%s3695 + $0x68] sm:$0xff]
      %v3710 = vld [vmem:[%s3695 + $0x70] sm:$0xff]
      %v3711 = vld [vmem:[%s3695 + $0x78] sm:$0xff]
      %s3712 = scalar_lea.vmem %s5, 3
      %v3713 = vld [vmem:[%s3712] sm:$0x1]
      %v3715 = vperm.slane %v3713, 0
      %3717 = vmatpush.msra.mxu0 %v3711
      %3718 = vmatpush.msra.mxu0 %v3710
      %3719 = vmatpush.msra.mxu0 %v3709
      %3720 = vmatpush.msra.mxu0 %v3708
      %3721 = vmatpush.msra.mxu0 %v3707
      %3722 = vmatpush.msra.mxu0 %v3706
      %3723 = vmatpush.msra.mxu0 %v3705
      %3724 = vmatpush.msra.mxu0 %v3704
      %3725 = vmatpush.msra.mxu0 %v3703
      %3726 = vmatpush.msra.mxu0 %v3702
      %3727 = vmatpush.msra.mxu0 %v3701
      %3728 = vmatpush.msra.mxu0 %v3700
      %3729 = vmatpush.msra.mxu0 %v3699
      %3730 = vmatpush.msra.mxu0 %v3698
      %3731 = vmatpush.msra.mxu0 %v3697
      %3732 = vmatpush.msra.mxu0 %v3696
      %3733 = vmatmul.f32.gmra.mxu0 %v3631
      %v3734 = vpop.f32.mrf.mxu0
      %v3735 = vadd.f32 %v3715, %v3734
      %3736 = vmatmul.f32.gmra.mxu0 %v3632
      %v3737 = vpop.f32.mrf.mxu0
      %v3738 = vadd.f32 %v3715, %v3737
      %3739 = vmatmul.f32.gmra.mxu0 %v3633
      %v3740 = vpop.f32.mrf.mxu0
      %v3741 = vadd.f32 %v3715, %v3740
      %3742 = vmatmul.f32.gmra.mxu0 %v3634
      %v3743 = vpop.f32.mrf.mxu0
      %v3744 = vadd.f32 %v3715, %v3743
      %3745 = vmatmul.f32.gmra.mxu0 %v3635
      %v3746 = vpop.f32.mrf.mxu0
      %v3747 = vadd.f32 %v3715, %v3746
      %3748 = vmatmul.f32.gmra.mxu0 %v3636
      %v3749 = vpop.f32.mrf.mxu0
      %v3750 = vadd.f32 %v3715, %v3749
      %3751 = vmatmul.f32.gmra.mxu0 %v3637
      %v3752 = vpop.f32.mrf.mxu0
      %v3753 = vadd.f32 %v3715, %v3752
      %3754 = vmatmul.f32.gmra.mxu0 %v3638
      %v3755 = vpop.f32.mrf.mxu0
      %v3756 = vadd.f32 %v3715, %v3755
      %3757 = vmatmul.f32.gmra.mxu0 %v3639
      %v3758 = vpop.f32.mrf.mxu0
      %v3759 = vadd.f32 %v3715, %v3758
      %3760 = vmatmul.f32.gmra.mxu0 %v3640
      %v3761 = vpop.f32.mrf.mxu0
      %v3762 = vadd.f32 %v3715, %v3761
      %3763 = vmatmul.f32.gmra.mxu0 %v3641
      %v3764 = vpop.f32.mrf.mxu0
      %v3765 = vadd.f32 %v3715, %v3764
      %3766 = vmatmul.f32.gmra.mxu0 %v3642
      %v3767 = vpop.f32.mrf.mxu0
      %v3768 = vadd.f32 %v3715, %v3767
      %3769 = vmatmul.f32.gmra.mxu0 %v3643
      %v3770 = vpop.f32.mrf.mxu0
      %v3771 = vadd.f32 %v3715, %v3770
      %3772 = vmatmul.f32.gmra.mxu0 %v3644
      %v3773 = vpop.f32.mrf.mxu0
      %v3774 = vadd.f32 %v3715, %v3773
      %3775 = vmatmul.f32.gmra.mxu0 %v3645
      %v3776 = vpop.f32.mrf.mxu0
      %v3777 = vadd.f32 %v3715, %v3776
      %3778 = vmatmul.f32.gmra.mxu0 %v3646
      %v3779 = vpop.f32.mrf.mxu0
      %v3780 = vadd.f32 %v3715, %v3779
      %3781 = vmatmul.f32.gmra.mxu0 %v3647
      %v3782 = vpop.f32.mrf.mxu0
      %v3783 = vadd.f32 %v3715, %v3782
      %3784 = vmatmul.f32.gmra.mxu0 %v3648
      %v3785 = vpop.f32.mrf.mxu0
      %v3786 = vadd.f32 %v3715, %v3785
      %3787 = vmatmul.f32.gmra.mxu0 %v3649
      %v3788 = vpop.f32.mrf.mxu0
      %v3789 = vadd.f32 %v3715, %v3788
      %3790 = vmatmul.f32.gmra.mxu0 %v3650
      %v3791 = vpop.f32.mrf.mxu0
      %v3792 = vadd.f32 %v3715, %v3791
      %3793 = vmatmul.f32.gmra.mxu0 %v3651
      %v3794 = vpop.f32.mrf.mxu0
      %v3795 = vadd.f32 %v3715, %v3794
      %3796 = vmatmul.f32.gmra.mxu0 %v3652
      %v3797 = vpop.f32.mrf.mxu0
      %v3798 = vadd.f32 %v3715, %v3797
      %3799 = vmatmul.f32.gmra.mxu0 %v3653
      %v3800 = vpop.f32.mrf.mxu0
      %v3801 = vadd.f32 %v3715, %v3800
      %3802 = vmatmul.f32.gmra.mxu0 %v3654
      %v3803 = vpop.f32.mrf.mxu0
      %v3804 = vadd.f32 %v3715, %v3803
      %3805 = vmatmul.f32.gmra.mxu0 %v3655
      %v3806 = vpop.f32.mrf.mxu0
      %v3807 = vadd.f32 %v3715, %v3806
      %3808 = vmatmul.f32.gmra.mxu0 %v3656
      %v3809 = vpop.f32.mrf.mxu0
      %v3810 = vadd.f32 %v3715, %v3809
      %3811 = vmatmul.f32.gmra.mxu0 %v3657
      %v3812 = vpop.f32.mrf.mxu0
      %v3813 = vadd.f32 %v3715, %v3812
      %3814 = vmatmul.f32.gmra.mxu0 %v3658
      %v3815 = vpop.f32.mrf.mxu0
      %v3816 = vadd.f32 %v3715, %v3815
      %3817 = vmatmul.f32.gmra.mxu0 %v3659
      %v3818 = vpop.f32.mrf.mxu0
      %v3819 = vadd.f32 %v3715, %v3818
      %3820 = vmatmul.f32.gmra.mxu0 %v3660
      %v3821 = vpop.f32.mrf.mxu0
      %v3822 = vadd.f32 %v3715, %v3821
      %3823 = vmatmul.f32.gmra.mxu0 %v3661
      %v3824 = vpop.f32.mrf.mxu0
      %v3825 = vadd.f32 %v3715, %v3824
      %3826 = vmatmul.f32.gmra.mxu0 %v3662
      %v3827 = vpop.f32.mrf.mxu0
      %v3828 = vadd.f32 %v3715, %v3827
      %3829 = vmatmul.f32.gmra.mxu0 %v3663
      %v3830 = vpop.f32.mrf.mxu0
      %v3831 = vadd.f32 %v3715, %v3830
      %3832 = vmatmul.f32.gmra.mxu0 %v3664
      %v3833 = vpop.f32.mrf.mxu0
      %v3834 = vadd.f32 %v3715, %v3833
      %3835 = vmatmul.f32.gmra.mxu0 %v3665
      %v3836 = vpop.f32.mrf.mxu0
      %v3837 = vadd.f32 %v3715, %v3836
      %3838 = vmatmul.f32.gmra.mxu0 %v3666
      %v3839 = vpop.f32.mrf.mxu0
      %v3840 = vadd.f32 %v3715, %v3839
      %3841 = vmatmul.f32.gmra.mxu0 %v3667
      %v3842 = vpop.f32.mrf.mxu0
      %v3843 = vadd.f32 %v3715, %v3842
      %3844 = vmatmul.f32.gmra.mxu0 %v3668
      %v3845 = vpop.f32.mrf.mxu0
      %v3846 = vadd.f32 %v3715, %v3845
      %3847 = vmatmul.f32.gmra.mxu0 %v3669
      %v3848 = vpop.f32.mrf.mxu0
      %v3849 = vadd.f32 %v3715, %v3848
      %3850 = vmatmul.f32.gmra.mxu0 %v3670
      %v3851 = vpop.f32.mrf.mxu0
      %v3852 = vadd.f32 %v3715, %v3851
      %3853 = vmatmul.f32.gmra.mxu0 %v3671
      %v3854 = vpop.f32.mrf.mxu0
      %v3855 = vadd.f32 %v3715, %v3854
      %3856 = vmatmul.f32.gmra.mxu0 %v3672
      %v3857 = vpop.f32.mrf.mxu0
      %v3858 = vadd.f32 %v3715, %v3857
      %3859 = vmatmul.f32.gmra.mxu0 %v3673
      %v3860 = vpop.f32.mrf.mxu0
      %v3861 = vadd.f32 %v3715, %v3860
      %3862 = vmatmul.f32.gmra.mxu0 %v3674
      %v3863 = vpop.f32.mrf.mxu0
      %v3864 = vadd.f32 %v3715, %v3863
      %3865 = vmatmul.f32.gmra.mxu0 %v3675
      %v3866 = vpop.f32.mrf.mxu0
      %v3867 = vadd.f32 %v3715, %v3866
      %3868 = vmatmul.f32.gmra.mxu0 %v3676
      %v3869 = vpop.f32.mrf.mxu0
      %v3870 = vadd.f32 %v3715, %v3869
      %3871 = vmatmul.f32.gmra.mxu0 %v3677
      %v3872 = vpop.f32.mrf.mxu0
      %v3873 = vadd.f32 %v3715, %v3872
      %3874 = vmatmul.f32.gmra.mxu0 %v3678
      %v3875 = vpop.f32.mrf.mxu0
      %v3876 = vadd.f32 %v3715, %v3875
      %3877 = vmatmul.f32.gmra.mxu0 %v3679
      %v3878 = vpop.f32.mrf.mxu0
      %v3879 = vadd.f32 %v3715, %v3878
      %3880 = vmatmul.f32.gmra.mxu0 %v3680
      %v3881 = vpop.f32.mrf.mxu0
      %v3882 = vadd.f32 %v3715, %v3881
      %3883 = vmatmul.f32.gmra.mxu0 %v3681
      %v3884 = vpop.f32.mrf.mxu0
      %v3885 = vadd.f32 %v3715, %v3884
      %3886 = vmatmul.f32.gmra.mxu0 %v3682
      %v3887 = vpop.f32.mrf.mxu0
      %v3888 = vadd.f32 %v3715, %v3887
      %3889 = vmatmul.f32.gmra.mxu0 %v3683
      %v3890 = vpop.f32.mrf.mxu0
      %v3891 = vadd.f32 %v3715, %v3890
      %3892 = vmatmul.f32.gmra.mxu0 %v3684
      %v3893 = vpop.f32.mrf.mxu0
      %v3894 = vadd.f32 %v3715, %v3893
      %3895 = vmatmul.f32.gmra.mxu0 %v3685
      %v3896 = vpop.f32.mrf.mxu0
      %v3897 = vadd.f32 %v3715, %v3896
      %3898 = vmatmul.f32.gmra.mxu0 %v3686
      %v3899 = vpop.f32.mrf.mxu0
      %v3900 = vadd.f32 %v3715, %v3899
      %3901 = vmatmul.f32.gmra.mxu0 %v3687
      %v3902 = vpop.f32.mrf.mxu0
      %v3903 = vadd.f32 %v3715, %v3902
      %3904 = vmatmul.f32.gmra.mxu0 %v3688
      %v3905 = vpop.f32.mrf.mxu0
      %v3906 = vadd.f32 %v3715, %v3905
      %3907 = vmatmul.f32.gmra.mxu0 %v3689
      %v3908 = vpop.f32.mrf.mxu0
      %v3909 = vadd.f32 %v3715, %v3908
      %3910 = vmatmul.f32.gmra.mxu0 %v3690
      %v3911 = vpop.f32.mrf.mxu0
      %v3912 = vadd.f32 %v3715, %v3911
      %3913 = vmatmul.f32.gmra.mxu0 %v3691
      %v3914 = vpop.f32.mrf.mxu0
      %v3915 = vadd.f32 %v3715, %v3914
      %3916 = vmatmul.f32.gmra.mxu0 %v3692
      %v3917 = vpop.f32.mrf.mxu0
      %v3918 = vadd.f32 %v3715, %v3917
      %3919 = vmatmul.f32.gmra.mxu0 %v3693
      %v3920 = vpop.f32.mrf.mxu0
      %v3921 = vadd.f32 %v3715, %v3920
      %3922 = vmatmul.f32.gmra.mxu0 %v3694
      %v3923 = vpop.f32.mrf.mxu0
      %v3924 = vadd.f32 %v3715, %v3923
      %3925 = vdwg.mxu0
      %v3926 = vtanh.pop %v3735
      %v3927 = vtanh.pop %v3738
      %v3928 = vtanh.pop %v3741
      %v3929 = vtanh.pop %v3744
      %v3930 = vtanh.pop %v3747
      %v3931 = vtanh.pop %v3750
      %v3932 = vtanh.pop %v3753
      %v3933 = vtanh.pop %v3756
      %v3934 = vtanh.pop %v3759
      %v3935 = vtanh.pop %v3762
      %v3936 = vtanh.pop %v3765
      %v3937 = vtanh.pop %v3768
      %v3938 = vtanh.pop %v3771
      %v3939 = vtanh.pop %v3774
      %v3940 = vtanh.pop %v3777
      %v3941 = vtanh.pop %v3780
      %v3942 = vtanh.pop %v3783
      %v3943 = vtanh.pop %v3786
      %v3944 = vtanh.pop %v3789
      %v3945 = vtanh.pop %v3792
      %v3946 = vtanh.pop %v3795
      %v3947 = vtanh.pop %v3798
      %v3948 = vtanh.pop %v3801
      %v3949 = vtanh.pop %v3804
      %v3950 = vtanh.pop %v3807
      %v3951 = vtanh.pop %v3810
      %v3952 = vtanh.pop %v3813
      %v3953 = vtanh.pop %v3816
      %v3954 = vtanh.pop %v3819
      %v3955 = vtanh.pop %v3822
      %v3956 = vtanh.pop %v3825
      %v3957 = vtanh.pop %v3828
      %v3958 = vtanh.pop %v3831
      %v3959 = vtanh.pop %v3834
      %v3960 = vtanh.pop %v3837
      %v3961 = vtanh.pop %v3840
      %v3962 = vtanh.pop %v3843
      %v3963 = vtanh.pop %v3846
      %v3964 = vtanh.pop %v3849
      %v3965 = vtanh.pop %v3852
      %v3966 = vtanh.pop %v3855
      %v3967 = vtanh.pop %v3858
      %v3968 = vtanh.pop %v3861
      %v3969 = vtanh.pop %v3864
      %v3970 = vtanh.pop %v3867
      %v3971 = vtanh.pop %v3870
      %v3972 = vtanh.pop %v3873
      %v3973 = vtanh.pop %v3876
      %v3974 = vtanh.pop %v3879
      %v3975 = vtanh.pop %v3882
      %v3976 = vtanh.pop %v3885
      %v3977 = vtanh.pop %v3888
      %v3978 = vtanh.pop %v3891
      %v3979 = vtanh.pop %v3894
      %v3980 = vtanh.pop %v3897
      %v3981 = vtanh.pop %v3900
      %v3982 = vtanh.pop %v3903
      %v3983 = vtanh.pop %v3906
      %v3984 = vtanh.pop %v3909
      %v3985 = vtanh.pop %v3912
      %v3986 = vtanh.pop %v3915
      %v3987 = vtanh.pop %v3918
      %v3988 = vtanh.pop %v3921
      %v3989 = vtanh.pop %v3924
      %s3990 = scalar_lea.vmem %s6, 384
      %v3991 = vld [vmem:[%s3990] sm:$0xff]
      %v3992 = vld [vmem:[%s3990 + $0x8] sm:$0xff]
      %v3993 = vld [vmem:[%s3990 + $0x10] sm:$0xff]
      %v3994 = vld [vmem:[%s3990 + $0x18] sm:$0xff]
      %v3995 = vld [vmem:[%s3990 + $0x20] sm:$0xff]
      %v3996 = vld [vmem:[%s3990 + $0x28] sm:$0xff]
      %v3997 = vld [vmem:[%s3990 + $0x30] sm:$0xff]
      %v3998 = vld [vmem:[%s3990 + $0x38] sm:$0xff]
      %v3999 = vld [vmem:[%s3990 + $0x40] sm:$0xff]
      %v4000 = vld [vmem:[%s3990 + $0x48] sm:$0xff]
      %v4001 = vld [vmem:[%s3990 + $0x50] sm:$0xff]
      %v4002 = vld [vmem:[%s3990 + $0x58] sm:$0xff]
      %v4003 = vld [vmem:[%s3990 + $0x60] sm:$0xff]
      %v4004 = vld [vmem:[%s3990 + $0x68] sm:$0xff]
      %v4005 = vld [vmem:[%s3990 + $0x70] sm:$0xff]
      %v4006 = vld [vmem:[%s3990 + $0x78] sm:$0xff]
      %s4007 = scalar_lea.vmem %s7, 3
      %v4008 = vld [vmem:[%s4007] sm:$0x1]
      %v4010 = vperm.slane %v4008, 0
      %4012 = vmatpush.msra.mxu0 %v4006
      %4013 = vmatpush.msra.mxu0 %v4005
      %4014 = vmatpush.msra.mxu0 %v4004
      %4015 = vmatpush.msra.mxu0 %v4003
      %4016 = vmatpush.msra.mxu0 %v4002
      %4017 = vmatpush.msra.mxu0 %v4001
      %4018 = vmatpush.msra.mxu0 %v4000
      %4019 = vmatpush.msra.mxu0 %v3999
      %4020 = vmatpush.msra.mxu0 %v3998
      %4021 = vmatpush.msra.mxu0 %v3997
      %4022 = vmatpush.msra.mxu0 %v3996
      %4023 = vmatpush.msra.mxu0 %v3995
      %4024 = vmatpush.msra.mxu0 %v3994
      %4025 = vmatpush.msra.mxu0 %v3993
      %4026 = vmatpush.msra.mxu0 %v3992
      %4027 = vmatpush.msra.mxu0 %v3991
      %4028 = vmatmul.f32.gmra.mxu0 %v3926
      %v4029 = vpop.f32.mrf.mxu0
      %v4030 = vadd.f32 %v4010, %v4029
      %4031 = vmatmul.f32.gmra.mxu0 %v3927
      %v4032 = vpop.f32.mrf.mxu0
      %v4033 = vadd.f32 %v4010, %v4032
      %4034 = vmatmul.f32.gmra.mxu0 %v3928
      %v4035 = vpop.f32.mrf.mxu0
      %v4036 = vadd.f32 %v4010, %v4035
      %4037 = vmatmul.f32.gmra.mxu0 %v3929
      %v4038 = vpop.f32.mrf.mxu0
      %v4039 = vadd.f32 %v4010, %v4038
      %4040 = vmatmul.f32.gmra.mxu0 %v3930
      %v4041 = vpop.f32.mrf.mxu0
      %v4042 = vadd.f32 %v4010, %v4041
      %4043 = vmatmul.f32.gmra.mxu0 %v3931
      %v4044 = vpop.f32.mrf.mxu0
      %v4045 = vadd.f32 %v4010, %v4044
      %4046 = vmatmul.f32.gmra.mxu0 %v3932
      %v4047 = vpop.f32.mrf.mxu0
      %v4048 = vadd.f32 %v4010, %v4047
      %4049 = vmatmul.f32.gmra.mxu0 %v3933
      %v4050 = vpop.f32.mrf.mxu0
      %v4051 = vadd.f32 %v4010, %v4050
      %4052 = vmatmul.f32.gmra.mxu0 %v3934
      %v4053 = vpop.f32.mrf.mxu0
      %v4054 = vadd.f32 %v4010, %v4053
      %4055 = vmatmul.f32.gmra.mxu0 %v3935
      %v4056 = vpop.f32.mrf.mxu0
      %v4057 = vadd.f32 %v4010, %v4056
      %4058 = vmatmul.f32.gmra.mxu0 %v3936
      %v4059 = vpop.f32.mrf.mxu0
      %v4060 = vadd.f32 %v4010, %v4059
      %4061 = vmatmul.f32.gmra.mxu0 %v3937
      %v4062 = vpop.f32.mrf.mxu0
      %v4063 = vadd.f32 %v4010, %v4062
      %4064 = vmatmul.f32.gmra.mxu0 %v3938
      %v4065 = vpop.f32.mrf.mxu0
      %v4066 = vadd.f32 %v4010, %v4065
      %4067 = vmatmul.f32.gmra.mxu0 %v3939
      %v4068 = vpop.f32.mrf.mxu0
      %v4069 = vadd.f32 %v4010, %v4068
      %4070 = vmatmul.f32.gmra.mxu0 %v3940
      %v4071 = vpop.f32.mrf.mxu0
      %v4072 = vadd.f32 %v4010, %v4071
      %4073 = vmatmul.f32.gmra.mxu0 %v3941
      %v4074 = vpop.f32.mrf.mxu0
      %v4075 = vadd.f32 %v4010, %v4074
      %4076 = vmatmul.f32.gmra.mxu0 %v3942
      %v4077 = vpop.f32.mrf.mxu0
      %v4078 = vadd.f32 %v4010, %v4077
      %4079 = vmatmul.f32.gmra.mxu0 %v3943
      %v4080 = vpop.f32.mrf.mxu0
      %v4081 = vadd.f32 %v4010, %v4080
      %4082 = vmatmul.f32.gmra.mxu0 %v3944
      %v4083 = vpop.f32.mrf.mxu0
      %v4084 = vadd.f32 %v4010, %v4083
      %4085 = vmatmul.f32.gmra.mxu0 %v3945
      %v4086 = vpop.f32.mrf.mxu0
      %v4087 = vadd.f32 %v4010, %v4086
      %4088 = vmatmul.f32.gmra.mxu0 %v3946
      %v4089 = vpop.f32.mrf.mxu0
      %v4090 = vadd.f32 %v4010, %v4089
      %4091 = vmatmul.f32.gmra.mxu0 %v3947
      %v4092 = vpop.f32.mrf.mxu0
      %v4093 = vadd.f32 %v4010, %v4092
      %4094 = vmatmul.f32.gmra.mxu0 %v3948
      %v4095 = vpop.f32.mrf.mxu0
      %v4096 = vadd.f32 %v4010, %v4095
      %4097 = vmatmul.f32.gmra.mxu0 %v3949
      %v4098 = vpop.f32.mrf.mxu0
      %v4099 = vadd.f32 %v4010, %v4098
      %4100 = vmatmul.f32.gmra.mxu0 %v3950
      %v4101 = vpop.f32.mrf.mxu0
      %v4102 = vadd.f32 %v4010, %v4101
      %4103 = vmatmul.f32.gmra.mxu0 %v3951
      %v4104 = vpop.f32.mrf.mxu0
      %v4105 = vadd.f32 %v4010, %v4104
      %4106 = vmatmul.f32.gmra.mxu0 %v3952
      %v4107 = vpop.f32.mrf.mxu0
      %v4108 = vadd.f32 %v4010, %v4107
      %4109 = vmatmul.f32.gmra.mxu0 %v3953
      %v4110 = vpop.f32.mrf.mxu0
      %v4111 = vadd.f32 %v4010, %v4110
      %4112 = vmatmul.f32.gmra.mxu0 %v3954
      %v4113 = vpop.f32.mrf.mxu0
      %v4114 = vadd.f32 %v4010, %v4113
      %4115 = vmatmul.f32.gmra.mxu0 %v3955
      %v4116 = vpop.f32.mrf.mxu0
      %v4117 = vadd.f32 %v4010, %v4116
      %4118 = vmatmul.f32.gmra.mxu0 %v3956
      %v4119 = vpop.f32.mrf.mxu0
      %v4120 = vadd.f32 %v4010, %v4119
      %4121 = vmatmul.f32.gmra.mxu0 %v3957
      %v4122 = vpop.f32.mrf.mxu0
      %v4123 = vadd.f32 %v4010, %v4122
      %4124 = vmatmul.f32.gmra.mxu0 %v3958
      %v4125 = vpop.f32.mrf.mxu0
      %v4126 = vadd.f32 %v4010, %v4125
      %4127 = vmatmul.f32.gmra.mxu0 %v3959
      %v4128 = vpop.f32.mrf.mxu0
      %v4129 = vadd.f32 %v4010, %v4128
      %4130 = vmatmul.f32.gmra.mxu0 %v3960
      %v4131 = vpop.f32.mrf.mxu0
      %v4132 = vadd.f32 %v4010, %v4131
      %4133 = vmatmul.f32.gmra.mxu0 %v3961
      %v4134 = vpop.f32.mrf.mxu0
      %v4135 = vadd.f32 %v4010, %v4134
      %4136 = vmatmul.f32.gmra.mxu0 %v3962
      %v4137 = vpop.f32.mrf.mxu0
      %v4138 = vadd.f32 %v4010, %v4137
      %4139 = vmatmul.f32.gmra.mxu0 %v3963
      %v4140 = vpop.f32.mrf.mxu0
      %v4141 = vadd.f32 %v4010, %v4140
      %4142 = vmatmul.f32.gmra.mxu0 %v3964
      %v4143 = vpop.f32.mrf.mxu0
      %v4144 = vadd.f32 %v4010, %v4143
      %4145 = vmatmul.f32.gmra.mxu0 %v3965
      %v4146 = vpop.f32.mrf.mxu0
      %v4147 = vadd.f32 %v4010, %v4146
      %4148 = vmatmul.f32.gmra.mxu0 %v3966
      %v4149 = vpop.f32.mrf.mxu0
      %v4150 = vadd.f32 %v4010, %v4149
      %4151 = vmatmul.f32.gmra.mxu0 %v3967
      %v4152 = vpop.f32.mrf.mxu0
      %v4153 = vadd.f32 %v4010, %v4152
      %4154 = vmatmul.f32.gmra.mxu0 %v3968
      %v4155 = vpop.f32.mrf.mxu0
      %v4156 = vadd.f32 %v4010, %v4155
      %4157 = vmatmul.f32.gmra.mxu0 %v3969
      %v4158 = vpop.f32.mrf.mxu0
      %v4159 = vadd.f32 %v4010, %v4158
      %4160 = vmatmul.f32.gmra.mxu0 %v3970
      %v4161 = vpop.f32.mrf.mxu0
      %v4162 = vadd.f32 %v4010, %v4161
      %4163 = vmatmul.f32.gmra.mxu0 %v3971
      %v4164 = vpop.f32.mrf.mxu0
      %v4165 = vadd.f32 %v4010, %v4164
      %4166 = vmatmul.f32.gmra.mxu0 %v3972
      %v4167 = vpop.f32.mrf.mxu0
      %v4168 = vadd.f32 %v4010, %v4167
      %4169 = vmatmul.f32.gmra.mxu0 %v3973
      %v4170 = vpop.f32.mrf.mxu0
      %v4171 = vadd.f32 %v4010, %v4170
      %4172 = vmatmul.f32.gmra.mxu0 %v3974
      %v4173 = vpop.f32.mrf.mxu0
      %v4174 = vadd.f32 %v4010, %v4173
      %4175 = vmatmul.f32.gmra.mxu0 %v3975
      %v4176 = vpop.f32.mrf.mxu0
      %v4177 = vadd.f32 %v4010, %v4176
      %4178 = vmatmul.f32.gmra.mxu0 %v3976
      %v4179 = vpop.f32.mrf.mxu0
      %v4180 = vadd.f32 %v4010, %v4179
      %4181 = vmatmul.f32.gmra.mxu0 %v3977
      %v4182 = vpop.f32.mrf.mxu0
      %v4183 = vadd.f32 %v4010, %v4182
      %4184 = vmatmul.f32.gmra.mxu0 %v3978
      %v4185 = vpop.f32.mrf.mxu0
      %v4186 = vadd.f32 %v4010, %v4185
      %4187 = vmatmul.f32.gmra.mxu0 %v3979
      %v4188 = vpop.f32.mrf.mxu0
      %v4189 = vadd.f32 %v4010, %v4188
      %4190 = vmatmul.f32.gmra.mxu0 %v3980
      %v4191 = vpop.f32.mrf.mxu0
      %v4192 = vadd.f32 %v4010, %v4191
      %4193 = vmatmul.f32.gmra.mxu0 %v3981
      %v4194 = vpop.f32.mrf.mxu0
      %v4195 = vadd.f32 %v4010, %v4194
      %4196 = vmatmul.f32.gmra.mxu0 %v3982
      %v4197 = vpop.f32.mrf.mxu0
      %v4198 = vadd.f32 %v4010, %v4197
      %4199 = vmatmul.f32.gmra.mxu0 %v3983
      %v4200 = vpop.f32.mrf.mxu0
      %v4201 = vadd.f32 %v4010, %v4200
      %4202 = vmatmul.f32.gmra.mxu0 %v3984
      %v4203 = vpop.f32.mrf.mxu0
      %v4204 = vadd.f32 %v4010, %v4203
      %4205 = vmatmul.f32.gmra.mxu0 %v3985
      %v4206 = vpop.f32.mrf.mxu0
      %v4207 = vadd.f32 %v4010, %v4206
      %4208 = vmatmul.f32.gmra.mxu0 %v3986
      %v4209 = vpop.f32.mrf.mxu0
      %v4210 = vadd.f32 %v4010, %v4209
      %4211 = vmatmul.f32.gmra.mxu0 %v3987
      %v4212 = vpop.f32.mrf.mxu0
      %v4213 = vadd.f32 %v4010, %v4212
      %4214 = vmatmul.f32.gmra.mxu0 %v3988
      %v4215 = vpop.f32.mrf.mxu0
      %v4216 = vadd.f32 %v4010, %v4215
      %4217 = vmatmul.f32.gmra.mxu0 %v3989
      %v4218 = vpop.f32.mrf.mxu0
      %v4219 = vadd.f32 %v4010, %v4218
      %4220 = vdwg.mxu0
      %v4221 = vadd.f32 %v4030, %v3631
      %v4222 = vadd.f32 %v4033, %v3632
      %v4223 = vadd.f32 %v4036, %v3633
      %v4224 = vadd.f32 %v4039, %v3634
      %v4225 = vadd.f32 %v4042, %v3635
      %v4226 = vadd.f32 %v4045, %v3636
      %v4227 = vadd.f32 %v4048, %v3637
      %v4228 = vadd.f32 %v4051, %v3638
      %v4229 = vadd.f32 %v4054, %v3639
      %v4230 = vadd.f32 %v4057, %v3640
      %v4231 = vadd.f32 %v4060, %v3641
      %v4232 = vadd.f32 %v4063, %v3642
      %v4233 = vadd.f32 %v4066, %v3643
      %v4234 = vadd.f32 %v4069, %v3644
      %v4235 = vadd.f32 %v4072, %v3645
      %v4236 = vadd.f32 %v4075, %v3646
      %v4237 = vadd.f32 %v4078, %v3647
      %v4238 = vadd.f32 %v4081, %v3648
      %v4239 = vadd.f32 %v4084, %v3649
      %v4240 = vadd.f32 %v4087, %v3650
      %v4241 = vadd.f32 %v4090, %v3651
      %v4242 = vadd.f32 %v4093, %v3652
      %v4243 = vadd.f32 %v4096, %v3653
      %v4244 = vadd.f32 %v4099, %v3654
      %v4245 = vadd.f32 %v4102, %v3655
      %v4246 = vadd.f32 %v4105, %v3656
      %v4247 = vadd.f32 %v4108, %v3657
      %v4248 = vadd.f32 %v4111, %v3658
      %v4249 = vadd.f32 %v4114, %v3659
      %v4250 = vadd.f32 %v4117, %v3660
      %v4251 = vadd.f32 %v4120, %v3661
      %v4252 = vadd.f32 %v4123, %v3662
      %v4253 = vadd.f32 %v4126, %v3663
      %v4254 = vadd.f32 %v4129, %v3664
      %v4255 = vadd.f32 %v4132, %v3665
      %v4256 = vadd.f32 %v4135, %v3666
      %v4257 = vadd.f32 %v4138, %v3667
      %v4258 = vadd.f32 %v4141, %v3668
      %v4259 = vadd.f32 %v4144, %v3669
      %v4260 = vadd.f32 %v4147, %v3670
      %v4261 = vadd.f32 %v4150, %v3671
      %v4262 = vadd.f32 %v4153, %v3672
      %v4263 = vadd.f32 %v4156, %v3673
      %v4264 = vadd.f32 %v4159, %v3674
      %v4265 = vadd.f32 %v4162, %v3675
      %v4266 = vadd.f32 %v4165, %v3676
      %v4267 = vadd.f32 %v4168, %v3677
      %v4268 = vadd.f32 %v4171, %v3678
      %v4269 = vadd.f32 %v4174, %v3679
      %v4270 = vadd.f32 %v4177, %v3680
      %v4271 = vadd.f32 %v4180, %v3681
      %v4272 = vadd.f32 %v4183, %v3682
      %v4273 = vadd.f32 %v4186, %v3683
      %v4274 = vadd.f32 %v4189, %v3684
      %v4275 = vadd.f32 %v4192, %v3685
      %v4276 = vadd.f32 %v4195, %v3686
      %v4277 = vadd.f32 %v4198, %v3687
      %v4278 = vadd.f32 %v4201, %v3688
      %v4279 = vadd.f32 %v4204, %v3689
      %v4280 = vadd.f32 %v4207, %v3690
      %v4281 = vadd.f32 %v4210, %v3691
      %v4282 = vadd.f32 %v4213, %v3692
      %v4283 = vadd.f32 %v4216, %v3693
      %v4284 = vadd.f32 %v4219, %v3694
      %v4285 = vtanh.pop %v4221
      %v4286 = vtanh.pop %v4222
      %v4287 = vtanh.pop %v4223
      %v4288 = vtanh.pop %v4224
      %v4289 = vtanh.pop %v4225
      %v4290 = vtanh.pop %v4226
      %v4291 = vtanh.pop %v4227
      %v4292 = vtanh.pop %v4228
      %v4293 = vtanh.pop %v4229
      %v4294 = vtanh.pop %v4230
      %v4295 = vtanh.pop %v4231
      %v4296 = vtanh.pop %v4232
      %v4297 = vtanh.pop %v4233
      %v4298 = vtanh.pop %v4234
      %v4299 = vtanh.pop %v4235
      %v4300 = vtanh.pop %v4236
      %v4301 = vtanh.pop %v4237
      %v4302 = vtanh.pop %v4238
      %v4303 = vtanh.pop %v4239
      %v4304 = vtanh.pop %v4240
      %v4305 = vtanh.pop %v4241
      %v4306 = vtanh.pop %v4242
      %v4307 = vtanh.pop %v4243
      %v4308 = vtanh.pop %v4244
      %v4309 = vtanh.pop %v4245
      %v4310 = vtanh.pop %v4246
      %v4311 = vtanh.pop %v4247
      %v4312 = vtanh.pop %v4248
      %v4313 = vtanh.pop %v4249
      %v4314 = vtanh.pop %v4250
      %v4315 = vtanh.pop %v4251
      %v4316 = vtanh.pop %v4252
      %v4317 = vtanh.pop %v4253
      %v4318 = vtanh.pop %v4254
      %v4319 = vtanh.pop %v4255
      %v4320 = vtanh.pop %v4256
      %v4321 = vtanh.pop %v4257
      %v4322 = vtanh.pop %v4258
      %v4323 = vtanh.pop %v4259
      %v4324 = vtanh.pop %v4260
      %v4325 = vtanh.pop %v4261
      %v4326 = vtanh.pop %v4262
      %v4327 = vtanh.pop %v4263
      %v4328 = vtanh.pop %v4264
      %v4329 = vtanh.pop %v4265
      %v4330 = vtanh.pop %v4266
      %v4331 = vtanh.pop %v4267
      %v4332 = vtanh.pop %v4268
      %v4333 = vtanh.pop %v4269
      %v4334 = vtanh.pop %v4270
      %v4335 = vtanh.pop %v4271
      %v4336 = vtanh.pop %v4272
      %v4337 = vtanh.pop %v4273
      %v4338 = vtanh.pop %v4274
      %v4339 = vtanh.pop %v4275
      %v4340 = vtanh.pop %v4276
      %v4341 = vtanh.pop %v4277
      %v4342 = vtanh.pop %v4278
      %v4343 = vtanh.pop %v4279
      %v4344 = vtanh.pop %v4280
      %v4345 = vtanh.pop %v4281
      %v4346 = vtanh.pop %v4282
      %v4347 = vtanh.pop %v4283
      %v4348 = vtanh.pop %v4284
      %s4349 = scalar_lea.vmem %s4, 512
      %v4350 = vld [vmem:[%s4349] sm:$0xff]
      %v4351 = vld [vmem:[%s4349 + $0x8] sm:$0xff]
      %v4352 = vld [vmem:[%s4349 + $0x10] sm:$0xff]
      %v4353 = vld [vmem:[%s4349 + $0x18] sm:$0xff]
      %v4354 = vld [vmem:[%s4349 + $0x20] sm:$0xff]
      %v4355 = vld [vmem:[%s4349 + $0x28] sm:$0xff]
      %v4356 = vld [vmem:[%s4349 + $0x30] sm:$0xff]
      %v4357 = vld [vmem:[%s4349 + $0x38] sm:$0xff]
      %v4358 = vld [vmem:[%s4349 + $0x40] sm:$0xff]
      %v4359 = vld [vmem:[%s4349 + $0x48] sm:$0xff]
      %v4360 = vld [vmem:[%s4349 + $0x50] sm:$0xff]
      %v4361 = vld [vmem:[%s4349 + $0x58] sm:$0xff]
      %v4362 = vld [vmem:[%s4349 + $0x60] sm:$0xff]
      %v4363 = vld [vmem:[%s4349 + $0x68] sm:$0xff]
      %v4364 = vld [vmem:[%s4349 + $0x70] sm:$0xff]
      %v4365 = vld [vmem:[%s4349 + $0x78] sm:$0xff]
      %s4366 = scalar_lea.vmem %s5, 4
      %v4367 = vld [vmem:[%s4366] sm:$0x1]
      %v4369 = vperm.slane %v4367, 0
      %4371 = vmatpush.msra.mxu0 %v4365
      %4372 = vmatpush.msra.mxu0 %v4364
      %4373 = vmatpush.msra.mxu0 %v4363
      %4374 = vmatpush.msra.mxu0 %v4362
      %4375 = vmatpush.msra.mxu0 %v4361
      %4376 = vmatpush.msra.mxu0 %v4360
      %4377 = vmatpush.msra.mxu0 %v4359
      %4378 = vmatpush.msra.mxu0 %v4358
      %4379 = vmatpush.msra.mxu0 %v4357
      %4380 = vmatpush.msra.mxu0 %v4356
      %4381 = vmatpush.msra.mxu0 %v4355
      %4382 = vmatpush.msra.mxu0 %v4354
      %4383 = vmatpush.msra.mxu0 %v4353
      %4384 = vmatpush.msra.mxu0 %v4352
      %4385 = vmatpush.msra.mxu0 %v4351
      %4386 = vmatpush.msra.mxu0 %v4350
      %4387 = vmatmul.f32.gmra.mxu0 %v4285
      %v4388 = vpop.f32.mrf.mxu0
      %v4389 = vadd.f32 %v4369, %v4388
      %4390 = vmatmul.f32.gmra.mxu0 %v4286
      %v4391 = vpop.f32.mrf.mxu0
      %v4392 = vadd.f32 %v4369, %v4391
      %4393 = vmatmul.f32.gmra.mxu0 %v4287
      %v4394 = vpop.f32.mrf.mxu0
      %v4395 = vadd.f32 %v4369, %v4394
      %4396 = vmatmul.f32.gmra.mxu0 %v4288
      %v4397 = vpop.f32.mrf.mxu0
      %v4398 = vadd.f32 %v4369, %v4397
      %4399 = vmatmul.f32.gmra.mxu0 %v4289
      %v4400 = vpop.f32.mrf.mxu0
      %v4401 = vadd.f32 %v4369, %v4400
      %4402 = vmatmul.f32.gmra.mxu0 %v4290
      %v4403 = vpop.f32.mrf.mxu0
      %v4404 = vadd.f32 %v4369, %v4403
      %4405 = vmatmul.f32.gmra.mxu0 %v4291
      %v4406 = vpop.f32.mrf.mxu0
      %v4407 = vadd.f32 %v4369, %v4406
      %4408 = vmatmul.f32.gmra.mxu0 %v4292
      %v4409 = vpop.f32.mrf.mxu0
      %v4410 = vadd.f32 %v4369, %v4409
      %4411 = vmatmul.f32.gmra.mxu0 %v4293
      %v4412 = vpop.f32.mrf.mxu0
      %v4413 = vadd.f32 %v4369, %v4412
      %4414 = vmatmul.f32.gmra.mxu0 %v4294
      %v4415 = vpop.f32.mrf.mxu0
      %v4416 = vadd.f32 %v4369, %v4415
      %4417 = vmatmul.f32.gmra.mxu0 %v4295
      %v4418 = vpop.f32.mrf.mxu0
      %v4419 = vadd.f32 %v4369, %v4418
      %4420 = vmatmul.f32.gmra.mxu0 %v4296
      %v4421 = vpop.f32.mrf.mxu0
      %v4422 = vadd.f32 %v4369, %v4421
      %4423 = vmatmul.f32.gmra.mxu0 %v4297
      %v4424 = vpop.f32.mrf.mxu0
      %v4425 = vadd.f32 %v4369, %v4424
      %4426 = vmatmul.f32.gmra.mxu0 %v4298
      %v4427 = vpop.f32.mrf.mxu0
      %v4428 = vadd.f32 %v4369, %v4427
      %4429 = vmatmul.f32.gmra.mxu0 %v4299
      %v4430 = vpop.f32.mrf.mxu0
      %v4431 = vadd.f32 %v4369, %v4430
      %4432 = vmatmul.f32.gmra.mxu0 %v4300
      %v4433 = vpop.f32.mrf.mxu0
      %v4434 = vadd.f32 %v4369, %v4433
      %4435 = vmatmul.f32.gmra.mxu0 %v4301
      %v4436 = vpop.f32.mrf.mxu0
      %v4437 = vadd.f32 %v4369, %v4436
      %4438 = vmatmul.f32.gmra.mxu0 %v4302
      %v4439 = vpop.f32.mrf.mxu0
      %v4440 = vadd.f32 %v4369, %v4439
      %4441 = vmatmul.f32.gmra.mxu0 %v4303
      %v4442 = vpop.f32.mrf.mxu0
      %v4443 = vadd.f32 %v4369, %v4442
      %4444 = vmatmul.f32.gmra.mxu0 %v4304
      %v4445 = vpop.f32.mrf.mxu0
      %v4446 = vadd.f32 %v4369, %v4445
      %4447 = vmatmul.f32.gmra.mxu0 %v4305
      %v4448 = vpop.f32.mrf.mxu0
      %v4449 = vadd.f32 %v4369, %v4448
      %4450 = vmatmul.f32.gmra.mxu0 %v4306
      %v4451 = vpop.f32.mrf.mxu0
      %v4452 = vadd.f32 %v4369, %v4451
      %4453 = vmatmul.f32.gmra.mxu0 %v4307
      %v4454 = vpop.f32.mrf.mxu0
      %v4455 = vadd.f32 %v4369, %v4454
      %4456 = vmatmul.f32.gmra.mxu0 %v4308
      %v4457 = vpop.f32.mrf.mxu0
      %v4458 = vadd.f32 %v4369, %v4457
      %4459 = vmatmul.f32.gmra.mxu0 %v4309
      %v4460 = vpop.f32.mrf.mxu0
      %v4461 = vadd.f32 %v4369, %v4460
      %4462 = vmatmul.f32.gmra.mxu0 %v4310
      %v4463 = vpop.f32.mrf.mxu0
      %v4464 = vadd.f32 %v4369, %v4463
      %4465 = vmatmul.f32.gmra.mxu0 %v4311
      %v4466 = vpop.f32.mrf.mxu0
      %v4467 = vadd.f32 %v4369, %v4466
      %4468 = vmatmul.f32.gmra.mxu0 %v4312
      %v4469 = vpop.f32.mrf.mxu0
      %v4470 = vadd.f32 %v4369, %v4469
      %4471 = vmatmul.f32.gmra.mxu0 %v4313
      %v4472 = vpop.f32.mrf.mxu0
      %v4473 = vadd.f32 %v4369, %v4472
      %4474 = vmatmul.f32.gmra.mxu0 %v4314
      %v4475 = vpop.f32.mrf.mxu0
      %v4476 = vadd.f32 %v4369, %v4475
      %4477 = vmatmul.f32.gmra.mxu0 %v4315
      %v4478 = vpop.f32.mrf.mxu0
      %v4479 = vadd.f32 %v4369, %v4478
      %4480 = vmatmul.f32.gmra.mxu0 %v4316
      %v4481 = vpop.f32.mrf.mxu0
      %v4482 = vadd.f32 %v4369, %v4481
      %4483 = vmatmul.f32.gmra.mxu0 %v4317
      %v4484 = vpop.f32.mrf.mxu0
      %v4485 = vadd.f32 %v4369, %v4484
      %4486 = vmatmul.f32.gmra.mxu0 %v4318
      %v4487 = vpop.f32.mrf.mxu0
      %v4488 = vadd.f32 %v4369, %v4487
      %4489 = vmatmul.f32.gmra.mxu0 %v4319
      %v4490 = vpop.f32.mrf.mxu0
      %v4491 = vadd.f32 %v4369, %v4490
      %4492 = vmatmul.f32.gmra.mxu0 %v4320
      %v4493 = vpop.f32.mrf.mxu0
      %v4494 = vadd.f32 %v4369, %v4493
      %4495 = vmatmul.f32.gmra.mxu0 %v4321
      %v4496 = vpop.f32.mrf.mxu0
      %v4497 = vadd.f32 %v4369, %v4496
      %4498 = vmatmul.f32.gmra.mxu0 %v4322
      %v4499 = vpop.f32.mrf.mxu0
      %v4500 = vadd.f32 %v4369, %v4499
      %4501 = vmatmul.f32.gmra.mxu0 %v4323
      %v4502 = vpop.f32.mrf.mxu0
      %v4503 = vadd.f32 %v4369, %v4502
      %4504 = vmatmul.f32.gmra.mxu0 %v4324
      %v4505 = vpop.f32.mrf.mxu0
      %v4506 = vadd.f32 %v4369, %v4505
      %4507 = vmatmul.f32.gmra.mxu0 %v4325
      %v4508 = vpop.f32.mrf.mxu0
      %v4509 = vadd.f32 %v4369, %v4508
      %4510 = vmatmul.f32.gmra.mxu0 %v4326
      %v4511 = vpop.f32.mrf.mxu0
      %v4512 = vadd.f32 %v4369, %v4511
      %4513 = vmatmul.f32.gmra.mxu0 %v4327
      %v4514 = vpop.f32.mrf.mxu0
      %v4515 = vadd.f32 %v4369, %v4514
      %4516 = vmatmul.f32.gmra.mxu0 %v4328
      %v4517 = vpop.f32.mrf.mxu0
      %v4518 = vadd.f32 %v4369, %v4517
      %4519 = vmatmul.f32.gmra.mxu0 %v4329
      %v4520 = vpop.f32.mrf.mxu0
      %v4521 = vadd.f32 %v4369, %v4520
      %4522 = vmatmul.f32.gmra.mxu0 %v4330
      %v4523 = vpop.f32.mrf.mxu0
      %v4524 = vadd.f32 %v4369, %v4523
      %4525 = vmatmul.f32.gmra.mxu0 %v4331
      %v4526 = vpop.f32.mrf.mxu0
      %v4527 = vadd.f32 %v4369, %v4526
      %4528 = vmatmul.f32.gmra.mxu0 %v4332
      %v4529 = vpop.f32.mrf.mxu0
      %v4530 = vadd.f32 %v4369, %v4529
      %4531 = vmatmul.f32.gmra.mxu0 %v4333
      %v4532 = vpop.f32.mrf.mxu0
      %v4533 = vadd.f32 %v4369, %v4532
      %4534 = vmatmul.f32.gmra.mxu0 %v4334
      %v4535 = vpop.f32.mrf.mxu0
      %v4536 = vadd.f32 %v4369, %v4535
      %4537 = vmatmul.f32.gmra.mxu0 %v4335
      %v4538 = vpop.f32.mrf.mxu0
      %v4539 = vadd.f32 %v4369, %v4538
      %4540 = vmatmul.f32.gmra.mxu0 %v4336
      %v4541 = vpop.f32.mrf.mxu0
      %v4542 = vadd.f32 %v4369, %v4541
      %4543 = vmatmul.f32.gmra.mxu0 %v4337
      %v4544 = vpop.f32.mrf.mxu0
      %v4545 = vadd.f32 %v4369, %v4544
      %4546 = vmatmul.f32.gmra.mxu0 %v4338
      %v4547 = vpop.f32.mrf.mxu0
      %v4548 = vadd.f32 %v4369, %v4547
      %4549 = vmatmul.f32.gmra.mxu0 %v4339
      %v4550 = vpop.f32.mrf.mxu0
      %v4551 = vadd.f32 %v4369, %v4550
      %4552 = vmatmul.f32.gmra.mxu0 %v4340
      %v4553 = vpop.f32.mrf.mxu0
      %v4554 = vadd.f32 %v4369, %v4553
      %4555 = vmatmul.f32.gmra.mxu0 %v4341
      %v4556 = vpop.f32.mrf.mxu0
      %v4557 = vadd.f32 %v4369, %v4556
      %4558 = vmatmul.f32.gmra.mxu0 %v4342
      %v4559 = vpop.f32.mrf.mxu0
      %v4560 = vadd.f32 %v4369, %v4559
      %4561 = vmatmul.f32.gmra.mxu0 %v4343
      %v4562 = vpop.f32.mrf.mxu0
      %v4563 = vadd.f32 %v4369, %v4562
      %4564 = vmatmul.f32.gmra.mxu0 %v4344
      %v4565 = vpop.f32.mrf.mxu0
      %v4566 = vadd.f32 %v4369, %v4565
      %4567 = vmatmul.f32.gmra.mxu0 %v4345
      %v4568 = vpop.f32.mrf.mxu0
      %v4569 = vadd.f32 %v4369, %v4568
      %4570 = vmatmul.f32.gmra.mxu0 %v4346
      %v4571 = vpop.f32.mrf.mxu0
      %v4572 = vadd.f32 %v4369, %v4571
      %4573 = vmatmul.f32.gmra.mxu0 %v4347
      %v4574 = vpop.f32.mrf.mxu0
      %v4575 = vadd.f32 %v4369, %v4574
      %4576 = vmatmul.f32.gmra.mxu0 %v4348
      %v4577 = vpop.f32.mrf.mxu0
      %v4578 = vadd.f32 %v4369, %v4577
      %4579 = vdwg.mxu0
      %v4580 = vtanh.pop %v4389
      %v4581 = vtanh.pop %v4392
      %v4582 = vtanh.pop %v4395
      %v4583 = vtanh.pop %v4398
      %v4584 = vtanh.pop %v4401
      %v4585 = vtanh.pop %v4404
      %v4586 = vtanh.pop %v4407
      %v4587 = vtanh.pop %v4410
      %v4588 = vtanh.pop %v4413
      %v4589 = vtanh.pop %v4416
      %v4590 = vtanh.pop %v4419
      %v4591 = vtanh.pop %v4422
      %v4592 = vtanh.pop %v4425
      %v4593 = vtanh.pop %v4428
      %v4594 = vtanh.pop %v4431
      %v4595 = vtanh.pop %v4434
      %v4596 = vtanh.pop %v4437
      %v4597 = vtanh.pop %v4440
      %v4598 = vtanh.pop %v4443
      %v4599 = vtanh.pop %v4446
      %v4600 = vtanh.pop %v4449
      %v4601 = vtanh.pop %v4452
      %v4602 = vtanh.pop %v4455
      %v4603 = vtanh.pop %v4458
      %v4604 = vtanh.pop %v4461
      %v4605 = vtanh.pop %v4464
      %v4606 = vtanh.pop %v4467
      %v4607 = vtanh.pop %v4470
      %v4608 = vtanh.pop %v4473
      %v4609 = vtanh.pop %v4476
      %v4610 = vtanh.pop %v4479
      %v4611 = vtanh.pop %v4482
      %v4612 = vtanh.pop %v4485
      %v4613 = vtanh.pop %v4488
      %v4614 = vtanh.pop %v4491
      %v4615 = vtanh.pop %v4494
      %v4616 = vtanh.pop %v4497
      %v4617 = vtanh.pop %v4500
      %v4618 = vtanh.pop %v4503
      %v4619 = vtanh.pop %v4506
      %v4620 = vtanh.pop %v4509
      %v4621 = vtanh.pop %v4512
      %v4622 = vtanh.pop %v4515
      %v4623 = vtanh.pop %v4518
      %v4624 = vtanh.pop %v4521
      %v4625 = vtanh.pop %v4524
      %v4626 = vtanh.pop %v4527
      %v4627 = vtanh.pop %v4530
      %v4628 = vtanh.pop %v4533
      %v4629 = vtanh.pop %v4536
      %v4630 = vtanh.pop %v4539
      %v4631 = vtanh.pop %v4542
      %v4632 = vtanh.pop %v4545
      %v4633 = vtanh.pop %v4548
      %v4634 = vtanh.pop %v4551
      %v4635 = vtanh.pop %v4554
      %v4636 = vtanh.pop %v4557
      %v4637 = vtanh.pop %v4560
      %v4638 = vtanh.pop %v4563
      %v4639 = vtanh.pop %v4566
      %v4640 = vtanh.pop %v4569
      %v4641 = vtanh.pop %v4572
      %v4642 = vtanh.pop %v4575
      %v4643 = vtanh.pop %v4578
      %s4644 = scalar_lea.vmem %s6, 512
      %v4645 = vld [vmem:[%s4644] sm:$0xff]
      %v4646 = vld [vmem:[%s4644 + $0x8] sm:$0xff]
      %v4647 = vld [vmem:[%s4644 + $0x10] sm:$0xff]
      %v4648 = vld [vmem:[%s4644 + $0x18] sm:$0xff]
      %v4649 = vld [vmem:[%s4644 + $0x20] sm:$0xff]
      %v4650 = vld [vmem:[%s4644 + $0x28] sm:$0xff]
      %v4651 = vld [vmem:[%s4644 + $0x30] sm:$0xff]
      %v4652 = vld [vmem:[%s4644 + $0x38] sm:$0xff]
      %v4653 = vld [vmem:[%s4644 + $0x40] sm:$0xff]
      %v4654 = vld [vmem:[%s4644 + $0x48] sm:$0xff]
      %v4655 = vld [vmem:[%s4644 + $0x50] sm:$0xff]
      %v4656 = vld [vmem:[%s4644 + $0x58] sm:$0xff]
      %v4657 = vld [vmem:[%s4644 + $0x60] sm:$0xff]
      %v4658 = vld [vmem:[%s4644 + $0x68] sm:$0xff]
      %v4659 = vld [vmem:[%s4644 + $0x70] sm:$0xff]
      %v4660 = vld [vmem:[%s4644 + $0x78] sm:$0xff]
      %s4661 = scalar_lea.vmem %s7, 4
      %v4662 = vld [vmem:[%s4661] sm:$0x1]
      %v4664 = vperm.slane %v4662, 0
      %4666 = vmatpush.msra.mxu0 %v4660
      %4667 = vmatpush.msra.mxu0 %v4659
      %4668 = vmatpush.msra.mxu0 %v4658
      %4669 = vmatpush.msra.mxu0 %v4657
      %4670 = vmatpush.msra.mxu0 %v4656
      %4671 = vmatpush.msra.mxu0 %v4655
      %4672 = vmatpush.msra.mxu0 %v4654
      %4673 = vmatpush.msra.mxu0 %v4653
      %4674 = vmatpush.msra.mxu0 %v4652
      %4675 = vmatpush.msra.mxu0 %v4651
      %4676 = vmatpush.msra.mxu0 %v4650
      %4677 = vmatpush.msra.mxu0 %v4649
      %4678 = vmatpush.msra.mxu0 %v4648
      %4679 = vmatpush.msra.mxu0 %v4647
      %4680 = vmatpush.msra.mxu0 %v4646
      %4681 = vmatpush.msra.mxu0 %v4645
      %4682 = vmatmul.f32.gmra.mxu0 %v4580
      %v4683 = vpop.f32.mrf.mxu0
      %v4684 = vadd.f32 %v4664, %v4683
      %4685 = vmatmul.f32.gmra.mxu0 %v4581
      %v4686 = vpop.f32.mrf.mxu0
      %v4687 = vadd.f32 %v4664, %v4686
      %4688 = vmatmul.f32.gmra.mxu0 %v4582
      %v4689 = vpop.f32.mrf.mxu0
      %v4690 = vadd.f32 %v4664, %v4689
      %4691 = vmatmul.f32.gmra.mxu0 %v4583
      %v4692 = vpop.f32.mrf.mxu0
      %v4693 = vadd.f32 %v4664, %v4692
      %4694 = vmatmul.f32.gmra.mxu0 %v4584
      %v4695 = vpop.f32.mrf.mxu0
      %v4696 = vadd.f32 %v4664, %v4695
      %4697 = vmatmul.f32.gmra.mxu0 %v4585
      %v4698 = vpop.f32.mrf.mxu0
      %v4699 = vadd.f32 %v4664, %v4698
      %4700 = vmatmul.f32.gmra.mxu0 %v4586
      %v4701 = vpop.f32.mrf.mxu0
      %v4702 = vadd.f32 %v4664, %v4701
      %4703 = vmatmul.f32.gmra.mxu0 %v4587
      %v4704 = vpop.f32.mrf.mxu0
      %v4705 = vadd.f32 %v4664, %v4704
      %4706 = vmatmul.f32.gmra.mxu0 %v4588
      %v4707 = vpop.f32.mrf.mxu0
      %v4708 = vadd.f32 %v4664, %v4707
      %4709 = vmatmul.f32.gmra.mxu0 %v4589
      %v4710 = vpop.f32.mrf.mxu0
      %v4711 = vadd.f32 %v4664, %v4710
      %4712 = vmatmul.f32.gmra.mxu0 %v4590
      %v4713 = vpop.f32.mrf.mxu0
      %v4714 = vadd.f32 %v4664, %v4713
      %4715 = vmatmul.f32.gmra.mxu0 %v4591
      %v4716 = vpop.f32.mrf.mxu0
      %v4717 = vadd.f32 %v4664, %v4716
      %4718 = vmatmul.f32.gmra.mxu0 %v4592
      %v4719 = vpop.f32.mrf.mxu0
      %v4720 = vadd.f32 %v4664, %v4719
      %4721 = vmatmul.f32.gmra.mxu0 %v4593
      %v4722 = vpop.f32.mrf.mxu0
      %v4723 = vadd.f32 %v4664, %v4722
      %4724 = vmatmul.f32.gmra.mxu0 %v4594
      %v4725 = vpop.f32.mrf.mxu0
      %v4726 = vadd.f32 %v4664, %v4725
      %4727 = vmatmul.f32.gmra.mxu0 %v4595
      %v4728 = vpop.f32.mrf.mxu0
      %v4729 = vadd.f32 %v4664, %v4728
      %4730 = vmatmul.f32.gmra.mxu0 %v4596
      %v4731 = vpop.f32.mrf.mxu0
      %v4732 = vadd.f32 %v4664, %v4731
      %4733 = vmatmul.f32.gmra.mxu0 %v4597
      %v4734 = vpop.f32.mrf.mxu0
      %v4735 = vadd.f32 %v4664, %v4734
      %4736 = vmatmul.f32.gmra.mxu0 %v4598
      %v4737 = vpop.f32.mrf.mxu0
      %v4738 = vadd.f32 %v4664, %v4737
      %4739 = vmatmul.f32.gmra.mxu0 %v4599
      %v4740 = vpop.f32.mrf.mxu0
      %v4741 = vadd.f32 %v4664, %v4740
      %4742 = vmatmul.f32.gmra.mxu0 %v4600
      %v4743 = vpop.f32.mrf.mxu0
      %v4744 = vadd.f32 %v4664, %v4743
      %4745 = vmatmul.f32.gmra.mxu0 %v4601
      %v4746 = vpop.f32.mrf.mxu0
      %v4747 = vadd.f32 %v4664, %v4746
      %4748 = vmatmul.f32.gmra.mxu0 %v4602
      %v4749 = vpop.f32.mrf.mxu0
      %v4750 = vadd.f32 %v4664, %v4749
      %4751 = vmatmul.f32.gmra.mxu0 %v4603
      %v4752 = vpop.f32.mrf.mxu0
      %v4753 = vadd.f32 %v4664, %v4752
      %4754 = vmatmul.f32.gmra.mxu0 %v4604
      %v4755 = vpop.f32.mrf.mxu0
      %v4756 = vadd.f32 %v4664, %v4755
      %4757 = vmatmul.f32.gmra.mxu0 %v4605
      %v4758 = vpop.f32.mrf.mxu0
      %v4759 = vadd.f32 %v4664, %v4758
      %4760 = vmatmul.f32.gmra.mxu0 %v4606
      %v4761 = vpop.f32.mrf.mxu0
      %v4762 = vadd.f32 %v4664, %v4761
      %4763 = vmatmul.f32.gmra.mxu0 %v4607
      %v4764 = vpop.f32.mrf.mxu0
      %v4765 = vadd.f32 %v4664, %v4764
      %4766 = vmatmul.f32.gmra.mxu0 %v4608
      %v4767 = vpop.f32.mrf.mxu0
      %v4768 = vadd.f32 %v4664, %v4767
      %4769 = vmatmul.f32.gmra.mxu0 %v4609
      %v4770 = vpop.f32.mrf.mxu0
      %v4771 = vadd.f32 %v4664, %v4770
      %4772 = vmatmul.f32.gmra.mxu0 %v4610
      %v4773 = vpop.f32.mrf.mxu0
      %v4774 = vadd.f32 %v4664, %v4773
      %4775 = vmatmul.f32.gmra.mxu0 %v4611
      %v4776 = vpop.f32.mrf.mxu0
      %v4777 = vadd.f32 %v4664, %v4776
      %4778 = vmatmul.f32.gmra.mxu0 %v4612
      %v4779 = vpop.f32.mrf.mxu0
      %v4780 = vadd.f32 %v4664, %v4779
      %4781 = vmatmul.f32.gmra.mxu0 %v4613
      %v4782 = vpop.f32.mrf.mxu0
      %v4783 = vadd.f32 %v4664, %v4782
      %4784 = vmatmul.f32.gmra.mxu0 %v4614
      %v4785 = vpop.f32.mrf.mxu0
      %v4786 = vadd.f32 %v4664, %v4785
      %4787 = vmatmul.f32.gmra.mxu0 %v4615
      %v4788 = vpop.f32.mrf.mxu0
      %v4789 = vadd.f32 %v4664, %v4788
      %4790 = vmatmul.f32.gmra.mxu0 %v4616
      %v4791 = vpop.f32.mrf.mxu0
      %v4792 = vadd.f32 %v4664, %v4791
      %4793 = vmatmul.f32.gmra.mxu0 %v4617
      %v4794 = vpop.f32.mrf.mxu0
      %v4795 = vadd.f32 %v4664, %v4794
      %4796 = vmatmul.f32.gmra.mxu0 %v4618
      %v4797 = vpop.f32.mrf.mxu0
      %v4798 = vadd.f32 %v4664, %v4797
      %4799 = vmatmul.f32.gmra.mxu0 %v4619
      %v4800 = vpop.f32.mrf.mxu0
      %v4801 = vadd.f32 %v4664, %v4800
      %4802 = vmatmul.f32.gmra.mxu0 %v4620
      %v4803 = vpop.f32.mrf.mxu0
      %v4804 = vadd.f32 %v4664, %v4803
      %4805 = vmatmul.f32.gmra.mxu0 %v4621
      %v4806 = vpop.f32.mrf.mxu0
      %v4807 = vadd.f32 %v4664, %v4806
      %4808 = vmatmul.f32.gmra.mxu0 %v4622
      %v4809 = vpop.f32.mrf.mxu0
      %v4810 = vadd.f32 %v4664, %v4809
      %4811 = vmatmul.f32.gmra.mxu0 %v4623
      %v4812 = vpop.f32.mrf.mxu0
      %v4813 = vadd.f32 %v4664, %v4812
      %4814 = vmatmul.f32.gmra.mxu0 %v4624
      %v4815 = vpop.f32.mrf.mxu0
      %v4816 = vadd.f32 %v4664, %v4815
      %4817 = vmatmul.f32.gmra.mxu0 %v4625
      %v4818 = vpop.f32.mrf.mxu0
      %v4819 = vadd.f32 %v4664, %v4818
      %4820 = vmatmul.f32.gmra.mxu0 %v4626
      %v4821 = vpop.f32.mrf.mxu0
      %v4822 = vadd.f32 %v4664, %v4821
      %4823 = vmatmul.f32.gmra.mxu0 %v4627
      %v4824 = vpop.f32.mrf.mxu0
      %v4825 = vadd.f32 %v4664, %v4824
      %4826 = vmatmul.f32.gmra.mxu0 %v4628
      %v4827 = vpop.f32.mrf.mxu0
      %v4828 = vadd.f32 %v4664, %v4827
      %4829 = vmatmul.f32.gmra.mxu0 %v4629
      %v4830 = vpop.f32.mrf.mxu0
      %v4831 = vadd.f32 %v4664, %v4830
      %4832 = vmatmul.f32.gmra.mxu0 %v4630
      %v4833 = vpop.f32.mrf.mxu0
      %v4834 = vadd.f32 %v4664, %v4833
      %4835 = vmatmul.f32.gmra.mxu0 %v4631
      %v4836 = vpop.f32.mrf.mxu0
      %v4837 = vadd.f32 %v4664, %v4836
      %4838 = vmatmul.f32.gmra.mxu0 %v4632
      %v4839 = vpop.f32.mrf.mxu0
      %v4840 = vadd.f32 %v4664, %v4839
      %4841 = vmatmul.f32.gmra.mxu0 %v4633
      %v4842 = vpop.f32.mrf.mxu0
      %v4843 = vadd.f32 %v4664, %v4842
      %4844 = vmatmul.f32.gmra.mxu0 %v4634
      %v4845 = vpop.f32.mrf.mxu0
      %v4846 = vadd.f32 %v4664, %v4845
      %4847 = vmatmul.f32.gmra.mxu0 %v4635
      %v4848 = vpop.f32.mrf.mxu0
      %v4849 = vadd.f32 %v4664, %v4848
      %4850 = vmatmul.f32.gmra.mxu0 %v4636
      %v4851 = vpop.f32.mrf.mxu0
      %v4852 = vadd.f32 %v4664, %v4851
      %4853 = vmatmul.f32.gmra.mxu0 %v4637
      %v4854 = vpop.f32.mrf.mxu0
      %v4855 = vadd.f32 %v4664, %v4854
      %4856 = vmatmul.f32.gmra.mxu0 %v4638
      %v4857 = vpop.f32.mrf.mxu0
      %v4858 = vadd.f32 %v4664, %v4857
      %4859 = vmatmul.f32.gmra.mxu0 %v4639
      %v4860 = vpop.f32.mrf.mxu0
      %v4861 = vadd.f32 %v4664, %v4860
      %4862 = vmatmul.f32.gmra.mxu0 %v4640
      %v4863 = vpop.f32.mrf.mxu0
      %v4864 = vadd.f32 %v4664, %v4863
      %4865 = vmatmul.f32.gmra.mxu0 %v4641
      %v4866 = vpop.f32.mrf.mxu0
      %v4867 = vadd.f32 %v4664, %v4866
      %4868 = vmatmul.f32.gmra.mxu0 %v4642
      %v4869 = vpop.f32.mrf.mxu0
      %v4870 = vadd.f32 %v4664, %v4869
      %4871 = vmatmul.f32.gmra.mxu0 %v4643
      %v4872 = vpop.f32.mrf.mxu0
      %v4873 = vadd.f32 %v4664, %v4872
      %4874 = vdwg.mxu0
      %v4875 = vadd.f32 %v4684, %v4285
      %v4876 = vadd.f32 %v4687, %v4286
      %v4877 = vadd.f32 %v4690, %v4287
      %v4878 = vadd.f32 %v4693, %v4288
      %v4879 = vadd.f32 %v4696, %v4289
      %v4880 = vadd.f32 %v4699, %v4290
      %v4881 = vadd.f32 %v4702, %v4291
      %v4882 = vadd.f32 %v4705, %v4292
      %v4883 = vadd.f32 %v4708, %v4293
      %v4884 = vadd.f32 %v4711, %v4294
      %v4885 = vadd.f32 %v4714, %v4295
      %v4886 = vadd.f32 %v4717, %v4296
      %v4887 = vadd.f32 %v4720, %v4297
      %v4888 = vadd.f32 %v4723, %v4298
      %v4889 = vadd.f32 %v4726, %v4299
      %v4890 = vadd.f32 %v4729, %v4300
      %v4891 = vadd.f32 %v4732, %v4301
      %v4892 = vadd.f32 %v4735, %v4302
      %v4893 = vadd.f32 %v4738, %v4303
      %v4894 = vadd.f32 %v4741, %v4304
      %v4895 = vadd.f32 %v4744, %v4305
      %v4896 = vadd.f32 %v4747, %v4306
      %v4897 = vadd.f32 %v4750, %v4307
      %v4898 = vadd.f32 %v4753, %v4308
      %v4899 = vadd.f32 %v4756, %v4309
      %v4900 = vadd.f32 %v4759, %v4310
      %v4901 = vadd.f32 %v4762, %v4311
      %v4902 = vadd.f32 %v4765, %v4312
      %v4903 = vadd.f32 %v4768, %v4313
      %v4904 = vadd.f32 %v4771, %v4314
      %v4905 = vadd.f32 %v4774, %v4315
      %v4906 = vadd.f32 %v4777, %v4316
      %v4907 = vadd.f32 %v4780, %v4317
      %v4908 = vadd.f32 %v4783, %v4318
      %v4909 = vadd.f32 %v4786, %v4319
      %v4910 = vadd.f32 %v4789, %v4320
      %v4911 = vadd.f32 %v4792, %v4321
      %v4912 = vadd.f32 %v4795, %v4322
      %v4913 = vadd.f32 %v4798, %v4323
      %v4914 = vadd.f32 %v4801, %v4324
      %v4915 = vadd.f32 %v4804, %v4325
      %v4916 = vadd.f32 %v4807, %v4326
      %v4917 = vadd.f32 %v4810, %v4327
      %v4918 = vadd.f32 %v4813, %v4328
      %v4919 = vadd.f32 %v4816, %v4329
      %v4920 = vadd.f32 %v4819, %v4330
      %v4921 = vadd.f32 %v4822, %v4331
      %v4922 = vadd.f32 %v4825, %v4332
      %v4923 = vadd.f32 %v4828, %v4333
      %v4924 = vadd.f32 %v4831, %v4334
      %v4925 = vadd.f32 %v4834, %v4335
      %v4926 = vadd.f32 %v4837, %v4336
      %v4927 = vadd.f32 %v4840, %v4337
      %v4928 = vadd.f32 %v4843, %v4338
      %v4929 = vadd.f32 %v4846, %v4339
      %v4930 = vadd.f32 %v4849, %v4340
      %v4931 = vadd.f32 %v4852, %v4341
      %v4932 = vadd.f32 %v4855, %v4342
      %v4933 = vadd.f32 %v4858, %v4343
      %v4934 = vadd.f32 %v4861, %v4344
      %v4935 = vadd.f32 %v4864, %v4345
      %v4936 = vadd.f32 %v4867, %v4346
      %v4937 = vadd.f32 %v4870, %v4347
      %v4938 = vadd.f32 %v4873, %v4348
      %v4939 = vtanh.pop %v4875
      %v4940 = vtanh.pop %v4876
      %v4941 = vtanh.pop %v4877
      %v4942 = vtanh.pop %v4878
      %v4943 = vtanh.pop %v4879
      %v4944 = vtanh.pop %v4880
      %v4945 = vtanh.pop %v4881
      %v4946 = vtanh.pop %v4882
      %v4947 = vtanh.pop %v4883
      %v4948 = vtanh.pop %v4884
      %v4949 = vtanh.pop %v4885
      %v4950 = vtanh.pop %v4886
      %v4951 = vtanh.pop %v4887
      %v4952 = vtanh.pop %v4888
      %v4953 = vtanh.pop %v4889
      %v4954 = vtanh.pop %v4890
      %v4955 = vtanh.pop %v4891
      %v4956 = vtanh.pop %v4892
      %v4957 = vtanh.pop %v4893
      %v4958 = vtanh.pop %v4894
      %v4959 = vtanh.pop %v4895
      %v4960 = vtanh.pop %v4896
      %v4961 = vtanh.pop %v4897
      %v4962 = vtanh.pop %v4898
      %v4963 = vtanh.pop %v4899
      %v4964 = vtanh.pop %v4900
      %v4965 = vtanh.pop %v4901
      %v4966 = vtanh.pop %v4902
      %v4967 = vtanh.pop %v4903
      %v4968 = vtanh.pop %v4904
      %v4969 = vtanh.pop %v4905
      %v4970 = vtanh.pop %v4906
      %v4971 = vtanh.pop %v4907
      %v4972 = vtanh.pop %v4908
      %v4973 = vtanh.pop %v4909
      %v4974 = vtanh.pop %v4910
      %v4975 = vtanh.pop %v4911
      %v4976 = vtanh.pop %v4912
      %v4977 = vtanh.pop %v4913
      %v4978 = vtanh.pop %v4914
      %v4979 = vtanh.pop %v4915
      %v4980 = vtanh.pop %v4916
      %v4981 = vtanh.pop %v4917
      %v4982 = vtanh.pop %v4918
      %v4983 = vtanh.pop %v4919
      %v4984 = vtanh.pop %v4920
      %v4985 = vtanh.pop %v4921
      %v4986 = vtanh.pop %v4922
      %v4987 = vtanh.pop %v4923
      %v4988 = vtanh.pop %v4924
      %v4989 = vtanh.pop %v4925
      %v4990 = vtanh.pop %v4926
      %v4991 = vtanh.pop %v4927
      %v4992 = vtanh.pop %v4928
      %v4993 = vtanh.pop %v4929
      %v4994 = vtanh.pop %v4930
      %v4995 = vtanh.pop %v4931
      %v4996 = vtanh.pop %v4932
      %v4997 = vtanh.pop %v4933
      %v4998 = vtanh.pop %v4934
      %v4999 = vtanh.pop %v4935
      %v5000 = vtanh.pop %v4936
      %v5001 = vtanh.pop %v4937
      %v5002 = vtanh.pop %v4938
      %s5003 = scalar_lea.vmem %s4, 640
      %v5004 = vld [vmem:[%s5003] sm:$0xff]
      %v5005 = vld [vmem:[%s5003 + $0x8] sm:$0xff]
      %v5006 = vld [vmem:[%s5003 + $0x10] sm:$0xff]
      %v5007 = vld [vmem:[%s5003 + $0x18] sm:$0xff]
      %v5008 = vld [vmem:[%s5003 + $0x20] sm:$0xff]
      %v5009 = vld [vmem:[%s5003 + $0x28] sm:$0xff]
      %v5010 = vld [vmem:[%s5003 + $0x30] sm:$0xff]
      %v5011 = vld [vmem:[%s5003 + $0x38] sm:$0xff]
      %v5012 = vld [vmem:[%s5003 + $0x40] sm:$0xff]
      %v5013 = vld [vmem:[%s5003 + $0x48] sm:$0xff]
      %v5014 = vld [vmem:[%s5003 + $0x50] sm:$0xff]
      %v5015 = vld [vmem:[%s5003 + $0x58] sm:$0xff]
      %v5016 = vld [vmem:[%s5003 + $0x60] sm:$0xff]
      %v5017 = vld [vmem:[%s5003 + $0x68] sm:$0xff]
      %v5018 = vld [vmem:[%s5003 + $0x70] sm:$0xff]
      %v5019 = vld [vmem:[%s5003 + $0x78] sm:$0xff]
      %s5020 = scalar_lea.vmem %s5, 5
      %v5021 = vld [vmem:[%s5020] sm:$0x1]
      %v5023 = vperm.slane %v5021, 0
      %5025 = vmatpush.msra.mxu0 %v5019
      %5026 = vmatpush.msra.mxu0 %v5018
      %5027 = vmatpush.msra.mxu0 %v5017
      %5028 = vmatpush.msra.mxu0 %v5016
      %5029 = vmatpush.msra.mxu0 %v5015
      %5030 = vmatpush.msra.mxu0 %v5014
      %5031 = vmatpush.msra.mxu0 %v5013
      %5032 = vmatpush.msra.mxu0 %v5012
      %5033 = vmatpush.msra.mxu0 %v5011
      %5034 = vmatpush.msra.mxu0 %v5010
      %5035 = vmatpush.msra.mxu0 %v5009
      %5036 = vmatpush.msra.mxu0 %v5008
      %5037 = vmatpush.msra.mxu0 %v5007
      %5038 = vmatpush.msra.mxu0 %v5006
      %5039 = vmatpush.msra.mxu0 %v5005
      %5040 = vmatpush.msra.mxu0 %v5004
      %5041 = vmatmul.f32.gmra.mxu0 %v4939
      %v5042 = vpop.f32.mrf.mxu0
      %v5043 = vadd.f32 %v5023, %v5042
      %5044 = vmatmul.f32.gmra.mxu0 %v4940
      %v5045 = vpop.f32.mrf.mxu0
      %v5046 = vadd.f32 %v5023, %v5045
      %5047 = vmatmul.f32.gmra.mxu0 %v4941
      %v5048 = vpop.f32.mrf.mxu0
      %v5049 = vadd.f32 %v5023, %v5048
      %5050 = vmatmul.f32.gmra.mxu0 %v4942
      %v5051 = vpop.f32.mrf.mxu0
      %v5052 = vadd.f32 %v5023, %v5051
      %5053 = vmatmul.f32.gmra.mxu0 %v4943
      %v5054 = vpop.f32.mrf.mxu0
      %v5055 = vadd.f32 %v5023, %v5054
      %5056 = vmatmul.f32.gmra.mxu0 %v4944
      %v5057 = vpop.f32.mrf.mxu0
      %v5058 = vadd.f32 %v5023, %v5057
      %5059 = vmatmul.f32.gmra.mxu0 %v4945
      %v5060 = vpop.f32.mrf.mxu0
      %v5061 = vadd.f32 %v5023, %v5060
      %5062 = vmatmul.f32.gmra.mxu0 %v4946
      %v5063 = vpop.f32.mrf.mxu0
      %v5064 = vadd.f32 %v5023, %v5063
      %5065 = vmatmul.f32.gmra.mxu0 %v4947
      %v5066 = vpop.f32.mrf.mxu0
      %v5067 = vadd.f32 %v5023, %v5066
      %5068 = vmatmul.f32.gmra.mxu0 %v4948
      %v5069 = vpop.f32.mrf.mxu0
      %v5070 = vadd.f32 %v5023, %v5069
      %5071 = vmatmul.f32.gmra.mxu0 %v4949
      %v5072 = vpop.f32.mrf.mxu0
      %v5073 = vadd.f32 %v5023, %v5072
      %5074 = vmatmul.f32.gmra.mxu0 %v4950
      %v5075 = vpop.f32.mrf.mxu0
      %v5076 = vadd.f32 %v5023, %v5075
      %5077 = vmatmul.f32.gmra.mxu0 %v4951
      %v5078 = vpop.f32.mrf.mxu0
      %v5079 = vadd.f32 %v5023, %v5078
      %5080 = vmatmul.f32.gmra.mxu0 %v4952
      %v5081 = vpop.f32.mrf.mxu0
      %v5082 = vadd.f32 %v5023, %v5081
      %5083 = vmatmul.f32.gmra.mxu0 %v4953
      %v5084 = vpop.f32.mrf.mxu0
      %v5085 = vadd.f32 %v5023, %v5084
      %5086 = vmatmul.f32.gmra.mxu0 %v4954
      %v5087 = vpop.f32.mrf.mxu0
      %v5088 = vadd.f32 %v5023, %v5087
      %5089 = vmatmul.f32.gmra.mxu0 %v4955
      %v5090 = vpop.f32.mrf.mxu0
      %v5091 = vadd.f32 %v5023, %v5090
      %5092 = vmatmul.f32.gmra.mxu0 %v4956
      %v5093 = vpop.f32.mrf.mxu0
      %v5094 = vadd.f32 %v5023, %v5093
      %5095 = vmatmul.f32.gmra.mxu0 %v4957
      %v5096 = vpop.f32.mrf.mxu0
      %v5097 = vadd.f32 %v5023, %v5096
      %5098 = vmatmul.f32.gmra.mxu0 %v4958
      %v5099 = vpop.f32.mrf.mxu0
      %v5100 = vadd.f32 %v5023, %v5099
      %5101 = vmatmul.f32.gmra.mxu0 %v4959
      %v5102 = vpop.f32.mrf.mxu0
      %v5103 = vadd.f32 %v5023, %v5102
      %5104 = vmatmul.f32.gmra.mxu0 %v4960
      %v5105 = vpop.f32.mrf.mxu0
      %v5106 = vadd.f32 %v5023, %v5105
      %5107 = vmatmul.f32.gmra.mxu0 %v4961
      %v5108 = vpop.f32.mrf.mxu0
      %v5109 = vadd.f32 %v5023, %v5108
      %5110 = vmatmul.f32.gmra.mxu0 %v4962
      %v5111 = vpop.f32.mrf.mxu0
      %v5112 = vadd.f32 %v5023, %v5111
      %5113 = vmatmul.f32.gmra.mxu0 %v4963
      %v5114 = vpop.f32.mrf.mxu0
      %v5115 = vadd.f32 %v5023, %v5114
      %5116 = vmatmul.f32.gmra.mxu0 %v4964
      %v5117 = vpop.f32.mrf.mxu0
      %v5118 = vadd.f32 %v5023, %v5117
      %5119 = vmatmul.f32.gmra.mxu0 %v4965
      %v5120 = vpop.f32.mrf.mxu0
      %v5121 = vadd.f32 %v5023, %v5120
      %5122 = vmatmul.f32.gmra.mxu0 %v4966
      %v5123 = vpop.f32.mrf.mxu0
      %v5124 = vadd.f32 %v5023, %v5123
      %5125 = vmatmul.f32.gmra.mxu0 %v4967
      %v5126 = vpop.f32.mrf.mxu0
      %v5127 = vadd.f32 %v5023, %v5126
      %5128 = vmatmul.f32.gmra.mxu0 %v4968
      %v5129 = vpop.f32.mrf.mxu0
      %v5130 = vadd.f32 %v5023, %v5129
      %5131 = vmatmul.f32.gmra.mxu0 %v4969
      %v5132 = vpop.f32.mrf.mxu0
      %v5133 = vadd.f32 %v5023, %v5132
      %5134 = vmatmul.f32.gmra.mxu0 %v4970
      %v5135 = vpop.f32.mrf.mxu0
      %v5136 = vadd.f32 %v5023, %v5135
      %5137 = vmatmul.f32.gmra.mxu0 %v4971
      %v5138 = vpop.f32.mrf.mxu0
      %v5139 = vadd.f32 %v5023, %v5138
      %5140 = vmatmul.f32.gmra.mxu0 %v4972
      %v5141 = vpop.f32.mrf.mxu0
      %v5142 = vadd.f32 %v5023, %v5141
      %5143 = vmatmul.f32.gmra.mxu0 %v4973
      %v5144 = vpop.f32.mrf.mxu0
      %v5145 = vadd.f32 %v5023, %v5144
      %5146 = vmatmul.f32.gmra.mxu0 %v4974
      %v5147 = vpop.f32.mrf.mxu0
      %v5148 = vadd.f32 %v5023, %v5147
      %5149 = vmatmul.f32.gmra.mxu0 %v4975
      %v5150 = vpop.f32.mrf.mxu0
      %v5151 = vadd.f32 %v5023, %v5150
      %5152 = vmatmul.f32.gmra.mxu0 %v4976
      %v5153 = vpop.f32.mrf.mxu0
      %v5154 = vadd.f32 %v5023, %v5153
      %5155 = vmatmul.f32.gmra.mxu0 %v4977
      %v5156 = vpop.f32.mrf.mxu0
      %v5157 = vadd.f32 %v5023, %v5156
      %5158 = vmatmul.f32.gmra.mxu0 %v4978
      %v5159 = vpop.f32.mrf.mxu0
      %v5160 = vadd.f32 %v5023, %v5159
      %5161 = vmatmul.f32.gmra.mxu0 %v4979
      %v5162 = vpop.f32.mrf.mxu0
      %v5163 = vadd.f32 %v5023, %v5162
      %5164 = vmatmul.f32.gmra.mxu0 %v4980
      %v5165 = vpop.f32.mrf.mxu0
      %v5166 = vadd.f32 %v5023, %v5165
      %5167 = vmatmul.f32.gmra.mxu0 %v4981
      %v5168 = vpop.f32.mrf.mxu0
      %v5169 = vadd.f32 %v5023, %v5168
      %5170 = vmatmul.f32.gmra.mxu0 %v4982
      %v5171 = vpop.f32.mrf.mxu0
      %v5172 = vadd.f32 %v5023, %v5171
      %5173 = vmatmul.f32.gmra.mxu0 %v4983
      %v5174 = vpop.f32.mrf.mxu0
      %v5175 = vadd.f32 %v5023, %v5174
      %5176 = vmatmul.f32.gmra.mxu0 %v4984
      %v5177 = vpop.f32.mrf.mxu0
      %v5178 = vadd.f32 %v5023, %v5177
      %5179 = vmatmul.f32.gmra.mxu0 %v4985
      %v5180 = vpop.f32.mrf.mxu0
      %v5181 = vadd.f32 %v5023, %v5180
      %5182 = vmatmul.f32.gmra.mxu0 %v4986
      %v5183 = vpop.f32.mrf.mxu0
      %v5184 = vadd.f32 %v5023, %v5183
      %5185 = vmatmul.f32.gmra.mxu0 %v4987
      %v5186 = vpop.f32.mrf.mxu0
      %v5187 = vadd.f32 %v5023, %v5186
      %5188 = vmatmul.f32.gmra.mxu0 %v4988
      %v5189 = vpop.f32.mrf.mxu0
      %v5190 = vadd.f32 %v5023, %v5189
      %5191 = vmatmul.f32.gmra.mxu0 %v4989
      %v5192 = vpop.f32.mrf.mxu0
      %v5193 = vadd.f32 %v5023, %v5192
      %5194 = vmatmul.f32.gmra.mxu0 %v4990
      %v5195 = vpop.f32.mrf.mxu0
      %v5196 = vadd.f32 %v5023, %v5195
      %5197 = vmatmul.f32.gmra.mxu0 %v4991
      %v5198 = vpop.f32.mrf.mxu0
      %v5199 = vadd.f32 %v5023, %v5198
      %5200 = vmatmul.f32.gmra.mxu0 %v4992
      %v5201 = vpop.f32.mrf.mxu0
      %v5202 = vadd.f32 %v5023, %v5201
      %5203 = vmatmul.f32.gmra.mxu0 %v4993
      %v5204 = vpop.f32.mrf.mxu0
      %v5205 = vadd.f32 %v5023, %v5204
      %5206 = vmatmul.f32.gmra.mxu0 %v4994
      %v5207 = vpop.f32.mrf.mxu0
      %v5208 = vadd.f32 %v5023, %v5207
      %5209 = vmatmul.f32.gmra.mxu0 %v4995
      %v5210 = vpop.f32.mrf.mxu0
      %v5211 = vadd.f32 %v5023, %v5210
      %5212 = vmatmul.f32.gmra.mxu0 %v4996
      %v5213 = vpop.f32.mrf.mxu0
      %v5214 = vadd.f32 %v5023, %v5213
      %5215 = vmatmul.f32.gmra.mxu0 %v4997
      %v5216 = vpop.f32.mrf.mxu0
      %v5217 = vadd.f32 %v5023, %v5216
      %5218 = vmatmul.f32.gmra.mxu0 %v4998
      %v5219 = vpop.f32.mrf.mxu0
      %v5220 = vadd.f32 %v5023, %v5219
      %5221 = vmatmul.f32.gmra.mxu0 %v4999
      %v5222 = vpop.f32.mrf.mxu0
      %v5223 = vadd.f32 %v5023, %v5222
      %5224 = vmatmul.f32.gmra.mxu0 %v5000
      %v5225 = vpop.f32.mrf.mxu0
      %v5226 = vadd.f32 %v5023, %v5225
      %5227 = vmatmul.f32.gmra.mxu0 %v5001
      %v5228 = vpop.f32.mrf.mxu0
      %v5229 = vadd.f32 %v5023, %v5228
      %5230 = vmatmul.f32.gmra.mxu0 %v5002
      %v5231 = vpop.f32.mrf.mxu0
      %v5232 = vadd.f32 %v5023, %v5231
      %5233 = vdwg.mxu0
      %v5234 = vtanh.pop %v5043
      %v5235 = vtanh.pop %v5046
      %v5236 = vtanh.pop %v5049
      %v5237 = vtanh.pop %v5052
      %v5238 = vtanh.pop %v5055
      %v5239 = vtanh.pop %v5058
      %v5240 = vtanh.pop %v5061
      %v5241 = vtanh.pop %v5064
      %v5242 = vtanh.pop %v5067
      %v5243 = vtanh.pop %v5070
      %v5244 = vtanh.pop %v5073
      %v5245 = vtanh.pop %v5076
      %v5246 = vtanh.pop %v5079
      %v5247 = vtanh.pop %v5082
      %v5248 = vtanh.pop %v5085
      %v5249 = vtanh.pop %v5088
      %v5250 = vtanh.pop %v5091
      %v5251 = vtanh.pop %v5094
      %v5252 = vtanh.pop %v5097
      %v5253 = vtanh.pop %v5100
      %v5254 = vtanh.pop %v5103
      %v5255 = vtanh.pop %v5106
      %v5256 = vtanh.pop %v5109
      %v5257 = vtanh.pop %v5112
      %v5258 = vtanh.pop %v5115
      %v5259 = vtanh.pop %v5118
      %v5260 = vtanh.pop %v5121
      %v5261 = vtanh.pop %v5124
      %v5262 = vtanh.pop %v5127
      %v5263 = vtanh.pop %v5130
      %v5264 = vtanh.pop %v5133
      %v5265 = vtanh.pop %v5136
      %v5266 = vtanh.pop %v5139
      %v5267 = vtanh.pop %v5142
      %v5268 = vtanh.pop %v5145
      %v5269 = vtanh.pop %v5148
      %v5270 = vtanh.pop %v5151
      %v5271 = vtanh.pop %v5154
      %v5272 = vtanh.pop %v5157
      %v5273 = vtanh.pop %v5160
      %v5274 = vtanh.pop %v5163
      %v5275 = vtanh.pop %v5166
      %v5276 = vtanh.pop %v5169
      %v5277 = vtanh.pop %v5172
      %v5278 = vtanh.pop %v5175
      %v5279 = vtanh.pop %v5178
      %v5280 = vtanh.pop %v5181
      %v5281 = vtanh.pop %v5184
      %v5282 = vtanh.pop %v5187
      %v5283 = vtanh.pop %v5190
      %v5284 = vtanh.pop %v5193
      %v5285 = vtanh.pop %v5196
      %v5286 = vtanh.pop %v5199
      %v5287 = vtanh.pop %v5202
      %v5288 = vtanh.pop %v5205
      %v5289 = vtanh.pop %v5208
      %v5290 = vtanh.pop %v5211
      %v5291 = vtanh.pop %v5214
      %v5292 = vtanh.pop %v5217
      %v5293 = vtanh.pop %v5220
      %v5294 = vtanh.pop %v5223
      %v5295 = vtanh.pop %v5226
      %v5296 = vtanh.pop %v5229
      %v5297 = vtanh.pop %v5232
      %s5298 = scalar_lea.vmem %s6, 640
      %v5299 = vld [vmem:[%s5298] sm:$0xff]
      %v5300 = vld [vmem:[%s5298 + $0x8] sm:$0xff]
      %v5301 = vld [vmem:[%s5298 + $0x10] sm:$0xff]
      %v5302 = vld [vmem:[%s5298 + $0x18] sm:$0xff]
      %v5303 = vld [vmem:[%s5298 + $0x20] sm:$0xff]
      %v5304 = vld [vmem:[%s5298 + $0x28] sm:$0xff]
      %v5305 = vld [vmem:[%s5298 + $0x30] sm:$0xff]
      %v5306 = vld [vmem:[%s5298 + $0x38] sm:$0xff]
      %v5307 = vld [vmem:[%s5298 + $0x40] sm:$0xff]
      %v5308 = vld [vmem:[%s5298 + $0x48] sm:$0xff]
      %v5309 = vld [vmem:[%s5298 + $0x50] sm:$0xff]
      %v5310 = vld [vmem:[%s5298 + $0x58] sm:$0xff]
      %v5311 = vld [vmem:[%s5298 + $0x60] sm:$0xff]
      %v5312 = vld [vmem:[%s5298 + $0x68] sm:$0xff]
      %v5313 = vld [vmem:[%s5298 + $0x70] sm:$0xff]
      %v5314 = vld [vmem:[%s5298 + $0x78] sm:$0xff]
      %s5315 = scalar_lea.vmem %s7, 5
      %v5316 = vld [vmem:[%s5315] sm:$0x1]
      %v5318 = vperm.slane %v5316, 0
      %5320 = vmatpush.msra.mxu0 %v5314
      %5321 = vmatpush.msra.mxu0 %v5313
      %5322 = vmatpush.msra.mxu0 %v5312
      %5323 = vmatpush.msra.mxu0 %v5311
      %5324 = vmatpush.msra.mxu0 %v5310
      %5325 = vmatpush.msra.mxu0 %v5309
      %5326 = vmatpush.msra.mxu0 %v5308
      %5327 = vmatpush.msra.mxu0 %v5307
      %5328 = vmatpush.msra.mxu0 %v5306
      %5329 = vmatpush.msra.mxu0 %v5305
      %5330 = vmatpush.msra.mxu0 %v5304
      %5331 = vmatpush.msra.mxu0 %v5303
      %5332 = vmatpush.msra.mxu0 %v5302
      %5333 = vmatpush.msra.mxu0 %v5301
      %5334 = vmatpush.msra.mxu0 %v5300
      %5335 = vmatpush.msra.mxu0 %v5299
      %5336 = vmatmul.f32.gmra.mxu0 %v5234
      %v5337 = vpop.f32.mrf.mxu0
      %v5338 = vadd.f32 %v5318, %v5337
      %5339 = vmatmul.f32.gmra.mxu0 %v5235
      %v5340 = vpop.f32.mrf.mxu0
      %v5341 = vadd.f32 %v5318, %v5340
      %5342 = vmatmul.f32.gmra.mxu0 %v5236
      %v5343 = vpop.f32.mrf.mxu0
      %v5344 = vadd.f32 %v5318, %v5343
      %5345 = vmatmul.f32.gmra.mxu0 %v5237
      %v5346 = vpop.f32.mrf.mxu0
      %v5347 = vadd.f32 %v5318, %v5346
      %5348 = vmatmul.f32.gmra.mxu0 %v5238
      %v5349 = vpop.f32.mrf.mxu0
      %v5350 = vadd.f32 %v5318, %v5349
      %5351 = vmatmul.f32.gmra.mxu0 %v5239
      %v5352 = vpop.f32.mrf.mxu0
      %v5353 = vadd.f32 %v5318, %v5352
      %5354 = vmatmul.f32.gmra.mxu0 %v5240
      %v5355 = vpop.f32.mrf.mxu0
      %v5356 = vadd.f32 %v5318, %v5355
      %5357 = vmatmul.f32.gmra.mxu0 %v5241
      %v5358 = vpop.f32.mrf.mxu0
      %v5359 = vadd.f32 %v5318, %v5358
      %5360 = vmatmul.f32.gmra.mxu0 %v5242
      %v5361 = vpop.f32.mrf.mxu0
      %v5362 = vadd.f32 %v5318, %v5361
      %5363 = vmatmul.f32.gmra.mxu0 %v5243
      %v5364 = vpop.f32.mrf.mxu0
      %v5365 = vadd.f32 %v5318, %v5364
      %5366 = vmatmul.f32.gmra.mxu0 %v5244
      %v5367 = vpop.f32.mrf.mxu0
      %v5368 = vadd.f32 %v5318, %v5367
      %5369 = vmatmul.f32.gmra.mxu0 %v5245
      %v5370 = vpop.f32.mrf.mxu0
      %v5371 = vadd.f32 %v5318, %v5370
      %5372 = vmatmul.f32.gmra.mxu0 %v5246
      %v5373 = vpop.f32.mrf.mxu0
      %v5374 = vadd.f32 %v5318, %v5373
      %5375 = vmatmul.f32.gmra.mxu0 %v5247
      %v5376 = vpop.f32.mrf.mxu0
      %v5377 = vadd.f32 %v5318, %v5376
      %5378 = vmatmul.f32.gmra.mxu0 %v5248
      %v5379 = vpop.f32.mrf.mxu0
      %v5380 = vadd.f32 %v5318, %v5379
      %5381 = vmatmul.f32.gmra.mxu0 %v5249
      %v5382 = vpop.f32.mrf.mxu0
      %v5383 = vadd.f32 %v5318, %v5382
      %5384 = vmatmul.f32.gmra.mxu0 %v5250
      %v5385 = vpop.f32.mrf.mxu0
      %v5386 = vadd.f32 %v5318, %v5385
      %5387 = vmatmul.f32.gmra.mxu0 %v5251
      %v5388 = vpop.f32.mrf.mxu0
      %v5389 = vadd.f32 %v5318, %v5388
      %5390 = vmatmul.f32.gmra.mxu0 %v5252
      %v5391 = vpop.f32.mrf.mxu0
      %v5392 = vadd.f32 %v5318, %v5391
      %5393 = vmatmul.f32.gmra.mxu0 %v5253
      %v5394 = vpop.f32.mrf.mxu0
      %v5395 = vadd.f32 %v5318, %v5394
      %5396 = vmatmul.f32.gmra.mxu0 %v5254
      %v5397 = vpop.f32.mrf.mxu0
      %v5398 = vadd.f32 %v5318, %v5397
      %5399 = vmatmul.f32.gmra.mxu0 %v5255
      %v5400 = vpop.f32.mrf.mxu0
      %v5401 = vadd.f32 %v5318, %v5400
      %5402 = vmatmul.f32.gmra.mxu0 %v5256
      %v5403 = vpop.f32.mrf.mxu0
      %v5404 = vadd.f32 %v5318, %v5403
      %5405 = vmatmul.f32.gmra.mxu0 %v5257
      %v5406 = vpop.f32.mrf.mxu0
      %v5407 = vadd.f32 %v5318, %v5406
      %5408 = vmatmul.f32.gmra.mxu0 %v5258
      %v5409 = vpop.f32.mrf.mxu0
      %v5410 = vadd.f32 %v5318, %v5409
      %5411 = vmatmul.f32.gmra.mxu0 %v5259
      %v5412 = vpop.f32.mrf.mxu0
      %v5413 = vadd.f32 %v5318, %v5412
      %5414 = vmatmul.f32.gmra.mxu0 %v5260
      %v5415 = vpop.f32.mrf.mxu0
      %v5416 = vadd.f32 %v5318, %v5415
      %5417 = vmatmul.f32.gmra.mxu0 %v5261
      %v5418 = vpop.f32.mrf.mxu0
      %v5419 = vadd.f32 %v5318, %v5418
      %5420 = vmatmul.f32.gmra.mxu0 %v5262
      %v5421 = vpop.f32.mrf.mxu0
      %v5422 = vadd.f32 %v5318, %v5421
      %5423 = vmatmul.f32.gmra.mxu0 %v5263
      %v5424 = vpop.f32.mrf.mxu0
      %v5425 = vadd.f32 %v5318, %v5424
      %5426 = vmatmul.f32.gmra.mxu0 %v5264
      %v5427 = vpop.f32.mrf.mxu0
      %v5428 = vadd.f32 %v5318, %v5427
      %5429 = vmatmul.f32.gmra.mxu0 %v5265
      %v5430 = vpop.f32.mrf.mxu0
      %v5431 = vadd.f32 %v5318, %v5430
      %5432 = vmatmul.f32.gmra.mxu0 %v5266
      %v5433 = vpop.f32.mrf.mxu0
      %v5434 = vadd.f32 %v5318, %v5433
      %5435 = vmatmul.f32.gmra.mxu0 %v5267
      %v5436 = vpop.f32.mrf.mxu0
      %v5437 = vadd.f32 %v5318, %v5436
      %5438 = vmatmul.f32.gmra.mxu0 %v5268
      %v5439 = vpop.f32.mrf.mxu0
      %v5440 = vadd.f32 %v5318, %v5439
      %5441 = vmatmul.f32.gmra.mxu0 %v5269
      %v5442 = vpop.f32.mrf.mxu0
      %v5443 = vadd.f32 %v5318, %v5442
      %5444 = vmatmul.f32.gmra.mxu0 %v5270
      %v5445 = vpop.f32.mrf.mxu0
      %v5446 = vadd.f32 %v5318, %v5445
      %5447 = vmatmul.f32.gmra.mxu0 %v5271
      %v5448 = vpop.f32.mrf.mxu0
      %v5449 = vadd.f32 %v5318, %v5448
      %5450 = vmatmul.f32.gmra.mxu0 %v5272
      %v5451 = vpop.f32.mrf.mxu0
      %v5452 = vadd.f32 %v5318, %v5451
      %5453 = vmatmul.f32.gmra.mxu0 %v5273
      %v5454 = vpop.f32.mrf.mxu0
      %v5455 = vadd.f32 %v5318, %v5454
      %5456 = vmatmul.f32.gmra.mxu0 %v5274
      %v5457 = vpop.f32.mrf.mxu0
      %v5458 = vadd.f32 %v5318, %v5457
      %5459 = vmatmul.f32.gmra.mxu0 %v5275
      %v5460 = vpop.f32.mrf.mxu0
      %v5461 = vadd.f32 %v5318, %v5460
      %5462 = vmatmul.f32.gmra.mxu0 %v5276
      %v5463 = vpop.f32.mrf.mxu0
      %v5464 = vadd.f32 %v5318, %v5463
      %5465 = vmatmul.f32.gmra.mxu0 %v5277
      %v5466 = vpop.f32.mrf.mxu0
      %v5467 = vadd.f32 %v5318, %v5466
      %5468 = vmatmul.f32.gmra.mxu0 %v5278
      %v5469 = vpop.f32.mrf.mxu0
      %v5470 = vadd.f32 %v5318, %v5469
      %5471 = vmatmul.f32.gmra.mxu0 %v5279
      %v5472 = vpop.f32.mrf.mxu0
      %v5473 = vadd.f32 %v5318, %v5472
      %5474 = vmatmul.f32.gmra.mxu0 %v5280
      %v5475 = vpop.f32.mrf.mxu0
      %v5476 = vadd.f32 %v5318, %v5475
      %5477 = vmatmul.f32.gmra.mxu0 %v5281
      %v5478 = vpop.f32.mrf.mxu0
      %v5479 = vadd.f32 %v5318, %v5478
      %5480 = vmatmul.f32.gmra.mxu0 %v5282
      %v5481 = vpop.f32.mrf.mxu0
      %v5482 = vadd.f32 %v5318, %v5481
      %5483 = vmatmul.f32.gmra.mxu0 %v5283
      %v5484 = vpop.f32.mrf.mxu0
      %v5485 = vadd.f32 %v5318, %v5484
      %5486 = vmatmul.f32.gmra.mxu0 %v5284
      %v5487 = vpop.f32.mrf.mxu0
      %v5488 = vadd.f32 %v5318, %v5487
      %5489 = vmatmul.f32.gmra.mxu0 %v5285
      %v5490 = vpop.f32.mrf.mxu0
      %v5491 = vadd.f32 %v5318, %v5490
      %5492 = vmatmul.f32.gmra.mxu0 %v5286
      %v5493 = vpop.f32.mrf.mxu0
      %v5494 = vadd.f32 %v5318, %v5493
      %5495 = vmatmul.f32.gmra.mxu0 %v5287
      %v5496 = vpop.f32.mrf.mxu0
      %v5497 = vadd.f32 %v5318, %v5496
      %5498 = vmatmul.f32.gmra.mxu0 %v5288
      %v5499 = vpop.f32.mrf.mxu0
      %v5500 = vadd.f32 %v5318, %v5499
      %5501 = vmatmul.f32.gmra.mxu0 %v5289
      %v5502 = vpop.f32.mrf.mxu0
      %v5503 = vadd.f32 %v5318, %v5502
      %5504 = vmatmul.f32.gmra.mxu0 %v5290
      %v5505 = vpop.f32.mrf.mxu0
      %v5506 = vadd.f32 %v5318, %v5505
      %5507 = vmatmul.f32.gmra.mxu0 %v5291
      %v5508 = vpop.f32.mrf.mxu0
      %v5509 = vadd.f32 %v5318, %v5508
      %5510 = vmatmul.f32.gmra.mxu0 %v5292
      %v5511 = vpop.f32.mrf.mxu0
      %v5512 = vadd.f32 %v5318, %v5511
      %5513 = vmatmul.f32.gmra.mxu0 %v5293
      %v5514 = vpop.f32.mrf.mxu0
      %v5515 = vadd.f32 %v5318, %v5514
      %5516 = vmatmul.f32.gmra.mxu0 %v5294
      %v5517 = vpop.f32.mrf.mxu0
      %v5518 = vadd.f32 %v5318, %v5517
      %5519 = vmatmul.f32.gmra.mxu0 %v5295
      %v5520 = vpop.f32.mrf.mxu0
      %v5521 = vadd.f32 %v5318, %v5520
      %5522 = vmatmul.f32.gmra.mxu0 %v5296
      %v5523 = vpop.f32.mrf.mxu0
      %v5524 = vadd.f32 %v5318, %v5523
      %5525 = vmatmul.f32.gmra.mxu0 %v5297
      %v5526 = vpop.f32.mrf.mxu0
      %v5527 = vadd.f32 %v5318, %v5526
      %5528 = vdwg.mxu0
      %v5529 = vadd.f32 %v5338, %v4939
      %v5530 = vadd.f32 %v5341, %v4940
      %v5531 = vadd.f32 %v5344, %v4941
      %v5532 = vadd.f32 %v5347, %v4942
      %v5533 = vadd.f32 %v5350, %v4943
      %v5534 = vadd.f32 %v5353, %v4944
      %v5535 = vadd.f32 %v5356, %v4945
      %v5536 = vadd.f32 %v5359, %v4946
      %v5537 = vadd.f32 %v5362, %v4947
      %v5538 = vadd.f32 %v5365, %v4948
      %v5539 = vadd.f32 %v5368, %v4949
      %v5540 = vadd.f32 %v5371, %v4950
      %v5541 = vadd.f32 %v5374, %v4951
      %v5542 = vadd.f32 %v5377, %v4952
      %v5543 = vadd.f32 %v5380, %v4953
      %v5544 = vadd.f32 %v5383, %v4954
      %v5545 = vadd.f32 %v5386, %v4955
      %v5546 = vadd.f32 %v5389, %v4956
      %v5547 = vadd.f32 %v5392, %v4957
      %v5548 = vadd.f32 %v5395, %v4958
      %v5549 = vadd.f32 %v5398, %v4959
      %v5550 = vadd.f32 %v5401, %v4960
      %v5551 = vadd.f32 %v5404, %v4961
      %v5552 = vadd.f32 %v5407, %v4962
      %v5553 = vadd.f32 %v5410, %v4963
      %v5554 = vadd.f32 %v5413, %v4964
      %v5555 = vadd.f32 %v5416, %v4965
      %v5556 = vadd.f32 %v5419, %v4966
      %v5557 = vadd.f32 %v5422, %v4967
      %v5558 = vadd.f32 %v5425, %v4968
      %v5559 = vadd.f32 %v5428, %v4969
      %v5560 = vadd.f32 %v5431, %v4970
      %v5561 = vadd.f32 %v5434, %v4971
      %v5562 = vadd.f32 %v5437, %v4972
      %v5563 = vadd.f32 %v5440, %v4973
      %v5564 = vadd.f32 %v5443, %v4974
      %v5565 = vadd.f32 %v5446, %v4975
      %v5566 = vadd.f32 %v5449, %v4976
      %v5567 = vadd.f32 %v5452, %v4977
      %v5568 = vadd.f32 %v5455, %v4978
      %v5569 = vadd.f32 %v5458, %v4979
      %v5570 = vadd.f32 %v5461, %v4980
      %v5571 = vadd.f32 %v5464, %v4981
      %v5572 = vadd.f32 %v5467, %v4982
      %v5573 = vadd.f32 %v5470, %v4983
      %v5574 = vadd.f32 %v5473, %v4984
      %v5575 = vadd.f32 %v5476, %v4985
      %v5576 = vadd.f32 %v5479, %v4986
      %v5577 = vadd.f32 %v5482, %v4987
      %v5578 = vadd.f32 %v5485, %v4988
      %v5579 = vadd.f32 %v5488, %v4989
      %v5580 = vadd.f32 %v5491, %v4990
      %v5581 = vadd.f32 %v5494, %v4991
      %v5582 = vadd.f32 %v5497, %v4992
      %v5583 = vadd.f32 %v5500, %v4993
      %v5584 = vadd.f32 %v5503, %v4994
      %v5585 = vadd.f32 %v5506, %v4995
      %v5586 = vadd.f32 %v5509, %v4996
      %v5587 = vadd.f32 %v5512, %v4997
      %v5588 = vadd.f32 %v5515, %v4998
      %v5589 = vadd.f32 %v5518, %v4999
      %v5590 = vadd.f32 %v5521, %v5000
      %v5591 = vadd.f32 %v5524, %v5001
      %v5592 = vadd.f32 %v5527, %v5002
      %v5593 = vtanh.pop %v5529
      %v5594 = vtanh.pop %v5530
      %v5595 = vtanh.pop %v5531
      %v5596 = vtanh.pop %v5532
      %v5597 = vtanh.pop %v5533
      %v5598 = vtanh.pop %v5534
      %v5599 = vtanh.pop %v5535
      %v5600 = vtanh.pop %v5536
      %v5601 = vtanh.pop %v5537
      %v5602 = vtanh.pop %v5538
      %v5603 = vtanh.pop %v5539
      %v5604 = vtanh.pop %v5540
      %v5605 = vtanh.pop %v5541
      %v5606 = vtanh.pop %v5542
      %v5607 = vtanh.pop %v5543
      %v5608 = vtanh.pop %v5544
      %v5609 = vtanh.pop %v5545
      %v5610 = vtanh.pop %v5546
      %v5611 = vtanh.pop %v5547
      %v5612 = vtanh.pop %v5548
      %v5613 = vtanh.pop %v5549
      %v5614 = vtanh.pop %v5550
      %v5615 = vtanh.pop %v5551
      %v5616 = vtanh.pop %v5552
      %v5617 = vtanh.pop %v5553
      %v5618 = vtanh.pop %v5554
      %v5619 = vtanh.pop %v5555
      %v5620 = vtanh.pop %v5556
      %v5621 = vtanh.pop %v5557
      %v5622 = vtanh.pop %v5558
      %v5623 = vtanh.pop %v5559
      %v5624 = vtanh.pop %v5560
      %v5625 = vtanh.pop %v5561
      %v5626 = vtanh.pop %v5562
      %v5627 = vtanh.pop %v5563
      %v5628 = vtanh.pop %v5564
      %v5629 = vtanh.pop %v5565
      %v5630 = vtanh.pop %v5566
      %v5631 = vtanh.pop %v5567
      %v5632 = vtanh.pop %v5568
      %v5633 = vtanh.pop %v5569
      %v5634 = vtanh.pop %v5570
      %v5635 = vtanh.pop %v5571
      %v5636 = vtanh.pop %v5572
      %v5637 = vtanh.pop %v5573
      %v5638 = vtanh.pop %v5574
      %v5639 = vtanh.pop %v5575
      %v5640 = vtanh.pop %v5576
      %v5641 = vtanh.pop %v5577
      %v5642 = vtanh.pop %v5578
      %v5643 = vtanh.pop %v5579
      %v5644 = vtanh.pop %v5580
      %v5645 = vtanh.pop %v5581
      %v5646 = vtanh.pop %v5582
      %v5647 = vtanh.pop %v5583
      %v5648 = vtanh.pop %v5584
      %v5649 = vtanh.pop %v5585
      %v5650 = vtanh.pop %v5586
      %v5651 = vtanh.pop %v5587
      %v5652 = vtanh.pop %v5588
      %v5653 = vtanh.pop %v5589
      %v5654 = vtanh.pop %v5590
      %v5655 = vtanh.pop %v5591
      %v5656 = vtanh.pop %v5592
      %s5657 = scalar_lea.vmem %s4, 768
      %v5658 = vld [vmem:[%s5657] sm:$0xff]
      %v5659 = vld [vmem:[%s5657 + $0x8] sm:$0xff]
      %v5660 = vld [vmem:[%s5657 + $0x10] sm:$0xff]
      %v5661 = vld [vmem:[%s5657 + $0x18] sm:$0xff]
      %v5662 = vld [vmem:[%s5657 + $0x20] sm:$0xff]
      %v5663 = vld [vmem:[%s5657 + $0x28] sm:$0xff]
      %v5664 = vld [vmem:[%s5657 + $0x30] sm:$0xff]
      %v5665 = vld [vmem:[%s5657 + $0x38] sm:$0xff]
      %v5666 = vld [vmem:[%s5657 + $0x40] sm:$0xff]
      %v5667 = vld [vmem:[%s5657 + $0x48] sm:$0xff]
      %v5668 = vld [vmem:[%s5657 + $0x50] sm:$0xff]
      %v5669 = vld [vmem:[%s5657 + $0x58] sm:$0xff]
      %v5670 = vld [vmem:[%s5657 + $0x60] sm:$0xff]
      %v5671 = vld [vmem:[%s5657 + $0x68] sm:$0xff]
      %v5672 = vld [vmem:[%s5657 + $0x70] sm:$0xff]
      %v5673 = vld [vmem:[%s5657 + $0x78] sm:$0xff]
      %s5674 = scalar_lea.vmem %s5, 6
      %v5675 = vld [vmem:[%s5674] sm:$0x1]
      %v5677 = vperm.slane %v5675, 0
      %5679 = vmatpush.msra.mxu0 %v5673
      %5680 = vmatpush.msra.mxu0 %v5672
      %5681 = vmatpush.msra.mxu0 %v5671
      %5682 = vmatpush.msra.mxu0 %v5670
      %5683 = vmatpush.msra.mxu0 %v5669
      %5684 = vmatpush.msra.mxu0 %v5668
      %5685 = vmatpush.msra.mxu0 %v5667
      %5686 = vmatpush.msra.mxu0 %v5666
      %5687 = vmatpush.msra.mxu0 %v5665
      %5688 = vmatpush.msra.mxu0 %v5664
      %5689 = vmatpush.msra.mxu0 %v5663
      %5690 = vmatpush.msra.mxu0 %v5662
      %5691 = vmatpush.msra.mxu0 %v5661
      %5692 = vmatpush.msra.mxu0 %v5660
      %5693 = vmatpush.msra.mxu0 %v5659
      %5694 = vmatpush.msra.mxu0 %v5658
      %5695 = vmatmul.f32.gmra.mxu0 %v5593
      %v5696 = vpop.f32.mrf.mxu0
      %v5697 = vadd.f32 %v5677, %v5696
      %5698 = vmatmul.f32.gmra.mxu0 %v5594
      %v5699 = vpop.f32.mrf.mxu0
      %v5700 = vadd.f32 %v5677, %v5699
      %5701 = vmatmul.f32.gmra.mxu0 %v5595
      %v5702 = vpop.f32.mrf.mxu0
      %v5703 = vadd.f32 %v5677, %v5702
      %5704 = vmatmul.f32.gmra.mxu0 %v5596
      %v5705 = vpop.f32.mrf.mxu0
      %v5706 = vadd.f32 %v5677, %v5705
      %5707 = vmatmul.f32.gmra.mxu0 %v5597
      %v5708 = vpop.f32.mrf.mxu0
      %v5709 = vadd.f32 %v5677, %v5708
      %5710 = vmatmul.f32.gmra.mxu0 %v5598
      %v5711 = vpop.f32.mrf.mxu0
      %v5712 = vadd.f32 %v5677, %v5711
      %5713 = vmatmul.f32.gmra.mxu0 %v5599
      %v5714 = vpop.f32.mrf.mxu0
      %v5715 = vadd.f32 %v5677, %v5714
      %5716 = vmatmul.f32.gmra.mxu0 %v5600
      %v5717 = vpop.f32.mrf.mxu0
      %v5718 = vadd.f32 %v5677, %v5717
      %5719 = vmatmul.f32.gmra.mxu0 %v5601
      %v5720 = vpop.f32.mrf.mxu0
      %v5721 = vadd.f32 %v5677, %v5720
      %5722 = vmatmul.f32.gmra.mxu0 %v5602
      %v5723 = vpop.f32.mrf.mxu0
      %v5724 = vadd.f32 %v5677, %v5723
      %5725 = vmatmul.f32.gmra.mxu0 %v5603
      %v5726 = vpop.f32.mrf.mxu0
      %v5727 = vadd.f32 %v5677, %v5726
      %5728 = vmatmul.f32.gmra.mxu0 %v5604
      %v5729 = vpop.f32.mrf.mxu0
      %v5730 = vadd.f32 %v5677, %v5729
      %5731 = vmatmul.f32.gmra.mxu0 %v5605
      %v5732 = vpop.f32.mrf.mxu0
      %v5733 = vadd.f32 %v5677, %v5732
      %5734 = vmatmul.f32.gmra.mxu0 %v5606
      %v5735 = vpop.f32.mrf.mxu0
      %v5736 = vadd.f32 %v5677, %v5735
      %5737 = vmatmul.f32.gmra.mxu0 %v5607
      %v5738 = vpop.f32.mrf.mxu0
      %v5739 = vadd.f32 %v5677, %v5738
      %5740 = vmatmul.f32.gmra.mxu0 %v5608
      %v5741 = vpop.f32.mrf.mxu0
      %v5742 = vadd.f32 %v5677, %v5741
      %5743 = vmatmul.f32.gmra.mxu0 %v5609
      %v5744 = vpop.f32.mrf.mxu0
      %v5745 = vadd.f32 %v5677, %v5744
      %5746 = vmatmul.f32.gmra.mxu0 %v5610
      %v5747 = vpop.f32.mrf.mxu0
      %v5748 = vadd.f32 %v5677, %v5747
      %5749 = vmatmul.f32.gmra.mxu0 %v5611
      %v5750 = vpop.f32.mrf.mxu0
      %v5751 = vadd.f32 %v5677, %v5750
      %5752 = vmatmul.f32.gmra.mxu0 %v5612
      %v5753 = vpop.f32.mrf.mxu0
      %v5754 = vadd.f32 %v5677, %v5753
      %5755 = vmatmul.f32.gmra.mxu0 %v5613
      %v5756 = vpop.f32.mrf.mxu0
      %v5757 = vadd.f32 %v5677, %v5756
      %5758 = vmatmul.f32.gmra.mxu0 %v5614
      %v5759 = vpop.f32.mrf.mxu0
      %v5760 = vadd.f32 %v5677, %v5759
      %5761 = vmatmul.f32.gmra.mxu0 %v5615
      %v5762 = vpop.f32.mrf.mxu0
      %v5763 = vadd.f32 %v5677, %v5762
      %5764 = vmatmul.f32.gmra.mxu0 %v5616
      %v5765 = vpop.f32.mrf.mxu0
      %v5766 = vadd.f32 %v5677, %v5765
      %5767 = vmatmul.f32.gmra.mxu0 %v5617
      %v5768 = vpop.f32.mrf.mxu0
      %v5769 = vadd.f32 %v5677, %v5768
      %5770 = vmatmul.f32.gmra.mxu0 %v5618
      %v5771 = vpop.f32.mrf.mxu0
      %v5772 = vadd.f32 %v5677, %v5771
      %5773 = vmatmul.f32.gmra.mxu0 %v5619
      %v5774 = vpop.f32.mrf.mxu0
      %v5775 = vadd.f32 %v5677, %v5774
      %5776 = vmatmul.f32.gmra.mxu0 %v5620
      %v5777 = vpop.f32.mrf.mxu0
      %v5778 = vadd.f32 %v5677, %v5777
      %5779 = vmatmul.f32.gmra.mxu0 %v5621
      %v5780 = vpop.f32.mrf.mxu0
      %v5781 = vadd.f32 %v5677, %v5780
      %5782 = vmatmul.f32.gmra.mxu0 %v5622
      %v5783 = vpop.f32.mrf.mxu0
      %v5784 = vadd.f32 %v5677, %v5783
      %5785 = vmatmul.f32.gmra.mxu0 %v5623
      %v5786 = vpop.f32.mrf.mxu0
      %v5787 = vadd.f32 %v5677, %v5786
      %5788 = vmatmul.f32.gmra.mxu0 %v5624
      %v5789 = vpop.f32.mrf.mxu0
      %v5790 = vadd.f32 %v5677, %v5789
      %5791 = vmatmul.f32.gmra.mxu0 %v5625
      %v5792 = vpop.f32.mrf.mxu0
      %v5793 = vadd.f32 %v5677, %v5792
      %5794 = vmatmul.f32.gmra.mxu0 %v5626
      %v5795 = vpop.f32.mrf.mxu0
      %v5796 = vadd.f32 %v5677, %v5795
      %5797 = vmatmul.f32.gmra.mxu0 %v5627
      %v5798 = vpop.f32.mrf.mxu0
      %v5799 = vadd.f32 %v5677, %v5798
      %5800 = vmatmul.f32.gmra.mxu0 %v5628
      %v5801 = vpop.f32.mrf.mxu0
      %v5802 = vadd.f32 %v5677, %v5801
      %5803 = vmatmul.f32.gmra.mxu0 %v5629
      %v5804 = vpop.f32.mrf.mxu0
      %v5805 = vadd.f32 %v5677, %v5804
      %5806 = vmatmul.f32.gmra.mxu0 %v5630
      %v5807 = vpop.f32.mrf.mxu0
      %v5808 = vadd.f32 %v5677, %v5807
      %5809 = vmatmul.f32.gmra.mxu0 %v5631
      %v5810 = vpop.f32.mrf.mxu0
      %v5811 = vadd.f32 %v5677, %v5810
      %5812 = vmatmul.f32.gmra.mxu0 %v5632
      %v5813 = vpop.f32.mrf.mxu0
      %v5814 = vadd.f32 %v5677, %v5813
      %5815 = vmatmul.f32.gmra.mxu0 %v5633
      %v5816 = vpop.f32.mrf.mxu0
      %v5817 = vadd.f32 %v5677, %v5816
      %5818 = vmatmul.f32.gmra.mxu0 %v5634
      %v5819 = vpop.f32.mrf.mxu0
      %v5820 = vadd.f32 %v5677, %v5819
      %5821 = vmatmul.f32.gmra.mxu0 %v5635
      %v5822 = vpop.f32.mrf.mxu0
      %v5823 = vadd.f32 %v5677, %v5822
      %5824 = vmatmul.f32.gmra.mxu0 %v5636
      %v5825 = vpop.f32.mrf.mxu0
      %v5826 = vadd.f32 %v5677, %v5825
      %5827 = vmatmul.f32.gmra.mxu0 %v5637
      %v5828 = vpop.f32.mrf.mxu0
      %v5829 = vadd.f32 %v5677, %v5828
      %5830 = vmatmul.f32.gmra.mxu0 %v5638
      %v5831 = vpop.f32.mrf.mxu0
      %v5832 = vadd.f32 %v5677, %v5831
      %5833 = vmatmul.f32.gmra.mxu0 %v5639
      %v5834 = vpop.f32.mrf.mxu0
      %v5835 = vadd.f32 %v5677, %v5834
      %5836 = vmatmul.f32.gmra.mxu0 %v5640
      %v5837 = vpop.f32.mrf.mxu0
      %v5838 = vadd.f32 %v5677, %v5837
      %5839 = vmatmul.f32.gmra.mxu0 %v5641
      %v5840 = vpop.f32.mrf.mxu0
      %v5841 = vadd.f32 %v5677, %v5840
      %5842 = vmatmul.f32.gmra.mxu0 %v5642
      %v5843 = vpop.f32.mrf.mxu0
      %v5844 = vadd.f32 %v5677, %v5843
      %5845 = vmatmul.f32.gmra.mxu0 %v5643
      %v5846 = vpop.f32.mrf.mxu0
      %v5847 = vadd.f32 %v5677, %v5846
      %5848 = vmatmul.f32.gmra.mxu0 %v5644
      %v5849 = vpop.f32.mrf.mxu0
      %v5850 = vadd.f32 %v5677, %v5849
      %5851 = vmatmul.f32.gmra.mxu0 %v5645
      %v5852 = vpop.f32.mrf.mxu0
      %v5853 = vadd.f32 %v5677, %v5852
      %5854 = vmatmul.f32.gmra.mxu0 %v5646
      %v5855 = vpop.f32.mrf.mxu0
      %v5856 = vadd.f32 %v5677, %v5855
      %5857 = vmatmul.f32.gmra.mxu0 %v5647
      %v5858 = vpop.f32.mrf.mxu0
      %v5859 = vadd.f32 %v5677, %v5858
      %5860 = vmatmul.f32.gmra.mxu0 %v5648
      %v5861 = vpop.f32.mrf.mxu0
      %v5862 = vadd.f32 %v5677, %v5861
      %5863 = vmatmul.f32.gmra.mxu0 %v5649
      %v5864 = vpop.f32.mrf.mxu0
      %v5865 = vadd.f32 %v5677, %v5864
      %5866 = vmatmul.f32.gmra.mxu0 %v5650
      %v5867 = vpop.f32.mrf.mxu0
      %v5868 = vadd.f32 %v5677, %v5867
      %5869 = vmatmul.f32.gmra.mxu0 %v5651
      %v5870 = vpop.f32.mrf.mxu0
      %v5871 = vadd.f32 %v5677, %v5870
      %5872 = vmatmul.f32.gmra.mxu0 %v5652
      %v5873 = vpop.f32.mrf.mxu0
      %v5874 = vadd.f32 %v5677, %v5873
      %5875 = vmatmul.f32.gmra.mxu0 %v5653
      %v5876 = vpop.f32.mrf.mxu0
      %v5877 = vadd.f32 %v5677, %v5876
      %5878 = vmatmul.f32.gmra.mxu0 %v5654
      %v5879 = vpop.f32.mrf.mxu0
      %v5880 = vadd.f32 %v5677, %v5879
      %5881 = vmatmul.f32.gmra.mxu0 %v5655
      %v5882 = vpop.f32.mrf.mxu0
      %v5883 = vadd.f32 %v5677, %v5882
      %5884 = vmatmul.f32.gmra.mxu0 %v5656
      %v5885 = vpop.f32.mrf.mxu0
      %v5886 = vadd.f32 %v5677, %v5885
      %5887 = vdwg.mxu0
      %v5888 = vtanh.pop %v5697
      %v5889 = vtanh.pop %v5700
      %v5890 = vtanh.pop %v5703
      %v5891 = vtanh.pop %v5706
      %v5892 = vtanh.pop %v5709
      %v5893 = vtanh.pop %v5712
      %v5894 = vtanh.pop %v5715
      %v5895 = vtanh.pop %v5718
      %v5896 = vtanh.pop %v5721
      %v5897 = vtanh.pop %v5724
      %v5898 = vtanh.pop %v5727
      %v5899 = vtanh.pop %v5730
      %v5900 = vtanh.pop %v5733
      %v5901 = vtanh.pop %v5736
      %v5902 = vtanh.pop %v5739
      %v5903 = vtanh.pop %v5742
      %v5904 = vtanh.pop %v5745
      %v5905 = vtanh.pop %v5748
      %v5906 = vtanh.pop %v5751
      %v5907 = vtanh.pop %v5754
      %v5908 = vtanh.pop %v5757
      %v5909 = vtanh.pop %v5760
      %v5910 = vtanh.pop %v5763
      %v5911 = vtanh.pop %v5766
      %v5912 = vtanh.pop %v5769
      %v5913 = vtanh.pop %v5772
      %v5914 = vtanh.pop %v5775
      %v5915 = vtanh.pop %v5778
      %v5916 = vtanh.pop %v5781
      %v5917 = vtanh.pop %v5784
      %v5918 = vtanh.pop %v5787
      %v5919 = vtanh.pop %v5790
      %v5920 = vtanh.pop %v5793
      %v5921 = vtanh.pop %v5796
      %v5922 = vtanh.pop %v5799
      %v5923 = vtanh.pop %v5802
      %v5924 = vtanh.pop %v5805
      %v5925 = vtanh.pop %v5808
      %v5926 = vtanh.pop %v5811
      %v5927 = vtanh.pop %v5814
      %v5928 = vtanh.pop %v5817
      %v5929 = vtanh.pop %v5820
      %v5930 = vtanh.pop %v5823
      %v5931 = vtanh.pop %v5826
      %v5932 = vtanh.pop %v5829
      %v5933 = vtanh.pop %v5832
      %v5934 = vtanh.pop %v5835
      %v5935 = vtanh.pop %v5838
      %v5936 = vtanh.pop %v5841
      %v5937 = vtanh.pop %v5844
      %v5938 = vtanh.pop %v5847
      %v5939 = vtanh.pop %v5850
      %v5940 = vtanh.pop %v5853
      %v5941 = vtanh.pop %v5856
      %v5942 = vtanh.pop %v5859
      %v5943 = vtanh.pop %v5862
      %v5944 = vtanh.pop %v5865
      %v5945 = vtanh.pop %v5868
      %v5946 = vtanh.pop %v5871
      %v5947 = vtanh.pop %v5874
      %v5948 = vtanh.pop %v5877
      %v5949 = vtanh.pop %v5880
      %v5950 = vtanh.pop %v5883
      %v5951 = vtanh.pop %v5886
      %s5952 = scalar_lea.vmem %s6, 768
      %v5953 = vld [vmem:[%s5952] sm:$0xff]
      %v5954 = vld [vmem:[%s5952 + $0x8] sm:$0xff]
      %v5955 = vld [vmem:[%s5952 + $0x10] sm:$0xff]
      %v5956 = vld [vmem:[%s5952 + $0x18] sm:$0xff]
      %v5957 = vld [vmem:[%s5952 + $0x20] sm:$0xff]
      %v5958 = vld [vmem:[%s5952 + $0x28] sm:$0xff]
      %v5959 = vld [vmem:[%s5952 + $0x30] sm:$0xff]
      %v5960 = vld [vmem:[%s5952 + $0x38] sm:$0xff]
      %v5961 = vld [vmem:[%s5952 + $0x40] sm:$0xff]
      %v5962 = vld [vmem:[%s5952 + $0x48] sm:$0xff]
      %v5963 = vld [vmem:[%s5952 + $0x50] sm:$0xff]
      %v5964 = vld [vmem:[%s5952 + $0x58] sm:$0xff]
      %v5965 = vld [vmem:[%s5952 + $0x60] sm:$0xff]
      %v5966 = vld [vmem:[%s5952 + $0x68] sm:$0xff]
      %v5967 = vld [vmem:[%s5952 + $0x70] sm:$0xff]
      %v5968 = vld [vmem:[%s5952 + $0x78] sm:$0xff]
      %s5969 = scalar_lea.vmem %s7, 6
      %v5970 = vld [vmem:[%s5969] sm:$0x1]
      %v5972 = vperm.slane %v5970, 0
      %5974 = vmatpush.msra.mxu0 %v5968
      %5975 = vmatpush.msra.mxu0 %v5967
      %5976 = vmatpush.msra.mxu0 %v5966
      %5977 = vmatpush.msra.mxu0 %v5965
      %5978 = vmatpush.msra.mxu0 %v5964
      %5979 = vmatpush.msra.mxu0 %v5963
      %5980 = vmatpush.msra.mxu0 %v5962
      %5981 = vmatpush.msra.mxu0 %v5961
      %5982 = vmatpush.msra.mxu0 %v5960
      %5983 = vmatpush.msra.mxu0 %v5959
      %5984 = vmatpush.msra.mxu0 %v5958
      %5985 = vmatpush.msra.mxu0 %v5957
      %5986 = vmatpush.msra.mxu0 %v5956
      %5987 = vmatpush.msra.mxu0 %v5955
      %5988 = vmatpush.msra.mxu0 %v5954
      %5989 = vmatpush.msra.mxu0 %v5953
      %5990 = vmatmul.f32.gmra.mxu0 %v5888
      %v5991 = vpop.f32.mrf.mxu0
      %v5992 = vadd.f32 %v5972, %v5991
      %5993 = vmatmul.f32.gmra.mxu0 %v5889
      %v5994 = vpop.f32.mrf.mxu0
      %v5995 = vadd.f32 %v5972, %v5994
      %5996 = vmatmul.f32.gmra.mxu0 %v5890
      %v5997 = vpop.f32.mrf.mxu0
      %v5998 = vadd.f32 %v5972, %v5997
      %5999 = vmatmul.f32.gmra.mxu0 %v5891
      %v6000 = vpop.f32.mrf.mxu0
      %v6001 = vadd.f32 %v5972, %v6000
      %6002 = vmatmul.f32.gmra.mxu0 %v5892
      %v6003 = vpop.f32.mrf.mxu0
      %v6004 = vadd.f32 %v5972, %v6003
      %6005 = vmatmul.f32.gmra.mxu0 %v5893
      %v6006 = vpop.f32.mrf.mxu0
      %v6007 = vadd.f32 %v5972, %v6006
      %6008 = vmatmul.f32.gmra.mxu0 %v5894
      %v6009 = vpop.f32.mrf.mxu0
      %v6010 = vadd.f32 %v5972, %v6009
      %6011 = vmatmul.f32.gmra.mxu0 %v5895
      %v6012 = vpop.f32.mrf.mxu0
      %v6013 = vadd.f32 %v5972, %v6012
      %6014 = vmatmul.f32.gmra.mxu0 %v5896
      %v6015 = vpop.f32.mrf.mxu0
      %v6016 = vadd.f32 %v5972, %v6015
      %6017 = vmatmul.f32.gmra.mxu0 %v5897
      %v6018 = vpop.f32.mrf.mxu0
      %v6019 = vadd.f32 %v5972, %v6018
      %6020 = vmatmul.f32.gmra.mxu0 %v5898
      %v6021 = vpop.f32.mrf.mxu0
      %v6022 = vadd.f32 %v5972, %v6021
      %6023 = vmatmul.f32.gmra.mxu0 %v5899
      %v6024 = vpop.f32.mrf.mxu0
      %v6025 = vadd.f32 %v5972, %v6024
      %6026 = vmatmul.f32.gmra.mxu0 %v5900
      %v6027 = vpop.f32.mrf.mxu0
      %v6028 = vadd.f32 %v5972, %v6027
      %6029 = vmatmul.f32.gmra.mxu0 %v5901
      %v6030 = vpop.f32.mrf.mxu0
      %v6031 = vadd.f32 %v5972, %v6030
      %6032 = vmatmul.f32.gmra.mxu0 %v5902
      %v6033 = vpop.f32.mrf.mxu0
      %v6034 = vadd.f32 %v5972, %v6033
      %6035 = vmatmul.f32.gmra.mxu0 %v5903
      %v6036 = vpop.f32.mrf.mxu0
      %v6037 = vadd.f32 %v5972, %v6036
      %6038 = vmatmul.f32.gmra.mxu0 %v5904
      %v6039 = vpop.f32.mrf.mxu0
      %v6040 = vadd.f32 %v5972, %v6039
      %6041 = vmatmul.f32.gmra.mxu0 %v5905
      %v6042 = vpop.f32.mrf.mxu0
      %v6043 = vadd.f32 %v5972, %v6042
      %6044 = vmatmul.f32.gmra.mxu0 %v5906
      %v6045 = vpop.f32.mrf.mxu0
      %v6046 = vadd.f32 %v5972, %v6045
      %6047 = vmatmul.f32.gmra.mxu0 %v5907
      %v6048 = vpop.f32.mrf.mxu0
      %v6049 = vadd.f32 %v5972, %v6048
      %6050 = vmatmul.f32.gmra.mxu0 %v5908
      %v6051 = vpop.f32.mrf.mxu0
      %v6052 = vadd.f32 %v5972, %v6051
      %6053 = vmatmul.f32.gmra.mxu0 %v5909
      %v6054 = vpop.f32.mrf.mxu0
      %v6055 = vadd.f32 %v5972, %v6054
      %6056 = vmatmul.f32.gmra.mxu0 %v5910
      %v6057 = vpop.f32.mrf.mxu0
      %v6058 = vadd.f32 %v5972, %v6057
      %6059 = vmatmul.f32.gmra.mxu0 %v5911
      %v6060 = vpop.f32.mrf.mxu0
      %v6061 = vadd.f32 %v5972, %v6060
      %6062 = vmatmul.f32.gmra.mxu0 %v5912
      %v6063 = vpop.f32.mrf.mxu0
      %v6064 = vadd.f32 %v5972, %v6063
      %6065 = vmatmul.f32.gmra.mxu0 %v5913
      %v6066 = vpop.f32.mrf.mxu0
      %v6067 = vadd.f32 %v5972, %v6066
      %6068 = vmatmul.f32.gmra.mxu0 %v5914
      %v6069 = vpop.f32.mrf.mxu0
      %v6070 = vadd.f32 %v5972, %v6069
      %6071 = vmatmul.f32.gmra.mxu0 %v5915
      %v6072 = vpop.f32.mrf.mxu0
      %v6073 = vadd.f32 %v5972, %v6072
      %6074 = vmatmul.f32.gmra.mxu0 %v5916
      %v6075 = vpop.f32.mrf.mxu0
      %v6076 = vadd.f32 %v5972, %v6075
      %6077 = vmatmul.f32.gmra.mxu0 %v5917
      %v6078 = vpop.f32.mrf.mxu0
      %v6079 = vadd.f32 %v5972, %v6078
      %6080 = vmatmul.f32.gmra.mxu0 %v5918
      %v6081 = vpop.f32.mrf.mxu0
      %v6082 = vadd.f32 %v5972, %v6081
      %6083 = vmatmul.f32.gmra.mxu0 %v5919
      %v6084 = vpop.f32.mrf.mxu0
      %v6085 = vadd.f32 %v5972, %v6084
      %6086 = vmatmul.f32.gmra.mxu0 %v5920
      %v6087 = vpop.f32.mrf.mxu0
      %v6088 = vadd.f32 %v5972, %v6087
      %6089 = vmatmul.f32.gmra.mxu0 %v5921
      %v6090 = vpop.f32.mrf.mxu0
      %v6091 = vadd.f32 %v5972, %v6090
      %6092 = vmatmul.f32.gmra.mxu0 %v5922
      %v6093 = vpop.f32.mrf.mxu0
      %v6094 = vadd.f32 %v5972, %v6093
      %6095 = vmatmul.f32.gmra.mxu0 %v5923
      %v6096 = vpop.f32.mrf.mxu0
      %v6097 = vadd.f32 %v5972, %v6096
      %6098 = vmatmul.f32.gmra.mxu0 %v5924
      %v6099 = vpop.f32.mrf.mxu0
      %v6100 = vadd.f32 %v5972, %v6099
      %6101 = vmatmul.f32.gmra.mxu0 %v5925
      %v6102 = vpop.f32.mrf.mxu0
      %v6103 = vadd.f32 %v5972, %v6102
      %6104 = vmatmul.f32.gmra.mxu0 %v5926
      %v6105 = vpop.f32.mrf.mxu0
      %v6106 = vadd.f32 %v5972, %v6105
      %6107 = vmatmul.f32.gmra.mxu0 %v5927
      %v6108 = vpop.f32.mrf.mxu0
      %v6109 = vadd.f32 %v5972, %v6108
      %6110 = vmatmul.f32.gmra.mxu0 %v5928
      %v6111 = vpop.f32.mrf.mxu0
      %v6112 = vadd.f32 %v5972, %v6111
      %6113 = vmatmul.f32.gmra.mxu0 %v5929
      %v6114 = vpop.f32.mrf.mxu0
      %v6115 = vadd.f32 %v5972, %v6114
      %6116 = vmatmul.f32.gmra.mxu0 %v5930
      %v6117 = vpop.f32.mrf.mxu0
      %v6118 = vadd.f32 %v5972, %v6117
      %6119 = vmatmul.f32.gmra.mxu0 %v5931
      %v6120 = vpop.f32.mrf.mxu0
      %v6121 = vadd.f32 %v5972, %v6120
      %6122 = vmatmul.f32.gmra.mxu0 %v5932
      %v6123 = vpop.f32.mrf.mxu0
      %v6124 = vadd.f32 %v5972, %v6123
      %6125 = vmatmul.f32.gmra.mxu0 %v5933
      %v6126 = vpop.f32.mrf.mxu0
      %v6127 = vadd.f32 %v5972, %v6126
      %6128 = vmatmul.f32.gmra.mxu0 %v5934
      %v6129 = vpop.f32.mrf.mxu0
      %v6130 = vadd.f32 %v5972, %v6129
      %6131 = vmatmul.f32.gmra.mxu0 %v5935
      %v6132 = vpop.f32.mrf.mxu0
      %v6133 = vadd.f32 %v5972, %v6132
      %6134 = vmatmul.f32.gmra.mxu0 %v5936
      %v6135 = vpop.f32.mrf.mxu0
      %v6136 = vadd.f32 %v5972, %v6135
      %6137 = vmatmul.f32.gmra.mxu0 %v5937
      %v6138 = vpop.f32.mrf.mxu0
      %v6139 = vadd.f32 %v5972, %v6138
      %6140 = vmatmul.f32.gmra.mxu0 %v5938
      %v6141 = vpop.f32.mrf.mxu0
      %v6142 = vadd.f32 %v5972, %v6141
      %6143 = vmatmul.f32.gmra.mxu0 %v5939
      %v6144 = vpop.f32.mrf.mxu0
      %v6145 = vadd.f32 %v5972, %v6144
      %6146 = vmatmul.f32.gmra.mxu0 %v5940
      %v6147 = vpop.f32.mrf.mxu0
      %v6148 = vadd.f32 %v5972, %v6147
      %6149 = vmatmul.f32.gmra.mxu0 %v5941
      %v6150 = vpop.f32.mrf.mxu0
      %v6151 = vadd.f32 %v5972, %v6150
      %6152 = vmatmul.f32.gmra.mxu0 %v5942
      %v6153 = vpop.f32.mrf.mxu0
      %v6154 = vadd.f32 %v5972, %v6153
      %6155 = vmatmul.f32.gmra.mxu0 %v5943
      %v6156 = vpop.f32.mrf.mxu0
      %v6157 = vadd.f32 %v5972, %v6156
      %6158 = vmatmul.f32.gmra.mxu0 %v5944
      %v6159 = vpop.f32.mrf.mxu0
      %v6160 = vadd.f32 %v5972, %v6159
      %6161 = vmatmul.f32.gmra.mxu0 %v5945
      %v6162 = vpop.f32.mrf.mxu0
      %v6163 = vadd.f32 %v5972, %v6162
      %6164 = vmatmul.f32.gmra.mxu0 %v5946
      %v6165 = vpop.f32.mrf.mxu0
      %v6166 = vadd.f32 %v5972, %v6165
      %6167 = vmatmul.f32.gmra.mxu0 %v5947
      %v6168 = vpop.f32.mrf.mxu0
      %v6169 = vadd.f32 %v5972, %v6168
      %6170 = vmatmul.f32.gmra.mxu0 %v5948
      %v6171 = vpop.f32.mrf.mxu0
      %v6172 = vadd.f32 %v5972, %v6171
      %6173 = vmatmul.f32.gmra.mxu0 %v5949
      %v6174 = vpop.f32.mrf.mxu0
      %v6175 = vadd.f32 %v5972, %v6174
      %6176 = vmatmul.f32.gmra.mxu0 %v5950
      %v6177 = vpop.f32.mrf.mxu0
      %v6178 = vadd.f32 %v5972, %v6177
      %6179 = vmatmul.f32.gmra.mxu0 %v5951
      %v6180 = vpop.f32.mrf.mxu0
      %v6181 = vadd.f32 %v5972, %v6180
      %6182 = vdwg.mxu0
      %v6183 = vadd.f32 %v5992, %v5593
      %v6184 = vadd.f32 %v5995, %v5594
      %v6185 = vadd.f32 %v5998, %v5595
      %v6186 = vadd.f32 %v6001, %v5596
      %v6187 = vadd.f32 %v6004, %v5597
      %v6188 = vadd.f32 %v6007, %v5598
      %v6189 = vadd.f32 %v6010, %v5599
      %v6190 = vadd.f32 %v6013, %v5600
      %v6191 = vadd.f32 %v6016, %v5601
      %v6192 = vadd.f32 %v6019, %v5602
      %v6193 = vadd.f32 %v6022, %v5603
      %v6194 = vadd.f32 %v6025, %v5604
      %v6195 = vadd.f32 %v6028, %v5605
      %v6196 = vadd.f32 %v6031, %v5606
      %v6197 = vadd.f32 %v6034, %v5607
      %v6198 = vadd.f32 %v6037, %v5608
      %v6199 = vadd.f32 %v6040, %v5609
      %v6200 = vadd.f32 %v6043, %v5610
      %v6201 = vadd.f32 %v6046, %v5611
      %v6202 = vadd.f32 %v6049, %v5612
      %v6203 = vadd.f32 %v6052, %v5613
      %v6204 = vadd.f32 %v6055, %v5614
      %v6205 = vadd.f32 %v6058, %v5615
      %v6206 = vadd.f32 %v6061, %v5616
      %v6207 = vadd.f32 %v6064, %v5617
      %v6208 = vadd.f32 %v6067, %v5618
      %v6209 = vadd.f32 %v6070, %v5619
      %v6210 = vadd.f32 %v6073, %v5620
      %v6211 = vadd.f32 %v6076, %v5621
      %v6212 = vadd.f32 %v6079, %v5622
      %v6213 = vadd.f32 %v6082, %v5623
      %v6214 = vadd.f32 %v6085, %v5624
      %v6215 = vadd.f32 %v6088, %v5625
      %v6216 = vadd.f32 %v6091, %v5626
      %v6217 = vadd.f32 %v6094, %v5627
      %v6218 = vadd.f32 %v6097, %v5628
      %v6219 = vadd.f32 %v6100, %v5629
      %v6220 = vadd.f32 %v6103, %v5630
      %v6221 = vadd.f32 %v6106, %v5631
      %v6222 = vadd.f32 %v6109, %v5632
      %v6223 = vadd.f32 %v6112, %v5633
      %v6224 = vadd.f32 %v6115, %v5634
      %v6225 = vadd.f32 %v6118, %v5635
      %v6226 = vadd.f32 %v6121, %v5636
      %v6227 = vadd.f32 %v6124, %v5637
      %v6228 = vadd.f32 %v6127, %v5638
      %v6229 = vadd.f32 %v6130, %v5639
      %v6230 = vadd.f32 %v6133, %v5640
      %v6231 = vadd.f32 %v6136, %v5641
      %v6232 = vadd.f32 %v6139, %v5642
      %v6233 = vadd.f32 %v6142, %v5643
      %v6234 = vadd.f32 %v6145, %v5644
      %v6235 = vadd.f32 %v6148, %v5645
      %v6236 = vadd.f32 %v6151, %v5646
      %v6237 = vadd.f32 %v6154, %v5647
      %v6238 = vadd.f32 %v6157, %v5648
      %v6239 = vadd.f32 %v6160, %v5649
      %v6240 = vadd.f32 %v6163, %v5650
      %v6241 = vadd.f32 %v6166, %v5651
      %v6242 = vadd.f32 %v6169, %v5652
      %v6243 = vadd.f32 %v6172, %v5653
      %v6244 = vadd.f32 %v6175, %v5654
      %v6245 = vadd.f32 %v6178, %v5655
      %v6246 = vadd.f32 %v6181, %v5656
      %v6247 = vtanh.pop %v6183
      %v6248 = vtanh.pop %v6184
      %v6249 = vtanh.pop %v6185
      %v6250 = vtanh.pop %v6186
      %v6251 = vtanh.pop %v6187
      %v6252 = vtanh.pop %v6188
      %v6253 = vtanh.pop %v6189
      %v6254 = vtanh.pop %v6190
      %v6255 = vtanh.pop %v6191
      %v6256 = vtanh.pop %v6192
      %v6257 = vtanh.pop %v6193
      %v6258 = vtanh.pop %v6194
      %v6259 = vtanh.pop %v6195
      %v6260 = vtanh.pop %v6196
      %v6261 = vtanh.pop %v6197
      %v6262 = vtanh.pop %v6198
      %v6263 = vtanh.pop %v6199
      %v6264 = vtanh.pop %v6200
      %v6265 = vtanh.pop %v6201
      %v6266 = vtanh.pop %v6202
      %v6267 = vtanh.pop %v6203
      %v6268 = vtanh.pop %v6204
      %v6269 = vtanh.pop %v6205
      %v6270 = vtanh.pop %v6206
      %v6271 = vtanh.pop %v6207
      %v6272 = vtanh.pop %v6208
      %v6273 = vtanh.pop %v6209
      %v6274 = vtanh.pop %v6210
      %v6275 = vtanh.pop %v6211
      %v6276 = vtanh.pop %v6212
      %v6277 = vtanh.pop %v6213
      %v6278 = vtanh.pop %v6214
      %v6279 = vtanh.pop %v6215
      %v6280 = vtanh.pop %v6216
      %v6281 = vtanh.pop %v6217
      %v6282 = vtanh.pop %v6218
      %v6283 = vtanh.pop %v6219
      %v6284 = vtanh.pop %v6220
      %v6285 = vtanh.pop %v6221
      %v6286 = vtanh.pop %v6222
      %v6287 = vtanh.pop %v6223
      %v6288 = vtanh.pop %v6224
      %v6289 = vtanh.pop %v6225
      %v6290 = vtanh.pop %v6226
      %v6291 = vtanh.pop %v6227
      %v6292 = vtanh.pop %v6228
      %v6293 = vtanh.pop %v6229
      %v6294 = vtanh.pop %v6230
      %v6295 = vtanh.pop %v6231
      %v6296 = vtanh.pop %v6232
      %v6297 = vtanh.pop %v6233
      %v6298 = vtanh.pop %v6234
      %v6299 = vtanh.pop %v6235
      %v6300 = vtanh.pop %v6236
      %v6301 = vtanh.pop %v6237
      %v6302 = vtanh.pop %v6238
      %v6303 = vtanh.pop %v6239
      %v6304 = vtanh.pop %v6240
      %v6305 = vtanh.pop %v6241
      %v6306 = vtanh.pop %v6242
      %v6307 = vtanh.pop %v6243
      %v6308 = vtanh.pop %v6244
      %v6309 = vtanh.pop %v6245
      %v6310 = vtanh.pop %v6246
      %s6311 = scalar_lea.vmem %s4, 896
      %v6312 = vld [vmem:[%s6311] sm:$0xff]
      %v6313 = vld [vmem:[%s6311 + $0x8] sm:$0xff]
      %v6314 = vld [vmem:[%s6311 + $0x10] sm:$0xff]
      %v6315 = vld [vmem:[%s6311 + $0x18] sm:$0xff]
      %v6316 = vld [vmem:[%s6311 + $0x20] sm:$0xff]
      %v6317 = vld [vmem:[%s6311 + $0x28] sm:$0xff]
      %v6318 = vld [vmem:[%s6311 + $0x30] sm:$0xff]
      %v6319 = vld [vmem:[%s6311 + $0x38] sm:$0xff]
      %v6320 = vld [vmem:[%s6311 + $0x40] sm:$0xff]
      %v6321 = vld [vmem:[%s6311 + $0x48] sm:$0xff]
      %v6322 = vld [vmem:[%s6311 + $0x50] sm:$0xff]
      %v6323 = vld [vmem:[%s6311 + $0x58] sm:$0xff]
      %v6324 = vld [vmem:[%s6311 + $0x60] sm:$0xff]
      %v6325 = vld [vmem:[%s6311 + $0x68] sm:$0xff]
      %v6326 = vld [vmem:[%s6311 + $0x70] sm:$0xff]
      %v6327 = vld [vmem:[%s6311 + $0x78] sm:$0xff]
      %s6328 = scalar_lea.vmem %s5, 7
      %v6329 = vld [vmem:[%s6328] sm:$0x1]
      %v6331 = vperm.slane %v6329, 0
      %6333 = vmatpush.msra.mxu0 %v6327
      %6334 = vmatpush.msra.mxu0 %v6326
      %6335 = vmatpush.msra.mxu0 %v6325
      %6336 = vmatpush.msra.mxu0 %v6324
      %6337 = vmatpush.msra.mxu0 %v6323
      %6338 = vmatpush.msra.mxu0 %v6322
      %6339 = vmatpush.msra.mxu0 %v6321
      %6340 = vmatpush.msra.mxu0 %v6320
      %6341 = vmatpush.msra.mxu0 %v6319
      %6342 = vmatpush.msra.mxu0 %v6318
      %6343 = vmatpush.msra.mxu0 %v6317
      %6344 = vmatpush.msra.mxu0 %v6316
      %6345 = vmatpush.msra.mxu0 %v6315
      %6346 = vmatpush.msra.mxu0 %v6314
      %6347 = vmatpush.msra.mxu0 %v6313
      %6348 = vmatpush.msra.mxu0 %v6312
      %6349 = vmatmul.f32.gmra.mxu0 %v6247
      %v6350 = vpop.f32.mrf.mxu0
      %v6351 = vadd.f32 %v6331, %v6350
      %6352 = vmatmul.f32.gmra.mxu0 %v6248
      %v6353 = vpop.f32.mrf.mxu0
      %v6354 = vadd.f32 %v6331, %v6353
      %6355 = vmatmul.f32.gmra.mxu0 %v6249
      %v6356 = vpop.f32.mrf.mxu0
      %v6357 = vadd.f32 %v6331, %v6356
      %6358 = vmatmul.f32.gmra.mxu0 %v6250
      %v6359 = vpop.f32.mrf.mxu0
      %v6360 = vadd.f32 %v6331, %v6359
      %6361 = vmatmul.f32.gmra.mxu0 %v6251
      %v6362 = vpop.f32.mrf.mxu0
      %v6363 = vadd.f32 %v6331, %v6362
      %6364 = vmatmul.f32.gmra.mxu0 %v6252
      %v6365 = vpop.f32.mrf.mxu0
      %v6366 = vadd.f32 %v6331, %v6365
      %6367 = vmatmul.f32.gmra.mxu0 %v6253
      %v6368 = vpop.f32.mrf.mxu0
      %v6369 = vadd.f32 %v6331, %v6368
      %6370 = vmatmul.f32.gmra.mxu0 %v6254
      %v6371 = vpop.f32.mrf.mxu0
      %v6372 = vadd.f32 %v6331, %v6371
      %6373 = vmatmul.f32.gmra.mxu0 %v6255
      %v6374 = vpop.f32.mrf.mxu0
      %v6375 = vadd.f32 %v6331, %v6374
      %6376 = vmatmul.f32.gmra.mxu0 %v6256
      %v6377 = vpop.f32.mrf.mxu0
      %v6378 = vadd.f32 %v6331, %v6377
      %6379 = vmatmul.f32.gmra.mxu0 %v6257
      %v6380 = vpop.f32.mrf.mxu0
      %v6381 = vadd.f32 %v6331, %v6380
      %6382 = vmatmul.f32.gmra.mxu0 %v6258
      %v6383 = vpop.f32.mrf.mxu0
      %v6384 = vadd.f32 %v6331, %v6383
      %6385 = vmatmul.f32.gmra.mxu0 %v6259
      %v6386 = vpop.f32.mrf.mxu0
      %v6387 = vadd.f32 %v6331, %v6386
      %6388 = vmatmul.f32.gmra.mxu0 %v6260
      %v6389 = vpop.f32.mrf.mxu0
      %v6390 = vadd.f32 %v6331, %v6389
      %6391 = vmatmul.f32.gmra.mxu0 %v6261
      %v6392 = vpop.f32.mrf.mxu0
      %v6393 = vadd.f32 %v6331, %v6392
      %6394 = vmatmul.f32.gmra.mxu0 %v6262
      %v6395 = vpop.f32.mrf.mxu0
      %v6396 = vadd.f32 %v6331, %v6395
      %6397 = vmatmul.f32.gmra.mxu0 %v6263
      %v6398 = vpop.f32.mrf.mxu0
      %v6399 = vadd.f32 %v6331, %v6398
      %6400 = vmatmul.f32.gmra.mxu0 %v6264
      %v6401 = vpop.f32.mrf.mxu0
      %v6402 = vadd.f32 %v6331, %v6401
      %6403 = vmatmul.f32.gmra.mxu0 %v6265
      %v6404 = vpop.f32.mrf.mxu0
      %v6405 = vadd.f32 %v6331, %v6404
      %6406 = vmatmul.f32.gmra.mxu0 %v6266
      %v6407 = vpop.f32.mrf.mxu0
      %v6408 = vadd.f32 %v6331, %v6407
      %6409 = vmatmul.f32.gmra.mxu0 %v6267
      %v6410 = vpop.f32.mrf.mxu0
      %v6411 = vadd.f32 %v6331, %v6410
      %6412 = vmatmul.f32.gmra.mxu0 %v6268
      %v6413 = vpop.f32.mrf.mxu0
      %v6414 = vadd.f32 %v6331, %v6413
      %6415 = vmatmul.f32.gmra.mxu0 %v6269
      %v6416 = vpop.f32.mrf.mxu0
      %v6417 = vadd.f32 %v6331, %v6416
      %6418 = vmatmul.f32.gmra.mxu0 %v6270
      %v6419 = vpop.f32.mrf.mxu0
      %v6420 = vadd.f32 %v6331, %v6419
      %6421 = vmatmul.f32.gmra.mxu0 %v6271
      %v6422 = vpop.f32.mrf.mxu0
      %v6423 = vadd.f32 %v6331, %v6422
      %6424 = vmatmul.f32.gmra.mxu0 %v6272
      %v6425 = vpop.f32.mrf.mxu0
      %v6426 = vadd.f32 %v6331, %v6425
      %6427 = vmatmul.f32.gmra.mxu0 %v6273
      %v6428 = vpop.f32.mrf.mxu0
      %v6429 = vadd.f32 %v6331, %v6428
      %6430 = vmatmul.f32.gmra.mxu0 %v6274
      %v6431 = vpop.f32.mrf.mxu0
      %v6432 = vadd.f32 %v6331, %v6431
      %6433 = vmatmul.f32.gmra.mxu0 %v6275
      %v6434 = vpop.f32.mrf.mxu0
      %v6435 = vadd.f32 %v6331, %v6434
      %6436 = vmatmul.f32.gmra.mxu0 %v6276
      %v6437 = vpop.f32.mrf.mxu0
      %v6438 = vadd.f32 %v6331, %v6437
      %6439 = vmatmul.f32.gmra.mxu0 %v6277
      %v6440 = vpop.f32.mrf.mxu0
      %v6441 = vadd.f32 %v6331, %v6440
      %6442 = vmatmul.f32.gmra.mxu0 %v6278
      %v6443 = vpop.f32.mrf.mxu0
      %v6444 = vadd.f32 %v6331, %v6443
      %6445 = vmatmul.f32.gmra.mxu0 %v6279
      %v6446 = vpop.f32.mrf.mxu0
      %v6447 = vadd.f32 %v6331, %v6446
      %6448 = vmatmul.f32.gmra.mxu0 %v6280
      %v6449 = vpop.f32.mrf.mxu0
      %v6450 = vadd.f32 %v6331, %v6449
      %6451 = vmatmul.f32.gmra.mxu0 %v6281
      %v6452 = vpop.f32.mrf.mxu0
      %v6453 = vadd.f32 %v6331, %v6452
      %6454 = vmatmul.f32.gmra.mxu0 %v6282
      %v6455 = vpop.f32.mrf.mxu0
      %v6456 = vadd.f32 %v6331, %v6455
      %6457 = vmatmul.f32.gmra.mxu0 %v6283
      %v6458 = vpop.f32.mrf.mxu0
      %v6459 = vadd.f32 %v6331, %v6458
      %6460 = vmatmul.f32.gmra.mxu0 %v6284
      %v6461 = vpop.f32.mrf.mxu0
      %v6462 = vadd.f32 %v6331, %v6461
      %6463 = vmatmul.f32.gmra.mxu0 %v6285
      %v6464 = vpop.f32.mrf.mxu0
      %v6465 = vadd.f32 %v6331, %v6464
      %6466 = vmatmul.f32.gmra.mxu0 %v6286
      %v6467 = vpop.f32.mrf.mxu0
      %v6468 = vadd.f32 %v6331, %v6467
      %6469 = vmatmul.f32.gmra.mxu0 %v6287
      %v6470 = vpop.f32.mrf.mxu0
      %v6471 = vadd.f32 %v6331, %v6470
      %6472 = vmatmul.f32.gmra.mxu0 %v6288
      %v6473 = vpop.f32.mrf.mxu0
      %v6474 = vadd.f32 %v6331, %v6473
      %6475 = vmatmul.f32.gmra.mxu0 %v6289
      %v6476 = vpop.f32.mrf.mxu0
      %v6477 = vadd.f32 %v6331, %v6476
      %6478 = vmatmul.f32.gmra.mxu0 %v6290
      %v6479 = vpop.f32.mrf.mxu0
      %v6480 = vadd.f32 %v6331, %v6479
      %6481 = vmatmul.f32.gmra.mxu0 %v6291
      %v6482 = vpop.f32.mrf.mxu0
      %v6483 = vadd.f32 %v6331, %v6482
      %6484 = vmatmul.f32.gmra.mxu0 %v6292
      %v6485 = vpop.f32.mrf.mxu0
      %v6486 = vadd.f32 %v6331, %v6485
      %6487 = vmatmul.f32.gmra.mxu0 %v6293
      %v6488 = vpop.f32.mrf.mxu0
      %v6489 = vadd.f32 %v6331, %v6488
      %6490 = vmatmul.f32.gmra.mxu0 %v6294
      %v6491 = vpop.f32.mrf.mxu0
      %v6492 = vadd.f32 %v6331, %v6491
      %6493 = vmatmul.f32.gmra.mxu0 %v6295
      %v6494 = vpop.f32.mrf.mxu0
      %v6495 = vadd.f32 %v6331, %v6494
      %6496 = vmatmul.f32.gmra.mxu0 %v6296
      %v6497 = vpop.f32.mrf.mxu0
      %v6498 = vadd.f32 %v6331, %v6497
      %6499 = vmatmul.f32.gmra.mxu0 %v6297
      %v6500 = vpop.f32.mrf.mxu0
      %v6501 = vadd.f32 %v6331, %v6500
      %6502 = vmatmul.f32.gmra.mxu0 %v6298
      %v6503 = vpop.f32.mrf.mxu0
      %v6504 = vadd.f32 %v6331, %v6503
      %6505 = vmatmul.f32.gmra.mxu0 %v6299
      %v6506 = vpop.f32.mrf.mxu0
      %v6507 = vadd.f32 %v6331, %v6506
      %6508 = vmatmul.f32.gmra.mxu0 %v6300
      %v6509 = vpop.f32.mrf.mxu0
      %v6510 = vadd.f32 %v6331, %v6509
      %6511 = vmatmul.f32.gmra.mxu0 %v6301
      %v6512 = vpop.f32.mrf.mxu0
      %v6513 = vadd.f32 %v6331, %v6512
      %6514 = vmatmul.f32.gmra.mxu0 %v6302
      %v6515 = vpop.f32.mrf.mxu0
      %v6516 = vadd.f32 %v6331, %v6515
      %6517 = vmatmul.f32.gmra.mxu0 %v6303
      %v6518 = vpop.f32.mrf.mxu0
      %v6519 = vadd.f32 %v6331, %v6518
      %6520 = vmatmul.f32.gmra.mxu0 %v6304
      %v6521 = vpop.f32.mrf.mxu0
      %v6522 = vadd.f32 %v6331, %v6521
      %6523 = vmatmul.f32.gmra.mxu0 %v6305
      %v6524 = vpop.f32.mrf.mxu0
      %v6525 = vadd.f32 %v6331, %v6524
      %6526 = vmatmul.f32.gmra.mxu0 %v6306
      %v6527 = vpop.f32.mrf.mxu0
      %v6528 = vadd.f32 %v6331, %v6527
      %6529 = vmatmul.f32.gmra.mxu0 %v6307
      %v6530 = vpop.f32.mrf.mxu0
      %v6531 = vadd.f32 %v6331, %v6530
      %6532 = vmatmul.f32.gmra.mxu0 %v6308
      %v6533 = vpop.f32.mrf.mxu0
      %v6534 = vadd.f32 %v6331, %v6533
      %6535 = vmatmul.f32.gmra.mxu0 %v6309
      %v6536 = vpop.f32.mrf.mxu0
      %v6537 = vadd.f32 %v6331, %v6536
      %6538 = vmatmul.f32.gmra.mxu0 %v6310
      %v6539 = vpop.f32.mrf.mxu0
      %v6540 = vadd.f32 %v6331, %v6539
      %6541 = vdwg.mxu0
      %v6542 = vtanh.pop %v6351
      %v6543 = vtanh.pop %v6354
      %v6544 = vtanh.pop %v6357
      %v6545 = vtanh.pop %v6360
      %v6546 = vtanh.pop %v6363
      %v6547 = vtanh.pop %v6366
      %v6548 = vtanh.pop %v6369
      %v6549 = vtanh.pop %v6372
      %v6550 = vtanh.pop %v6375
      %v6551 = vtanh.pop %v6378
      %v6552 = vtanh.pop %v6381
      %v6553 = vtanh.pop %v6384
      %v6554 = vtanh.pop %v6387
      %v6555 = vtanh.pop %v6390
      %v6556 = vtanh.pop %v6393
      %v6557 = vtanh.pop %v6396
      %v6558 = vtanh.pop %v6399
      %v6559 = vtanh.pop %v6402
      %v6560 = vtanh.pop %v6405
      %v6561 = vtanh.pop %v6408
      %v6562 = vtanh.pop %v6411
      %v6563 = vtanh.pop %v6414
      %v6564 = vtanh.pop %v6417
      %v6565 = vtanh.pop %v6420
      %v6566 = vtanh.pop %v6423
      %v6567 = vtanh.pop %v6426
      %v6568 = vtanh.pop %v6429
      %v6569 = vtanh.pop %v6432
      %v6570 = vtanh.pop %v6435
      %v6571 = vtanh.pop %v6438
      %v6572 = vtanh.pop %v6441
      %v6573 = vtanh.pop %v6444
      %v6574 = vtanh.pop %v6447
      %v6575 = vtanh.pop %v6450
      %v6576 = vtanh.pop %v6453
      %v6577 = vtanh.pop %v6456
      %v6578 = vtanh.pop %v6459
      %v6579 = vtanh.pop %v6462
      %v6580 = vtanh.pop %v6465
      %v6581 = vtanh.pop %v6468
      %v6582 = vtanh.pop %v6471
      %v6583 = vtanh.pop %v6474
      %v6584 = vtanh.pop %v6477
      %v6585 = vtanh.pop %v6480
      %v6586 = vtanh.pop %v6483
      %v6587 = vtanh.pop %v6486
      %v6588 = vtanh.pop %v6489
      %v6589 = vtanh.pop %v6492
      %v6590 = vtanh.pop %v6495
      %v6591 = vtanh.pop %v6498
      %v6592 = vtanh.pop %v6501
      %v6593 = vtanh.pop %v6504
      %v6594 = vtanh.pop %v6507
      %v6595 = vtanh.pop %v6510
      %v6596 = vtanh.pop %v6513
      %v6597 = vtanh.pop %v6516
      %v6598 = vtanh.pop %v6519
      %v6599 = vtanh.pop %v6522
      %v6600 = vtanh.pop %v6525
      %v6601 = vtanh.pop %v6528
      %v6602 = vtanh.pop %v6531
      %v6603 = vtanh.pop %v6534
      %v6604 = vtanh.pop %v6537
      %v6605 = vtanh.pop %v6540
      %s6606 = scalar_lea.vmem %s6, 896
      %v6607 = vld [vmem:[%s6606] sm:$0xff]
      %v6608 = vld [vmem:[%s6606 + $0x8] sm:$0xff]
      %v6609 = vld [vmem:[%s6606 + $0x10] sm:$0xff]
      %v6610 = vld [vmem:[%s6606 + $0x18] sm:$0xff]
      %v6611 = vld [vmem:[%s6606 + $0x20] sm:$0xff]
      %v6612 = vld [vmem:[%s6606 + $0x28] sm:$0xff]
      %v6613 = vld [vmem:[%s6606 + $0x30] sm:$0xff]
      %v6614 = vld [vmem:[%s6606 + $0x38] sm:$0xff]
      %v6615 = vld [vmem:[%s6606 + $0x40] sm:$0xff]
      %v6616 = vld [vmem:[%s6606 + $0x48] sm:$0xff]
      %v6617 = vld [vmem:[%s6606 + $0x50] sm:$0xff]
      %v6618 = vld [vmem:[%s6606 + $0x58] sm:$0xff]
      %v6619 = vld [vmem:[%s6606 + $0x60] sm:$0xff]
      %v6620 = vld [vmem:[%s6606 + $0x68] sm:$0xff]
      %v6621 = vld [vmem:[%s6606 + $0x70] sm:$0xff]
      %v6622 = vld [vmem:[%s6606 + $0x78] sm:$0xff]
      %s6623 = scalar_lea.vmem %s7, 7
      %v6624 = vld [vmem:[%s6623] sm:$0x1]
      %v6626 = vperm.slane %v6624, 0
      %6628 = vmatpush.msra.mxu0 %v6622
      %6629 = vmatpush.msra.mxu0 %v6621
      %6630 = vmatpush.msra.mxu0 %v6620
      %6631 = vmatpush.msra.mxu0 %v6619
      %6632 = vmatpush.msra.mxu0 %v6618
      %6633 = vmatpush.msra.mxu0 %v6617
      %6634 = vmatpush.msra.mxu0 %v6616
      %6635 = vmatpush.msra.mxu0 %v6615
      %6636 = vmatpush.msra.mxu0 %v6614
      %6637 = vmatpush.msra.mxu0 %v6613
      %6638 = vmatpush.msra.mxu0 %v6612
      %6639 = vmatpush.msra.mxu0 %v6611
      %6640 = vmatpush.msra.mxu0 %v6610
      %6641 = vmatpush.msra.mxu0 %v6609
      %6642 = vmatpush.msra.mxu0 %v6608
      %6643 = vmatpush.msra.mxu0 %v6607
      %6644 = vmatmul.f32.gmra.mxu0 %v6542
      %v6645 = vpop.f32.mrf.mxu0
      %v6646 = vadd.f32 %v6626, %v6645
      %6647 = vmatmul.f32.gmra.mxu0 %v6543
      %v6648 = vpop.f32.mrf.mxu0
      %v6649 = vadd.f32 %v6626, %v6648
      %6650 = vmatmul.f32.gmra.mxu0 %v6544
      %v6651 = vpop.f32.mrf.mxu0
      %v6652 = vadd.f32 %v6626, %v6651
      %6653 = vmatmul.f32.gmra.mxu0 %v6545
      %v6654 = vpop.f32.mrf.mxu0
      %v6655 = vadd.f32 %v6626, %v6654
      %6656 = vmatmul.f32.gmra.mxu0 %v6546
      %v6657 = vpop.f32.mrf.mxu0
      %v6658 = vadd.f32 %v6626, %v6657
      %6659 = vmatmul.f32.gmra.mxu0 %v6547
      %v6660 = vpop.f32.mrf.mxu0
      %v6661 = vadd.f32 %v6626, %v6660
      %6662 = vmatmul.f32.gmra.mxu0 %v6548
      %v6663 = vpop.f32.mrf.mxu0
      %v6664 = vadd.f32 %v6626, %v6663
      %6665 = vmatmul.f32.gmra.mxu0 %v6549
      %v6666 = vpop.f32.mrf.mxu0
      %v6667 = vadd.f32 %v6626, %v6666
      %6668 = vmatmul.f32.gmra.mxu0 %v6550
      %v6669 = vpop.f32.mrf.mxu0
      %v6670 = vadd.f32 %v6626, %v6669
      %6671 = vmatmul.f32.gmra.mxu0 %v6551
      %v6672 = vpop.f32.mrf.mxu0
      %v6673 = vadd.f32 %v6626, %v6672
      %6674 = vmatmul.f32.gmra.mxu0 %v6552
      %v6675 = vpop.f32.mrf.mxu0
      %v6676 = vadd.f32 %v6626, %v6675
      %6677 = vmatmul.f32.gmra.mxu0 %v6553
      %v6678 = vpop.f32.mrf.mxu0
      %v6679 = vadd.f32 %v6626, %v6678
      %6680 = vmatmul.f32.gmra.mxu0 %v6554
      %v6681 = vpop.f32.mrf.mxu0
      %v6682 = vadd.f32 %v6626, %v6681
      %6683 = vmatmul.f32.gmra.mxu0 %v6555
      %v6684 = vpop.f32.mrf.mxu0
      %v6685 = vadd.f32 %v6626, %v6684
      %6686 = vmatmul.f32.gmra.mxu0 %v6556
      %v6687 = vpop.f32.mrf.mxu0
      %v6688 = vadd.f32 %v6626, %v6687
      %6689 = vmatmul.f32.gmra.mxu0 %v6557
      %v6690 = vpop.f32.mrf.mxu0
      %v6691 = vadd.f32 %v6626, %v6690
      %6692 = vmatmul.f32.gmra.mxu0 %v6558
      %v6693 = vpop.f32.mrf.mxu0
      %v6694 = vadd.f32 %v6626, %v6693
      %6695 = vmatmul.f32.gmra.mxu0 %v6559
      %v6696 = vpop.f32.mrf.mxu0
      %v6697 = vadd.f32 %v6626, %v6696
      %6698 = vmatmul.f32.gmra.mxu0 %v6560
      %v6699 = vpop.f32.mrf.mxu0
      %v6700 = vadd.f32 %v6626, %v6699
      %6701 = vmatmul.f32.gmra.mxu0 %v6561
      %v6702 = vpop.f32.mrf.mxu0
      %v6703 = vadd.f32 %v6626, %v6702
      %6704 = vmatmul.f32.gmra.mxu0 %v6562
      %v6705 = vpop.f32.mrf.mxu0
      %v6706 = vadd.f32 %v6626, %v6705
      %6707 = vmatmul.f32.gmra.mxu0 %v6563
      %v6708 = vpop.f32.mrf.mxu0
      %v6709 = vadd.f32 %v6626, %v6708
      %6710 = vmatmul.f32.gmra.mxu0 %v6564
      %v6711 = vpop.f32.mrf.mxu0
      %v6712 = vadd.f32 %v6626, %v6711
      %6713 = vmatmul.f32.gmra.mxu0 %v6565
      %v6714 = vpop.f32.mrf.mxu0
      %v6715 = vadd.f32 %v6626, %v6714
      %6716 = vmatmul.f32.gmra.mxu0 %v6566
      %v6717 = vpop.f32.mrf.mxu0
      %v6718 = vadd.f32 %v6626, %v6717
      %6719 = vmatmul.f32.gmra.mxu0 %v6567
      %v6720 = vpop.f32.mrf.mxu0
      %v6721 = vadd.f32 %v6626, %v6720
      %6722 = vmatmul.f32.gmra.mxu0 %v6568
      %v6723 = vpop.f32.mrf.mxu0
      %v6724 = vadd.f32 %v6626, %v6723
      %6725 = vmatmul.f32.gmra.mxu0 %v6569
      %v6726 = vpop.f32.mrf.mxu0
      %v6727 = vadd.f32 %v6626, %v6726
      %6728 = vmatmul.f32.gmra.mxu0 %v6570
      %v6729 = vpop.f32.mrf.mxu0
      %v6730 = vadd.f32 %v6626, %v6729
      %6731 = vmatmul.f32.gmra.mxu0 %v6571
      %v6732 = vpop.f32.mrf.mxu0
      %v6733 = vadd.f32 %v6626, %v6732
      %6734 = vmatmul.f32.gmra.mxu0 %v6572
      %v6735 = vpop.f32.mrf.mxu0
      %v6736 = vadd.f32 %v6626, %v6735
      %6737 = vmatmul.f32.gmra.mxu0 %v6573
      %v6738 = vpop.f32.mrf.mxu0
      %v6739 = vadd.f32 %v6626, %v6738
      %6740 = vmatmul.f32.gmra.mxu0 %v6574
      %v6741 = vpop.f32.mrf.mxu0
      %v6742 = vadd.f32 %v6626, %v6741
      %6743 = vmatmul.f32.gmra.mxu0 %v6575
      %v6744 = vpop.f32.mrf.mxu0
      %v6745 = vadd.f32 %v6626, %v6744
      %6746 = vmatmul.f32.gmra.mxu0 %v6576
      %v6747 = vpop.f32.mrf.mxu0
      %v6748 = vadd.f32 %v6626, %v6747
      %6749 = vmatmul.f32.gmra.mxu0 %v6577
      %v6750 = vpop.f32.mrf.mxu0
      %v6751 = vadd.f32 %v6626, %v6750
      %6752 = vmatmul.f32.gmra.mxu0 %v6578
      %v6753 = vpop.f32.mrf.mxu0
      %v6754 = vadd.f32 %v6626, %v6753
      %6755 = vmatmul.f32.gmra.mxu0 %v6579
      %v6756 = vpop.f32.mrf.mxu0
      %v6757 = vadd.f32 %v6626, %v6756
      %6758 = vmatmul.f32.gmra.mxu0 %v6580
      %v6759 = vpop.f32.mrf.mxu0
      %v6760 = vadd.f32 %v6626, %v6759
      %6761 = vmatmul.f32.gmra.mxu0 %v6581
      %v6762 = vpop.f32.mrf.mxu0
      %v6763 = vadd.f32 %v6626, %v6762
      %6764 = vmatmul.f32.gmra.mxu0 %v6582
      %v6765 = vpop.f32.mrf.mxu0
      %v6766 = vadd.f32 %v6626, %v6765
      %6767 = vmatmul.f32.gmra.mxu0 %v6583
      %v6768 = vpop.f32.mrf.mxu0
      %v6769 = vadd.f32 %v6626, %v6768
      %6770 = vmatmul.f32.gmra.mxu0 %v6584
      %v6771 = vpop.f32.mrf.mxu0
      %v6772 = vadd.f32 %v6626, %v6771
      %6773 = vmatmul.f32.gmra.mxu0 %v6585
      %v6774 = vpop.f32.mrf.mxu0
      %v6775 = vadd.f32 %v6626, %v6774
      %6776 = vmatmul.f32.gmra.mxu0 %v6586
      %v6777 = vpop.f32.mrf.mxu0
      %v6778 = vadd.f32 %v6626, %v6777
      %6779 = vmatmul.f32.gmra.mxu0 %v6587
      %v6780 = vpop.f32.mrf.mxu0
      %v6781 = vadd.f32 %v6626, %v6780
      %6782 = vmatmul.f32.gmra.mxu0 %v6588
      %v6783 = vpop.f32.mrf.mxu0
      %v6784 = vadd.f32 %v6626, %v6783
      %6785 = vmatmul.f32.gmra.mxu0 %v6589
      %v6786 = vpop.f32.mrf.mxu0
      %v6787 = vadd.f32 %v6626, %v6786
      %6788 = vmatmul.f32.gmra.mxu0 %v6590
      %v6789 = vpop.f32.mrf.mxu0
      %v6790 = vadd.f32 %v6626, %v6789
      %6791 = vmatmul.f32.gmra.mxu0 %v6591
      %v6792 = vpop.f32.mrf.mxu0
      %v6793 = vadd.f32 %v6626, %v6792
      %6794 = vmatmul.f32.gmra.mxu0 %v6592
      %v6795 = vpop.f32.mrf.mxu0
      %v6796 = vadd.f32 %v6626, %v6795
      %6797 = vmatmul.f32.gmra.mxu0 %v6593
      %v6798 = vpop.f32.mrf.mxu0
      %v6799 = vadd.f32 %v6626, %v6798
      %6800 = vmatmul.f32.gmra.mxu0 %v6594
      %v6801 = vpop.f32.mrf.mxu0
      %v6802 = vadd.f32 %v6626, %v6801
      %6803 = vmatmul.f32.gmra.mxu0 %v6595
      %v6804 = vpop.f32.mrf.mxu0
      %v6805 = vadd.f32 %v6626, %v6804
      %6806 = vmatmul.f32.gmra.mxu0 %v6596
      %v6807 = vpop.f32.mrf.mxu0
      %v6808 = vadd.f32 %v6626, %v6807
      %6809 = vmatmul.f32.gmra.mxu0 %v6597
      %v6810 = vpop.f32.mrf.mxu0
      %v6811 = vadd.f32 %v6626, %v6810
      %6812 = vmatmul.f32.gmra.mxu0 %v6598
      %v6813 = vpop.f32.mrf.mxu0
      %v6814 = vadd.f32 %v6626, %v6813
      %6815 = vmatmul.f32.gmra.mxu0 %v6599
      %v6816 = vpop.f32.mrf.mxu0
      %v6817 = vadd.f32 %v6626, %v6816
      %6818 = vmatmul.f32.gmra.mxu0 %v6600
      %v6819 = vpop.f32.mrf.mxu0
      %v6820 = vadd.f32 %v6626, %v6819
      %6821 = vmatmul.f32.gmra.mxu0 %v6601
      %v6822 = vpop.f32.mrf.mxu0
      %v6823 = vadd.f32 %v6626, %v6822
      %6824 = vmatmul.f32.gmra.mxu0 %v6602
      %v6825 = vpop.f32.mrf.mxu0
      %v6826 = vadd.f32 %v6626, %v6825
      %6827 = vmatmul.f32.gmra.mxu0 %v6603
      %v6828 = vpop.f32.mrf.mxu0
      %v6829 = vadd.f32 %v6626, %v6828
      %6830 = vmatmul.f32.gmra.mxu0 %v6604
      %v6831 = vpop.f32.mrf.mxu0
      %v6832 = vadd.f32 %v6626, %v6831
      %6833 = vmatmul.f32.gmra.mxu0 %v6605
      %v6834 = vpop.f32.mrf.mxu0
      %v6835 = vadd.f32 %v6626, %v6834
      %6836 = vdwg.mxu0
      %v6837 = vadd.f32 %v6646, %v6247
      %v6838 = vadd.f32 %v6649, %v6248
      %v6839 = vadd.f32 %v6652, %v6249
      %v6840 = vadd.f32 %v6655, %v6250
      %v6841 = vadd.f32 %v6658, %v6251
      %v6842 = vadd.f32 %v6661, %v6252
      %v6843 = vadd.f32 %v6664, %v6253
      %v6844 = vadd.f32 %v6667, %v6254
      %v6845 = vadd.f32 %v6670, %v6255
      %v6846 = vadd.f32 %v6673, %v6256
      %v6847 = vadd.f32 %v6676, %v6257
      %v6848 = vadd.f32 %v6679, %v6258
      %v6849 = vadd.f32 %v6682, %v6259
      %v6850 = vadd.f32 %v6685, %v6260
      %v6851 = vadd.f32 %v6688, %v6261
      %v6852 = vadd.f32 %v6691, %v6262
      %v6853 = vadd.f32 %v6694, %v6263
      %v6854 = vadd.f32 %v6697, %v6264
      %v6855 = vadd.f32 %v6700, %v6265
      %v6856 = vadd.f32 %v6703, %v6266
      %v6857 = vadd.f32 %v6706, %v6267
      %v6858 = vadd.f32 %v6709, %v6268
      %v6859 = vadd.f32 %v6712, %v6269
      %v6860 = vadd.f32 %v6715, %v6270
      %v6861 = vadd.f32 %v6718, %v6271
      %v6862 = vadd.f32 %v6721, %v6272
      %v6863 = vadd.f32 %v6724, %v6273
      %v6864 = vadd.f32 %v6727, %v6274
      %v6865 = vadd.f32 %v6730, %v6275
      %v6866 = vadd.f32 %v6733, %v6276
      %v6867 = vadd.f32 %v6736, %v6277
      %v6868 = vadd.f32 %v6739, %v6278
      %v6869 = vadd.f32 %v6742, %v6279
      %v6870 = vadd.f32 %v6745, %v6280
      %v6871 = vadd.f32 %v6748, %v6281
      %v6872 = vadd.f32 %v6751, %v6282
      %v6873 = vadd.f32 %v6754, %v6283
      %v6874 = vadd.f32 %v6757, %v6284
      %v6875 = vadd.f32 %v6760, %v6285
      %v6876 = vadd.f32 %v6763, %v6286
      %v6877 = vadd.f32 %v6766, %v6287
      %v6878 = vadd.f32 %v6769, %v6288
      %v6879 = vadd.f32 %v6772, %v6289
      %v6880 = vadd.f32 %v6775, %v6290
      %v6881 = vadd.f32 %v6778, %v6291
      %v6882 = vadd.f32 %v6781, %v6292
      %v6883 = vadd.f32 %v6784, %v6293
      %v6884 = vadd.f32 %v6787, %v6294
      %v6885 = vadd.f32 %v6790, %v6295
      %v6886 = vadd.f32 %v6793, %v6296
      %v6887 = vadd.f32 %v6796, %v6297
      %v6888 = vadd.f32 %v6799, %v6298
      %v6889 = vadd.f32 %v6802, %v6299
      %v6890 = vadd.f32 %v6805, %v6300
      %v6891 = vadd.f32 %v6808, %v6301
      %v6892 = vadd.f32 %v6811, %v6302
      %v6893 = vadd.f32 %v6814, %v6303
      %v6894 = vadd.f32 %v6817, %v6304
      %v6895 = vadd.f32 %v6820, %v6305
      %v6896 = vadd.f32 %v6823, %v6306
      %v6897 = vadd.f32 %v6826, %v6307
      %v6898 = vadd.f32 %v6829, %v6308
      %v6899 = vadd.f32 %v6832, %v6309
      %v6900 = vadd.f32 %v6835, %v6310
      %v6901 = vtanh.pop %v6837
      %v6902 = vtanh.pop %v6838
      %v6903 = vtanh.pop %v6839
      %v6904 = vtanh.pop %v6840
      %v6905 = vtanh.pop %v6841
      %v6906 = vtanh.pop %v6842
      %v6907 = vtanh.pop %v6843
      %v6908 = vtanh.pop %v6844
      %v6909 = vtanh.pop %v6845
      %v6910 = vtanh.pop %v6846
      %v6911 = vtanh.pop %v6847
      %v6912 = vtanh.pop %v6848
      %v6913 = vtanh.pop %v6849
      %v6914 = vtanh.pop %v6850
      %v6915 = vtanh.pop %v6851
      %v6916 = vtanh.pop %v6852
      %v6917 = vtanh.pop %v6853
      %v6918 = vtanh.pop %v6854
      %v6919 = vtanh.pop %v6855
      %v6920 = vtanh.pop %v6856
      %v6921 = vtanh.pop %v6857
      %v6922 = vtanh.pop %v6858
      %v6923 = vtanh.pop %v6859
      %v6924 = vtanh.pop %v6860
      %v6925 = vtanh.pop %v6861
      %v6926 = vtanh.pop %v6862
      %v6927 = vtanh.pop %v6863
      %v6928 = vtanh.pop %v6864
      %v6929 = vtanh.pop %v6865
      %v6930 = vtanh.pop %v6866
      %v6931 = vtanh.pop %v6867
      %v6932 = vtanh.pop %v6868
      %v6933 = vtanh.pop %v6869
      %v6934 = vtanh.pop %v6870
      %v6935 = vtanh.pop %v6871
      %v6936 = vtanh.pop %v6872
      %v6937 = vtanh.pop %v6873
      %v6938 = vtanh.pop %v6874
      %v6939 = vtanh.pop %v6875
      %v6940 = vtanh.pop %v6876
      %v6941 = vtanh.pop %v6877
      %v6942 = vtanh.pop %v6878
      %v6943 = vtanh.pop %v6879
      %v6944 = vtanh.pop %v6880
      %v6945 = vtanh.pop %v6881
      %v6946 = vtanh.pop %v6882
      %v6947 = vtanh.pop %v6883
      %v6948 = vtanh.pop %v6884
      %v6949 = vtanh.pop %v6885
      %v6950 = vtanh.pop %v6886
      %v6951 = vtanh.pop %v6887
      %v6952 = vtanh.pop %v6888
      %v6953 = vtanh.pop %v6889
      %v6954 = vtanh.pop %v6890
      %v6955 = vtanh.pop %v6891
      %v6956 = vtanh.pop %v6892
      %v6957 = vtanh.pop %v6893
      %v6958 = vtanh.pop %v6894
      %v6959 = vtanh.pop %v6895
      %v6960 = vtanh.pop %v6896
      %v6961 = vtanh.pop %v6897
      %v6962 = vtanh.pop %v6898
      %v6963 = vtanh.pop %v6899
      %v6964 = vtanh.pop %v6900
      %s6965 = scalar_lea.vmem %s4, 1024
      %v6966 = vld [vmem:[%s6965] sm:$0xff]
      %v6967 = vld [vmem:[%s6965 + $0x8] sm:$0xff]
      %v6968 = vld [vmem:[%s6965 + $0x10] sm:$0xff]
      %v6969 = vld [vmem:[%s6965 + $0x18] sm:$0xff]
      %v6970 = vld [vmem:[%s6965 + $0x20] sm:$0xff]
      %v6971 = vld [vmem:[%s6965 + $0x28] sm:$0xff]
      %v6972 = vld [vmem:[%s6965 + $0x30] sm:$0xff]
      %v6973 = vld [vmem:[%s6965 + $0x38] sm:$0xff]
      %v6974 = vld [vmem:[%s6965 + $0x40] sm:$0xff]
      %v6975 = vld [vmem:[%s6965 + $0x48] sm:$0xff]
      %v6976 = vld [vmem:[%s6965 + $0x50] sm:$0xff]
      %v6977 = vld [vmem:[%s6965 + $0x58] sm:$0xff]
      %v6978 = vld [vmem:[%s6965 + $0x60] sm:$0xff]
      %v6979 = vld [vmem:[%s6965 + $0x68] sm:$0xff]
      %v6980 = vld [vmem:[%s6965 + $0x70] sm:$0xff]
      %v6981 = vld [vmem:[%s6965 + $0x78] sm:$0xff]
      %s6982 = scalar_lea.vmem %s5, 8
      %v6983 = vld [vmem:[%s6982] sm:$0x1]
      %v6985 = vperm.slane %v6983, 0
      %6987 = vmatpush.msra.mxu0 %v6981
      %6988 = vmatpush.msra.mxu0 %v6980
      %6989 = vmatpush.msra.mxu0 %v6979
      %6990 = vmatpush.msra.mxu0 %v6978
      %6991 = vmatpush.msra.mxu0 %v6977
      %6992 = vmatpush.msra.mxu0 %v6976
      %6993 = vmatpush.msra.mxu0 %v6975
      %6994 = vmatpush.msra.mxu0 %v6974
      %6995 = vmatpush.msra.mxu0 %v6973
      %6996 = vmatpush.msra.mxu0 %v6972
      %6997 = vmatpush.msra.mxu0 %v6971
      %6998 = vmatpush.msra.mxu0 %v6970
      %6999 = vmatpush.msra.mxu0 %v6969
      %7000 = vmatpush.msra.mxu0 %v6968
      %7001 = vmatpush.msra.mxu0 %v6967
      %7002 = vmatpush.msra.mxu0 %v6966
      %7003 = vmatmul.f32.gmra.mxu0 %v6901
      %v7004 = vpop.f32.mrf.mxu0
      %v7005 = vadd.f32 %v6985, %v7004
      %7006 = vmatmul.f32.gmra.mxu0 %v6902
      %v7007 = vpop.f32.mrf.mxu0
      %v7008 = vadd.f32 %v6985, %v7007
      %7009 = vmatmul.f32.gmra.mxu0 %v6903
      %v7010 = vpop.f32.mrf.mxu0
      %v7011 = vadd.f32 %v6985, %v7010
      %7012 = vmatmul.f32.gmra.mxu0 %v6904
      %v7013 = vpop.f32.mrf.mxu0
      %v7014 = vadd.f32 %v6985, %v7013
      %7015 = vmatmul.f32.gmra.mxu0 %v6905
      %v7016 = vpop.f32.mrf.mxu0
      %v7017 = vadd.f32 %v6985, %v7016
      %7018 = vmatmul.f32.gmra.mxu0 %v6906
      %v7019 = vpop.f32.mrf.mxu0
      %v7020 = vadd.f32 %v6985, %v7019
      %7021 = vmatmul.f32.gmra.mxu0 %v6907
      %v7022 = vpop.f32.mrf.mxu0
      %v7023 = vadd.f32 %v6985, %v7022
      %7024 = vmatmul.f32.gmra.mxu0 %v6908
      %v7025 = vpop.f32.mrf.mxu0
      %v7026 = vadd.f32 %v6985, %v7025
      %7027 = vmatmul.f32.gmra.mxu0 %v6909
      %v7028 = vpop.f32.mrf.mxu0
      %v7029 = vadd.f32 %v6985, %v7028
      %7030 = vmatmul.f32.gmra.mxu0 %v6910
      %v7031 = vpop.f32.mrf.mxu0
      %v7032 = vadd.f32 %v6985, %v7031
      %7033 = vmatmul.f32.gmra.mxu0 %v6911
      %v7034 = vpop.f32.mrf.mxu0
      %v7035 = vadd.f32 %v6985, %v7034
      %7036 = vmatmul.f32.gmra.mxu0 %v6912
      %v7037 = vpop.f32.mrf.mxu0
      %v7038 = vadd.f32 %v6985, %v7037
      %7039 = vmatmul.f32.gmra.mxu0 %v6913
      %v7040 = vpop.f32.mrf.mxu0
      %v7041 = vadd.f32 %v6985, %v7040
      %7042 = vmatmul.f32.gmra.mxu0 %v6914
      %v7043 = vpop.f32.mrf.mxu0
      %v7044 = vadd.f32 %v6985, %v7043
      %7045 = vmatmul.f32.gmra.mxu0 %v6915
      %v7046 = vpop.f32.mrf.mxu0
      %v7047 = vadd.f32 %v6985, %v7046
      %7048 = vmatmul.f32.gmra.mxu0 %v6916
      %v7049 = vpop.f32.mrf.mxu0
      %v7050 = vadd.f32 %v6985, %v7049
      %7051 = vmatmul.f32.gmra.mxu0 %v6917
      %v7052 = vpop.f32.mrf.mxu0
      %v7053 = vadd.f32 %v6985, %v7052
      %7054 = vmatmul.f32.gmra.mxu0 %v6918
      %v7055 = vpop.f32.mrf.mxu0
      %v7056 = vadd.f32 %v6985, %v7055
      %7057 = vmatmul.f32.gmra.mxu0 %v6919
      %v7058 = vpop.f32.mrf.mxu0
      %v7059 = vadd.f32 %v6985, %v7058
      %7060 = vmatmul.f32.gmra.mxu0 %v6920
      %v7061 = vpop.f32.mrf.mxu0
      %v7062 = vadd.f32 %v6985, %v7061
      %7063 = vmatmul.f32.gmra.mxu0 %v6921
      %v7064 = vpop.f32.mrf.mxu0
      %v7065 = vadd.f32 %v6985, %v7064
      %7066 = vmatmul.f32.gmra.mxu0 %v6922
      %v7067 = vpop.f32.mrf.mxu0
      %v7068 = vadd.f32 %v6985, %v7067
      %7069 = vmatmul.f32.gmra.mxu0 %v6923
      %v7070 = vpop.f32.mrf.mxu0
      %v7071 = vadd.f32 %v6985, %v7070
      %7072 = vmatmul.f32.gmra.mxu0 %v6924
      %v7073 = vpop.f32.mrf.mxu0
      %v7074 = vadd.f32 %v6985, %v7073
      %7075 = vmatmul.f32.gmra.mxu0 %v6925
      %v7076 = vpop.f32.mrf.mxu0
      %v7077 = vadd.f32 %v6985, %v7076
      %7078 = vmatmul.f32.gmra.mxu0 %v6926
      %v7079 = vpop.f32.mrf.mxu0
      %v7080 = vadd.f32 %v6985, %v7079
      %7081 = vmatmul.f32.gmra.mxu0 %v6927
      %v7082 = vpop.f32.mrf.mxu0
      %v7083 = vadd.f32 %v6985, %v7082
      %7084 = vmatmul.f32.gmra.mxu0 %v6928
      %v7085 = vpop.f32.mrf.mxu0
      %v7086 = vadd.f32 %v6985, %v7085
      %7087 = vmatmul.f32.gmra.mxu0 %v6929
      %v7088 = vpop.f32.mrf.mxu0
      %v7089 = vadd.f32 %v6985, %v7088
      %7090 = vmatmul.f32.gmra.mxu0 %v6930
      %v7091 = vpop.f32.mrf.mxu0
      %v7092 = vadd.f32 %v6985, %v7091
      %7093 = vmatmul.f32.gmra.mxu0 %v6931
      %v7094 = vpop.f32.mrf.mxu0
      %v7095 = vadd.f32 %v6985, %v7094
      %7096 = vmatmul.f32.gmra.mxu0 %v6932
      %v7097 = vpop.f32.mrf.mxu0
      %v7098 = vadd.f32 %v6985, %v7097
      %7099 = vmatmul.f32.gmra.mxu0 %v6933
      %v7100 = vpop.f32.mrf.mxu0
      %v7101 = vadd.f32 %v6985, %v7100
      %7102 = vmatmul.f32.gmra.mxu0 %v6934
      %v7103 = vpop.f32.mrf.mxu0
      %v7104 = vadd.f32 %v6985, %v7103
      %7105 = vmatmul.f32.gmra.mxu0 %v6935
      %v7106 = vpop.f32.mrf.mxu0
      %v7107 = vadd.f32 %v6985, %v7106
      %7108 = vmatmul.f32.gmra.mxu0 %v6936
      %v7109 = vpop.f32.mrf.mxu0
      %v7110 = vadd.f32 %v6985, %v7109
      %7111 = vmatmul.f32.gmra.mxu0 %v6937
      %v7112 = vpop.f32.mrf.mxu0
      %v7113 = vadd.f32 %v6985, %v7112
      %7114 = vmatmul.f32.gmra.mxu0 %v6938
      %v7115 = vpop.f32.mrf.mxu0
      %v7116 = vadd.f32 %v6985, %v7115
      %7117 = vmatmul.f32.gmra.mxu0 %v6939
      %v7118 = vpop.f32.mrf.mxu0
      %v7119 = vadd.f32 %v6985, %v7118
      %7120 = vmatmul.f32.gmra.mxu0 %v6940
      %v7121 = vpop.f32.mrf.mxu0
      %v7122 = vadd.f32 %v6985, %v7121
      %7123 = vmatmul.f32.gmra.mxu0 %v6941
      %v7124 = vpop.f32.mrf.mxu0
      %v7125 = vadd.f32 %v6985, %v7124
      %7126 = vmatmul.f32.gmra.mxu0 %v6942
      %v7127 = vpop.f32.mrf.mxu0
      %v7128 = vadd.f32 %v6985, %v7127
      %7129 = vmatmul.f32.gmra.mxu0 %v6943
      %v7130 = vpop.f32.mrf.mxu0
      %v7131 = vadd.f32 %v6985, %v7130
      %7132 = vmatmul.f32.gmra.mxu0 %v6944
      %v7133 = vpop.f32.mrf.mxu0
      %v7134 = vadd.f32 %v6985, %v7133
      %7135 = vmatmul.f32.gmra.mxu0 %v6945
      %v7136 = vpop.f32.mrf.mxu0
      %v7137 = vadd.f32 %v6985, %v7136
      %7138 = vmatmul.f32.gmra.mxu0 %v6946
      %v7139 = vpop.f32.mrf.mxu0
      %v7140 = vadd.f32 %v6985, %v7139
      %7141 = vmatmul.f32.gmra.mxu0 %v6947
      %v7142 = vpop.f32.mrf.mxu0
      %v7143 = vadd.f32 %v6985, %v7142
      %7144 = vmatmul.f32.gmra.mxu0 %v6948
      %v7145 = vpop.f32.mrf.mxu0
      %v7146 = vadd.f32 %v6985, %v7145
      %7147 = vmatmul.f32.gmra.mxu0 %v6949
      %v7148 = vpop.f32.mrf.mxu0
      %v7149 = vadd.f32 %v6985, %v7148
      %7150 = vmatmul.f32.gmra.mxu0 %v6950
      %v7151 = vpop.f32.mrf.mxu0
      %v7152 = vadd.f32 %v6985, %v7151
      %7153 = vmatmul.f32.gmra.mxu0 %v6951
      %v7154 = vpop.f32.mrf.mxu0
      %v7155 = vadd.f32 %v6985, %v7154
      %7156 = vmatmul.f32.gmra.mxu0 %v6952
      %v7157 = vpop.f32.mrf.mxu0
      %v7158 = vadd.f32 %v6985, %v7157
      %7159 = vmatmul.f32.gmra.mxu0 %v6953
      %v7160 = vpop.f32.mrf.mxu0
      %v7161 = vadd.f32 %v6985, %v7160
      %7162 = vmatmul.f32.gmra.mxu0 %v6954
      %v7163 = vpop.f32.mrf.mxu0
      %v7164 = vadd.f32 %v6985, %v7163
      %7165 = vmatmul.f32.gmra.mxu0 %v6955
      %v7166 = vpop.f32.mrf.mxu0
      %v7167 = vadd.f32 %v6985, %v7166
      %7168 = vmatmul.f32.gmra.mxu0 %v6956
      %v7169 = vpop.f32.mrf.mxu0
      %v7170 = vadd.f32 %v6985, %v7169
      %7171 = vmatmul.f32.gmra.mxu0 %v6957
      %v7172 = vpop.f32.mrf.mxu0
      %v7173 = vadd.f32 %v6985, %v7172
      %7174 = vmatmul.f32.gmra.mxu0 %v6958
      %v7175 = vpop.f32.mrf.mxu0
      %v7176 = vadd.f32 %v6985, %v7175
      %7177 = vmatmul.f32.gmra.mxu0 %v6959
      %v7178 = vpop.f32.mrf.mxu0
      %v7179 = vadd.f32 %v6985, %v7178
      %7180 = vmatmul.f32.gmra.mxu0 %v6960
      %v7181 = vpop.f32.mrf.mxu0
      %v7182 = vadd.f32 %v6985, %v7181
      %7183 = vmatmul.f32.gmra.mxu0 %v6961
      %v7184 = vpop.f32.mrf.mxu0
      %v7185 = vadd.f32 %v6985, %v7184
      %7186 = vmatmul.f32.gmra.mxu0 %v6962
      %v7187 = vpop.f32.mrf.mxu0
      %v7188 = vadd.f32 %v6985, %v7187
      %7189 = vmatmul.f32.gmra.mxu0 %v6963
      %v7190 = vpop.f32.mrf.mxu0
      %v7191 = vadd.f32 %v6985, %v7190
      %7192 = vmatmul.f32.gmra.mxu0 %v6964
      %v7193 = vpop.f32.mrf.mxu0
      %v7194 = vadd.f32 %v6985, %v7193
      %7195 = vdwg.mxu0
      %v7196 = vtanh.pop %v7005
      %v7197 = vtanh.pop %v7008
      %v7198 = vtanh.pop %v7011
      %v7199 = vtanh.pop %v7014
      %v7200 = vtanh.pop %v7017
      %v7201 = vtanh.pop %v7020
      %v7202 = vtanh.pop %v7023
      %v7203 = vtanh.pop %v7026
      %v7204 = vtanh.pop %v7029
      %v7205 = vtanh.pop %v7032
      %v7206 = vtanh.pop %v7035
      %v7207 = vtanh.pop %v7038
      %v7208 = vtanh.pop %v7041
      %v7209 = vtanh.pop %v7044
      %v7210 = vtanh.pop %v7047
      %v7211 = vtanh.pop %v7050
      %v7212 = vtanh.pop %v7053
      %v7213 = vtanh.pop %v7056
      %v7214 = vtanh.pop %v7059
      %v7215 = vtanh.pop %v7062
      %v7216 = vtanh.pop %v7065
      %v7217 = vtanh.pop %v7068
      %v7218 = vtanh.pop %v7071
      %v7219 = vtanh.pop %v7074
      %v7220 = vtanh.pop %v7077
      %v7221 = vtanh.pop %v7080
      %v7222 = vtanh.pop %v7083
      %v7223 = vtanh.pop %v7086
      %v7224 = vtanh.pop %v7089
      %v7225 = vtanh.pop %v7092
      %v7226 = vtanh.pop %v7095
      %v7227 = vtanh.pop %v7098
      %v7228 = vtanh.pop %v7101
      %v7229 = vtanh.pop %v7104
      %v7230 = vtanh.pop %v7107
      %v7231 = vtanh.pop %v7110
      %v7232 = vtanh.pop %v7113
      %v7233 = vtanh.pop %v7116
      %v7234 = vtanh.pop %v7119
      %v7235 = vtanh.pop %v7122
      %v7236 = vtanh.pop %v7125
      %v7237 = vtanh.pop %v7128
      %v7238 = vtanh.pop %v7131
      %v7239 = vtanh.pop %v7134
      %v7240 = vtanh.pop %v7137
      %v7241 = vtanh.pop %v7140
      %v7242 = vtanh.pop %v7143
      %v7243 = vtanh.pop %v7146
      %v7244 = vtanh.pop %v7149
      %v7245 = vtanh.pop %v7152
      %v7246 = vtanh.pop %v7155
      %v7247 = vtanh.pop %v7158
      %v7248 = vtanh.pop %v7161
      %v7249 = vtanh.pop %v7164
      %v7250 = vtanh.pop %v7167
      %v7251 = vtanh.pop %v7170
      %v7252 = vtanh.pop %v7173
      %v7253 = vtanh.pop %v7176
      %v7254 = vtanh.pop %v7179
      %v7255 = vtanh.pop %v7182
      %v7256 = vtanh.pop %v7185
      %v7257 = vtanh.pop %v7188
      %v7258 = vtanh.pop %v7191
      %v7259 = vtanh.pop %v7194
      %s7260 = scalar_lea.vmem %s6, 1024
      %v7261 = vld [vmem:[%s7260] sm:$0xff]
      %v7262 = vld [vmem:[%s7260 + $0x8] sm:$0xff]
      %v7263 = vld [vmem:[%s7260 + $0x10] sm:$0xff]
      %v7264 = vld [vmem:[%s7260 + $0x18] sm:$0xff]
      %v7265 = vld [vmem:[%s7260 + $0x20] sm:$0xff]
      %v7266 = vld [vmem:[%s7260 + $0x28] sm:$0xff]
      %v7267 = vld [vmem:[%s7260 + $0x30] sm:$0xff]
      %v7268 = vld [vmem:[%s7260 + $0x38] sm:$0xff]
      %v7269 = vld [vmem:[%s7260 + $0x40] sm:$0xff]
      %v7270 = vld [vmem:[%s7260 + $0x48] sm:$0xff]
      %v7271 = vld [vmem:[%s7260 + $0x50] sm:$0xff]
      %v7272 = vld [vmem:[%s7260 + $0x58] sm:$0xff]
      %v7273 = vld [vmem:[%s7260 + $0x60] sm:$0xff]
      %v7274 = vld [vmem:[%s7260 + $0x68] sm:$0xff]
      %v7275 = vld [vmem:[%s7260 + $0x70] sm:$0xff]
      %v7276 = vld [vmem:[%s7260 + $0x78] sm:$0xff]
      %s7277 = scalar_lea.vmem %s7, 8
      %v7278 = vld [vmem:[%s7277] sm:$0x1]
      %v7280 = vperm.slane %v7278, 0
      %7282 = vmatpush.msra.mxu0 %v7276
      %7283 = vmatpush.msra.mxu0 %v7275
      %7284 = vmatpush.msra.mxu0 %v7274
      %7285 = vmatpush.msra.mxu0 %v7273
      %7286 = vmatpush.msra.mxu0 %v7272
      %7287 = vmatpush.msra.mxu0 %v7271
      %7288 = vmatpush.msra.mxu0 %v7270
      %7289 = vmatpush.msra.mxu0 %v7269
      %7290 = vmatpush.msra.mxu0 %v7268
      %7291 = vmatpush.msra.mxu0 %v7267
      %7292 = vmatpush.msra.mxu0 %v7266
      %7293 = vmatpush.msra.mxu0 %v7265
      %7294 = vmatpush.msra.mxu0 %v7264
      %7295 = vmatpush.msra.mxu0 %v7263
      %7296 = vmatpush.msra.mxu0 %v7262
      %7297 = vmatpush.msra.mxu0 %v7261
      %7298 = vmatmul.f32.gmra.mxu0 %v7196
      %v7299 = vpop.f32.mrf.mxu0
      %v7300 = vadd.f32 %v7280, %v7299
      %7301 = vmatmul.f32.gmra.mxu0 %v7197
      %v7302 = vpop.f32.mrf.mxu0
      %v7303 = vadd.f32 %v7280, %v7302
      %7304 = vmatmul.f32.gmra.mxu0 %v7198
      %v7305 = vpop.f32.mrf.mxu0
      %v7306 = vadd.f32 %v7280, %v7305
      %7307 = vmatmul.f32.gmra.mxu0 %v7199
      %v7308 = vpop.f32.mrf.mxu0
      %v7309 = vadd.f32 %v7280, %v7308
      %7310 = vmatmul.f32.gmra.mxu0 %v7200
      %v7311 = vpop.f32.mrf.mxu0
      %v7312 = vadd.f32 %v7280, %v7311
      %7313 = vmatmul.f32.gmra.mxu0 %v7201
      %v7314 = vpop.f32.mrf.mxu0
      %v7315 = vadd.f32 %v7280, %v7314
      %7316 = vmatmul.f32.gmra.mxu0 %v7202
      %v7317 = vpop.f32.mrf.mxu0
      %v7318 = vadd.f32 %v7280, %v7317
      %7319 = vmatmul.f32.gmra.mxu0 %v7203
      %v7320 = vpop.f32.mrf.mxu0
      %v7321 = vadd.f32 %v7280, %v7320
      %7322 = vmatmul.f32.gmra.mxu0 %v7204
      %v7323 = vpop.f32.mrf.mxu0
      %v7324 = vadd.f32 %v7280, %v7323
      %7325 = vmatmul.f32.gmra.mxu0 %v7205
      %v7326 = vpop.f32.mrf.mxu0
      %v7327 = vadd.f32 %v7280, %v7326
      %7328 = vmatmul.f32.gmra.mxu0 %v7206
      %v7329 = vpop.f32.mrf.mxu0
      %v7330 = vadd.f32 %v7280, %v7329
      %7331 = vmatmul.f32.gmra.mxu0 %v7207
      %v7332 = vpop.f32.mrf.mxu0
      %v7333 = vadd.f32 %v7280, %v7332
      %7334 = vmatmul.f32.gmra.mxu0 %v7208
      %v7335 = vpop.f32.mrf.mxu0
      %v7336 = vadd.f32 %v7280, %v7335
      %7337 = vmatmul.f32.gmra.mxu0 %v7209
      %v7338 = vpop.f32.mrf.mxu0
      %v7339 = vadd.f32 %v7280, %v7338
      %7340 = vmatmul.f32.gmra.mxu0 %v7210
      %v7341 = vpop.f32.mrf.mxu0
      %v7342 = vadd.f32 %v7280, %v7341
      %7343 = vmatmul.f32.gmra.mxu0 %v7211
      %v7344 = vpop.f32.mrf.mxu0
      %v7345 = vadd.f32 %v7280, %v7344
      %7346 = vmatmul.f32.gmra.mxu0 %v7212
      %v7347 = vpop.f32.mrf.mxu0
      %v7348 = vadd.f32 %v7280, %v7347
      %7349 = vmatmul.f32.gmra.mxu0 %v7213
      %v7350 = vpop.f32.mrf.mxu0
      %v7351 = vadd.f32 %v7280, %v7350
      %7352 = vmatmul.f32.gmra.mxu0 %v7214
      %v7353 = vpop.f32.mrf.mxu0
      %v7354 = vadd.f32 %v7280, %v7353
      %7355 = vmatmul.f32.gmra.mxu0 %v7215
      %v7356 = vpop.f32.mrf.mxu0
      %v7357 = vadd.f32 %v7280, %v7356
      %7358 = vmatmul.f32.gmra.mxu0 %v7216
      %v7359 = vpop.f32.mrf.mxu0
      %v7360 = vadd.f32 %v7280, %v7359
      %7361 = vmatmul.f32.gmra.mxu0 %v7217
      %v7362 = vpop.f32.mrf.mxu0
      %v7363 = vadd.f32 %v7280, %v7362
      %7364 = vmatmul.f32.gmra.mxu0 %v7218
      %v7365 = vpop.f32.mrf.mxu0
      %v7366 = vadd.f32 %v7280, %v7365
      %7367 = vmatmul.f32.gmra.mxu0 %v7219
      %v7368 = vpop.f32.mrf.mxu0
      %v7369 = vadd.f32 %v7280, %v7368
      %7370 = vmatmul.f32.gmra.mxu0 %v7220
      %v7371 = vpop.f32.mrf.mxu0
      %v7372 = vadd.f32 %v7280, %v7371
      %7373 = vmatmul.f32.gmra.mxu0 %v7221
      %v7374 = vpop.f32.mrf.mxu0
      %v7375 = vadd.f32 %v7280, %v7374
      %7376 = vmatmul.f32.gmra.mxu0 %v7222
      %v7377 = vpop.f32.mrf.mxu0
      %v7378 = vadd.f32 %v7280, %v7377
      %7379 = vmatmul.f32.gmra.mxu0 %v7223
      %v7380 = vpop.f32.mrf.mxu0
      %v7381 = vadd.f32 %v7280, %v7380
      %7382 = vmatmul.f32.gmra.mxu0 %v7224
      %v7383 = vpop.f32.mrf.mxu0
      %v7384 = vadd.f32 %v7280, %v7383
      %7385 = vmatmul.f32.gmra.mxu0 %v7225
      %v7386 = vpop.f32.mrf.mxu0
      %v7387 = vadd.f32 %v7280, %v7386
      %7388 = vmatmul.f32.gmra.mxu0 %v7226
      %v7389 = vpop.f32.mrf.mxu0
      %v7390 = vadd.f32 %v7280, %v7389
      %7391 = vmatmul.f32.gmra.mxu0 %v7227
      %v7392 = vpop.f32.mrf.mxu0
      %v7393 = vadd.f32 %v7280, %v7392
      %7394 = vmatmul.f32.gmra.mxu0 %v7228
      %v7395 = vpop.f32.mrf.mxu0
      %v7396 = vadd.f32 %v7280, %v7395
      %7397 = vmatmul.f32.gmra.mxu0 %v7229
      %v7398 = vpop.f32.mrf.mxu0
      %v7399 = vadd.f32 %v7280, %v7398
      %7400 = vmatmul.f32.gmra.mxu0 %v7230
      %v7401 = vpop.f32.mrf.mxu0
      %v7402 = vadd.f32 %v7280, %v7401
      %7403 = vmatmul.f32.gmra.mxu0 %v7231
      %v7404 = vpop.f32.mrf.mxu0
      %v7405 = vadd.f32 %v7280, %v7404
      %7406 = vmatmul.f32.gmra.mxu0 %v7232
      %v7407 = vpop.f32.mrf.mxu0
      %v7408 = vadd.f32 %v7280, %v7407
      %7409 = vmatmul.f32.gmra.mxu0 %v7233
      %v7410 = vpop.f32.mrf.mxu0
      %v7411 = vadd.f32 %v7280, %v7410
      %7412 = vmatmul.f32.gmra.mxu0 %v7234
      %v7413 = vpop.f32.mrf.mxu0
      %v7414 = vadd.f32 %v7280, %v7413
      %7415 = vmatmul.f32.gmra.mxu0 %v7235
      %v7416 = vpop.f32.mrf.mxu0
      %v7417 = vadd.f32 %v7280, %v7416
      %7418 = vmatmul.f32.gmra.mxu0 %v7236
      %v7419 = vpop.f32.mrf.mxu0
      %v7420 = vadd.f32 %v7280, %v7419
      %7421 = vmatmul.f32.gmra.mxu0 %v7237
      %v7422 = vpop.f32.mrf.mxu0
      %v7423 = vadd.f32 %v7280, %v7422
      %7424 = vmatmul.f32.gmra.mxu0 %v7238
      %v7425 = vpop.f32.mrf.mxu0
      %v7426 = vadd.f32 %v7280, %v7425
      %7427 = vmatmul.f32.gmra.mxu0 %v7239
      %v7428 = vpop.f32.mrf.mxu0
      %v7429 = vadd.f32 %v7280, %v7428
      %7430 = vmatmul.f32.gmra.mxu0 %v7240
      %v7431 = vpop.f32.mrf.mxu0
      %v7432 = vadd.f32 %v7280, %v7431
      %7433 = vmatmul.f32.gmra.mxu0 %v7241
      %v7434 = vpop.f32.mrf.mxu0
      %v7435 = vadd.f32 %v7280, %v7434
      %7436 = vmatmul.f32.gmra.mxu0 %v7242
      %v7437 = vpop.f32.mrf.mxu0
      %v7438 = vadd.f32 %v7280, %v7437
      %7439 = vmatmul.f32.gmra.mxu0 %v7243
      %v7440 = vpop.f32.mrf.mxu0
      %v7441 = vadd.f32 %v7280, %v7440
      %7442 = vmatmul.f32.gmra.mxu0 %v7244
      %v7443 = vpop.f32.mrf.mxu0
      %v7444 = vadd.f32 %v7280, %v7443
      %7445 = vmatmul.f32.gmra.mxu0 %v7245
      %v7446 = vpop.f32.mrf.mxu0
      %v7447 = vadd.f32 %v7280, %v7446
      %7448 = vmatmul.f32.gmra.mxu0 %v7246
      %v7449 = vpop.f32.mrf.mxu0
      %v7450 = vadd.f32 %v7280, %v7449
      %7451 = vmatmul.f32.gmra.mxu0 %v7247
      %v7452 = vpop.f32.mrf.mxu0
      %v7453 = vadd.f32 %v7280, %v7452
      %7454 = vmatmul.f32.gmra.mxu0 %v7248
      %v7455 = vpop.f32.mrf.mxu0
      %v7456 = vadd.f32 %v7280, %v7455
      %7457 = vmatmul.f32.gmra.mxu0 %v7249
      %v7458 = vpop.f32.mrf.mxu0
      %v7459 = vadd.f32 %v7280, %v7458
      %7460 = vmatmul.f32.gmra.mxu0 %v7250
      %v7461 = vpop.f32.mrf.mxu0
      %v7462 = vadd.f32 %v7280, %v7461
      %7463 = vmatmul.f32.gmra.mxu0 %v7251
      %v7464 = vpop.f32.mrf.mxu0
      %v7465 = vadd.f32 %v7280, %v7464
      %7466 = vmatmul.f32.gmra.mxu0 %v7252
      %v7467 = vpop.f32.mrf.mxu0
      %v7468 = vadd.f32 %v7280, %v7467
      %7469 = vmatmul.f32.gmra.mxu0 %v7253
      %v7470 = vpop.f32.mrf.mxu0
      %v7471 = vadd.f32 %v7280, %v7470
      %7472 = vmatmul.f32.gmra.mxu0 %v7254
      %v7473 = vpop.f32.mrf.mxu0
      %v7474 = vadd.f32 %v7280, %v7473
      %7475 = vmatmul.f32.gmra.mxu0 %v7255
      %v7476 = vpop.f32.mrf.mxu0
      %v7477 = vadd.f32 %v7280, %v7476
      %7478 = vmatmul.f32.gmra.mxu0 %v7256
      %v7479 = vpop.f32.mrf.mxu0
      %v7480 = vadd.f32 %v7280, %v7479
      %7481 = vmatmul.f32.gmra.mxu0 %v7257
      %v7482 = vpop.f32.mrf.mxu0
      %v7483 = vadd.f32 %v7280, %v7482
      %7484 = vmatmul.f32.gmra.mxu0 %v7258
      %v7485 = vpop.f32.mrf.mxu0
      %v7486 = vadd.f32 %v7280, %v7485
      %7487 = vmatmul.f32.gmra.mxu0 %v7259
      %v7488 = vpop.f32.mrf.mxu0
      %v7489 = vadd.f32 %v7280, %v7488
      %7490 = vdwg.mxu0
      %v7491 = vadd.f32 %v7300, %v6901
      %v7492 = vadd.f32 %v7303, %v6902
      %v7493 = vadd.f32 %v7306, %v6903
      %v7494 = vadd.f32 %v7309, %v6904
      %v7495 = vadd.f32 %v7312, %v6905
      %v7496 = vadd.f32 %v7315, %v6906
      %v7497 = vadd.f32 %v7318, %v6907
      %v7498 = vadd.f32 %v7321, %v6908
      %v7499 = vadd.f32 %v7324, %v6909
      %v7500 = vadd.f32 %v7327, %v6910
      %v7501 = vadd.f32 %v7330, %v6911
      %v7502 = vadd.f32 %v7333, %v6912
      %v7503 = vadd.f32 %v7336, %v6913
      %v7504 = vadd.f32 %v7339, %v6914
      %v7505 = vadd.f32 %v7342, %v6915
      %v7506 = vadd.f32 %v7345, %v6916
      %v7507 = vadd.f32 %v7348, %v6917
      %v7508 = vadd.f32 %v7351, %v6918
      %v7509 = vadd.f32 %v7354, %v6919
      %v7510 = vadd.f32 %v7357, %v6920
      %v7511 = vadd.f32 %v7360, %v6921
      %v7512 = vadd.f32 %v7363, %v6922
      %v7513 = vadd.f32 %v7366, %v6923
      %v7514 = vadd.f32 %v7369, %v6924
      %v7515 = vadd.f32 %v7372, %v6925
      %v7516 = vadd.f32 %v7375, %v6926
      %v7517 = vadd.f32 %v7378, %v6927
      %v7518 = vadd.f32 %v7381, %v6928
      %v7519 = vadd.f32 %v7384, %v6929
      %v7520 = vadd.f32 %v7387, %v6930
      %v7521 = vadd.f32 %v7390, %v6931
      %v7522 = vadd.f32 %v7393, %v6932
      %v7523 = vadd.f32 %v7396, %v6933
      %v7524 = vadd.f32 %v7399, %v6934
      %v7525 = vadd.f32 %v7402, %v6935
      %v7526 = vadd.f32 %v7405, %v6936
      %v7527 = vadd.f32 %v7408, %v6937
      %v7528 = vadd.f32 %v7411, %v6938
      %v7529 = vadd.f32 %v7414, %v6939
      %v7530 = vadd.f32 %v7417, %v6940
      %v7531 = vadd.f32 %v7420, %v6941
      %v7532 = vadd.f32 %v7423, %v6942
      %v7533 = vadd.f32 %v7426, %v6943
      %v7534 = vadd.f32 %v7429, %v6944
      %v7535 = vadd.f32 %v7432, %v6945
      %v7536 = vadd.f32 %v7435, %v6946
      %v7537 = vadd.f32 %v7438, %v6947
      %v7538 = vadd.f32 %v7441, %v6948
      %v7539 = vadd.f32 %v7444, %v6949
      %v7540 = vadd.f32 %v7447, %v6950
      %v7541 = vadd.f32 %v7450, %v6951
      %v7542 = vadd.f32 %v7453, %v6952
      %v7543 = vadd.f32 %v7456, %v6953
      %v7544 = vadd.f32 %v7459, %v6954
      %v7545 = vadd.f32 %v7462, %v6955
      %v7546 = vadd.f32 %v7465, %v6956
      %v7547 = vadd.f32 %v7468, %v6957
      %v7548 = vadd.f32 %v7471, %v6958
      %v7549 = vadd.f32 %v7474, %v6959
      %v7550 = vadd.f32 %v7477, %v6960
      %v7551 = vadd.f32 %v7480, %v6961
      %v7552 = vadd.f32 %v7483, %v6962
      %v7553 = vadd.f32 %v7486, %v6963
      %v7554 = vadd.f32 %v7489, %v6964
      %v7555 = vtanh.pop %v7491
      %v7556 = vtanh.pop %v7492
      %v7557 = vtanh.pop %v7493
      %v7558 = vtanh.pop %v7494
      %v7559 = vtanh.pop %v7495
      %v7560 = vtanh.pop %v7496
      %v7561 = vtanh.pop %v7497
      %v7562 = vtanh.pop %v7498
      %v7563 = vtanh.pop %v7499
      %v7564 = vtanh.pop %v7500
      %v7565 = vtanh.pop %v7501
      %v7566 = vtanh.pop %v7502
      %v7567 = vtanh.pop %v7503
      %v7568 = vtanh.pop %v7504
      %v7569 = vtanh.pop %v7505
      %v7570 = vtanh.pop %v7506
      %v7571 = vtanh.pop %v7507
      %v7572 = vtanh.pop %v7508
      %v7573 = vtanh.pop %v7509
      %v7574 = vtanh.pop %v7510
      %v7575 = vtanh.pop %v7511
      %v7576 = vtanh.pop %v7512
      %v7577 = vtanh.pop %v7513
      %v7578 = vtanh.pop %v7514
      %v7579 = vtanh.pop %v7515
      %v7580 = vtanh.pop %v7516
      %v7581 = vtanh.pop %v7517
      %v7582 = vtanh.pop %v7518
      %v7583 = vtanh.pop %v7519
      %v7584 = vtanh.pop %v7520
      %v7585 = vtanh.pop %v7521
      %v7586 = vtanh.pop %v7522
      %v7587 = vtanh.pop %v7523
      %v7588 = vtanh.pop %v7524
      %v7589 = vtanh.pop %v7525
      %v7590 = vtanh.pop %v7526
      %v7591 = vtanh.pop %v7527
      %v7592 = vtanh.pop %v7528
      %v7593 = vtanh.pop %v7529
      %v7594 = vtanh.pop %v7530
      %v7595 = vtanh.pop %v7531
      %v7596 = vtanh.pop %v7532
      %v7597 = vtanh.pop %v7533
      %v7598 = vtanh.pop %v7534
      %v7599 = vtanh.pop %v7535
      %v7600 = vtanh.pop %v7536
      %v7601 = vtanh.pop %v7537
      %v7602 = vtanh.pop %v7538
      %v7603 = vtanh.pop %v7539
      %v7604 = vtanh.pop %v7540
      %v7605 = vtanh.pop %v7541
      %v7606 = vtanh.pop %v7542
      %v7607 = vtanh.pop %v7543
      %v7608 = vtanh.pop %v7544
      %v7609 = vtanh.pop %v7545
      %v7610 = vtanh.pop %v7546
      %v7611 = vtanh.pop %v7547
      %v7612 = vtanh.pop %v7548
      %v7613 = vtanh.pop %v7549
      %v7614 = vtanh.pop %v7550
      %v7615 = vtanh.pop %v7551
      %v7616 = vtanh.pop %v7552
      %v7617 = vtanh.pop %v7553
      %v7618 = vtanh.pop %v7554
      %s7619 = scalar_lea.vmem %s4, 1152
      %v7620 = vld [vmem:[%s7619] sm:$0xff]
      %v7621 = vld [vmem:[%s7619 + $0x8] sm:$0xff]
      %v7622 = vld [vmem:[%s7619 + $0x10] sm:$0xff]
      %v7623 = vld [vmem:[%s7619 + $0x18] sm:$0xff]
      %v7624 = vld [vmem:[%s7619 + $0x20] sm:$0xff]
      %v7625 = vld [vmem:[%s7619 + $0x28] sm:$0xff]
      %v7626 = vld [vmem:[%s7619 + $0x30] sm:$0xff]
      %v7627 = vld [vmem:[%s7619 + $0x38] sm:$0xff]
      %v7628 = vld [vmem:[%s7619 + $0x40] sm:$0xff]
      %v7629 = vld [vmem:[%s7619 + $0x48] sm:$0xff]
      %v7630 = vld [vmem:[%s7619 + $0x50] sm:$0xff]
      %v7631 = vld [vmem:[%s7619 + $0x58] sm:$0xff]
      %v7632 = vld [vmem:[%s7619 + $0x60] sm:$0xff]
      %v7633 = vld [vmem:[%s7619 + $0x68] sm:$0xff]
      %v7634 = vld [vmem:[%s7619 + $0x70] sm:$0xff]
      %v7635 = vld [vmem:[%s7619 + $0x78] sm:$0xff]
      %s7636 = scalar_lea.vmem %s5, 9
      %v7637 = vld [vmem:[%s7636] sm:$0x1]
      %v7639 = vperm.slane %v7637, 0
      %7641 = vmatpush.msra.mxu0 %v7635
      %7642 = vmatpush.msra.mxu0 %v7634
      %7643 = vmatpush.msra.mxu0 %v7633
      %7644 = vmatpush.msra.mxu0 %v7632
      %7645 = vmatpush.msra.mxu0 %v7631
      %7646 = vmatpush.msra.mxu0 %v7630
      %7647 = vmatpush.msra.mxu0 %v7629
      %7648 = vmatpush.msra.mxu0 %v7628
      %7649 = vmatpush.msra.mxu0 %v7627
      %7650 = vmatpush.msra.mxu0 %v7626
      %7651 = vmatpush.msra.mxu0 %v7625
      %7652 = vmatpush.msra.mxu0 %v7624
      %7653 = vmatpush.msra.mxu0 %v7623
      %7654 = vmatpush.msra.mxu0 %v7622
      %7655 = vmatpush.msra.mxu0 %v7621
      %7656 = vmatpush.msra.mxu0 %v7620
      %7657 = vmatmul.f32.gmra.mxu0 %v7555
      %v7658 = vpop.f32.mrf.mxu0
      %v7659 = vadd.f32 %v7639, %v7658
      %7660 = vmatmul.f32.gmra.mxu0 %v7556
      %v7661 = vpop.f32.mrf.mxu0
      %v7662 = vadd.f32 %v7639, %v7661
      %7663 = vmatmul.f32.gmra.mxu0 %v7557
      %v7664 = vpop.f32.mrf.mxu0
      %v7665 = vadd.f32 %v7639, %v7664
      %7666 = vmatmul.f32.gmra.mxu0 %v7558
      %v7667 = vpop.f32.mrf.mxu0
      %v7668 = vadd.f32 %v7639, %v7667
      %7669 = vmatmul.f32.gmra.mxu0 %v7559
      %v7670 = vpop.f32.mrf.mxu0
      %v7671 = vadd.f32 %v7639, %v7670
      %7672 = vmatmul.f32.gmra.mxu0 %v7560
      %v7673 = vpop.f32.mrf.mxu0
      %v7674 = vadd.f32 %v7639, %v7673
      %7675 = vmatmul.f32.gmra.mxu0 %v7561
      %v7676 = vpop.f32.mrf.mxu0
      %v7677 = vadd.f32 %v7639, %v7676
      %7678 = vmatmul.f32.gmra.mxu0 %v7562
      %v7679 = vpop.f32.mrf.mxu0
      %v7680 = vadd.f32 %v7639, %v7679
      %7681 = vmatmul.f32.gmra.mxu0 %v7563
      %v7682 = vpop.f32.mrf.mxu0
      %v7683 = vadd.f32 %v7639, %v7682
      %7684 = vmatmul.f32.gmra.mxu0 %v7564
      %v7685 = vpop.f32.mrf.mxu0
      %v7686 = vadd.f32 %v7639, %v7685
      %7687 = vmatmul.f32.gmra.mxu0 %v7565
      %v7688 = vpop.f32.mrf.mxu0
      %v7689 = vadd.f32 %v7639, %v7688
      %7690 = vmatmul.f32.gmra.mxu0 %v7566
      %v7691 = vpop.f32.mrf.mxu0
      %v7692 = vadd.f32 %v7639, %v7691
      %7693 = vmatmul.f32.gmra.mxu0 %v7567
      %v7694 = vpop.f32.mrf.mxu0
      %v7695 = vadd.f32 %v7639, %v7694
      %7696 = vmatmul.f32.gmra.mxu0 %v7568
      %v7697 = vpop.f32.mrf.mxu0
      %v7698 = vadd.f32 %v7639, %v7697
      %7699 = vmatmul.f32.gmra.mxu0 %v7569
      %v7700 = vpop.f32.mrf.mxu0
      %v7701 = vadd.f32 %v7639, %v7700
      %7702 = vmatmul.f32.gmra.mxu0 %v7570
      %v7703 = vpop.f32.mrf.mxu0
      %v7704 = vadd.f32 %v7639, %v7703
      %7705 = vmatmul.f32.gmra.mxu0 %v7571
      %v7706 = vpop.f32.mrf.mxu0
      %v7707 = vadd.f32 %v7639, %v7706
      %7708 = vmatmul.f32.gmra.mxu0 %v7572
      %v7709 = vpop.f32.mrf.mxu0
      %v7710 = vadd.f32 %v7639, %v7709
      %7711 = vmatmul.f32.gmra.mxu0 %v7573
      %v7712 = vpop.f32.mrf.mxu0
      %v7713 = vadd.f32 %v7639, %v7712
      %7714 = vmatmul.f32.gmra.mxu0 %v7574
      %v7715 = vpop.f32.mrf.mxu0
      %v7716 = vadd.f32 %v7639, %v7715
      %7717 = vmatmul.f32.gmra.mxu0 %v7575
      %v7718 = vpop.f32.mrf.mxu0
      %v7719 = vadd.f32 %v7639, %v7718
      %7720 = vmatmul.f32.gmra.mxu0 %v7576
      %v7721 = vpop.f32.mrf.mxu0
      %v7722 = vadd.f32 %v7639, %v7721
      %7723 = vmatmul.f32.gmra.mxu0 %v7577
      %v7724 = vpop.f32.mrf.mxu0
      %v7725 = vadd.f32 %v7639, %v7724
      %7726 = vmatmul.f32.gmra.mxu0 %v7578
      %v7727 = vpop.f32.mrf.mxu0
      %v7728 = vadd.f32 %v7639, %v7727
      %7729 = vmatmul.f32.gmra.mxu0 %v7579
      %v7730 = vpop.f32.mrf.mxu0
      %v7731 = vadd.f32 %v7639, %v7730
      %7732 = vmatmul.f32.gmra.mxu0 %v7580
      %v7733 = vpop.f32.mrf.mxu0
      %v7734 = vadd.f32 %v7639, %v7733
      %7735 = vmatmul.f32.gmra.mxu0 %v7581
      %v7736 = vpop.f32.mrf.mxu0
      %v7737 = vadd.f32 %v7639, %v7736
      %7738 = vmatmul.f32.gmra.mxu0 %v7582
      %v7739 = vpop.f32.mrf.mxu0
      %v7740 = vadd.f32 %v7639, %v7739
      %7741 = vmatmul.f32.gmra.mxu0 %v7583
      %v7742 = vpop.f32.mrf.mxu0
      %v7743 = vadd.f32 %v7639, %v7742
      %7744 = vmatmul.f32.gmra.mxu0 %v7584
      %v7745 = vpop.f32.mrf.mxu0
      %v7746 = vadd.f32 %v7639, %v7745
      %7747 = vmatmul.f32.gmra.mxu0 %v7585
      %v7748 = vpop.f32.mrf.mxu0
      %v7749 = vadd.f32 %v7639, %v7748
      %7750 = vmatmul.f32.gmra.mxu0 %v7586
      %v7751 = vpop.f32.mrf.mxu0
      %v7752 = vadd.f32 %v7639, %v7751
      %7753 = vmatmul.f32.gmra.mxu0 %v7587
      %v7754 = vpop.f32.mrf.mxu0
      %v7755 = vadd.f32 %v7639, %v7754
      %7756 = vmatmul.f32.gmra.mxu0 %v7588
      %v7757 = vpop.f32.mrf.mxu0
      %v7758 = vadd.f32 %v7639, %v7757
      %7759 = vmatmul.f32.gmra.mxu0 %v7589
      %v7760 = vpop.f32.mrf.mxu0
      %v7761 = vadd.f32 %v7639, %v7760
      %7762 = vmatmul.f32.gmra.mxu0 %v7590
      %v7763 = vpop.f32.mrf.mxu0
      %v7764 = vadd.f32 %v7639, %v7763
      %7765 = vmatmul.f32.gmra.mxu0 %v7591
      %v7766 = vpop.f32.mrf.mxu0
      %v7767 = vadd.f32 %v7639, %v7766
      %7768 = vmatmul.f32.gmra.mxu0 %v7592
      %v7769 = vpop.f32.mrf.mxu0
      %v7770 = vadd.f32 %v7639, %v7769
      %7771 = vmatmul.f32.gmra.mxu0 %v7593
      %v7772 = vpop.f32.mrf.mxu0
      %v7773 = vadd.f32 %v7639, %v7772
      %7774 = vmatmul.f32.gmra.mxu0 %v7594
      %v7775 = vpop.f32.mrf.mxu0
      %v7776 = vadd.f32 %v7639, %v7775
      %7777 = vmatmul.f32.gmra.mxu0 %v7595
      %v7778 = vpop.f32.mrf.mxu0
      %v7779 = vadd.f32 %v7639, %v7778
      %7780 = vmatmul.f32.gmra.mxu0 %v7596
      %v7781 = vpop.f32.mrf.mxu0
      %v7782 = vadd.f32 %v7639, %v7781
      %7783 = vmatmul.f32.gmra.mxu0 %v7597
      %v7784 = vpop.f32.mrf.mxu0
      %v7785 = vadd.f32 %v7639, %v7784
      %7786 = vmatmul.f32.gmra.mxu0 %v7598
      %v7787 = vpop.f32.mrf.mxu0
      %v7788 = vadd.f32 %v7639, %v7787
      %7789 = vmatmul.f32.gmra.mxu0 %v7599
      %v7790 = vpop.f32.mrf.mxu0
      %v7791 = vadd.f32 %v7639, %v7790
      %7792 = vmatmul.f32.gmra.mxu0 %v7600
      %v7793 = vpop.f32.mrf.mxu0
      %v7794 = vadd.f32 %v7639, %v7793
      %7795 = vmatmul.f32.gmra.mxu0 %v7601
      %v7796 = vpop.f32.mrf.mxu0
      %v7797 = vadd.f32 %v7639, %v7796
      %7798 = vmatmul.f32.gmra.mxu0 %v7602
      %v7799 = vpop.f32.mrf.mxu0
      %v7800 = vadd.f32 %v7639, %v7799
      %7801 = vmatmul.f32.gmra.mxu0 %v7603
      %v7802 = vpop.f32.mrf.mxu0
      %v7803 = vadd.f32 %v7639, %v7802
      %7804 = vmatmul.f32.gmra.mxu0 %v7604
      %v7805 = vpop.f32.mrf.mxu0
      %v7806 = vadd.f32 %v7639, %v7805
      %7807 = vmatmul.f32.gmra.mxu0 %v7605
      %v7808 = vpop.f32.mrf.mxu0
      %v7809 = vadd.f32 %v7639, %v7808
      %7810 = vmatmul.f32.gmra.mxu0 %v7606
      %v7811 = vpop.f32.mrf.mxu0
      %v7812 = vadd.f32 %v7639, %v7811
      %7813 = vmatmul.f32.gmra.mxu0 %v7607
      %v7814 = vpop.f32.mrf.mxu0
      %v7815 = vadd.f32 %v7639, %v7814
      %7816 = vmatmul.f32.gmra.mxu0 %v7608
      %v7817 = vpop.f32.mrf.mxu0
      %v7818 = vadd.f32 %v7639, %v7817
      %7819 = vmatmul.f32.gmra.mxu0 %v7609
      %v7820 = vpop.f32.mrf.mxu0
      %v7821 = vadd.f32 %v7639, %v7820
      %7822 = vmatmul.f32.gmra.mxu0 %v7610
      %v7823 = vpop.f32.mrf.mxu0
      %v7824 = vadd.f32 %v7639, %v7823
      %7825 = vmatmul.f32.gmra.mxu0 %v7611
      %v7826 = vpop.f32.mrf.mxu0
      %v7827 = vadd.f32 %v7639, %v7826
      %7828 = vmatmul.f32.gmra.mxu0 %v7612
      %v7829 = vpop.f32.mrf.mxu0
      %v7830 = vadd.f32 %v7639, %v7829
      %7831 = vmatmul.f32.gmra.mxu0 %v7613
      %v7832 = vpop.f32.mrf.mxu0
      %v7833 = vadd.f32 %v7639, %v7832
      %7834 = vmatmul.f32.gmra.mxu0 %v7614
      %v7835 = vpop.f32.mrf.mxu0
      %v7836 = vadd.f32 %v7639, %v7835
      %7837 = vmatmul.f32.gmra.mxu0 %v7615
      %v7838 = vpop.f32.mrf.mxu0
      %v7839 = vadd.f32 %v7639, %v7838
      %7840 = vmatmul.f32.gmra.mxu0 %v7616
      %v7841 = vpop.f32.mrf.mxu0
      %v7842 = vadd.f32 %v7639, %v7841
      %7843 = vmatmul.f32.gmra.mxu0 %v7617
      %v7844 = vpop.f32.mrf.mxu0
      %v7845 = vadd.f32 %v7639, %v7844
      %7846 = vmatmul.f32.gmra.mxu0 %v7618
      %v7847 = vpop.f32.mrf.mxu0
      %v7848 = vadd.f32 %v7639, %v7847
      %7849 = vdwg.mxu0
      %v7850 = vtanh.pop %v7659
      %v7851 = vtanh.pop %v7662
      %v7852 = vtanh.pop %v7665
      %v7853 = vtanh.pop %v7668
      %v7854 = vtanh.pop %v7671
      %v7855 = vtanh.pop %v7674
      %v7856 = vtanh.pop %v7677
      %v7857 = vtanh.pop %v7680
      %v7858 = vtanh.pop %v7683
      %v7859 = vtanh.pop %v7686
      %v7860 = vtanh.pop %v7689
      %v7861 = vtanh.pop %v7692
      %v7862 = vtanh.pop %v7695
      %v7863 = vtanh.pop %v7698
      %v7864 = vtanh.pop %v7701
      %v7865 = vtanh.pop %v7704
      %v7866 = vtanh.pop %v7707
      %v7867 = vtanh.pop %v7710
      %v7868 = vtanh.pop %v7713
      %v7869 = vtanh.pop %v7716
      %v7870 = vtanh.pop %v7719
      %v7871 = vtanh.pop %v7722
      %v7872 = vtanh.pop %v7725
      %v7873 = vtanh.pop %v7728
      %v7874 = vtanh.pop %v7731
      %v7875 = vtanh.pop %v7734
      %v7876 = vtanh.pop %v7737
      %v7877 = vtanh.pop %v7740
      %v7878 = vtanh.pop %v7743
      %v7879 = vtanh.pop %v7746
      %v7880 = vtanh.pop %v7749
      %v7881 = vtanh.pop %v7752
      %v7882 = vtanh.pop %v7755
      %v7883 = vtanh.pop %v7758
      %v7884 = vtanh.pop %v7761
      %v7885 = vtanh.pop %v7764
      %v7886 = vtanh.pop %v7767
      %v7887 = vtanh.pop %v7770
      %v7888 = vtanh.pop %v7773
      %v7889 = vtanh.pop %v7776
      %v7890 = vtanh.pop %v7779
      %v7891 = vtanh.pop %v7782
      %v7892 = vtanh.pop %v7785
      %v7893 = vtanh.pop %v7788
      %v7894 = vtanh.pop %v7791
      %v7895 = vtanh.pop %v7794
      %v7896 = vtanh.pop %v7797
      %v7897 = vtanh.pop %v7800
      %v7898 = vtanh.pop %v7803
      %v7899 = vtanh.pop %v7806
      %v7900 = vtanh.pop %v7809
      %v7901 = vtanh.pop %v7812
      %v7902 = vtanh.pop %v7815
      %v7903 = vtanh.pop %v7818
      %v7904 = vtanh.pop %v7821
      %v7905 = vtanh.pop %v7824
      %v7906 = vtanh.pop %v7827
      %v7907 = vtanh.pop %v7830
      %v7908 = vtanh.pop %v7833
      %v7909 = vtanh.pop %v7836
      %v7910 = vtanh.pop %v7839
      %v7911 = vtanh.pop %v7842
      %v7912 = vtanh.pop %v7845
      %v7913 = vtanh.pop %v7848
      %s7914 = scalar_lea.vmem %s6, 1152
      %v7915 = vld [vmem:[%s7914] sm:$0xff]
      %v7916 = vld [vmem:[%s7914 + $0x8] sm:$0xff]
      %v7917 = vld [vmem:[%s7914 + $0x10] sm:$0xff]
      %v7918 = vld [vmem:[%s7914 + $0x18] sm:$0xff]
      %v7919 = vld [vmem:[%s7914 + $0x20] sm:$0xff]
      %v7920 = vld [vmem:[%s7914 + $0x28] sm:$0xff]
      %v7921 = vld [vmem:[%s7914 + $0x30] sm:$0xff]
      %v7922 = vld [vmem:[%s7914 + $0x38] sm:$0xff]
      %v7923 = vld [vmem:[%s7914 + $0x40] sm:$0xff]
      %v7924 = vld [vmem:[%s7914 + $0x48] sm:$0xff]
      %v7925 = vld [vmem:[%s7914 + $0x50] sm:$0xff]
      %v7926 = vld [vmem:[%s7914 + $0x58] sm:$0xff]
      %v7927 = vld [vmem:[%s7914 + $0x60] sm:$0xff]
      %v7928 = vld [vmem:[%s7914 + $0x68] sm:$0xff]
      %v7929 = vld [vmem:[%s7914 + $0x70] sm:$0xff]
      %v7930 = vld [vmem:[%s7914 + $0x78] sm:$0xff]
      %s7931 = scalar_lea.vmem %s7, 9
      %v7932 = vld [vmem:[%s7931] sm:$0x1]
      %v7934 = vperm.slane %v7932, 0
      %7936 = vmatpush.msra.mxu0 %v7930
      %7937 = vmatpush.msra.mxu0 %v7929
      %7938 = vmatpush.msra.mxu0 %v7928
      %7939 = vmatpush.msra.mxu0 %v7927
      %7940 = vmatpush.msra.mxu0 %v7926
      %7941 = vmatpush.msra.mxu0 %v7925
      %7942 = vmatpush.msra.mxu0 %v7924
      %7943 = vmatpush.msra.mxu0 %v7923
      %7944 = vmatpush.msra.mxu0 %v7922
      %7945 = vmatpush.msra.mxu0 %v7921
      %7946 = vmatpush.msra.mxu0 %v7920
      %7947 = vmatpush.msra.mxu0 %v7919
      %7948 = vmatpush.msra.mxu0 %v7918
      %7949 = vmatpush.msra.mxu0 %v7917
      %7950 = vmatpush.msra.mxu0 %v7916
      %7951 = vmatpush.msra.mxu0 %v7915
      %7952 = vmatmul.f32.gmra.mxu0 %v7850
      %v7953 = vpop.f32.mrf.mxu0
      %v7954 = vadd.f32 %v7934, %v7953
      %7955 = vmatmul.f32.gmra.mxu0 %v7851
      %v7956 = vpop.f32.mrf.mxu0
      %v7957 = vadd.f32 %v7934, %v7956
      %7958 = vmatmul.f32.gmra.mxu0 %v7852
      %v7959 = vpop.f32.mrf.mxu0
      %v7960 = vadd.f32 %v7934, %v7959
      %7961 = vmatmul.f32.gmra.mxu0 %v7853
      %v7962 = vpop.f32.mrf.mxu0
      %v7963 = vadd.f32 %v7934, %v7962
      %7964 = vmatmul.f32.gmra.mxu0 %v7854
      %v7965 = vpop.f32.mrf.mxu0
      %v7966 = vadd.f32 %v7934, %v7965
      %7967 = vmatmul.f32.gmra.mxu0 %v7855
      %v7968 = vpop.f32.mrf.mxu0
      %v7969 = vadd.f32 %v7934, %v7968
      %7970 = vmatmul.f32.gmra.mxu0 %v7856
      %v7971 = vpop.f32.mrf.mxu0
      %v7972 = vadd.f32 %v7934, %v7971
      %7973 = vmatmul.f32.gmra.mxu0 %v7857
      %v7974 = vpop.f32.mrf.mxu0
      %v7975 = vadd.f32 %v7934, %v7974
      %7976 = vmatmul.f32.gmra.mxu0 %v7858
      %v7977 = vpop.f32.mrf.mxu0
      %v7978 = vadd.f32 %v7934, %v7977
      %7979 = vmatmul.f32.gmra.mxu0 %v7859
      %v7980 = vpop.f32.mrf.mxu0
      %v7981 = vadd.f32 %v7934, %v7980
      %7982 = vmatmul.f32.gmra.mxu0 %v7860
      %v7983 = vpop.f32.mrf.mxu0
      %v7984 = vadd.f32 %v7934, %v7983
      %7985 = vmatmul.f32.gmra.mxu0 %v7861
      %v7986 = vpop.f32.mrf.mxu0
      %v7987 = vadd.f32 %v7934, %v7986
      %7988 = vmatmul.f32.gmra.mxu0 %v7862
      %v7989 = vpop.f32.mrf.mxu0
      %v7990 = vadd.f32 %v7934, %v7989
      %7991 = vmatmul.f32.gmra.mxu0 %v7863
      %v7992 = vpop.f32.mrf.mxu0
      %v7993 = vadd.f32 %v7934, %v7992
      %7994 = vmatmul.f32.gmra.mxu0 %v7864
      %v7995 = vpop.f32.mrf.mxu0
      %v7996 = vadd.f32 %v7934, %v7995
      %7997 = vmatmul.f32.gmra.mxu0 %v7865
      %v7998 = vpop.f32.mrf.mxu0
      %v7999 = vadd.f32 %v7934, %v7998
      %8000 = vmatmul.f32.gmra.mxu0 %v7866
      %v8001 = vpop.f32.mrf.mxu0
      %v8002 = vadd.f32 %v7934, %v8001
      %8003 = vmatmul.f32.gmra.mxu0 %v7867
      %v8004 = vpop.f32.mrf.mxu0
      %v8005 = vadd.f32 %v7934, %v8004
      %8006 = vmatmul.f32.gmra.mxu0 %v7868
      %v8007 = vpop.f32.mrf.mxu0
      %v8008 = vadd.f32 %v7934, %v8007
      %8009 = vmatmul.f32.gmra.mxu0 %v7869
      %v8010 = vpop.f32.mrf.mxu0
      %v8011 = vadd.f32 %v7934, %v8010
      %8012 = vmatmul.f32.gmra.mxu0 %v7870
      %v8013 = vpop.f32.mrf.mxu0
      %v8014 = vadd.f32 %v7934, %v8013
      %8015 = vmatmul.f32.gmra.mxu0 %v7871
      %v8016 = vpop.f32.mrf.mxu0
      %v8017 = vadd.f32 %v7934, %v8016
      %8018 = vmatmul.f32.gmra.mxu0 %v7872
      %v8019 = vpop.f32.mrf.mxu0
      %v8020 = vadd.f32 %v7934, %v8019
      %8021 = vmatmul.f32.gmra.mxu0 %v7873
      %v8022 = vpop.f32.mrf.mxu0
      %v8023 = vadd.f32 %v7934, %v8022
      %8024 = vmatmul.f32.gmra.mxu0 %v7874
      %v8025 = vpop.f32.mrf.mxu0
      %v8026 = vadd.f32 %v7934, %v8025
      %8027 = vmatmul.f32.gmra.mxu0 %v7875
      %v8028 = vpop.f32.mrf.mxu0
      %v8029 = vadd.f32 %v7934, %v8028
      %8030 = vmatmul.f32.gmra.mxu0 %v7876
      %v8031 = vpop.f32.mrf.mxu0
      %v8032 = vadd.f32 %v7934, %v8031
      %8033 = vmatmul.f32.gmra.mxu0 %v7877
      %v8034 = vpop.f32.mrf.mxu0
      %v8035 = vadd.f32 %v7934, %v8034
      %8036 = vmatmul.f32.gmra.mxu0 %v7878
      %v8037 = vpop.f32.mrf.mxu0
      %v8038 = vadd.f32 %v7934, %v8037
      %8039 = vmatmul.f32.gmra.mxu0 %v7879
      %v8040 = vpop.f32.mrf.mxu0
      %v8041 = vadd.f32 %v7934, %v8040
      %8042 = vmatmul.f32.gmra.mxu0 %v7880
      %v8043 = vpop.f32.mrf.mxu0
      %v8044 = vadd.f32 %v7934, %v8043
      %8045 = vmatmul.f32.gmra.mxu0 %v7881
      %v8046 = vpop.f32.mrf.mxu0
      %v8047 = vadd.f32 %v7934, %v8046
      %8048 = vmatmul.f32.gmra.mxu0 %v7882
      %v8049 = vpop.f32.mrf.mxu0
      %v8050 = vadd.f32 %v7934, %v8049
      %8051 = vmatmul.f32.gmra.mxu0 %v7883
      %v8052 = vpop.f32.mrf.mxu0
      %v8053 = vadd.f32 %v7934, %v8052
      %8054 = vmatmul.f32.gmra.mxu0 %v7884
      %v8055 = vpop.f32.mrf.mxu0
      %v8056 = vadd.f32 %v7934, %v8055
      %8057 = vmatmul.f32.gmra.mxu0 %v7885
      %v8058 = vpop.f32.mrf.mxu0
      %v8059 = vadd.f32 %v7934, %v8058
      %8060 = vmatmul.f32.gmra.mxu0 %v7886
      %v8061 = vpop.f32.mrf.mxu0
      %v8062 = vadd.f32 %v7934, %v8061
      %8063 = vmatmul.f32.gmra.mxu0 %v7887
      %v8064 = vpop.f32.mrf.mxu0
      %v8065 = vadd.f32 %v7934, %v8064
      %8066 = vmatmul.f32.gmra.mxu0 %v7888
      %v8067 = vpop.f32.mrf.mxu0
      %v8068 = vadd.f32 %v7934, %v8067
      %8069 = vmatmul.f32.gmra.mxu0 %v7889
      %v8070 = vpop.f32.mrf.mxu0
      %v8071 = vadd.f32 %v7934, %v8070
      %8072 = vmatmul.f32.gmra.mxu0 %v7890
      %v8073 = vpop.f32.mrf.mxu0
      %v8074 = vadd.f32 %v7934, %v8073
      %8075 = vmatmul.f32.gmra.mxu0 %v7891
      %v8076 = vpop.f32.mrf.mxu0
      %v8077 = vadd.f32 %v7934, %v8076
      %8078 = vmatmul.f32.gmra.mxu0 %v7892
      %v8079 = vpop.f32.mrf.mxu0
      %v8080 = vadd.f32 %v7934, %v8079
      %8081 = vmatmul.f32.gmra.mxu0 %v7893
      %v8082 = vpop.f32.mrf.mxu0
      %v8083 = vadd.f32 %v7934, %v8082
      %8084 = vmatmul.f32.gmra.mxu0 %v7894
      %v8085 = vpop.f32.mrf.mxu0
      %v8086 = vadd.f32 %v7934, %v8085
      %8087 = vmatmul.f32.gmra.mxu0 %v7895
      %v8088 = vpop.f32.mrf.mxu0
      %v8089 = vadd.f32 %v7934, %v8088
      %8090 = vmatmul.f32.gmra.mxu0 %v7896
      %v8091 = vpop.f32.mrf.mxu0
      %v8092 = vadd.f32 %v7934, %v8091
      %8093 = vmatmul.f32.gmra.mxu0 %v7897
      %v8094 = vpop.f32.mrf.mxu0
      %v8095 = vadd.f32 %v7934, %v8094
      %8096 = vmatmul.f32.gmra.mxu0 %v7898
      %v8097 = vpop.f32.mrf.mxu0
      %v8098 = vadd.f32 %v7934, %v8097
      %8099 = vmatmul.f32.gmra.mxu0 %v7899
      %v8100 = vpop.f32.mrf.mxu0
      %v8101 = vadd.f32 %v7934, %v8100
      %8102 = vmatmul.f32.gmra.mxu0 %v7900
      %v8103 = vpop.f32.mrf.mxu0
      %v8104 = vadd.f32 %v7934, %v8103
      %8105 = vmatmul.f32.gmra.mxu0 %v7901
      %v8106 = vpop.f32.mrf.mxu0
      %v8107 = vadd.f32 %v7934, %v8106
      %8108 = vmatmul.f32.gmra.mxu0 %v7902
      %v8109 = vpop.f32.mrf.mxu0
      %v8110 = vadd.f32 %v7934, %v8109
      %8111 = vmatmul.f32.gmra.mxu0 %v7903
      %v8112 = vpop.f32.mrf.mxu0
      %v8113 = vadd.f32 %v7934, %v8112
      %8114 = vmatmul.f32.gmra.mxu0 %v7904
      %v8115 = vpop.f32.mrf.mxu0
      %v8116 = vadd.f32 %v7934, %v8115
      %8117 = vmatmul.f32.gmra.mxu0 %v7905
      %v8118 = vpop.f32.mrf.mxu0
      %v8119 = vadd.f32 %v7934, %v8118
      %8120 = vmatmul.f32.gmra.mxu0 %v7906
      %v8121 = vpop.f32.mrf.mxu0
      %v8122 = vadd.f32 %v7934, %v8121
      %8123 = vmatmul.f32.gmra.mxu0 %v7907
      %v8124 = vpop.f32.mrf.mxu0
      %v8125 = vadd.f32 %v7934, %v8124
      %8126 = vmatmul.f32.gmra.mxu0 %v7908
      %v8127 = vpop.f32.mrf.mxu0
      %v8128 = vadd.f32 %v7934, %v8127
      %8129 = vmatmul.f32.gmra.mxu0 %v7909
      %v8130 = vpop.f32.mrf.mxu0
      %v8131 = vadd.f32 %v7934, %v8130
      %8132 = vmatmul.f32.gmra.mxu0 %v7910
      %v8133 = vpop.f32.mrf.mxu0
      %v8134 = vadd.f32 %v7934, %v8133
      %8135 = vmatmul.f32.gmra.mxu0 %v7911
      %v8136 = vpop.f32.mrf.mxu0
      %v8137 = vadd.f32 %v7934, %v8136
      %8138 = vmatmul.f32.gmra.mxu0 %v7912
      %v8139 = vpop.f32.mrf.mxu0
      %v8140 = vadd.f32 %v7934, %v8139
      %8141 = vmatmul.f32.gmra.mxu0 %v7913
      %v8142 = vpop.f32.mrf.mxu0
      %v8143 = vadd.f32 %v7934, %v8142
      %8144 = vdwg.mxu0
      %v8145 = vadd.f32 %v7954, %v7555
      %v8146 = vadd.f32 %v7957, %v7556
      %v8147 = vadd.f32 %v7960, %v7557
      %v8148 = vadd.f32 %v7963, %v7558
      %v8149 = vadd.f32 %v7966, %v7559
      %v8150 = vadd.f32 %v7969, %v7560
      %v8151 = vadd.f32 %v7972, %v7561
      %v8152 = vadd.f32 %v7975, %v7562
      %v8153 = vadd.f32 %v7978, %v7563
      %v8154 = vadd.f32 %v7981, %v7564
      %v8155 = vadd.f32 %v7984, %v7565
      %v8156 = vadd.f32 %v7987, %v7566
      %v8157 = vadd.f32 %v7990, %v7567
      %v8158 = vadd.f32 %v7993, %v7568
      %v8159 = vadd.f32 %v7996, %v7569
      %v8160 = vadd.f32 %v7999, %v7570
      %v8161 = vadd.f32 %v8002, %v7571
      %v8162 = vadd.f32 %v8005, %v7572
      %v8163 = vadd.f32 %v8008, %v7573
      %v8164 = vadd.f32 %v8011, %v7574
      %v8165 = vadd.f32 %v8014, %v7575
      %v8166 = vadd.f32 %v8017, %v7576
      %v8167 = vadd.f32 %v8020, %v7577
      %v8168 = vadd.f32 %v8023, %v7578
      %v8169 = vadd.f32 %v8026, %v7579
      %v8170 = vadd.f32 %v8029, %v7580
      %v8171 = vadd.f32 %v8032, %v7581
      %v8172 = vadd.f32 %v8035, %v7582
      %v8173 = vadd.f32 %v8038, %v7583
      %v8174 = vadd.f32 %v8041, %v7584
      %v8175 = vadd.f32 %v8044, %v7585
      %v8176 = vadd.f32 %v8047, %v7586
      %v8177 = vadd.f32 %v8050, %v7587
      %v8178 = vadd.f32 %v8053, %v7588
      %v8179 = vadd.f32 %v8056, %v7589
      %v8180 = vadd.f32 %v8059, %v7590
      %v8181 = vadd.f32 %v8062, %v7591
      %v8182 = vadd.f32 %v8065, %v7592
      %v8183 = vadd.f32 %v8068, %v7593
      %v8184 = vadd.f32 %v8071, %v7594
      %v8185 = vadd.f32 %v8074, %v7595
      %v8186 = vadd.f32 %v8077, %v7596
      %v8187 = vadd.f32 %v8080, %v7597
      %v8188 = vadd.f32 %v8083, %v7598
      %v8189 = vadd.f32 %v8086, %v7599
      %v8190 = vadd.f32 %v8089, %v7600
      %v8191 = vadd.f32 %v8092, %v7601
      %v8192 = vadd.f32 %v8095, %v7602
      %v8193 = vadd.f32 %v8098, %v7603
      %v8194 = vadd.f32 %v8101, %v7604
      %v8195 = vadd.f32 %v8104, %v7605
      %v8196 = vadd.f32 %v8107, %v7606
      %v8197 = vadd.f32 %v8110, %v7607
      %v8198 = vadd.f32 %v8113, %v7608
      %v8199 = vadd.f32 %v8116, %v7609
      %v8200 = vadd.f32 %v8119, %v7610
      %v8201 = vadd.f32 %v8122, %v7611
      %v8202 = vadd.f32 %v8125, %v7612
      %v8203 = vadd.f32 %v8128, %v7613
      %v8204 = vadd.f32 %v8131, %v7614
      %v8205 = vadd.f32 %v8134, %v7615
      %v8206 = vadd.f32 %v8137, %v7616
      %v8207 = vadd.f32 %v8140, %v7617
      %v8208 = vadd.f32 %v8143, %v7618
      %v8209 = vtanh.pop %v8145
      %v8210 = vtanh.pop %v8146
      %v8211 = vtanh.pop %v8147
      %v8212 = vtanh.pop %v8148
      %v8213 = vtanh.pop %v8149
      %v8214 = vtanh.pop %v8150
      %v8215 = vtanh.pop %v8151
      %v8216 = vtanh.pop %v8152
      %v8217 = vtanh.pop %v8153
      %v8218 = vtanh.pop %v8154
      %v8219 = vtanh.pop %v8155
      %v8220 = vtanh.pop %v8156
      %v8221 = vtanh.pop %v8157
      %v8222 = vtanh.pop %v8158
      %v8223 = vtanh.pop %v8159
      %v8224 = vtanh.pop %v8160
      %v8225 = vtanh.pop %v8161
      %v8226 = vtanh.pop %v8162
      %v8227 = vtanh.pop %v8163
      %v8228 = vtanh.pop %v8164
      %v8229 = vtanh.pop %v8165
      %v8230 = vtanh.pop %v8166
      %v8231 = vtanh.pop %v8167
      %v8232 = vtanh.pop %v8168
      %v8233 = vtanh.pop %v8169
      %v8234 = vtanh.pop %v8170
      %v8235 = vtanh.pop %v8171
      %v8236 = vtanh.pop %v8172
      %v8237 = vtanh.pop %v8173
      %v8238 = vtanh.pop %v8174
      %v8239 = vtanh.pop %v8175
      %v8240 = vtanh.pop %v8176
      %v8241 = vtanh.pop %v8177
      %v8242 = vtanh.pop %v8178
      %v8243 = vtanh.pop %v8179
      %v8244 = vtanh.pop %v8180
      %v8245 = vtanh.pop %v8181
      %v8246 = vtanh.pop %v8182
      %v8247 = vtanh.pop %v8183
      %v8248 = vtanh.pop %v8184
      %v8249 = vtanh.pop %v8185
      %v8250 = vtanh.pop %v8186
      %v8251 = vtanh.pop %v8187
      %v8252 = vtanh.pop %v8188
      %v8253 = vtanh.pop %v8189
      %v8254 = vtanh.pop %v8190
      %v8255 = vtanh.pop %v8191
      %v8256 = vtanh.pop %v8192
      %v8257 = vtanh.pop %v8193
      %v8258 = vtanh.pop %v8194
      %v8259 = vtanh.pop %v8195
      %v8260 = vtanh.pop %v8196
      %v8261 = vtanh.pop %v8197
      %v8262 = vtanh.pop %v8198
      %v8263 = vtanh.pop %v8199
      %v8264 = vtanh.pop %v8200
      %v8265 = vtanh.pop %v8201
      %v8266 = vtanh.pop %v8202
      %v8267 = vtanh.pop %v8203
      %v8268 = vtanh.pop %v8204
      %v8269 = vtanh.pop %v8205
      %v8270 = vtanh.pop %v8206
      %v8271 = vtanh.pop %v8207
      %v8272 = vtanh.pop %v8208
      %s8273 = scalar_lea.vmem %s4, 1280
      %v8274 = vld [vmem:[%s8273] sm:$0xff]
      %v8275 = vld [vmem:[%s8273 + $0x8] sm:$0xff]
      %v8276 = vld [vmem:[%s8273 + $0x10] sm:$0xff]
      %v8277 = vld [vmem:[%s8273 + $0x18] sm:$0xff]
      %v8278 = vld [vmem:[%s8273 + $0x20] sm:$0xff]
      %v8279 = vld [vmem:[%s8273 + $0x28] sm:$0xff]
      %v8280 = vld [vmem:[%s8273 + $0x30] sm:$0xff]
      %v8281 = vld [vmem:[%s8273 + $0x38] sm:$0xff]
      %v8282 = vld [vmem:[%s8273 + $0x40] sm:$0xff]
      %v8283 = vld [vmem:[%s8273 + $0x48] sm:$0xff]
      %v8284 = vld [vmem:[%s8273 + $0x50] sm:$0xff]
      %v8285 = vld [vmem:[%s8273 + $0x58] sm:$0xff]
      %v8286 = vld [vmem:[%s8273 + $0x60] sm:$0xff]
      %v8287 = vld [vmem:[%s8273 + $0x68] sm:$0xff]
      %v8288 = vld [vmem:[%s8273 + $0x70] sm:$0xff]
      %v8289 = vld [vmem:[%s8273 + $0x78] sm:$0xff]
      %s8290 = scalar_lea.vmem %s5, 10
      %v8291 = vld [vmem:[%s8290] sm:$0x1]
      %v8293 = vperm.slane %v8291, 0
      %8295 = vmatpush.msra.mxu0 %v8289
      %8296 = vmatpush.msra.mxu0 %v8288
      %8297 = vmatpush.msra.mxu0 %v8287
      %8298 = vmatpush.msra.mxu0 %v8286
      %8299 = vmatpush.msra.mxu0 %v8285
      %8300 = vmatpush.msra.mxu0 %v8284
      %8301 = vmatpush.msra.mxu0 %v8283
      %8302 = vmatpush.msra.mxu0 %v8282
      %8303 = vmatpush.msra.mxu0 %v8281
      %8304 = vmatpush.msra.mxu0 %v8280
      %8305 = vmatpush.msra.mxu0 %v8279
      %8306 = vmatpush.msra.mxu0 %v8278
      %8307 = vmatpush.msra.mxu0 %v8277
      %8308 = vmatpush.msra.mxu0 %v8276
      %8309 = vmatpush.msra.mxu0 %v8275
      %8310 = vmatpush.msra.mxu0 %v8274
      %8311 = vmatmul.f32.gmra.mxu0 %v8209
      %v8312 = vpop.f32.mrf.mxu0
      %v8313 = vadd.f32 %v8293, %v8312
      %8314 = vmatmul.f32.gmra.mxu0 %v8210
      %v8315 = vpop.f32.mrf.mxu0
      %v8316 = vadd.f32 %v8293, %v8315
      %8317 = vmatmul.f32.gmra.mxu0 %v8211
      %v8318 = vpop.f32.mrf.mxu0
      %v8319 = vadd.f32 %v8293, %v8318
      %8320 = vmatmul.f32.gmra.mxu0 %v8212
      %v8321 = vpop.f32.mrf.mxu0
      %v8322 = vadd.f32 %v8293, %v8321
      %8323 = vmatmul.f32.gmra.mxu0 %v8213
      %v8324 = vpop.f32.mrf.mxu0
      %v8325 = vadd.f32 %v8293, %v8324
      %8326 = vmatmul.f32.gmra.mxu0 %v8214
      %v8327 = vpop.f32.mrf.mxu0
      %v8328 = vadd.f32 %v8293, %v8327
      %8329 = vmatmul.f32.gmra.mxu0 %v8215
      %v8330 = vpop.f32.mrf.mxu0
      %v8331 = vadd.f32 %v8293, %v8330
      %8332 = vmatmul.f32.gmra.mxu0 %v8216
      %v8333 = vpop.f32.mrf.mxu0
      %v8334 = vadd.f32 %v8293, %v8333
      %8335 = vmatmul.f32.gmra.mxu0 %v8217
      %v8336 = vpop.f32.mrf.mxu0
      %v8337 = vadd.f32 %v8293, %v8336
      %8338 = vmatmul.f32.gmra.mxu0 %v8218
      %v8339 = vpop.f32.mrf.mxu0
      %v8340 = vadd.f32 %v8293, %v8339
      %8341 = vmatmul.f32.gmra.mxu0 %v8219
      %v8342 = vpop.f32.mrf.mxu0
      %v8343 = vadd.f32 %v8293, %v8342
      %8344 = vmatmul.f32.gmra.mxu0 %v8220
      %v8345 = vpop.f32.mrf.mxu0
      %v8346 = vadd.f32 %v8293, %v8345
      %8347 = vmatmul.f32.gmra.mxu0 %v8221
      %v8348 = vpop.f32.mrf.mxu0
      %v8349 = vadd.f32 %v8293, %v8348
      %8350 = vmatmul.f32.gmra.mxu0 %v8222
      %v8351 = vpop.f32.mrf.mxu0
      %v8352 = vadd.f32 %v8293, %v8351
      %8353 = vmatmul.f32.gmra.mxu0 %v8223
      %v8354 = vpop.f32.mrf.mxu0
      %v8355 = vadd.f32 %v8293, %v8354
      %8356 = vmatmul.f32.gmra.mxu0 %v8224
      %v8357 = vpop.f32.mrf.mxu0
      %v8358 = vadd.f32 %v8293, %v8357
      %8359 = vmatmul.f32.gmra.mxu0 %v8225
      %v8360 = vpop.f32.mrf.mxu0
      %v8361 = vadd.f32 %v8293, %v8360
      %8362 = vmatmul.f32.gmra.mxu0 %v8226
      %v8363 = vpop.f32.mrf.mxu0
      %v8364 = vadd.f32 %v8293, %v8363
      %8365 = vmatmul.f32.gmra.mxu0 %v8227
      %v8366 = vpop.f32.mrf.mxu0
      %v8367 = vadd.f32 %v8293, %v8366
      %8368 = vmatmul.f32.gmra.mxu0 %v8228
      %v8369 = vpop.f32.mrf.mxu0
      %v8370 = vadd.f32 %v8293, %v8369
      %8371 = vmatmul.f32.gmra.mxu0 %v8229
      %v8372 = vpop.f32.mrf.mxu0
      %v8373 = vadd.f32 %v8293, %v8372
      %8374 = vmatmul.f32.gmra.mxu0 %v8230
      %v8375 = vpop.f32.mrf.mxu0
      %v8376 = vadd.f32 %v8293, %v8375
      %8377 = vmatmul.f32.gmra.mxu0 %v8231
      %v8378 = vpop.f32.mrf.mxu0
      %v8379 = vadd.f32 %v8293, %v8378
      %8380 = vmatmul.f32.gmra.mxu0 %v8232
      %v8381 = vpop.f32.mrf.mxu0
      %v8382 = vadd.f32 %v8293, %v8381
      %8383 = vmatmul.f32.gmra.mxu0 %v8233
      %v8384 = vpop.f32.mrf.mxu0
      %v8385 = vadd.f32 %v8293, %v8384
      %8386 = vmatmul.f32.gmra.mxu0 %v8234
      %v8387 = vpop.f32.mrf.mxu0
      %v8388 = vadd.f32 %v8293, %v8387
      %8389 = vmatmul.f32.gmra.mxu0 %v8235
      %v8390 = vpop.f32.mrf.mxu0
      %v8391 = vadd.f32 %v8293, %v8390
      %8392 = vmatmul.f32.gmra.mxu0 %v8236
      %v8393 = vpop.f32.mrf.mxu0
      %v8394 = vadd.f32 %v8293, %v8393
      %8395 = vmatmul.f32.gmra.mxu0 %v8237
      %v8396 = vpop.f32.mrf.mxu0
      %v8397 = vadd.f32 %v8293, %v8396
      %8398 = vmatmul.f32.gmra.mxu0 %v8238
      %v8399 = vpop.f32.mrf.mxu0
      %v8400 = vadd.f32 %v8293, %v8399
      %8401 = vmatmul.f32.gmra.mxu0 %v8239
      %v8402 = vpop.f32.mrf.mxu0
      %v8403 = vadd.f32 %v8293, %v8402
      %8404 = vmatmul.f32.gmra.mxu0 %v8240
      %v8405 = vpop.f32.mrf.mxu0
      %v8406 = vadd.f32 %v8293, %v8405
      %8407 = vmatmul.f32.gmra.mxu0 %v8241
      %v8408 = vpop.f32.mrf.mxu0
      %v8409 = vadd.f32 %v8293, %v8408
      %8410 = vmatmul.f32.gmra.mxu0 %v8242
      %v8411 = vpop.f32.mrf.mxu0
      %v8412 = vadd.f32 %v8293, %v8411
      %8413 = vmatmul.f32.gmra.mxu0 %v8243
      %v8414 = vpop.f32.mrf.mxu0
      %v8415 = vadd.f32 %v8293, %v8414
      %8416 = vmatmul.f32.gmra.mxu0 %v8244
      %v8417 = vpop.f32.mrf.mxu0
      %v8418 = vadd.f32 %v8293, %v8417
      %8419 = vmatmul.f32.gmra.mxu0 %v8245
      %v8420 = vpop.f32.mrf.mxu0
      %v8421 = vadd.f32 %v8293, %v8420
      %8422 = vmatmul.f32.gmra.mxu0 %v8246
      %v8423 = vpop.f32.mrf.mxu0
      %v8424 = vadd.f32 %v8293, %v8423
      %8425 = vmatmul.f32.gmra.mxu0 %v8247
      %v8426 = vpop.f32.mrf.mxu0
      %v8427 = vadd.f32 %v8293, %v8426
      %8428 = vmatmul.f32.gmra.mxu0 %v8248
      %v8429 = vpop.f32.mrf.mxu0
      %v8430 = vadd.f32 %v8293, %v8429
      %8431 = vmatmul.f32.gmra.mxu0 %v8249
      %v8432 = vpop.f32.mrf.mxu0
      %v8433 = vadd.f32 %v8293, %v8432
      %8434 = vmatmul.f32.gmra.mxu0 %v8250
      %v8435 = vpop.f32.mrf.mxu0
      %v8436 = vadd.f32 %v8293, %v8435
      %8437 = vmatmul.f32.gmra.mxu0 %v8251
      %v8438 = vpop.f32.mrf.mxu0
      %v8439 = vadd.f32 %v8293, %v8438
      %8440 = vmatmul.f32.gmra.mxu0 %v8252
      %v8441 = vpop.f32.mrf.mxu0
      %v8442 = vadd.f32 %v8293, %v8441
      %8443 = vmatmul.f32.gmra.mxu0 %v8253
      %v8444 = vpop.f32.mrf.mxu0
      %v8445 = vadd.f32 %v8293, %v8444
      %8446 = vmatmul.f32.gmra.mxu0 %v8254
      %v8447 = vpop.f32.mrf.mxu0
      %v8448 = vadd.f32 %v8293, %v8447
      %8449 = vmatmul.f32.gmra.mxu0 %v8255
      %v8450 = vpop.f32.mrf.mxu0
      %v8451 = vadd.f32 %v8293, %v8450
      %8452 = vmatmul.f32.gmra.mxu0 %v8256
      %v8453 = vpop.f32.mrf.mxu0
      %v8454 = vadd.f32 %v8293, %v8453
      %8455 = vmatmul.f32.gmra.mxu0 %v8257
      %v8456 = vpop.f32.mrf.mxu0
      %v8457 = vadd.f32 %v8293, %v8456
      %8458 = vmatmul.f32.gmra.mxu0 %v8258
      %v8459 = vpop.f32.mrf.mxu0
      %v8460 = vadd.f32 %v8293, %v8459
      %8461 = vmatmul.f32.gmra.mxu0 %v8259
      %v8462 = vpop.f32.mrf.mxu0
      %v8463 = vadd.f32 %v8293, %v8462
      %8464 = vmatmul.f32.gmra.mxu0 %v8260
      %v8465 = vpop.f32.mrf.mxu0
      %v8466 = vadd.f32 %v8293, %v8465
      %8467 = vmatmul.f32.gmra.mxu0 %v8261
      %v8468 = vpop.f32.mrf.mxu0
      %v8469 = vadd.f32 %v8293, %v8468
      %8470 = vmatmul.f32.gmra.mxu0 %v8262
      %v8471 = vpop.f32.mrf.mxu0
      %v8472 = vadd.f32 %v8293, %v8471
      %8473 = vmatmul.f32.gmra.mxu0 %v8263
      %v8474 = vpop.f32.mrf.mxu0
      %v8475 = vadd.f32 %v8293, %v8474
      %8476 = vmatmul.f32.gmra.mxu0 %v8264
      %v8477 = vpop.f32.mrf.mxu0
      %v8478 = vadd.f32 %v8293, %v8477
      %8479 = vmatmul.f32.gmra.mxu0 %v8265
      %v8480 = vpop.f32.mrf.mxu0
      %v8481 = vadd.f32 %v8293, %v8480
      %8482 = vmatmul.f32.gmra.mxu0 %v8266
      %v8483 = vpop.f32.mrf.mxu0
      %v8484 = vadd.f32 %v8293, %v8483
      %8485 = vmatmul.f32.gmra.mxu0 %v8267
      %v8486 = vpop.f32.mrf.mxu0
      %v8487 = vadd.f32 %v8293, %v8486
      %8488 = vmatmul.f32.gmra.mxu0 %v8268
      %v8489 = vpop.f32.mrf.mxu0
      %v8490 = vadd.f32 %v8293, %v8489
      %8491 = vmatmul.f32.gmra.mxu0 %v8269
      %v8492 = vpop.f32.mrf.mxu0
      %v8493 = vadd.f32 %v8293, %v8492
      %8494 = vmatmul.f32.gmra.mxu0 %v8270
      %v8495 = vpop.f32.mrf.mxu0
      %v8496 = vadd.f32 %v8293, %v8495
      %8497 = vmatmul.f32.gmra.mxu0 %v8271
      %v8498 = vpop.f32.mrf.mxu0
      %v8499 = vadd.f32 %v8293, %v8498
      %8500 = vmatmul.f32.gmra.mxu0 %v8272
      %v8501 = vpop.f32.mrf.mxu0
      %v8502 = vadd.f32 %v8293, %v8501
      %8503 = vdwg.mxu0
      %v8504 = vtanh.pop %v8313
      %v8505 = vtanh.pop %v8316
      %v8506 = vtanh.pop %v8319
      %v8507 = vtanh.pop %v8322
      %v8508 = vtanh.pop %v8325
      %v8509 = vtanh.pop %v8328
      %v8510 = vtanh.pop %v8331
      %v8511 = vtanh.pop %v8334
      %v8512 = vtanh.pop %v8337
      %v8513 = vtanh.pop %v8340
      %v8514 = vtanh.pop %v8343
      %v8515 = vtanh.pop %v8346
      %v8516 = vtanh.pop %v8349
      %v8517 = vtanh.pop %v8352
      %v8518 = vtanh.pop %v8355
      %v8519 = vtanh.pop %v8358
      %v8520 = vtanh.pop %v8361
      %v8521 = vtanh.pop %v8364
      %v8522 = vtanh.pop %v8367
      %v8523 = vtanh.pop %v8370
      %v8524 = vtanh.pop %v8373
      %v8525 = vtanh.pop %v8376
      %v8526 = vtanh.pop %v8379
      %v8527 = vtanh.pop %v8382
      %v8528 = vtanh.pop %v8385
      %v8529 = vtanh.pop %v8388
      %v8530 = vtanh.pop %v8391
      %v8531 = vtanh.pop %v8394
      %v8532 = vtanh.pop %v8397
      %v8533 = vtanh.pop %v8400
      %v8534 = vtanh.pop %v8403
      %v8535 = vtanh.pop %v8406
      %v8536 = vtanh.pop %v8409
      %v8537 = vtanh.pop %v8412
      %v8538 = vtanh.pop %v8415
      %v8539 = vtanh.pop %v8418
      %v8540 = vtanh.pop %v8421
      %v8541 = vtanh.pop %v8424
      %v8542 = vtanh.pop %v8427
      %v8543 = vtanh.pop %v8430
      %v8544 = vtanh.pop %v8433
      %v8545 = vtanh.pop %v8436
      %v8546 = vtanh.pop %v8439
      %v8547 = vtanh.pop %v8442
      %v8548 = vtanh.pop %v8445
      %v8549 = vtanh.pop %v8448
      %v8550 = vtanh.pop %v8451
      %v8551 = vtanh.pop %v8454
      %v8552 = vtanh.pop %v8457
      %v8553 = vtanh.pop %v8460
      %v8554 = vtanh.pop %v8463
      %v8555 = vtanh.pop %v8466
      %v8556 = vtanh.pop %v8469
      %v8557 = vtanh.pop %v8472
      %v8558 = vtanh.pop %v8475
      %v8559 = vtanh.pop %v8478
      %v8560 = vtanh.pop %v8481
      %v8561 = vtanh.pop %v8484
      %v8562 = vtanh.pop %v8487
      %v8563 = vtanh.pop %v8490
      %v8564 = vtanh.pop %v8493
      %v8565 = vtanh.pop %v8496
      %v8566 = vtanh.pop %v8499
      %v8567 = vtanh.pop %v8502
      %s8568 = scalar_lea.vmem %s6, 1280
      %v8569 = vld [vmem:[%s8568] sm:$0xff]
      %v8570 = vld [vmem:[%s8568 + $0x8] sm:$0xff]
      %v8571 = vld [vmem:[%s8568 + $0x10] sm:$0xff]
      %v8572 = vld [vmem:[%s8568 + $0x18] sm:$0xff]
      %v8573 = vld [vmem:[%s8568 + $0x20] sm:$0xff]
      %v8574 = vld [vmem:[%s8568 + $0x28] sm:$0xff]
      %v8575 = vld [vmem:[%s8568 + $0x30] sm:$0xff]
      %v8576 = vld [vmem:[%s8568 + $0x38] sm:$0xff]
      %v8577 = vld [vmem:[%s8568 + $0x40] sm:$0xff]
      %v8578 = vld [vmem:[%s8568 + $0x48] sm:$0xff]
      %v8579 = vld [vmem:[%s8568 + $0x50] sm:$0xff]
      %v8580 = vld [vmem:[%s8568 + $0x58] sm:$0xff]
      %v8581 = vld [vmem:[%s8568 + $0x60] sm:$0xff]
      %v8582 = vld [vmem:[%s8568 + $0x68] sm:$0xff]
      %v8583 = vld [vmem:[%s8568 + $0x70] sm:$0xff]
      %v8584 = vld [vmem:[%s8568 + $0x78] sm:$0xff]
      %s8585 = scalar_lea.vmem %s7, 10
      %v8586 = vld [vmem:[%s8585] sm:$0x1]
      %v8588 = vperm.slane %v8586, 0
      %8590 = vmatpush.msra.mxu0 %v8584
      %8591 = vmatpush.msra.mxu0 %v8583
      %8592 = vmatpush.msra.mxu0 %v8582
      %8593 = vmatpush.msra.mxu0 %v8581
      %8594 = vmatpush.msra.mxu0 %v8580
      %8595 = vmatpush.msra.mxu0 %v8579
      %8596 = vmatpush.msra.mxu0 %v8578
      %8597 = vmatpush.msra.mxu0 %v8577
      %8598 = vmatpush.msra.mxu0 %v8576
      %8599 = vmatpush.msra.mxu0 %v8575
      %8600 = vmatpush.msra.mxu0 %v8574
      %8601 = vmatpush.msra.mxu0 %v8573
      %8602 = vmatpush.msra.mxu0 %v8572
      %8603 = vmatpush.msra.mxu0 %v8571
      %8604 = vmatpush.msra.mxu0 %v8570
      %8605 = vmatpush.msra.mxu0 %v8569
      %8606 = vmatmul.f32.gmra.mxu0 %v8504
      %v8607 = vpop.f32.mrf.mxu0
      %v8608 = vadd.f32 %v8588, %v8607
      %8609 = vmatmul.f32.gmra.mxu0 %v8505
      %v8610 = vpop.f32.mrf.mxu0
      %v8611 = vadd.f32 %v8588, %v8610
      %8612 = vmatmul.f32.gmra.mxu0 %v8506
      %v8613 = vpop.f32.mrf.mxu0
      %v8614 = vadd.f32 %v8588, %v8613
      %8615 = vmatmul.f32.gmra.mxu0 %v8507
      %v8616 = vpop.f32.mrf.mxu0
      %v8617 = vadd.f32 %v8588, %v8616
      %8618 = vmatmul.f32.gmra.mxu0 %v8508
      %v8619 = vpop.f32.mrf.mxu0
      %v8620 = vadd.f32 %v8588, %v8619
      %8621 = vmatmul.f32.gmra.mxu0 %v8509
      %v8622 = vpop.f32.mrf.mxu0
      %v8623 = vadd.f32 %v8588, %v8622
      %8624 = vmatmul.f32.gmra.mxu0 %v8510
      %v8625 = vpop.f32.mrf.mxu0
      %v8626 = vadd.f32 %v8588, %v8625
      %8627 = vmatmul.f32.gmra.mxu0 %v8511
      %v8628 = vpop.f32.mrf.mxu0
      %v8629 = vadd.f32 %v8588, %v8628
      %8630 = vmatmul.f32.gmra.mxu0 %v8512
      %v8631 = vpop.f32.mrf.mxu0
      %v8632 = vadd.f32 %v8588, %v8631
      %8633 = vmatmul.f32.gmra.mxu0 %v8513
      %v8634 = vpop.f32.mrf.mxu0
      %v8635 = vadd.f32 %v8588, %v8634
      %8636 = vmatmul.f32.gmra.mxu0 %v8514
      %v8637 = vpop.f32.mrf.mxu0
      %v8638 = vadd.f32 %v8588, %v8637
      %8639 = vmatmul.f32.gmra.mxu0 %v8515
      %v8640 = vpop.f32.mrf.mxu0
      %v8641 = vadd.f32 %v8588, %v8640
      %8642 = vmatmul.f32.gmra.mxu0 %v8516
      %v8643 = vpop.f32.mrf.mxu0
      %v8644 = vadd.f32 %v8588, %v8643
      %8645 = vmatmul.f32.gmra.mxu0 %v8517
      %v8646 = vpop.f32.mrf.mxu0
      %v8647 = vadd.f32 %v8588, %v8646
      %8648 = vmatmul.f32.gmra.mxu0 %v8518
      %v8649 = vpop.f32.mrf.mxu0
      %v8650 = vadd.f32 %v8588, %v8649
      %8651 = vmatmul.f32.gmra.mxu0 %v8519
      %v8652 = vpop.f32.mrf.mxu0
      %v8653 = vadd.f32 %v8588, %v8652
      %8654 = vmatmul.f32.gmra.mxu0 %v8520
      %v8655 = vpop.f32.mrf.mxu0
      %v8656 = vadd.f32 %v8588, %v8655
      %8657 = vmatmul.f32.gmra.mxu0 %v8521
      %v8658 = vpop.f32.mrf.mxu0
      %v8659 = vadd.f32 %v8588, %v8658
      %8660 = vmatmul.f32.gmra.mxu0 %v8522
      %v8661 = vpop.f32.mrf.mxu0
      %v8662 = vadd.f32 %v8588, %v8661
      %8663 = vmatmul.f32.gmra.mxu0 %v8523
      %v8664 = vpop.f32.mrf.mxu0
      %v8665 = vadd.f32 %v8588, %v8664
      %8666 = vmatmul.f32.gmra.mxu0 %v8524
      %v8667 = vpop.f32.mrf.mxu0
      %v8668 = vadd.f32 %v8588, %v8667
      %8669 = vmatmul.f32.gmra.mxu0 %v8525
      %v8670 = vpop.f32.mrf.mxu0
      %v8671 = vadd.f32 %v8588, %v8670
      %8672 = vmatmul.f32.gmra.mxu0 %v8526
      %v8673 = vpop.f32.mrf.mxu0
      %v8674 = vadd.f32 %v8588, %v8673
      %8675 = vmatmul.f32.gmra.mxu0 %v8527
      %v8676 = vpop.f32.mrf.mxu0
      %v8677 = vadd.f32 %v8588, %v8676
      %8678 = vmatmul.f32.gmra.mxu0 %v8528
      %v8679 = vpop.f32.mrf.mxu0
      %v8680 = vadd.f32 %v8588, %v8679
      %8681 = vmatmul.f32.gmra.mxu0 %v8529
      %v8682 = vpop.f32.mrf.mxu0
      %v8683 = vadd.f32 %v8588, %v8682
      %8684 = vmatmul.f32.gmra.mxu0 %v8530
      %v8685 = vpop.f32.mrf.mxu0
      %v8686 = vadd.f32 %v8588, %v8685
      %8687 = vmatmul.f32.gmra.mxu0 %v8531
      %v8688 = vpop.f32.mrf.mxu0
      %v8689 = vadd.f32 %v8588, %v8688
      %8690 = vmatmul.f32.gmra.mxu0 %v8532
      %v8691 = vpop.f32.mrf.mxu0
      %v8692 = vadd.f32 %v8588, %v8691
      %8693 = vmatmul.f32.gmra.mxu0 %v8533
      %v8694 = vpop.f32.mrf.mxu0
      %v8695 = vadd.f32 %v8588, %v8694
      %8696 = vmatmul.f32.gmra.mxu0 %v8534
      %v8697 = vpop.f32.mrf.mxu0
      %v8698 = vadd.f32 %v8588, %v8697
      %8699 = vmatmul.f32.gmra.mxu0 %v8535
      %v8700 = vpop.f32.mrf.mxu0
      %v8701 = vadd.f32 %v8588, %v8700
      %8702 = vmatmul.f32.gmra.mxu0 %v8536
      %v8703 = vpop.f32.mrf.mxu0
      %v8704 = vadd.f32 %v8588, %v8703
      %8705 = vmatmul.f32.gmra.mxu0 %v8537
      %v8706 = vpop.f32.mrf.mxu0
      %v8707 = vadd.f32 %v8588, %v8706
      %8708 = vmatmul.f32.gmra.mxu0 %v8538
      %v8709 = vpop.f32.mrf.mxu0
      %v8710 = vadd.f32 %v8588, %v8709
      %8711 = vmatmul.f32.gmra.mxu0 %v8539
      %v8712 = vpop.f32.mrf.mxu0
      %v8713 = vadd.f32 %v8588, %v8712
      %8714 = vmatmul.f32.gmra.mxu0 %v8540
      %v8715 = vpop.f32.mrf.mxu0
      %v8716 = vadd.f32 %v8588, %v8715
      %8717 = vmatmul.f32.gmra.mxu0 %v8541
      %v8718 = vpop.f32.mrf.mxu0
      %v8719 = vadd.f32 %v8588, %v8718
      %8720 = vmatmul.f32.gmra.mxu0 %v8542
      %v8721 = vpop.f32.mrf.mxu0
      %v8722 = vadd.f32 %v8588, %v8721
      %8723 = vmatmul.f32.gmra.mxu0 %v8543
      %v8724 = vpop.f32.mrf.mxu0
      %v8725 = vadd.f32 %v8588, %v8724
      %8726 = vmatmul.f32.gmra.mxu0 %v8544
      %v8727 = vpop.f32.mrf.mxu0
      %v8728 = vadd.f32 %v8588, %v8727
      %8729 = vmatmul.f32.gmra.mxu0 %v8545
      %v8730 = vpop.f32.mrf.mxu0
      %v8731 = vadd.f32 %v8588, %v8730
      %8732 = vmatmul.f32.gmra.mxu0 %v8546
      %v8733 = vpop.f32.mrf.mxu0
      %v8734 = vadd.f32 %v8588, %v8733
      %8735 = vmatmul.f32.gmra.mxu0 %v8547
      %v8736 = vpop.f32.mrf.mxu0
      %v8737 = vadd.f32 %v8588, %v8736
      %8738 = vmatmul.f32.gmra.mxu0 %v8548
      %v8739 = vpop.f32.mrf.mxu0
      %v8740 = vadd.f32 %v8588, %v8739
      %8741 = vmatmul.f32.gmra.mxu0 %v8549
      %v8742 = vpop.f32.mrf.mxu0
      %v8743 = vadd.f32 %v8588, %v8742
      %8744 = vmatmul.f32.gmra.mxu0 %v8550
      %v8745 = vpop.f32.mrf.mxu0
      %v8746 = vadd.f32 %v8588, %v8745
      %8747 = vmatmul.f32.gmra.mxu0 %v8551
      %v8748 = vpop.f32.mrf.mxu0
      %v8749 = vadd.f32 %v8588, %v8748
      %8750 = vmatmul.f32.gmra.mxu0 %v8552
      %v8751 = vpop.f32.mrf.mxu0
      %v8752 = vadd.f32 %v8588, %v8751
      %8753 = vmatmul.f32.gmra.mxu0 %v8553
      %v8754 = vpop.f32.mrf.mxu0
      %v8755 = vadd.f32 %v8588, %v8754
      %8756 = vmatmul.f32.gmra.mxu0 %v8554
      %v8757 = vpop.f32.mrf.mxu0
      %v8758 = vadd.f32 %v8588, %v8757
      %8759 = vmatmul.f32.gmra.mxu0 %v8555
      %v8760 = vpop.f32.mrf.mxu0
      %v8761 = vadd.f32 %v8588, %v8760
      %8762 = vmatmul.f32.gmra.mxu0 %v8556
      %v8763 = vpop.f32.mrf.mxu0
      %v8764 = vadd.f32 %v8588, %v8763
      %8765 = vmatmul.f32.gmra.mxu0 %v8557
      %v8766 = vpop.f32.mrf.mxu0
      %v8767 = vadd.f32 %v8588, %v8766
      %8768 = vmatmul.f32.gmra.mxu0 %v8558
      %v8769 = vpop.f32.mrf.mxu0
      %v8770 = vadd.f32 %v8588, %v8769
      %8771 = vmatmul.f32.gmra.mxu0 %v8559
      %v8772 = vpop.f32.mrf.mxu0
      %v8773 = vadd.f32 %v8588, %v8772
      %8774 = vmatmul.f32.gmra.mxu0 %v8560
      %v8775 = vpop.f32.mrf.mxu0
      %v8776 = vadd.f32 %v8588, %v8775
      %8777 = vmatmul.f32.gmra.mxu0 %v8561
      %v8778 = vpop.f32.mrf.mxu0
      %v8779 = vadd.f32 %v8588, %v8778
      %8780 = vmatmul.f32.gmra.mxu0 %v8562
      %v8781 = vpop.f32.mrf.mxu0
      %v8782 = vadd.f32 %v8588, %v8781
      %8783 = vmatmul.f32.gmra.mxu0 %v8563
      %v8784 = vpop.f32.mrf.mxu0
      %v8785 = vadd.f32 %v8588, %v8784
      %8786 = vmatmul.f32.gmra.mxu0 %v8564
      %v8787 = vpop.f32.mrf.mxu0
      %v8788 = vadd.f32 %v8588, %v8787
      %8789 = vmatmul.f32.gmra.mxu0 %v8565
      %v8790 = vpop.f32.mrf.mxu0
      %v8791 = vadd.f32 %v8588, %v8790
      %8792 = vmatmul.f32.gmra.mxu0 %v8566
      %v8793 = vpop.f32.mrf.mxu0
      %v8794 = vadd.f32 %v8588, %v8793
      %8795 = vmatmul.f32.gmra.mxu0 %v8567
      %v8796 = vpop.f32.mrf.mxu0
      %v8797 = vadd.f32 %v8588, %v8796
      %8798 = vdwg.mxu0
      %v8799 = vadd.f32 %v8608, %v8209
      %v8800 = vadd.f32 %v8611, %v8210
      %v8801 = vadd.f32 %v8614, %v8211
      %v8802 = vadd.f32 %v8617, %v8212
      %v8803 = vadd.f32 %v8620, %v8213
      %v8804 = vadd.f32 %v8623, %v8214
      %v8805 = vadd.f32 %v8626, %v8215
      %v8806 = vadd.f32 %v8629, %v8216
      %v8807 = vadd.f32 %v8632, %v8217
      %v8808 = vadd.f32 %v8635, %v8218
      %v8809 = vadd.f32 %v8638, %v8219
      %v8810 = vadd.f32 %v8641, %v8220
      %v8811 = vadd.f32 %v8644, %v8221
      %v8812 = vadd.f32 %v8647, %v8222
      %v8813 = vadd.f32 %v8650, %v8223
      %v8814 = vadd.f32 %v8653, %v8224
      %v8815 = vadd.f32 %v8656, %v8225
      %v8816 = vadd.f32 %v8659, %v8226
      %v8817 = vadd.f32 %v8662, %v8227
      %v8818 = vadd.f32 %v8665, %v8228
      %v8819 = vadd.f32 %v8668, %v8229
      %v8820 = vadd.f32 %v8671, %v8230
      %v8821 = vadd.f32 %v8674, %v8231
      %v8822 = vadd.f32 %v8677, %v8232
      %v8823 = vadd.f32 %v8680, %v8233
      %v8824 = vadd.f32 %v8683, %v8234
      %v8825 = vadd.f32 %v8686, %v8235
      %v8826 = vadd.f32 %v8689, %v8236
      %v8827 = vadd.f32 %v8692, %v8237
      %v8828 = vadd.f32 %v8695, %v8238
      %v8829 = vadd.f32 %v8698, %v8239
      %v8830 = vadd.f32 %v8701, %v8240
      %v8831 = vadd.f32 %v8704, %v8241
      %v8832 = vadd.f32 %v8707, %v8242
      %v8833 = vadd.f32 %v8710, %v8243
      %v8834 = vadd.f32 %v8713, %v8244
      %v8835 = vadd.f32 %v8716, %v8245
      %v8836 = vadd.f32 %v8719, %v8246
      %v8837 = vadd.f32 %v8722, %v8247
      %v8838 = vadd.f32 %v8725, %v8248
      %v8839 = vadd.f32 %v8728, %v8249
      %v8840 = vadd.f32 %v8731, %v8250
      %v8841 = vadd.f32 %v8734, %v8251
      %v8842 = vadd.f32 %v8737, %v8252
      %v8843 = vadd.f32 %v8740, %v8253
      %v8844 = vadd.f32 %v8743, %v8254
      %v8845 = vadd.f32 %v8746, %v8255
      %v8846 = vadd.f32 %v8749, %v8256
      %v8847 = vadd.f32 %v8752, %v8257
      %v8848 = vadd.f32 %v8755, %v8258
      %v8849 = vadd.f32 %v8758, %v8259
      %v8850 = vadd.f32 %v8761, %v8260
      %v8851 = vadd.f32 %v8764, %v8261
      %v8852 = vadd.f32 %v8767, %v8262
      %v8853 = vadd.f32 %v8770, %v8263
      %v8854 = vadd.f32 %v8773, %v8264
      %v8855 = vadd.f32 %v8776, %v8265
      %v8856 = vadd.f32 %v8779, %v8266
      %v8857 = vadd.f32 %v8782, %v8267
      %v8858 = vadd.f32 %v8785, %v8268
      %v8859 = vadd.f32 %v8788, %v8269
      %v8860 = vadd.f32 %v8791, %v8270
      %v8861 = vadd.f32 %v8794, %v8271
      %v8862 = vadd.f32 %v8797, %v8272
      %v8863 = vtanh.pop %v8799
      %v8864 = vtanh.pop %v8800
      %v8865 = vtanh.pop %v8801
      %v8866 = vtanh.pop %v8802
      %v8867 = vtanh.pop %v8803
      %v8868 = vtanh.pop %v8804
      %v8869 = vtanh.pop %v8805
      %v8870 = vtanh.pop %v8806
      %v8871 = vtanh.pop %v8807
      %v8872 = vtanh.pop %v8808
      %v8873 = vtanh.pop %v8809
      %v8874 = vtanh.pop %v8810
      %v8875 = vtanh.pop %v8811
      %v8876 = vtanh.pop %v8812
      %v8877 = vtanh.pop %v8813
      %v8878 = vtanh.pop %v8814
      %v8879 = vtanh.pop %v8815
      %v8880 = vtanh.pop %v8816
      %v8881 = vtanh.pop %v8817
      %v8882 = vtanh.pop %v8818
      %v8883 = vtanh.pop %v8819
      %v8884 = vtanh.pop %v8820
      %v8885 = vtanh.pop %v8821
      %v8886 = vtanh.pop %v8822
      %v8887 = vtanh.pop %v8823
      %v8888 = vtanh.pop %v8824
      %v8889 = vtanh.pop %v8825
      %v8890 = vtanh.pop %v8826
      %v8891 = vtanh.pop %v8827
      %v8892 = vtanh.pop %v8828
      %v8893 = vtanh.pop %v8829
      %v8894 = vtanh.pop %v8830
      %v8895 = vtanh.pop %v8831
      %v8896 = vtanh.pop %v8832
      %v8897 = vtanh.pop %v8833
      %v8898 = vtanh.pop %v8834
      %v8899 = vtanh.pop %v8835
      %v8900 = vtanh.pop %v8836
      %v8901 = vtanh.pop %v8837
      %v8902 = vtanh.pop %v8838
      %v8903 = vtanh.pop %v8839
      %v8904 = vtanh.pop %v8840
      %v8905 = vtanh.pop %v8841
      %v8906 = vtanh.pop %v8842
      %v8907 = vtanh.pop %v8843
      %v8908 = vtanh.pop %v8844
      %v8909 = vtanh.pop %v8845
      %v8910 = vtanh.pop %v8846
      %v8911 = vtanh.pop %v8847
      %v8912 = vtanh.pop %v8848
      %v8913 = vtanh.pop %v8849
      %v8914 = vtanh.pop %v8850
      %v8915 = vtanh.pop %v8851
      %v8916 = vtanh.pop %v8852
      %v8917 = vtanh.pop %v8853
      %v8918 = vtanh.pop %v8854
      %v8919 = vtanh.pop %v8855
      %v8920 = vtanh.pop %v8856
      %v8921 = vtanh.pop %v8857
      %v8922 = vtanh.pop %v8858
      %v8923 = vtanh.pop %v8859
      %v8924 = vtanh.pop %v8860
      %v8925 = vtanh.pop %v8861
      %v8926 = vtanh.pop %v8862
      %v8927 = vld [vmem:[%s8] sm:$0xff]
      %v8928 = vld [vmem:[%s9] sm:$0xff]
      %8930 = vset.pattern.permute.xlu0 0
      %8931 = vperm.xlu0 %8930, %v8928
      %v8932 = vpop.permute.xlu0 %8931
      %8934 = vmatpush.xpose.msra.mxu0 %v8878
      %8935 = vmatpush.xpose.msra.mxu0 %v8877
      %8936 = vmatpush.xpose.msra.mxu0 %v8876
      %8937 = vmatpush.xpose.msra.mxu0 %v8875
      %8938 = vmatpush.xpose.msra.mxu0 %v8874
      %8939 = vmatpush.xpose.msra.mxu0 %v8873
      %8940 = vmatpush.xpose.msra.mxu0 %v8872
      %8941 = vmatpush.xpose.msra.mxu0 %v8871
      %8942 = vmatpush.xpose.msra.mxu0 %v8870
      %8943 = vmatpush.xpose.msra.mxu0 %v8869
      %8944 = vmatpush.xpose.msra.mxu0 %v8868
      %8945 = vmatpush.xpose.msra.mxu0 %v8867
      %8946 = vmatpush.xpose.msra.mxu0 %v8866
      %8947 = vmatpush.xpose.msra.mxu0 %v8865
      %8948 = vmatpush.xpose.msra.mxu0 %v8864
      %8949 = vmatpush.xpose.msra.mxu0 %v8863
      %8950 = vmatmul.f32.gmra.mxu0 %v8927
      %v8951 = vpop.f32.mrf.mxu0
      %v8952 = vadd.f32 %v8932, %v8951
      %8953 = vdwg.mxu0
      %8954 = vmatpush.xpose.msra.mxu0 %v8894
      %8955 = vmatpush.xpose.msra.mxu0 %v8893
      %8956 = vmatpush.xpose.msra.mxu0 %v8892
      %8957 = vmatpush.xpose.msra.mxu0 %v8891
      %8958 = vmatpush.xpose.msra.mxu0 %v8890
      %8959 = vmatpush.xpose.msra.mxu0 %v8889
      %8960 = vmatpush.xpose.msra.mxu0 %v8888
      %8961 = vmatpush.xpose.msra.mxu0 %v8887
      %8962 = vmatpush.xpose.msra.mxu0 %v8886
      %8963 = vmatpush.xpose.msra.mxu0 %v8885
      %8964 = vmatpush.xpose.msra.mxu0 %v8884
      %8965 = vmatpush.xpose.msra.mxu0 %v8883
      %8966 = vmatpush.xpose.msra.mxu0 %v8882
      %8967 = vmatpush.xpose.msra.mxu0 %v8881
      %8968 = vmatpush.xpose.msra.mxu0 %v8880
      %8969 = vmatpush.xpose.msra.mxu0 %v8879
      %8970 = vmatmul.f32.gmra.mxu0 %v8927
      %v8971 = vpop.f32.mrf.mxu0
      %v8972 = vadd.f32 %v8932, %v8971
      %8973 = vdwg.mxu0
      %8974 = vmatpush.xpose.msra.mxu0 %v8910
      %8975 = vmatpush.xpose.msra.mxu0 %v8909
      %8976 = vmatpush.xpose.msra.mxu0 %v8908
      %8977 = vmatpush.xpose.msra.mxu0 %v8907
      %8978 = vmatpush.xpose.msra.mxu0 %v8906
      %8979 = vmatpush.xpose.msra.mxu0 %v8905
      %8980 = vmatpush.xpose.msra.mxu0 %v8904
      %8981 = vmatpush.xpose.msra.mxu0 %v8903
      %8982 = vmatpush.xpose.msra.mxu0 %v8902
      %8983 = vmatpush.xpose.msra.mxu0 %v8901
      %8984 = vmatpush.xpose.msra.mxu0 %v8900
      %8985 = vmatpush.xpose.msra.mxu0 %v8899
      %8986 = vmatpush.xpose.msra.mxu0 %v8898
      %8987 = vmatpush.xpose.msra.mxu0 %v8897
      %8988 = vmatpush.xpose.msra.mxu0 %v8896
      %8989 = vmatpush.xpose.msra.mxu0 %v8895
      %8990 = vmatmul.f32.gmra.mxu0 %v8927
      %v8991 = vpop.f32.mrf.mxu0
      %v8992 = vadd.f32 %v8932, %v8991
      %8993 = vdwg.mxu0
      %8994 = vmatpush.xpose.msra.mxu0 %v8926
      %8995 = vmatpush.xpose.msra.mxu0 %v8925
      %8996 = vmatpush.xpose.msra.mxu0 %v8924
      %8997 = vmatpush.xpose.msra.mxu0 %v8923
      %8998 = vmatpush.xpose.msra.mxu0 %v8922
      %8999 = vmatpush.xpose.msra.mxu0 %v8921
      %9000 = vmatpush.xpose.msra.mxu0 %v8920
      %9001 = vmatpush.xpose.msra.mxu0 %v8919
      %9002 = vmatpush.xpose.msra.mxu0 %v8918
      %9003 = vmatpush.xpose.msra.mxu0 %v8917
      %9004 = vmatpush.xpose.msra.mxu0 %v8916
      %9005 = vmatpush.xpose.msra.mxu0 %v8915
      %9006 = vmatpush.xpose.msra.mxu0 %v8914
      %9007 = vmatpush.xpose.msra.mxu0 %v8913
      %9008 = vmatpush.xpose.msra.mxu0 %v8912
      %9009 = vmatpush.xpose.msra.mxu0 %v8911
      %9010 = vmatmul.f32.gmra.mxu0 %v8927
      %v9011 = vpop.f32.mrf.mxu0
      %v9012 = vadd.f32 %v8932, %v9011
      %9013 = vdwg.mxu0
      %9014 = vst [vmem:[%s383] sm:$0xff] %v8952
      %9015 = vst [vmem:[%s383 + $0x8] sm:$0xff] %v8972
      %9016 = vst [vmem:[%s383 + $0x10] sm:$0xff] %v8992
      %9017 = vst [vmem:[%s383 + $0x18] sm:$0xff] %v9012
      %s9018 = smul.u32 4, %s21
      %p9019 = scmp.lt.s32.totalorder %s9018, 7
      %s9020 = scalar_select %p9019, %s9018, 7
      %s9021 = smul.addr %s9020, 8
      %s9022 = scalar_lea.vmem %s10, %s9021
      // Predicated region
      $region61: #{resnet_pinn_forward.1} parent=59 // pred_check
        %p9023 = pneg %p259
      $region62: #{resnet_pinn_forward.1} parent=59 // pred_check_branch
        %9025 = sbr.rel (%p9023) target = $region64
      $region63: #{resnet_pinn_forward.1} parent=59 // pred_region
        %s9026 = smul.u32 4, %s21
      $region64: #{resnet_pinn_forward.1} parent=59 // pred_fallthru
        _
    $region60: #{resnet_pinn_forward.1} parent=5 // pred_fallthru
      _
    %p9027 = scmp.le.s32.totalorder 2, %s16
    // Predicated region
    $region65: #{resnet_pinn_forward.1} parent=5 // pred_check
      %p9028 = pneg %p9027
    $region66: #{resnet_pinn_forward.1} parent=5 // pred_check_branch
      %9030 = sbr.rel (%p9028) target = $region68
    $region67: #{resnet_pinn_forward.1} parent=5 // pred_region
      %s9031 = ssub.s32 %s16, 2
      // Predicated region
      $region69: #{resnet_pinn_forward.1} parent=67 // pred_check
        %p9032 = pneg %p265
      $region70: #{resnet_pinn_forward.1} parent=67 // pred_check_branch
        %9034 = sbr.rel (%p9032) target = $region72
      $region71: #{resnet_pinn_forward.1} parent=67 // pred_region
        %s9035 = smul.u32 4, %s22
        %p9036 = scmp.lt.s32.totalorder %s9035, 7
        %s9037 = scalar_select %p9036, %s9035, 7
        %s9038 = smul.addr %s9037, 8
        %s9039 = scalar_lea.vmem %s10, %s9038
      $region72: #{resnet_pinn_forward.1} parent=67 // pred_fallthru
        _
    $region68: #{resnet_pinn_forward.1} parent=5 // pred_fallthru
      _
  $region6: #{resnet_pinn_forward.1} parent=0 // loop_footer
    %s20 = sadd.s32 1, %s16
  $region7: #{resnet_pinn_forward.1} parent=0 // loop_footer_branch
    %15 = sbr.rel target = $region3
  $region8: #{resnet_pinn_forward.1} parent=0 // loop_exit
    _

</llo_original>
